<compile_context>
chip_gen: v7x
topology: tpu7x:2x2x1
jax: 0.10.0
libtpu: 0.0.40
codegen_flags: <defaults>
</compile_context>

<pallas_src>
import functools
import math
from math import pi as PI

import jax
import jax.numpy as jnp
from jax.experimental import pallas as pl
from jax.experimental.pallas import tpu as pltpu

LOG2 = math.log(2.0)
BF16 = jnp.bfloat16
F32 = jnp.float32


# ---------------------------- small helpers ----------------------------
def _vmem_limit_bytes():
    cap = None
    try:
        info = pltpu.get_tpu_info()
        cap = getattr(info, "vmem_capacity_bytes", None)
    except Exception:
        cap = None
    if not cap:
        cap = 64 * 1024 * 1024  # conservative default (v7x per-TC physical)
    # leave ~25% headroom for compiler scratch; ~48 MiB on v7x, ~96 MiB on v5e/v6e
    return int(min(cap * 3 // 4, 100 * 1024 * 1024))


def _compiler_params():
    return pltpu.CompilerParams(
        dimension_semantics=("arbitrary",),
        vmem_limit_bytes=_vmem_limit_bytes(),
    )


def _spec(shape, single_buffer=False):
    idx = lambda i: (0,) * len(shape)
    if single_buffer:
        try:
            # grid=(1,): nothing to pipeline, so don't pay for double buffers.
            return pl.BlockSpec(shape, idx, pipeline_mode=pl.Buffered(1))
        except Exception:
            pass
    return pl.BlockSpec(shape, idx)


def _sigmoid(x):
    # EUP exp + EUP approx reciprocal (keeps the divide off the VALU)
    return pl.reciprocal(1.0 + jnp.exp(-x), approx=True)


def _ssp(x):
    # ShiftedSoftplus: softplus(x) - log(2)
    return jnp.maximum(x, 0.0) + jnp.log1p(jnp.exp(-jnp.abs(x))) - LOG2


def _mm(a, b):
    # bf16 MXU matmul with f32 accumulation (b is already bf16)
    return jnp.dot(a.astype(BF16), b, preferred_element_type=jnp.float32)


# ----------------------------------------------------------------------------
# Fused kernel:
#   lin0+relu -> edge filter -> 3x (CFConv + GRU) -> 3x Set2Set -> lin1+relu
# ----------------------------------------------------------------------------
def _cggru_kernel(x_ref, l0w_ref, l0b_ref,
                  ea_ref, n1w_ref, n1b_ref, n2w_ref, n2b_ref, c_ref,
                  s_ref, dstT_ref,
                  cf1w_ref, cf2w_ref, cf2b_ref, cf3w_ref,
                  g_wrz_ref, g_win_ref, g_whn_ref, g_brz_ref, g_bin_ref, g_bhn_ref,
                  mbn_ref,
                  ls_whq_ref, ls_wr_ref, ls_b_ref,
                  l1wq_ref, l1wr_ref, l1b_ref,
                  o_ref, *, n_iters, n_steps):
    N = x_ref.shape[0]
    B = o_ref.shape[0]
    D = o_ref.shape[1]

    # ---------------- node embedding:  h = relu(lin0(x)) ----------------
    h = jnp.maximum(_mm(x_ref[...], l0w_ref[...]) + l0b_ref[...], 0.0)       # (N, D) f32

    # ------------- edge filter (iteration invariant) --------------------
    # W = nn(edge_attr) * [C(edge_weight) * 1/deg(dst)]  (mean-aggr folded into c_ref)
    e1 = jnp.maximum(_mm(ea_ref[...], n1w_ref[...]) + n1b_ref[...], 0.0)
    W = (_mm(e1, n2w_ref[...]) + n2b_ref[...]) * c_ref[...]                  # (E, D) f32

    S = s_ref[...]        # (E, N) bf16 one-hot gather (x[src])
    dstT = dstT_ref[...]  # (N, E) bf16 one-hot scatter-to-dst (transposed)

    # hoist loop-invariant weight loads / bias broadcasts out of the unrolled loop
    cf1w = cf1w_ref[...]
    cf2w = cf2w_ref[...]
    cf3w = cf3w_ref[...]
    cf2b = jnp.broadcast_to(cf2b_ref[...], (N, D))
    g_wrz = g_wrz_ref[...]                                   # (2D, 2D) packed r|z weights
    g_win = g_win_ref[...]
    g_whn = g_whn_ref[...]
    g_brz = jnp.broadcast_to(g_brz_ref[...], (N, 2 * D))
    g_bin = jnp.broadcast_to(g_bin_ref[...], (N, D))
    g_bhn = jnp.broadcast_to(g_bhn_ref[...], (N, D))

    for _ in range(n_iters):
        # ---- CFConv ----
        x1 = _mm(h, cf1w)                                                    # lin1 (no bias)
        xj = jnp.dot(S, x1.astype(BF16), preferred_element_type=jnp.float32)  # gather x1[src]
        msg = xj * W                                                          # x_j * W
        agg = jnp.dot(dstT, msg.astype(BF16),
                      preferred_element_type=jnp.float32)                     # mean (1/deg in W)
        x2 = _ssp(_mm(agg, cf2w) + cf2b)                                      # lin2 + ssp
        m = jnp.maximum(_mm(x2, cf3w), 0.0)                                   # lin3 + outer relu

        # ---- GRU cell (PyTorch gate order r, z, n); r/z packed 256-deep ----
        mh = jnp.concatenate([m.astype(BF16), h.astype(BF16)], axis=1)        # (N, 2D) bf16
        rz = jnp.dot(mh, g_wrz, preferred_element_type=jnp.float32) + g_brz   # (N, 2D)
        r = _sigmoid(rz[:, :D])
        z = _sigmoid(rz[:, D:])
        gi_n = _mm(m, g_win) + g_bin
        gh_n = _mm(h, g_whn) + g_bhn
        n = jnp.tanh(gi_n + r * gh_n)
        h = (1.0 - z) * n + z * h

    # ---------------- Set2Set readout (3 steps) + lin1 + relu ----------------
    x_bf = h.astype(BF16)
    mbn = mbn_ref[...]                    # (B, N) f32 graph membership (one-hot)
    is_member = mbn > 0.5

    ls_whq = ls_whq_ref[...]              # (D, 4D) bf16  = Wih[:D] + Whh (both multiply hh)
    ls_wr = ls_wr_ref[...]                # (D, 4D) bf16  = Wih[D:]
    ls_b = jnp.broadcast_to(ls_b_ref[...], (B, 4 * D))   # bih + bhh

    hh = jnp.zeros((B, D), jnp.float32)
    cc = jnp.zeros((B, D), jnp.float32)
    rr = jnp.zeros((B, D), jnp.float32)   # q_star = [hh, rr]; split weights avoid concat

    for _ in range(n_steps):
        # LSTM step on q_star (PyTorch gate order i, f, g, o); hh-weights pre-summed
        g = _mm(hh, ls_whq) + _mm(rr, ls_wr) + ls_b
        gi = _sigmoid(g[:, 0:D])
        gf = _sigmoid(g[:, D:2 * D])
        gg = jnp.tanh(g[:, 2 * D:3 * D])
        go = _sigmoid(g[:, 3 * D:4 * D])
        cc = gf * cc + gi * gg
        hh = go * jnp.tanh(cc)

        # lane-dense per-graph masked softmax attention in (B, N) layout
        scores = jax.lax.dot_general(hh.astype(BF16), x_bf,
                                     (((1,), (1,)), ((), ())),
                                     preferred_element_type=jnp.float32)     # (B, N)
        masked = jnp.where(is_member, scores, -1e30)
        mx = jnp.max(masked, axis=1, keepdims=True)                          # (B, 1)
        p = mbn * jnp.exp(masked - mx)                                       # (B, N)
        denom = jnp.maximum(jnp.sum(p, axis=1, keepdims=True), 1e-20)        # (B, 1)
        num = jnp.dot(p.astype(BF16), x_bf,
                      preferred_element_type=jnp.float32)                    # (B, D)
        rr = num * pl.reciprocal(denom, approx=True)                         # scatter_add(a*x)

    # lin1 + relu on q_star = [hh, rr]
    y1 = jnp.maximum(_mm(hh, l1wq_ref[...]) + _mm(rr, l1wr_ref[...]) + l1b_ref[...], 0.0)
    o_ref[...] = y1


# ---------------------------- parameters ----------------------------
def init_params(key, nfeat_node=19, nc_edge_hidden=50, dim=128):
    ks = jax.random.split(key, 21)

    def w(k, shape, scale=0.1):
        return (scale * jax.random.normal(k, shape)).astype(jnp.float32)

    return {
        "lin0_w": w(ks[0], (nfeat_node, dim)), "lin0_b": w(ks[1], (1, dim), 0.01),
        # CFConv edge MLP: Linear(50,128) + ReLU + Linear(128,dim)
        "nn1_w": w(ks[2], (nc_edge_hidden, 128)), "nn1_b": w(ks[3], (1, 128), 0.01),
        "nn2_w": w(ks[4], (128, dim)), "nn2_b": w(ks[5], (1, dim), 0.01),
        "cf_lin1_w": w(ks[6], (dim, dim)),                                  # bias=False
        "cf_lin2_w": w(ks[7], (dim, dim)), "cf_lin2_b": jnp.zeros((1, dim), jnp.float32),
        "cf_lin3_w": w(ks[8], (dim, dim)),                                  # bias=False
        "gru_wih": w(ks[9], (dim, 3 * dim)), "gru_whh": w(ks[10], (dim, 3 * dim)),
        "gru_bih": w(ks[11], (1, 3 * dim), 0.01), "gru_bhh": w(ks[12], (1, 3 * dim), 0.01),
        # Set2Set LSTM: input 2*dim -> hidden dim
        "lstm_wih": w(ks[13], (2 * dim, 4 * dim)), "lstm_whh": w(ks[14], (dim, 4 * dim)),
        "lstm_bih": w(ks[15], (1, 4 * dim), 0.01), "lstm_bhh": w(ks[16], (1, 4 * dim), 0.01),
        "lin1_w": w(ks[17], (2 * dim, dim)), "lin1_b": w(ks[18], (1, dim), 0.01),
        "lin2_w": w(ks[19], (dim, 1)), "lin2_b": w(ks[20], (1, 1), 0.01),
    }


# ---------------------------- glue helpers ----------------------------
def _pad_lanes(a, mult=128):
    pad = (-a.shape[-1]) % mult
    if pad:
        a = jnp.pad(a, ((0, 0), (0, pad)))
    return a


def _pad_rows(a, rows):
    pad = rows - a.shape[0]
    if pad:
        a = jnp.pad(a, ((0, pad), (0, 0)))
    return a


# ---------------------------- forward ----------------------------
def cggru_forward(params, x, edge_index, edge_weight, batch, num_graphs,
                  dim=128, cutoff=5.0, nc_edge_hidden=50, n_conv=3, n_s2s=3):
    N = x.shape[0]
    E = edge_weight.shape[0]
    B = num_graphs
    D = dim

    # --- elementwise / indexing glue (tiny, one-time) ---
    step = cutoff / (nc_edge_hidden - 1)
    offset = jnp.linspace(0.0, cutoff, nc_edge_hidden, dtype=F32)
    coeff = -0.5 / (step * step)
    edge_attr = jnp.exp(coeff * (edge_weight[:, None] - offset[None, :]) ** 2)

    src, dst = edge_index[0], edge_index[1]
    S = jax.nn.one_hot(src, N, dtype=BF16)                  # (E, N) exact in bf16
    dst_oh = jax.nn.one_hot(dst, N, dtype=F32)              # (E, N)
    deg = jnp.maximum(jnp.sum(dst_oh, axis=0), 1.0)         # PyG mean: isolated -> 0
    dstT = dst_oh.T.astype(BF16)                            # (N, E)
    # cosine cutoff envelope with the mean normalization 1/deg(dst) folded in (f32, exact)
    C = (((jnp.cos(edge_weight * PI / cutoff) + 1.0) * 0.5) / deg[dst])[:, None].astype(F32)
    Mbn = jax.nn.one_hot(batch, B, dtype=F32).T             # (B, N)

    # pad feature dims to multiples of 128 lanes (zero padding is exact)
    x_pad = _pad_lanes(x).astype(BF16)
    Kx = x_pad.shape[1]
    l0w = _pad_rows(params["lin0_w"], Kx).astype(BF16)

    ea_pad = _pad_lanes(edge_attr).astype(BF16)
    Ke = ea_pad.shape[1]
    n1w = _pad_rows(params["nn1_w"], Ke).astype(BF16)
    H1 = n1w.shape[1]
    n2w = params["nn2_w"].astype(BF16)

    cf1w = params["cf_lin1_w"].astype(BF16)
    cf2w = params["cf_lin2_w"].astype(BF16)
    cf3w = params["cf_lin3_w"].astype(BF16)

    # GRU: pack the r/z gate weights ([m | h] contraction depth 2D); keep n-gate split
    gwih, gwhh = params["gru_wih"], params["gru_whh"]
    gbih, gbhh = params["gru_bih"], params["gru_bhh"]
    g_wrz = jnp.concatenate([gwih[:, :2 * D], gwhh[:, :2 * D]], axis=0).astype(BF16)  # (2D,2D)
    g_win = gwih[:, 2 * D:].astype(BF16)
    g_whn = gwhh[:, 2 * D:].astype(BF16)
    g_brz = (gbih[:, :2 * D] + gbhh[:, :2 * D]).astype(F32)
    g_bin = gbih[:, 2 * D:].astype(F32)
    g_bhn = gbhh[:, 2 * D:].astype(F32)

    # Set2Set LSTM: pre-sum the two hh weights (q_star = [hh, r]) and the biases (f32)
    lwih, lwhh = params["lstm_wih"], params["lstm_whh"]
    ls_whq = (lwih[:D] + lwhh).astype(BF16)                 # (D, 4D)
    ls_wr = lwih[D:].astype(BF16)                           # (D, 4D)
    ls_b = (params["lstm_bih"] + params["lstm_bhh"]).astype(F32)

    l1w = params["lin1_w"]
    l1wq = l1w[:D].astype(BF16)
    l1wr = l1w[D:].astype(BF16)

    args = [x_pad, l0w, params["lin0_b"],
            ea_pad, n1w, params["nn1_b"], n2w, params["nn2_b"], C,
            S, dstT,
            cf1w, cf2w, params["cf_lin2_b"], cf3w,
            g_wrz, g_win, g_whn, g_brz, g_bin, g_bhn,
            Mbn,
            ls_whq, ls_wr, ls_b,
            l1wq, l1wr, params["lin1_b"]]
    shapes = [tuple(a.shape) for a in args]

    def _call(single_buffer):
        in_specs = [_spec(s, single_buffer) for s in shapes]
        return pl.pallas_call(
            functools.partial(_cggru_kernel, n_iters=n_conv, n_steps=n_s2s),
            grid=(1,),
            in_specs=in_specs,
            out_specs=pl.BlockSpec((B, D), lambda i: (0, 0)),
            out_shape=jax.ShapeDtypeStruct((B, D), jnp.float32),
            compiler_params=_compiler_params(),
        )(*args)

    try:
        y1 = _call(True)                 # single-buffered inputs (grid=(1,))
    except Exception:
        y1 = _call(False)                # fallback if Buffered(1) unsupported

    # final dim -> 1 projection: 1-wide lane output, done in plain jnp (no kernel)
    y = y1 @ params["lin2_w"] + params["lin2_b"]
    return y.reshape(-1)


if __name__ == "__main__":
    N, E, B = 16, 32, 2
    nfeat_node, nc_edge_hidden, dim, cutoff = 19, 50, 128, 5.0

    key = jax.random.PRNGKey(0)
    kx, ks0, kd0, ks1, kd1, kw, kp = jax.random.split(key, 7)
    x = jax.random.normal(kx, (N, nfeat_node), dtype=jnp.float32)
    # edges kept within each graph: nodes 0..7 -> graph 0, 8..15 -> graph 1
    src = jnp.concatenate([jax.random.randint(ks0, (E // 2,), 0, N // 2),
                           jax.random.randint(ks1, (E // 2,), N // 2, N)]).astype(jnp.int32)
    dst = jnp.concatenate([jax.random.randint(kd0, (E // 2,), 0, N // 2),
                           jax.random.randint(kd1, (E // 2,), N // 2, N)]).astype(jnp.int32)
    edge_index = jnp.stack([src, dst])
    edge_weight = jax.random.uniform(kw, (E,), minval=0.5, maxval=4.5, dtype=jnp.float32)
    batch = jnp.concatenate([jnp.zeros(N // 2, jnp.int32), jnp.ones(N // 2, jnp.int32)])

    params = init_params(kp, nfeat_node, nc_edge_hidden, dim)
    out = cggru_forward(params, x, edge_index, edge_weight, batch, B,
                        dim=dim, cutoff=cutoff, nc_edge_hidden=nc_edge_hidden)
    out = jax.block_until_ready(out)
    assert out.shape == (B,), out.shape
    assert bool(jnp.all(jnp.isfinite(out)))
    print("KERNEL_OK")
</pallas_src>

<mosaic_0001>
module attributes {stable_mosaic.version = 11 : i64} {
  func.func @_cggru_kernel(%arg0: i32, %arg1: memref<16x128xbf16, #tpu.memory_space<vmem>>, %arg2: memref<128x128xbf16, #tpu.memory_space<vmem>>, %arg3: memref<1x128xf32, #tpu.memory_space<vmem>>, %arg4: memref<32x128xbf16, #tpu.memory_space<vmem>>, %arg5: memref<128x128xbf16, #tpu.memory_space<vmem>>, %arg6: memref<1x128xf32, #tpu.memory_space<vmem>>, %arg7: memref<128x128xbf16, #tpu.memory_space<vmem>>, %arg8: memref<1x128xf32, #tpu.memory_space<vmem>>, %arg9: memref<32x1xf32, #tpu.memory_space<vmem>>, %arg10: memref<32x16xbf16, #tpu.memory_space<vmem>>, %arg11: memref<16x32xbf16, #tpu.memory_space<vmem>>, %arg12: memref<128x128xbf16, #tpu.memory_space<vmem>>, %arg13: memref<128x128xbf16, #tpu.memory_space<vmem>>, %arg14: memref<1x128xf32, #tpu.memory_space<vmem>>, %arg15: memref<128x128xbf16, #tpu.memory_space<vmem>>, %arg16: memref<256x256xbf16, #tpu.memory_space<vmem>>, %arg17: memref<128x128xbf16, #tpu.memory_space<vmem>>, %arg18: memref<128x128xbf16, #tpu.memory_space<vmem>>, %arg19: memref<1x256xf32, #tpu.memory_space<vmem>>, %arg20: memref<1x128xf32, #tpu.memory_space<vmem>>, %arg21: memref<1x128xf32, #tpu.memory_space<vmem>>, %arg22: memref<2x16xf32, #tpu.memory_space<vmem>>, %arg23: memref<128x512xbf16, #tpu.memory_space<vmem>>, %arg24: memref<128x512xbf16, #tpu.memory_space<vmem>>, %arg25: memref<1x512xf32, #tpu.memory_space<vmem>>, %arg26: memref<128x128xbf16, #tpu.memory_space<vmem>>, %arg27: memref<128x128xbf16, #tpu.memory_space<vmem>>, %arg28: memref<1x128xf32, #tpu.memory_space<vmem>>, %arg29: memref<2x128xf32, #tpu.memory_space<vmem>>) attributes {dimension_semantics = [#tpu.dimension_semantics<arbitrary>], iteration_bounds = array<i64: 1>, scalar_prefetch = 0 : i64, scratch_operands = 0 : i64, tpu.core_type = #tpu.core_type<tc>, window_params = [{pipeline_mode = #tpu.pipeline_mode<synchronous>, transform_indices = @transform_0, window_bounds = array<i64: 16, 128>}, {pipeline_mode = #tpu.pipeline_mode<synchronous>, transform_indices = @transform_1, window_bounds = array<i64: 128, 128>}, {pipeline_mode = #tpu.pipeline_mode<synchronous>, transform_indices = @transform_2, window_bounds = array<i64: 1, 128>}, {pipeline_mode = #tpu.pipeline_mode<synchronous>, transform_indices = @transform_3, window_bounds = array<i64: 32, 128>}, {pipeline_mode = #tpu.pipeline_mode<synchronous>, transform_indices = @transform_4, window_bounds = array<i64: 128, 128>}, {pipeline_mode = #tpu.pipeline_mode<synchronous>, transform_indices = @transform_5, window_bounds = array<i64: 1, 128>}, {pipeline_mode = #tpu.pipeline_mode<synchronous>, transform_indices = @transform_6, window_bounds = array<i64: 128, 128>}, {pipeline_mode = #tpu.pipeline_mode<synchronous>, transform_indices = @transform_7, window_bounds = array<i64: 1, 128>}, {pipeline_mode = #tpu.pipeline_mode<synchronous>, transform_indices = @transform_8, window_bounds = array<i64: 32, 1>}, {pipeline_mode = #tpu.pipeline_mode<synchronous>, transform_indices = @transform_9, window_bounds = array<i64: 32, 16>}, {pipeline_mode = #tpu.pipeline_mode<synchronous>, transform_indices = @transform_10, window_bounds = array<i64: 16, 32>}, {pipeline_mode = #tpu.pipeline_mode<synchronous>, transform_indices = @transform_11, window_bounds = array<i64: 128, 128>}, {pipeline_mode = #tpu.pipeline_mode<synchronous>, transform_indices = @transform_12, window_bounds = array<i64: 128, 128>}, {pipeline_mode = #tpu.pipeline_mode<synchronous>, transform_indices = @transform_13, window_bounds = array<i64: 1, 128>}, {pipeline_mode = #tpu.pipeline_mode<synchronous>, transform_indices = @transform_14, window_bounds = array<i64: 128, 128>}, {pipeline_mode = #tpu.pipeline_mode<synchronous>, transform_indices = @transform_15, window_bounds = array<i64: 256, 256>}, {pipeline_mode = #tpu.pipeline_mode<synchronous>, transform_indices = @transform_16, window_bounds = array<i64: 128, 128>}, {pipeline_mode = #tpu.pipeline_mode<synchronous>, transform_indices = @transform_17, window_bounds = array<i64: 128, 128>}, {pipeline_mode = #tpu.pipeline_mode<synchronous>, transform_indices = @transform_18, window_bounds = array<i64: 1, 256>}, {pipeline_mode = #tpu.pipeline_mode<synchronous>, transform_indices = @transform_19, window_bounds = array<i64: 1, 128>}, {pipeline_mode = #tpu.pipeline_mode<synchronous>, transform_indices = @transform_20, window_bounds = array<i64: 1, 128>}, {pipeline_mode = #tpu.pipeline_mode<synchronous>, transform_indices = @transform_21, window_bounds = array<i64: 2, 16>}, {pipeline_mode = #tpu.pipeline_mode<synchronous>, transform_indices = @transform_22, window_bounds = array<i64: 128, 512>}, {pipeline_mode = #tpu.pipeline_mode<synchronous>, transform_indices = @transform_23, window_bounds = array<i64: 128, 512>}, {pipeline_mode = #tpu.pipeline_mode<synchronous>, transform_indices = @transform_24, window_bounds = array<i64: 1, 512>}, {pipeline_mode = #tpu.pipeline_mode<synchronous>, transform_indices = @transform_25, window_bounds = array<i64: 128, 128>}, {pipeline_mode = #tpu.pipeline_mode<synchronous>, transform_indices = @transform_26, window_bounds = array<i64: 128, 128>}, {pipeline_mode = #tpu.pipeline_mode<synchronous>, transform_indices = @transform_27, window_bounds = array<i64: 1, 128>}, {pipeline_mode = #tpu.pipeline_mode<synchronous>, transform_indices = @transform_28, window_bounds = array<i64: 2, 128>}]} {
    %c0 = arith.constant 0 : index
    %c0_0 = arith.constant 0 : index
    %0 = vector.load %arg1[%c0, %c0_0] : memref<16x128xbf16, #tpu.memory_space<vmem>>, vector<16x128xbf16>
    %c0_1 = arith.constant 0 : index
    %c0_2 = arith.constant 0 : index
    %1 = vector.load %arg2[%c0_1, %c0_2] : memref<128x128xbf16, #tpu.memory_space<vmem>>, vector<128x128xbf16>
    %cst = arith.constant dense<0.000000e+00> : vector<16x128xf32>
    %2 = tpu.matmul %0, %1, %cst {dimension_numbers = #tpu.dot_dimension_numbers<[1], [0], [0], [1], [0, 0, 1, 1], [], []>} : vector<16x128xbf16>, vector<128x128xbf16>, vector<16x128xf32> -> vector<16x128xf32>
    %c0_3 = arith.constant 0 : index
    %c0_4 = arith.constant 0 : index
    %3 = vector.load %arg3[%c0_3, %c0_4] : memref<1x128xf32, #tpu.memory_space<vmem>>, vector<1x128xf32>
    %4 = vector.broadcast %3 : vector<1x128xf32> to vector<16x128xf32>
    %5 = arith.addf %2, %4 : vector<16x128xf32>
    %cst_5 = arith.constant 0.000000e+00 : f32
    %6 = vector.broadcast %cst_5 : f32 to vector<16x128xf32>
    %7 = arith.maximumf %5, %6 : vector<16x128xf32>
    %c0_6 = arith.constant 0 : index
    %c0_7 = arith.constant 0 : index
    %8 = vector.load %arg4[%c0_6, %c0_7] : memref<32x128xbf16, #tpu.memory_space<vmem>>, vector<32x128xbf16>
    %c0_8 = arith.constant 0 : index
    %c0_9 = arith.constant 0 : index
    %9 = vector.load %arg5[%c0_8, %c0_9] : memref<128x128xbf16, #tpu.memory_space<vmem>>, vector<128x128xbf16>
    %cst_10 = arith.constant dense<0.000000e+00> : vector<32x128xf32>
    %10 = tpu.matmul %8, %9, %cst_10 {dimension_numbers = #tpu.dot_dimension_numbers<[1], [0], [0], [1], [0, 0, 1, 1], [], []>} : vector<32x128xbf16>, vector<128x128xbf16>, vector<32x128xf32> -> vector<32x128xf32>
    %c0_11 = arith.constant 0 : index
    %c0_12 = arith.constant 0 : index
    %11 = vector.load %arg6[%c0_11, %c0_12] : memref<1x128xf32, #tpu.memory_space<vmem>>, vector<1x128xf32>
    %12 = vector.broadcast %11 : vector<1x128xf32> to vector<32x128xf32>
    %13 = arith.addf %10, %12 : vector<32x128xf32>
    %cst_13 = arith.constant 0.000000e+00 : f32
    %14 = vector.broadcast %cst_13 : f32 to vector<32x128xf32>
    %15 = arith.maximumf %13, %14 : vector<32x128xf32>
    %c0_14 = arith.constant 0 : index
    %c0_15 = arith.constant 0 : index
    %16 = vector.load %arg7[%c0_14, %c0_15] : memref<128x128xbf16, #tpu.memory_space<vmem>>, vector<128x128xbf16>
    %17 = arith.truncf %15 : vector<32x128xf32> to vector<32x128xbf16>
    %cst_16 = arith.constant dense<0.000000e+00> : vector<32x128xf32>
    %18 = tpu.matmul %17, %16, %cst_16 {dimension_numbers = #tpu.dot_dimension_numbers<[1], [0], [0], [1], [0, 0, 1, 1], [], []>} : vector<32x128xbf16>, vector<128x128xbf16>, vector<32x128xf32> -> vector<32x128xf32>
    %c0_17 = arith.constant 0 : index
    %c0_18 = arith.constant 0 : index
    %19 = vector.load %arg8[%c0_17, %c0_18] : memref<1x128xf32, #tpu.memory_space<vmem>>, vector<1x128xf32>
    %20 = vector.broadcast %19 : vector<1x128xf32> to vector<32x128xf32>
    %21 = arith.addf %18, %20 : vector<32x128xf32>
    %c0_19 = arith.constant 0 : index
    %c0_20 = arith.constant 0 : index
    %22 = vector.load %arg9[%c0_19, %c0_20] : memref<32x1xf32, #tpu.memory_space<vmem>>, vector<32x1xf32>
    %23 = vector.broadcast %22 : vector<32x1xf32> to vector<32x128xf32>
    %24 = arith.mulf %21, %23 : vector<32x128xf32>
    %c0_21 = arith.constant 0 : index
    %c0_22 = arith.constant 0 : index
    %25 = vector.load %arg10[%c0_21, %c0_22] : memref<32x16xbf16, #tpu.memory_space<vmem>>, vector<32x16xbf16>
    %c0_23 = arith.constant 0 : index
    %c0_24 = arith.constant 0 : index
    %26 = vector.load %arg11[%c0_23, %c0_24] : memref<16x32xbf16, #tpu.memory_space<vmem>>, vector<16x32xbf16>
    %c0_25 = arith.constant 0 : index
    %c0_26 = arith.constant 0 : index
    %27 = vector.load %arg12[%c0_25, %c0_26] : memref<128x128xbf16, #tpu.memory_space<vmem>>, vector<128x128xbf16>
    %c0_27 = arith.constant 0 : index
    %c0_28 = arith.constant 0 : index
    %28 = vector.load %arg13[%c0_27, %c0_28] : memref<128x128xbf16, #tpu.memory_space<vmem>>, vector<128x128xbf16>
    %c0_29 = arith.constant 0 : index
    %c0_30 = arith.constant 0 : index
    %29 = vector.load %arg15[%c0_29, %c0_30] : memref<128x128xbf16, #tpu.memory_space<vmem>>, vector<128x128xbf16>
    %c0_31 = arith.constant 0 : index
    %c0_32 = arith.constant 0 : index
    %30 = vector.load %arg14[%c0_31, %c0_32] : memref<1x128xf32, #tpu.memory_space<vmem>>, vector<1x128xf32>
    %31 = vector.shape_cast %30 : vector<1x128xf32> to vector<1x128xf32>
    %32 = vector.broadcast %31 : vector<1x128xf32> to vector<16x128xf32>
    %c0_33 = arith.constant 0 : index
    %c0_34 = arith.constant 0 : index
    %33 = vector.load %arg16[%c0_33, %c0_34] : memref<256x256xbf16, #tpu.memory_space<vmem>>, vector<256x256xbf16>
    %c0_35 = arith.constant 0 : index
    %c0_36 = arith.constant 0 : index
    %34 = vector.load %arg17[%c0_35, %c0_36] : memref<128x128xbf16, #tpu.memory_space<vmem>>, vector<128x128xbf16>
    %c0_37 = arith.constant 0 : index
    %c0_38 = arith.constant 0 : index
    %35 = vector.load %arg18[%c0_37, %c0_38] : memref<128x128xbf16, #tpu.memory_space<vmem>>, vector<128x128xbf16>
    %c0_39 = arith.constant 0 : index
    %c0_40 = arith.constant 0 : index
    %36 = vector.load %arg19[%c0_39, %c0_40] : memref<1x256xf32, #tpu.memory_space<vmem>>, vector<1x256xf32>
    %37 = vector.shape_cast %36 : vector<1x256xf32> to vector<1x256xf32>
    %38 = vector.broadcast %37 : vector<1x256xf32> to vector<16x256xf32>
    %c0_41 = arith.constant 0 : index
    %c0_42 = arith.constant 0 : index
    %39 = vector.load %arg20[%c0_41, %c0_42] : memref<1x128xf32, #tpu.memory_space<vmem>>, vector<1x128xf32>
    %40 = vector.shape_cast %39 : vector<1x128xf32> to vector<1x128xf32>
    %41 = vector.broadcast %40 : vector<1x128xf32> to vector<16x128xf32>
    %c0_43 = arith.constant 0 : index
    %c0_44 = arith.constant 0 : index
    %42 = vector.load %arg21[%c0_43, %c0_44] : memref<1x128xf32, #tpu.memory_space<vmem>>, vector<1x128xf32>
    %43 = vector.shape_cast %42 : vector<1x128xf32> to vector<1x128xf32>
    %44 = vector.broadcast %43 : vector<1x128xf32> to vector<16x128xf32>
    %45 = arith.truncf %7 : vector<16x128xf32> to vector<16x128xbf16>
    %cst_45 = arith.constant dense<0.000000e+00> : vector<16x128xf32>
    %46 = tpu.matmul %45, %27, %cst_45 {dimension_numbers = #tpu.dot_dimension_numbers<[1], [0], [0], [1], [0, 0, 1, 1], [], []>} : vector<16x128xbf16>, vector<128x128xbf16>, vector<16x128xf32> -> vector<16x128xf32>
    %47 = arith.truncf %46 : vector<16x128xf32> to vector<16x128xbf16>
    %cst_46 = arith.constant dense<0.000000e+00> : vector<32x128xf32>
    %48 = tpu.matmul %25, %47, %cst_46 {dimension_numbers = #tpu.dot_dimension_numbers<[1], [0], [0], [1], [0, 0, 1, 1], [], []>} : vector<32x16xbf16>, vector<16x128xbf16>, vector<32x128xf32> -> vector<32x128xf32>
    %49 = arith.mulf %48, %24 : vector<32x128xf32>
    %50 = arith.truncf %49 : vector<32x128xf32> to vector<32x128xbf16>
    %cst_47 = arith.constant dense<0.000000e+00> : vector<16x128xf32>
    %51 = tpu.matmul %26, %50, %cst_47 {dimension_numbers = #tpu.dot_dimension_numbers<[1], [0], [0], [1], [0, 0, 1, 1], [], []>} : vector<16x32xbf16>, vector<32x128xbf16>, vector<16x128xf32> -> vector<16x128xf32>
    %52 = arith.truncf %51 : vector<16x128xf32> to vector<16x128xbf16>
    %cst_48 = arith.constant dense<0.000000e+00> : vector<16x128xf32>
    %53 = tpu.matmul %52, %28, %cst_48 {dimension_numbers = #tpu.dot_dimension_numbers<[1], [0], [0], [1], [0, 0, 1, 1], [], []>} : vector<16x128xbf16>, vector<128x128xbf16>, vector<16x128xf32> -> vector<16x128xf32>
    %54 = arith.addf %53, %32 : vector<16x128xf32>
    %cst_49 = arith.constant 0.000000e+00 : f32
    %55 = vector.broadcast %cst_49 : f32 to vector<16x128xf32>
    %56 = arith.maximumf %54, %55 : vector<16x128xf32>
    %57 = math.absf %54 : vector<16x128xf32>
    %cst_50 = arith.constant 0.000000e+00 : f32
    %58 = vector.broadcast %cst_50 : f32 to vector<16x128xf32>
    %59 = arith.subf %58, %57 : vector<16x128xf32>
    %60 = math.exp %59 : vector<16x128xf32>
    %61 = math.log1p %60 : vector<16x128xf32>
    %62 = arith.addf %56, %61 : vector<16x128xf32>
    %cst_51 = arith.constant 0.693147182 : f32
    %63 = vector.broadcast %cst_51 : f32 to vector<16x128xf32>
    %64 = arith.subf %62, %63 : vector<16x128xf32>
    %65 = arith.truncf %64 : vector<16x128xf32> to vector<16x128xbf16>
    %cst_52 = arith.constant dense<0.000000e+00> : vector<16x128xf32>
    %66 = tpu.matmul %65, %29, %cst_52 {dimension_numbers = #tpu.dot_dimension_numbers<[1], [0], [0], [1], [0, 0, 1, 1], [], []>} : vector<16x128xbf16>, vector<128x128xbf16>, vector<16x128xf32> -> vector<16x128xf32>
    %cst_53 = arith.constant 0.000000e+00 : f32
    %67 = vector.broadcast %cst_53 : f32 to vector<16x128xf32>
    %68 = arith.maximumf %66, %67 : vector<16x128xf32>
    %69 = arith.truncf %68 : vector<16x128xf32> to vector<16x128xbf16>
    %70 = arith.truncf %7 : vector<16x128xf32> to vector<16x128xbf16>
    %71 = tpu.concatenate %69, %70 in 1 : vector<16x128xbf16>, vector<16x128xbf16> -> vector<16x256xbf16>
    %cst_54 = arith.constant dense<0.000000e+00> : vector<16x256xf32>
    %72 = tpu.matmul %71, %33, %cst_54 {dimension_numbers = #tpu.dot_dimension_numbers<[1], [0], [0], [1], [0, 0, 1, 1], [], []>} : vector<16x256xbf16>, vector<256x256xbf16>, vector<16x256xf32> -> vector<16x256xf32>
    %73 = arith.addf %72, %38 : vector<16x256xf32>
    %74 = vector.extract_strided_slice %73 {offsets = [0, 0], sizes = [16, 128], strides = [1, 1]} : vector<16x256xf32> to vector<16x128xf32>
    %cst_55 = arith.constant 0.000000e+00 : f32
    %75 = vector.broadcast %cst_55 : f32 to vector<16x128xf32>
    %76 = arith.subf %75, %74 : vector<16x128xf32>
    %77 = math.exp %76 : vector<16x128xf32>
    %cst_56 = arith.constant 1.000000e+00 : f32
    %78 = vector.broadcast %cst_56 : f32 to vector<16x128xf32>
    %79 = arith.addf %78, %77 : vector<16x128xf32>
    %80 = tpu.reciprocal %79 {approx = true} : vector<16x128xf32> -> vector<16x128xf32>
    %81 = vector.extract_strided_slice %73 {offsets = [0, 128], sizes = [16, 128], strides = [1, 1]} : vector<16x256xf32> to vector<16x128xf32>
    %cst_57 = arith.constant 0.000000e+00 : f32
    %82 = vector.broadcast %cst_57 : f32 to vector<16x128xf32>
    %83 = arith.subf %82, %81 : vector<16x128xf32>
    %84 = math.exp %83 : vector<16x128xf32>
    %cst_58 = arith.constant 1.000000e+00 : f32
    %85 = vector.broadcast %cst_58 : f32 to vector<16x128xf32>
    %86 = arith.addf %85, %84 : vector<16x128xf32>
    %87 = tpu.reciprocal %86 {approx = true} : vector<16x128xf32> -> vector<16x128xf32>
    %88 = arith.truncf %68 : vector<16x128xf32> to vector<16x128xbf16>
    %cst_59 = arith.constant dense<0.000000e+00> : vector<16x128xf32>
    %89 = tpu.matmul %88, %34, %cst_59 {dimension_numbers = #tpu.dot_dimension_numbers<[1], [0], [0], [1], [0, 0, 1, 1], [], []>} : vector<16x128xbf16>, vector<128x128xbf16>, vector<16x128xf32> -> vector<16x128xf32>
    %90 = arith.addf %89, %41 : vector<16x128xf32>
    %91 = arith.truncf %7 : vector<16x128xf32> to vector<16x128xbf16>
    %cst_60 = arith.constant dense<0.000000e+00> : vector<16x128xf32>
    %92 = tpu.matmul %91, %35, %cst_60 {dimension_numbers = #tpu.dot_dimension_numbers<[1], [0], [0], [1], [0, 0, 1, 1], [], []>} : vector<16x128xbf16>, vector<128x128xbf16>, vector<16x128xf32> -> vector<16x128xf32>
    %93 = arith.addf %92, %44 : vector<16x128xf32>
    %94 = arith.mulf %80, %93 : vector<16x128xf32>
    %95 = arith.addf %90, %94 : vector<16x128xf32>
    %96 = math.tanh %95 : vector<16x128xf32>
    %cst_61 = arith.constant 1.000000e+00 : f32
    %97 = vector.broadcast %cst_61 : f32 to vector<16x128xf32>
    %98 = arith.subf %97, %87 : vector<16x128xf32>
    %99 = arith.mulf %98, %96 : vector<16x128xf32>
    %100 = arith.mulf %87, %7 : vector<16x128xf32>
    %101 = arith.addf %99, %100 : vector<16x128xf32>
    %102 = arith.truncf %101 : vector<16x128xf32> to vector<16x128xbf16>
    %cst_62 = arith.constant dense<0.000000e+00> : vector<16x128xf32>
    %103 = tpu.matmul %102, %27, %cst_62 {dimension_numbers = #tpu.dot_dimension_numbers<[1], [0], [0], [1], [0, 0, 1, 1], [], []>} : vector<16x128xbf16>, vector<128x128xbf16>, vector<16x128xf32> -> vector<16x128xf32>
    %104 = arith.truncf %103 : vector<16x128xf32> to vector<16x128xbf16>
    %cst_63 = arith.constant dense<0.000000e+00> : vector<32x128xf32>
    %105 = tpu.matmul %25, %104, %cst_63 {dimension_numbers = #tpu.dot_dimension_numbers<[1], [0], [0], [1], [0, 0, 1, 1], [], []>} : vector<32x16xbf16>, vector<16x128xbf16>, vector<32x128xf32> -> vector<32x128xf32>
    %106 = arith.mulf %105, %24 : vector<32x128xf32>
    %107 = arith.truncf %106 : vector<32x128xf32> to vector<32x128xbf16>
    %cst_64 = arith.constant dense<0.000000e+00> : vector<16x128xf32>
    %108 = tpu.matmul %26, %107, %cst_64 {dimension_numbers = #tpu.dot_dimension_numbers<[1], [0], [0], [1], [0, 0, 1, 1], [], []>} : vector<16x32xbf16>, vector<32x128xbf16>, vector<16x128xf32> -> vector<16x128xf32>
    %109 = arith.truncf %108 : vector<16x128xf32> to vector<16x128xbf16>
    %cst_65 = arith.constant dense<0.000000e+00> : vector<16x128xf32>
    %110 = tpu.matmul %109, %28, %cst_65 {dimension_numbers = #tpu.dot_dimension_numbers<[1], [0], [0], [1], [0, 0, 1, 1], [], []>} : vector<16x128xbf16>, vector<128x128xbf16>, vector<16x128xf32> -> vector<16x128xf32>
    %111 = arith.addf %110, %32 : vector<16x128xf32>
    %cst_66 = arith.constant 0.000000e+00 : f32
    %112 = vector.broadcast %cst_66 : f32 to vector<16x128xf32>
    %113 = arith.maximumf %111, %112 : vector<16x128xf32>
    %114 = math.absf %111 : vector<16x128xf32>
    %cst_67 = arith.constant 0.000000e+00 : f32
    %115 = vector.broadcast %cst_67 : f32 to vector<16x128xf32>
    %116 = arith.subf %115, %114 : vector<16x128xf32>
    %117 = math.exp %116 : vector<16x128xf32>
    %118 = math.log1p %117 : vector<16x128xf32>
    %119 = arith.addf %113, %118 : vector<16x128xf32>
    %cst_68 = arith.constant 0.693147182 : f32
    %120 = vector.broadcast %cst_68 : f32 to vector<16x128xf32>
    %121 = arith.subf %119, %120 : vector<16x128xf32>
    %122 = arith.truncf %121 : vector<16x128xf32> to vector<16x128xbf16>
    %cst_69 = arith.constant dense<0.000000e+00> : vector<16x128xf32>
    %123 = tpu.matmul %122, %29, %cst_69 {dimension_numbers = #tpu.dot_dimension_numbers<[1], [0], [0], [1], [0, 0, 1, 1], [], []>} : vector<16x128xbf16>, vector<128x128xbf16>, vector<16x128xf32> -> vector<16x128xf32>
    %cst_70 = arith.constant 0.000000e+00 : f32
    %124 = vector.broadcast %cst_70 : f32 to vector<16x128xf32>
    %125 = arith.maximumf %123, %124 : vector<16x128xf32>
    %126 = arith.truncf %125 : vector<16x128xf32> to vector<16x128xbf16>
    %127 = arith.truncf %101 : vector<16x128xf32> to vector<16x128xbf16>
    %128 = tpu.concatenate %126, %127 in 1 : vector<16x128xbf16>, vector<16x128xbf16> -> vector<16x256xbf16>
    %cst_71 = arith.constant dense<0.000000e+00> : vector<16x256xf32>
    %129 = tpu.matmul %128, %33, %cst_71 {dimension_numbers = #tpu.dot_dimension_numbers<[1], [0], [0], [1], [0, 0, 1, 1], [], []>} : vector<16x256xbf16>, vector<256x256xbf16>, vector<16x256xf32> -> vector<16x256xf32>
    %130 = arith.addf %129, %38 : vector<16x256xf32>
    %131 = vector.extract_strided_slice %130 {offsets = [0, 0], sizes = [16, 128], strides = [1, 1]} : vector<16x256xf32> to vector<16x128xf32>
    %cst_72 = arith.constant 0.000000e+00 : f32
    %132 = vector.broadcast %cst_72 : f32 to vector<16x128xf32>
    %133 = arith.subf %132, %131 : vector<16x128xf32>
    %134 = math.exp %133 : vector<16x128xf32>
    %cst_73 = arith.constant 1.000000e+00 : f32
    %135 = vector.broadcast %cst_73 : f32 to vector<16x128xf32>
    %136 = arith.addf %135, %134 : vector<16x128xf32>
    %137 = tpu.reciprocal %136 {approx = true} : vector<16x128xf32> -> vector<16x128xf32>
    %138 = vector.extract_strided_slice %130 {offsets = [0, 128], sizes = [16, 128], strides = [1, 1]} : vector<16x256xf32> to vector<16x128xf32>
    %cst_74 = arith.constant 0.000000e+00 : f32
    %139 = vector.broadcast %cst_74 : f32 to vector<16x128xf32>
    %140 = arith.subf %139, %138 : vector<16x128xf32>
    %141 = math.exp %140 : vector<16x128xf32>
    %cst_75 = arith.constant 1.000000e+00 : f32
    %142 = vector.broadcast %cst_75 : f32 to vector<16x128xf32>
    %143 = arith.addf %142, %141 : vector<16x128xf32>
    %144 = tpu.reciprocal %143 {approx = true} : vector<16x128xf32> -> vector<16x128xf32>
    %145 = arith.truncf %125 : vector<16x128xf32> to vector<16x128xbf16>
    %cst_76 = arith.constant dense<0.000000e+00> : vector<16x128xf32>
    %146 = tpu.matmul %145, %34, %cst_76 {dimension_numbers = #tpu.dot_dimension_numbers<[1], [0], [0], [1], [0, 0, 1, 1], [], []>} : vector<16x128xbf16>, vector<128x128xbf16>, vector<16x128xf32> -> vector<16x128xf32>
    %147 = arith.addf %146, %41 : vector<16x128xf32>
    %148 = arith.truncf %101 : vector<16x128xf32> to vector<16x128xbf16>
    %cst_77 = arith.constant dense<0.000000e+00> : vector<16x128xf32>
    %149 = tpu.matmul %148, %35, %cst_77 {dimension_numbers = #tpu.dot_dimension_numbers<[1], [0], [0], [1], [0, 0, 1, 1], [], []>} : vector<16x128xbf16>, vector<128x128xbf16>, vector<16x128xf32> -> vector<16x128xf32>
    %150 = arith.addf %149, %44 : vector<16x128xf32>
    %151 = arith.mulf %137, %150 : vector<16x128xf32>
    %152 = arith.addf %147, %151 : vector<16x128xf32>
    %153 = math.tanh %152 : vector<16x128xf32>
    %cst_78 = arith.constant 1.000000e+00 : f32
    %154 = vector.broadcast %cst_78 : f32 to vector<16x128xf32>
    %155 = arith.subf %154, %144 : vector<16x128xf32>
    %156 = arith.mulf %155, %153 : vector<16x128xf32>
    %157 = arith.mulf %144, %101 : vector<16x128xf32>
    %158 = arith.addf %156, %157 : vector<16x128xf32>
    %159 = arith.truncf %158 : vector<16x128xf32> to vector<16x128xbf16>
    %cst_79 = arith.constant dense<0.000000e+00> : vector<16x128xf32>
    %160 = tpu.matmul %159, %27, %cst_79 {dimension_numbers = #tpu.dot_dimension_numbers<[1], [0], [0], [1], [0, 0, 1, 1], [], []>} : vector<16x128xbf16>, vector<128x128xbf16>, vector<16x128xf32> -> vector<16x128xf32>
    %161 = arith.truncf %160 : vector<16x128xf32> to vector<16x128xbf16>
    %cst_80 = arith.constant dense<0.000000e+00> : vector<32x128xf32>
    %162 = tpu.matmul %25, %161, %cst_80 {dimension_numbers = #tpu.dot_dimension_numbers<[1], [0], [0], [1], [0, 0, 1, 1], [], []>} : vector<32x16xbf16>, vector<16x128xbf16>, vector<32x128xf32> -> vector<32x128xf32>
    %163 = arith.mulf %162, %24 : vector<32x128xf32>
    %164 = arith.truncf %163 : vector<32x128xf32> to vector<32x128xbf16>
    %cst_81 = arith.constant dense<0.000000e+00> : vector<16x128xf32>
    %165 = tpu.matmul %26, %164, %cst_81 {dimension_numbers = #tpu.dot_dimension_numbers<[1], [0], [0], [1], [0, 0, 1, 1], [], []>} : vector<16x32xbf16>, vector<32x128xbf16>, vector<16x128xf32> -> vector<16x128xf32>
    %166 = arith.truncf %165 : vector<16x128xf32> to vector<16x128xbf16>
    %cst_82 = arith.constant dense<0.000000e+00> : vector<16x128xf32>
    %167 = tpu.matmul %166, %28, %cst_82 {dimension_numbers = #tpu.dot_dimension_numbers<[1], [0], [0], [1], [0, 0, 1, 1], [], []>} : vector<16x128xbf16>, vector<128x128xbf16>, vector<16x128xf32> -> vector<16x128xf32>
    %168 = arith.addf %167, %32 : vector<16x128xf32>
    %cst_83 = arith.constant 0.000000e+00 : f32
    %169 = vector.broadcast %cst_83 : f32 to vector<16x128xf32>
    %170 = arith.maximumf %168, %169 : vector<16x128xf32>
    %171 = math.absf %168 : vector<16x128xf32>
    %cst_84 = arith.constant 0.000000e+00 : f32
    %172 = vector.broadcast %cst_84 : f32 to vector<16x128xf32>
    %173 = arith.subf %172, %171 : vector<16x128xf32>
    %174 = math.exp %173 : vector<16x128xf32>
    %175 = math.log1p %174 : vector<16x128xf32>
    %176 = arith.addf %170, %175 : vector<16x128xf32>
    %cst_85 = arith.constant 0.693147182 : f32
    %177 = vector.broadcast %cst_85 : f32 to vector<16x128xf32>
    %178 = arith.subf %176, %177 : vector<16x128xf32>
    %179 = arith.truncf %178 : vector<16x128xf32> to vector<16x128xbf16>
    %cst_86 = arith.constant dense<0.000000e+00> : vector<16x128xf32>
    %180 = tpu.matmul %179, %29, %cst_86 {dimension_numbers = #tpu.dot_dimension_numbers<[1], [0], [0], [1], [0, 0, 1, 1], [], []>} : vector<16x128xbf16>, vector<128x128xbf16>, vector<16x128xf32> -> vector<16x128xf32>
    %cst_87 = arith.constant 0.000000e+00 : f32
    %181 = vector.broadcast %cst_87 : f32 to vector<16x128xf32>
    %182 = arith.maximumf %180, %181 : vector<16x128xf32>
    %183 = arith.truncf %182 : vector<16x128xf32> to vector<16x128xbf16>
    %184 = arith.truncf %158 : vector<16x128xf32> to vector<16x128xbf16>
    %185 = tpu.concatenate %183, %184 in 1 : vector<16x128xbf16>, vector<16x128xbf16> -> vector<16x256xbf16>
    %cst_88 = arith.constant dense<0.000000e+00> : vector<16x256xf32>
    %186 = tpu.matmul %185, %33, %cst_88 {dimension_numbers = #tpu.dot_dimension_numbers<[1], [0], [0], [1], [0, 0, 1, 1], [], []>} : vector<16x256xbf16>, vector<256x256xbf16>, vector<16x256xf32> -> vector<16x256xf32>
    %187 = arith.addf %186, %38 : vector<16x256xf32>
    %188 = vector.extract_strided_slice %187 {offsets = [0, 0], sizes = [16, 128], strides = [1, 1]} : vector<16x256xf32> to vector<16x128xf32>
    %cst_89 = arith.constant 0.000000e+00 : f32
    %189 = vector.broadcast %cst_89 : f32 to vector<16x128xf32>
    %190 = arith.subf %189, %188 : vector<16x128xf32>
    %191 = math.exp %190 : vector<16x128xf32>
    %cst_90 = arith.constant 1.000000e+00 : f32
    %192 = vector.broadcast %cst_90 : f32 to vector<16x128xf32>
    %193 = arith.addf %192, %191 : vector<16x128xf32>
    %194 = tpu.reciprocal %193 {approx = true} : vector<16x128xf32> -> vector<16x128xf32>
    %195 = vector.extract_strided_slice %187 {offsets = [0, 128], sizes = [16, 128], strides = [1, 1]} : vector<16x256xf32> to vector<16x128xf32>
    %cst_91 = arith.constant 0.000000e+00 : f32
    %196 = vector.broadcast %cst_91 : f32 to vector<16x128xf32>
    %197 = arith.subf %196, %195 : vector<16x128xf32>
    %198 = math.exp %197 : vector<16x128xf32>
    %cst_92 = arith.constant 1.000000e+00 : f32
    %199 = vector.broadcast %cst_92 : f32 to vector<16x128xf32>
    %200 = arith.addf %199, %198 : vector<16x128xf32>
    %201 = tpu.reciprocal %200 {approx = true} : vector<16x128xf32> -> vector<16x128xf32>
    %202 = arith.truncf %182 : vector<16x128xf32> to vector<16x128xbf16>
    %cst_93 = arith.constant dense<0.000000e+00> : vector<16x128xf32>
    %203 = tpu.matmul %202, %34, %cst_93 {dimension_numbers = #tpu.dot_dimension_numbers<[1], [0], [0], [1], [0, 0, 1, 1], [], []>} : vector<16x128xbf16>, vector<128x128xbf16>, vector<16x128xf32> -> vector<16x128xf32>
    %204 = arith.addf %203, %41 : vector<16x128xf32>
    %205 = arith.truncf %158 : vector<16x128xf32> to vector<16x128xbf16>
    %cst_94 = arith.constant dense<0.000000e+00> : vector<16x128xf32>
    %206 = tpu.matmul %205, %35, %cst_94 {dimension_numbers = #tpu.dot_dimension_numbers<[1], [0], [0], [1], [0, 0, 1, 1], [], []>} : vector<16x128xbf16>, vector<128x128xbf16>, vector<16x128xf32> -> vector<16x128xf32>
    %207 = arith.addf %206, %44 : vector<16x128xf32>
    %208 = arith.mulf %194, %207 : vector<16x128xf32>
    %209 = arith.addf %204, %208 : vector<16x128xf32>
    %210 = math.tanh %209 : vector<16x128xf32>
    %cst_95 = arith.constant 1.000000e+00 : f32
    %211 = vector.broadcast %cst_95 : f32 to vector<16x128xf32>
    %212 = arith.subf %211, %201 : vector<16x128xf32>
    %213 = arith.mulf %212, %210 : vector<16x128xf32>
    %214 = arith.mulf %201, %158 : vector<16x128xf32>
    %215 = arith.addf %213, %214 : vector<16x128xf32>
    %216 = arith.truncf %215 : vector<16x128xf32> to vector<16x128xbf16>
    %c0_96 = arith.constant 0 : index
    %c0_97 = arith.constant 0 : index
    %217 = vector.load %arg22[%c0_96, %c0_97] : memref<2x16xf32, #tpu.memory_space<vmem>>, vector<2x16xf32>
    %cst_98 = arith.constant 5.000000e-01 : f32
    %218 = vector.broadcast %cst_98 : f32 to vector<2x16xf32>
    %219 = arith.cmpf ogt, %217, %218 : vector<2x16xf32>
    %c0_99 = arith.constant 0 : index
    %c0_100 = arith.constant 0 : index
    %220 = vector.load %arg23[%c0_99, %c0_100] : memref<128x512xbf16, #tpu.memory_space<vmem>>, vector<128x512xbf16>
    %c0_101 = arith.constant 0 : index
    %c0_102 = arith.constant 0 : index
    %221 = vector.load %arg24[%c0_101, %c0_102] : memref<128x512xbf16, #tpu.memory_space<vmem>>, vector<128x512xbf16>
    %c0_103 = arith.constant 0 : index
    %c0_104 = arith.constant 0 : index
    %222 = vector.load %arg25[%c0_103, %c0_104] : memref<1x512xf32, #tpu.memory_space<vmem>>, vector<1x512xf32>
    %223 = vector.shape_cast %222 : vector<1x512xf32> to vector<1x512xf32>
    %224 = vector.broadcast %223 : vector<1x512xf32> to vector<2x512xf32>
    %cst_105 = arith.constant 0.000000e+00 : f32
    %225 = vector.broadcast %cst_105 : f32 to vector<2x128xf32>
    %cst_106 = arith.constant 0.000000e+00 : f32
    %226 = vector.broadcast %cst_106 : f32 to vector<2x128xf32>
    %cst_107 = arith.constant 0.000000e+00 : f32
    %227 = vector.broadcast %cst_107 : f32 to vector<2x128xf32>
    %228 = arith.truncf %225 : vector<2x128xf32> to vector<2x128xbf16>
    %cst_108 = arith.constant dense<0.000000e+00> : vector<2x512xf32>
    %229 = tpu.matmul %228, %220, %cst_108 {dimension_numbers = #tpu.dot_dimension_numbers<[1], [0], [0], [1], [0, 0, 1, 1], [], []>} : vector<2x128xbf16>, vector<128x512xbf16>, vector<2x512xf32> -> vector<2x512xf32>
    %230 = arith.truncf %227 : vector<2x128xf32> to vector<2x128xbf16>
    %cst_109 = arith.constant dense<0.000000e+00> : vector<2x512xf32>
    %231 = tpu.matmul %230, %221, %cst_109 {dimension_numbers = #tpu.dot_dimension_numbers<[1], [0], [0], [1], [0, 0, 1, 1], [], []>} : vector<2x128xbf16>, vector<128x512xbf16>, vector<2x512xf32> -> vector<2x512xf32>
    %232 = arith.addf %229, %231 : vector<2x512xf32>
    %233 = arith.addf %232, %224 : vector<2x512xf32>
    %234 = vector.extract_strided_slice %233 {offsets = [0, 0], sizes = [2, 128], strides = [1, 1]} : vector<2x512xf32> to vector<2x128xf32>
    %cst_110 = arith.constant 0.000000e+00 : f32
    %235 = vector.broadcast %cst_110 : f32 to vector<2x128xf32>
    %236 = arith.subf %235, %234 : vector<2x128xf32>
    %237 = math.exp %236 : vector<2x128xf32>
    %cst_111 = arith.constant 1.000000e+00 : f32
    %238 = vector.broadcast %cst_111 : f32 to vector<2x128xf32>
    %239 = arith.addf %238, %237 : vector<2x128xf32>
    %240 = tpu.reciprocal %239 {approx = true} : vector<2x128xf32> -> vector<2x128xf32>
    %241 = vector.extract_strided_slice %233 {offsets = [0, 128], sizes = [2, 128], strides = [1, 1]} : vector<2x512xf32> to vector<2x128xf32>
    %cst_112 = arith.constant 0.000000e+00 : f32
    %242 = vector.broadcast %cst_112 : f32 to vector<2x128xf32>
    %243 = arith.subf %242, %241 : vector<2x128xf32>
    %244 = math.exp %243 : vector<2x128xf32>
    %cst_113 = arith.constant 1.000000e+00 : f32
    %245 = vector.broadcast %cst_113 : f32 to vector<2x128xf32>
    %246 = arith.addf %245, %244 : vector<2x128xf32>
    %247 = tpu.reciprocal %246 {approx = true} : vector<2x128xf32> -> vector<2x128xf32>
    %248 = vector.extract_strided_slice %233 {offsets = [0, 256], sizes = [2, 128], strides = [1, 1]} : vector<2x512xf32> to vector<2x128xf32>
    %249 = math.tanh %248 : vector<2x128xf32>
    %250 = vector.extract_strided_slice %233 {offsets = [0, 384], sizes = [2, 128], strides = [1, 1]} : vector<2x512xf32> to vector<2x128xf32>
    %cst_114 = arith.constant 0.000000e+00 : f32
    %251 = vector.broadcast %cst_114 : f32 to vector<2x128xf32>
    %252 = arith.subf %251, %250 : vector<2x128xf32>
    %253 = math.exp %252 : vector<2x128xf32>
    %cst_115 = arith.constant 1.000000e+00 : f32
    %254 = vector.broadcast %cst_115 : f32 to vector<2x128xf32>
    %255 = arith.addf %254, %253 : vector<2x128xf32>
    %256 = tpu.reciprocal %255 {approx = true} : vector<2x128xf32> -> vector<2x128xf32>
    %257 = arith.mulf %247, %226 : vector<2x128xf32>
    %258 = arith.mulf %240, %249 : vector<2x128xf32>
    %259 = arith.addf %257, %258 : vector<2x128xf32>
    %260 = math.tanh %259 : vector<2x128xf32>
    %261 = arith.mulf %256, %260 : vector<2x128xf32>
    %262 = arith.truncf %261 : vector<2x128xf32> to vector<2x128xbf16>
    %cst_116 = arith.constant dense<0.000000e+00> : vector<2x16xf32>
    %263 = tpu.matmul %262, %216, %cst_116 {dimension_numbers = #tpu.dot_dimension_numbers<[1], [1], [0], [0], [0, 0, 1, 0], [], []>} : vector<2x128xbf16>, vector<16x128xbf16>, vector<2x16xf32> -> vector<2x16xf32>
    %cst_117 = arith.constant -1.000000e+30 : f32
    %264 = vector.broadcast %cst_117 : f32 to vector<2x16xf32>
    %265 = arith.select %219, %263, %264 : vector<2x16xi1>, vector<2x16xf32>
    %cst_118 = arith.constant dense<0xFF800000> : vector<2xf32>
    %266 = vector.multi_reduction <maximumf>, %265, %cst_118 [1] : vector<2x16xf32> to vector<2xf32>
    %267 = vector.shape_cast %266 : vector<2xf32> to vector<2x1xf32>
    %268 = vector.broadcast %267 : vector<2x1xf32> to vector<2x16xf32>
    %269 = arith.subf %265, %268 : vector<2x16xf32>
    %270 = math.exp %269 : vector<2x16xf32>
    %271 = arith.mulf %217, %270 : vector<2x16xf32>
    %cst_119 = arith.constant dense<0.000000e+00> : vector<2xf32>
    %272 = vector.multi_reduction <add>, %271, %cst_119 [1] : vector<2x16xf32> to vector<2xf32>
    %273 = vector.shape_cast %272 : vector<2xf32> to vector<2x1xf32>
    %cst_120 = arith.constant 9.99999968E-21 : f32
    %274 = vector.broadcast %cst_120 : f32 to vector<2x1xf32>
    %275 = arith.maximumf %273, %274 : vector<2x1xf32>
    %276 = arith.truncf %271 : vector<2x16xf32> to vector<2x16xbf16>
    %cst_121 = arith.constant dense<0.000000e+00> : vector<2x128xf32>
    %277 = tpu.matmul %276, %216, %cst_121 {dimension_numbers = #tpu.dot_dimension_numbers<[1], [0], [0], [1], [0, 0, 1, 1], [], []>} : vector<2x16xbf16>, vector<16x128xbf16>, vector<2x128xf32> -> vector<2x128xf32>
    %278 = tpu.reciprocal %275 {approx = true} : vector<2x1xf32> -> vector<2x1xf32>
    %279 = vector.broadcast %278 : vector<2x1xf32> to vector<2x128xf32>
    %280 = arith.mulf %277, %279 : vector<2x128xf32>
    %281 = arith.truncf %261 : vector<2x128xf32> to vector<2x128xbf16>
    %cst_122 = arith.constant dense<0.000000e+00> : vector<2x512xf32>
    %282 = tpu.matmul %281, %220, %cst_122 {dimension_numbers = #tpu.dot_dimension_numbers<[1], [0], [0], [1], [0, 0, 1, 1], [], []>} : vector<2x128xbf16>, vector<128x512xbf16>, vector<2x512xf32> -> vector<2x512xf32>
    %283 = arith.truncf %280 : vector<2x128xf32> to vector<2x128xbf16>
    %cst_123 = arith.constant dense<0.000000e+00> : vector<2x512xf32>
    %284 = tpu.matmul %283, %221, %cst_123 {dimension_numbers = #tpu.dot_dimension_numbers<[1], [0], [0], [1], [0, 0, 1, 1], [], []>} : vector<2x128xbf16>, vector<128x512xbf16>, vector<2x512xf32> -> vector<2x512xf32>
    %285 = arith.addf %282, %284 : vector<2x512xf32>
    %286 = arith.addf %285, %224 : vector<2x512xf32>
    %287 = vector.extract_strided_slice %286 {offsets = [0, 0], sizes = [2, 128], strides = [1, 1]} : vector<2x512xf32> to vector<2x128xf32>
    %cst_124 = arith.constant 0.000000e+00 : f32
    %288 = vector.broadcast %cst_124 : f32 to vector<2x128xf32>
    %289 = arith.subf %288, %287 : vector<2x128xf32>
    %290 = math.exp %289 : vector<2x128xf32>
    %cst_125 = arith.constant 1.000000e+00 : f32
    %291 = vector.broadcast %cst_125 : f32 to vector<2x128xf32>
    %292 = arith.addf %291, %290 : vector<2x128xf32>
    %293 = tpu.reciprocal %292 {approx = true} : vector<2x128xf32> -> vector<2x128xf32>
    %294 = vector.extract_strided_slice %286 {offsets = [0, 128], sizes = [2, 128], strides = [1, 1]} : vector<2x512xf32> to vector<2x128xf32>
    %cst_126 = arith.constant 0.000000e+00 : f32
    %295 = vector.broadcast %cst_126 : f32 to vector<2x128xf32>
    %296 = arith.subf %295, %294 : vector<2x128xf32>
    %297 = math.exp %296 : vector<2x128xf32>
    %cst_127 = arith.constant 1.000000e+00 : f32
    %298 = vector.broadcast %cst_127 : f32 to vector<2x128xf32>
    %299 = arith.addf %298, %297 : vector<2x128xf32>
    %300 = tpu.reciprocal %299 {approx = true} : vector<2x128xf32> -> vector<2x128xf32>
    %301 = vector.extract_strided_slice %286 {offsets = [0, 256], sizes = [2, 128], strides = [1, 1]} : vector<2x512xf32> to vector<2x128xf32>
    %302 = math.tanh %301 : vector<2x128xf32>
    %303 = vector.extract_strided_slice %286 {offsets = [0, 384], sizes = [2, 128], strides = [1, 1]} : vector<2x512xf32> to vector<2x128xf32>
    %cst_128 = arith.constant 0.000000e+00 : f32
    %304 = vector.broadcast %cst_128 : f32 to vector<2x128xf32>
    %305 = arith.subf %304, %303 : vector<2x128xf32>
    %306 = math.exp %305 : vector<2x128xf32>
    %cst_129 = arith.constant 1.000000e+00 : f32
    %307 = vector.broadcast %cst_129 : f32 to vector<2x128xf32>
    %308 = arith.addf %307, %306 : vector<2x128xf32>
    %309 = tpu.reciprocal %308 {approx = true} : vector<2x128xf32> -> vector<2x128xf32>
    %310 = arith.mulf %300, %259 : vector<2x128xf32>
    %311 = arith.mulf %293, %302 : vector<2x128xf32>
    %312 = arith.addf %310, %311 : vector<2x128xf32>
    %313 = math.tanh %312 : vector<2x128xf32>
    %314 = arith.mulf %309, %313 : vector<2x128xf32>
    %315 = arith.truncf %314 : vector<2x128xf32> to vector<2x128xbf16>
    %cst_130 = arith.constant dense<0.000000e+00> : vector<2x16xf32>
    %316 = tpu.matmul %315, %216, %cst_130 {dimension_numbers = #tpu.dot_dimension_numbers<[1], [1], [0], [0], [0, 0, 1, 0], [], []>} : vector<2x128xbf16>, vector<16x128xbf16>, vector<2x16xf32> -> vector<2x16xf32>
    %cst_131 = arith.constant -1.000000e+30 : f32
    %317 = vector.broadcast %cst_131 : f32 to vector<2x16xf32>
    %318 = arith.select %219, %316, %317 : vector<2x16xi1>, vector<2x16xf32>
    %cst_132 = arith.constant dense<0xFF800000> : vector<2xf32>
    %319 = vector.multi_reduction <maximumf>, %318, %cst_132 [1] : vector<2x16xf32> to vector<2xf32>
    %320 = vector.shape_cast %319 : vector<2xf32> to vector<2x1xf32>
    %321 = vector.broadcast %320 : vector<2x1xf32> to vector<2x16xf32>
    %322 = arith.subf %318, %321 : vector<2x16xf32>
    %323 = math.exp %322 : vector<2x16xf32>
    %324 = arith.mulf %217, %323 : vector<2x16xf32>
    %cst_133 = arith.constant dense<0.000000e+00> : vector<2xf32>
    %325 = vector.multi_reduction <add>, %324, %cst_133 [1] : vector<2x16xf32> to vector<2xf32>
    %326 = vector.shape_cast %325 : vector<2xf32> to vector<2x1xf32>
    %cst_134 = arith.constant 9.99999968E-21 : f32
    %327 = vector.broadcast %cst_134 : f32 to vector<2x1xf32>
    %328 = arith.maximumf %326, %327 : vector<2x1xf32>
    %329 = arith.truncf %324 : vector<2x16xf32> to vector<2x16xbf16>
    %cst_135 = arith.constant dense<0.000000e+00> : vector<2x128xf32>
    %330 = tpu.matmul %329, %216, %cst_135 {dimension_numbers = #tpu.dot_dimension_numbers<[1], [0], [0], [1], [0, 0, 1, 1], [], []>} : vector<2x16xbf16>, vector<16x128xbf16>, vector<2x128xf32> -> vector<2x128xf32>
    %331 = tpu.reciprocal %328 {approx = true} : vector<2x1xf32> -> vector<2x1xf32>
    %332 = vector.broadcast %331 : vector<2x1xf32> to vector<2x128xf32>
    %333 = arith.mulf %330, %332 : vector<2x128xf32>
    %334 = arith.truncf %314 : vector<2x128xf32> to vector<2x128xbf16>
    %cst_136 = arith.constant dense<0.000000e+00> : vector<2x512xf32>
    %335 = tpu.matmul %334, %220, %cst_136 {dimension_numbers = #tpu.dot_dimension_numbers<[1], [0], [0], [1], [0, 0, 1, 1], [], []>} : vector<2x128xbf16>, vector<128x512xbf16>, vector<2x512xf32> -> vector<2x512xf32>
    %336 = arith.truncf %333 : vector<2x128xf32> to vector<2x128xbf16>
    %cst_137 = arith.constant dense<0.000000e+00> : vector<2x512xf32>
    %337 = tpu.matmul %336, %221, %cst_137 {dimension_numbers = #tpu.dot_dimension_numbers<[1], [0], [0], [1], [0, 0, 1, 1], [], []>} : vector<2x128xbf16>, vector<128x512xbf16>, vector<2x512xf32> -> vector<2x512xf32>
    %338 = arith.addf %335, %337 : vector<2x512xf32>
    %339 = arith.addf %338, %224 : vector<2x512xf32>
    %340 = vector.extract_strided_slice %339 {offsets = [0, 0], sizes = [2, 128], strides = [1, 1]} : vector<2x512xf32> to vector<2x128xf32>
    %cst_138 = arith.constant 0.000000e+00 : f32
    %341 = vector.broadcast %cst_138 : f32 to vector<2x128xf32>
    %342 = arith.subf %341, %340 : vector<2x128xf32>
    %343 = math.exp %342 : vector<2x128xf32>
    %cst_139 = arith.constant 1.000000e+00 : f32
    %344 = vector.broadcast %cst_139 : f32 to vector<2x128xf32>
    %345 = arith.addf %344, %343 : vector<2x128xf32>
    %346 = tpu.reciprocal %345 {approx = true} : vector<2x128xf32> -> vector<2x128xf32>
    %347 = vector.extract_strided_slice %339 {offsets = [0, 128], sizes = [2, 128], strides = [1, 1]} : vector<2x512xf32> to vector<2x128xf32>
    %cst_140 = arith.constant 0.000000e+00 : f32
    %348 = vector.broadcast %cst_140 : f32 to vector<2x128xf32>
    %349 = arith.subf %348, %347 : vector<2x128xf32>
    %350 = math.exp %349 : vector<2x128xf32>
    %cst_141 = arith.constant 1.000000e+00 : f32
    %351 = vector.broadcast %cst_141 : f32 to vector<2x128xf32>
    %352 = arith.addf %351, %350 : vector<2x128xf32>
    %353 = tpu.reciprocal %352 {approx = true} : vector<2x128xf32> -> vector<2x128xf32>
    %354 = vector.extract_strided_slice %339 {offsets = [0, 256], sizes = [2, 128], strides = [1, 1]} : vector<2x512xf32> to vector<2x128xf32>
    %355 = math.tanh %354 : vector<2x128xf32>
    %356 = vector.extract_strided_slice %339 {offsets = [0, 384], sizes = [2, 128], strides = [1, 1]} : vector<2x512xf32> to vector<2x128xf32>
    %cst_142 = arith.constant 0.000000e+00 : f32
    %357 = vector.broadcast %cst_142 : f32 to vector<2x128xf32>
    %358 = arith.subf %357, %356 : vector<2x128xf32>
    %359 = math.exp %358 : vector<2x128xf32>
    %cst_143 = arith.constant 1.000000e+00 : f32
    %360 = vector.broadcast %cst_143 : f32 to vector<2x128xf32>
    %361 = arith.addf %360, %359 : vector<2x128xf32>
    %362 = tpu.reciprocal %361 {approx = true} : vector<2x128xf32> -> vector<2x128xf32>
    %363 = arith.mulf %353, %312 : vector<2x128xf32>
    %364 = arith.mulf %346, %355 : vector<2x128xf32>
    %365 = arith.addf %363, %364 : vector<2x128xf32>
    %366 = math.tanh %365 : vector<2x128xf32>
    %367 = arith.mulf %362, %366 : vector<2x128xf32>
    %368 = arith.truncf %367 : vector<2x128xf32> to vector<2x128xbf16>
    %cst_144 = arith.constant dense<0.000000e+00> : vector<2x16xf32>
    %369 = tpu.matmul %368, %216, %cst_144 {dimension_numbers = #tpu.dot_dimension_numbers<[1], [1], [0], [0], [0, 0, 1, 0], [], []>} : vector<2x128xbf16>, vector<16x128xbf16>, vector<2x16xf32> -> vector<2x16xf32>
    %cst_145 = arith.constant -1.000000e+30 : f32
    %370 = vector.broadcast %cst_145 : f32 to vector<2x16xf32>
    %371 = arith.select %219, %369, %370 : vector<2x16xi1>, vector<2x16xf32>
    %cst_146 = arith.constant dense<0xFF800000> : vector<2xf32>
    %372 = vector.multi_reduction <maximumf>, %371, %cst_146 [1] : vector<2x16xf32> to vector<2xf32>
    %373 = vector.shape_cast %372 : vector<2xf32> to vector<2x1xf32>
    %374 = vector.broadcast %373 : vector<2x1xf32> to vector<2x16xf32>
    %375 = arith.subf %371, %374 : vector<2x16xf32>
    %376 = math.exp %375 : vector<2x16xf32>
    %377 = arith.mulf %217, %376 : vector<2x16xf32>
    %cst_147 = arith.constant dense<0.000000e+00> : vector<2xf32>
    %378 = vector.multi_reduction <add>, %377, %cst_147 [1] : vector<2x16xf32> to vector<2xf32>
    %379 = vector.shape_cast %378 : vector<2xf32> to vector<2x1xf32>
    %cst_148 = arith.constant 9.99999968E-21 : f32
    %380 = vector.broadcast %cst_148 : f32 to vector<2x1xf32>
    %381 = arith.maximumf %379, %380 : vector<2x1xf32>
    %382 = arith.truncf %377 : vector<2x16xf32> to vector<2x16xbf16>
    %cst_149 = arith.constant dense<0.000000e+00> : vector<2x128xf32>
    %383 = tpu.matmul %382, %216, %cst_149 {dimension_numbers = #tpu.dot_dimension_numbers<[1], [0], [0], [1], [0, 0, 1, 1], [], []>} : vector<2x16xbf16>, vector<16x128xbf16>, vector<2x128xf32> -> vector<2x128xf32>
    %384 = tpu.reciprocal %381 {approx = true} : vector<2x1xf32> -> vector<2x1xf32>
    %385 = vector.broadcast %384 : vector<2x1xf32> to vector<2x128xf32>
    %386 = arith.mulf %383, %385 : vector<2x128xf32>
    %c0_150 = arith.constant 0 : index
    %c0_151 = arith.constant 0 : index
    %387 = vector.load %arg26[%c0_150, %c0_151] : memref<128x128xbf16, #tpu.memory_space<vmem>>, vector<128x128xbf16>
    %388 = arith.truncf %367 : vector<2x128xf32> to vector<2x128xbf16>
    %cst_152 = arith.constant dense<0.000000e+00> : vector<2x128xf32>
    %389 = tpu.matmul %388, %387, %cst_152 {dimension_numbers = #tpu.dot_dimension_numbers<[1], [0], [0], [1], [0, 0, 1, 1], [], []>} : vector<2x128xbf16>, vector<128x128xbf16>, vector<2x128xf32> -> vector<2x128xf32>
    %c0_153 = arith.constant 0 : index
    %c0_154 = arith.constant 0 : index
    %390 = vector.load %arg27[%c0_153, %c0_154] : memref<128x128xbf16, #tpu.memory_space<vmem>>, vector<128x128xbf16>
    %391 = arith.truncf %386 : vector<2x128xf32> to vector<2x128xbf16>
    %cst_155 = arith.constant dense<0.000000e+00> : vector<2x128xf32>
    %392 = tpu.matmul %391, %390, %cst_155 {dimension_numbers = #tpu.dot_dimension_numbers<[1], [0], [0], [1], [0, 0, 1, 1], [], []>} : vector<2x128xbf16>, vector<128x128xbf16>, vector<2x128xf32> -> vector<2x128xf32>
    %393 = arith.addf %389, %392 : vector<2x128xf32>
    %c0_156 = arith.constant 0 : index
    %c0_157 = arith.constant 0 : index
    %394 = vector.load %arg28[%c0_156, %c0_157] : memref<1x128xf32, #tpu.memory_space<vmem>>, vector<1x128xf32>
    %395 = vector.broadcast %394 : vector<1x128xf32> to vector<2x128xf32>
    %396 = arith.addf %393, %395 : vector<2x128xf32>
    %cst_158 = arith.constant 0.000000e+00 : f32
    %397 = vector.broadcast %cst_158 : f32 to vector<2x128xf32>
    %398 = arith.maximumf %396, %397 : vector<2x128xf32>
    %c0_159 = arith.constant 0 : index
    %c0_160 = arith.constant 0 : index
    %399 = vector.load %arg29[%c0_159, %c0_160] : memref<2x128xf32, #tpu.memory_space<vmem>>, vector<2x128xf32>
    tpu.vector_store %arg29[%c0_159, %c0_160], %398 {strides = array<i32>} : memref<2x128xf32, #tpu.memory_space<vmem>>, vector<2x128xf32>,
    return
  }
  func.func @transform_0(%arg0: i32) -> (i32, i32) {
    %c0_i32 = arith.constant 0 : i32
    %c0_i32_0 = arith.constant 0 : i32
    %c0_i32_1 = arith.constant 0 : i32
    return %c0_i32, %c0_i32_0 : i32, i32
  }
  func.func @transform_1(%arg0: i32) -> (i32, i32) {
    %c0_i32 = arith.constant 0 : i32
    %c0_i32_0 = arith.constant 0 : i32
    %c0_i32_1 = arith.constant 0 : i32
    return %c0_i32, %c0_i32_0 : i32, i32
  }
  func.func @transform_2(%arg0: i32) -> (i32, i32) {
    %c0_i32 = arith.constant 0 : i32
    %c0_i32_0 = arith.constant 0 : i32
    %c0_i32_1 = arith.constant 0 : i32
    return %c0_i32, %c0_i32_0 : i32, i32
  }
  func.func @transform_3(%arg0: i32) -> (i32, i32) {
    %c0_i32 = arith.constant 0 : i32
    %c0_i32_0 = arith.constant 0 : i32
    %c0_i32_1 = arith.constant 0 : i32
    return %c0_i32, %c0_i32_0 : i32, i32
  }
  func.func @transform_4(%arg0: i32) -> (i32, i32) {
    %c0_i32 = arith.constant 0 : i32
    %c0_i32_0 = arith.constant 0 : i32
    %c0_i32_1 = arith.constant 0 : i32
    return %c0_i32, %c0_i32_0 : i32, i32
  }
  func.func @transform_5(%arg0: i32) -> (i32, i32) {
    %c0_i32 = arith.constant 0 : i32
    %c0_i32_0 = arith.constant 0 : i32
    %c0_i32_1 = arith.constant 0 : i32
    return %c0_i32, %c0_i32_0 : i32, i32
  }
  func.func @transform_6(%arg0: i32) -> (i32, i32) {
    %c0_i32 = arith.constant 0 : i32
    %c0_i32_0 = arith.constant 0 : i32
    %c0_i32_1 = arith.constant 0 : i32
    return %c0_i32, %c0_i32_0 : i32, i32
  }
  func.func @transform_7(%arg0: i32) -> (i32, i32) {
    %c0_i32 = arith.constant 0 : i32
    %c0_i32_0 = arith.constant 0 : i32
    %c0_i32_1 = arith.constant 0 : i32
    return %c0_i32, %c0_i32_0 : i32, i32
  }
  func.func @transform_8(%arg0: i32) -> (i32, i32) {
    %c0_i32 = arith.constant 0 : i32
    %c0_i32_0 = arith.constant 0 : i32
    %c0_i32_1 = arith.constant 0 : i32
    return %c0_i32, %c0_i32_0 : i32, i32
  }
  func.func @transform_9(%arg0: i32) -> (i32, i32) {
    %c0_i32 = arith.constant 0 : i32
    %c0_i32_0 = arith.constant 0 : i32
    %c0_i32_1 = arith.constant 0 : i32
    return %c0_i32, %c0_i32_0 : i32, i32
  }
  func.func @transform_10(%arg0: i32) -> (i32, i32) {
    %c0_i32 = arith.constant 0 : i32
    %c0_i32_0 = arith.constant 0 : i32
    %c0_i32_1 = arith.constant 0 : i32
    return %c0_i32, %c0_i32_0 : i32, i32
  }
  func.func @transform_11(%arg0: i32) -> (i32, i32) {
    %c0_i32 = arith.constant 0 : i32
    %c0_i32_0 = arith.constant 0 : i32
    %c0_i32_1 = arith.constant 0 : i32
    return %c0_i32, %c0_i32_0 : i32, i32
  }
  func.func @transform_12(%arg0: i32) -> (i32, i32) {
    %c0_i32 = arith.constant 0 : i32
    %c0_i32_0 = arith.constant 0 : i32
    %c0_i32_1 = arith.constant 0 : i32
    return %c0_i32, %c0_i32_0 : i32, i32
  }
  func.func @transform_13(%arg0: i32) -> (i32, i32) {
    %c0_i32 = arith.constant 0 : i32
    %c0_i32_0 = arith.constant 0 : i32
    %c0_i32_1 = arith.constant 0 : i32
    return %c0_i32, %c0_i32_0 : i32, i32
  }
  func.func @transform_14(%arg0: i32) -> (i32, i32) {
    %c0_i32 = arith.constant 0 : i32
    %c0_i32_0 = arith.constant 0 : i32
    %c0_i32_1 = arith.constant 0 : i32
    return %c0_i32, %c0_i32_0 : i32, i32
  }
  func.func @transform_15(%arg0: i32) -> (i32, i32) {
    %c0_i32 = arith.constant 0 : i32
    %c0_i32_0 = arith.constant 0 : i32
    %c0_i32_1 = arith.constant 0 : i32
    return %c0_i32, %c0_i32_0 : i32, i32
  }
  func.func @transform_16(%arg0: i32) -> (i32, i32) {
    %c0_i32 = arith.constant 0 : i32
    %c0_i32_0 = arith.constant 0 : i32
    %c0_i32_1 = arith.constant 0 : i32
    return %c0_i32, %c0_i32_0 : i32, i32
  }
  func.func @transform_17(%arg0: i32) -> (i32, i32) {
    %c0_i32 = arith.constant 0 : i32
    %c0_i32_0 = arith.constant 0 : i32
    %c0_i32_1 = arith.constant 0 : i32
    return %c0_i32, %c0_i32_0 : i32, i32
  }
  func.func @transform_18(%arg0: i32) -> (i32, i32) {
    %c0_i32 = arith.constant 0 : i32
    %c0_i32_0 = arith.constant 0 : i32
    %c0_i32_1 = arith.constant 0 : i32
    return %c0_i32, %c0_i32_0 : i32, i32
  }
  func.func @transform_19(%arg0: i32) -> (i32, i32) {
    %c0_i32 = arith.constant 0 : i32
    %c0_i32_0 = arith.constant 0 : i32
    %c0_i32_1 = arith.constant 0 : i32
    return %c0_i32, %c0_i32_0 : i32, i32
  }
  func.func @transform_20(%arg0: i32) -> (i32, i32) {
    %c0_i32 = arith.constant 0 : i32
    %c0_i32_0 = arith.constant 0 : i32
    %c0_i32_1 = arith.constant 0 : i32
    return %c0_i32, %c0_i32_0 : i32, i32
  }
  func.func @transform_21(%arg0: i32) -> (i32, i32) {
    %c0_i32 = arith.constant 0 : i32
    %c0_i32_0 = arith.constant 0 : i32
    %c0_i32_1 = arith.constant 0 : i32
    return %c0_i32, %c0_i32_0 : i32, i32
  }
  func.func @transform_22(%arg0: i32) -> (i32, i32) {
    %c0_i32 = arith.constant 0 : i32
    %c0_i32_0 = arith.constant 0 : i32
    %c0_i32_1 = arith.constant 0 : i32
    return %c0_i32, %c0_i32_0 : i32, i32
  }
  func.func @transform_23(%arg0: i32) -> (i32, i32) {
    %c0_i32 = arith.constant 0 : i32
    %c0_i32_0 = arith.constant 0 : i32
    %c0_i32_1 = arith.constant 0 : i32
    return %c0_i32, %c0_i32_0 : i32, i32
  }
  func.func @transform_24(%arg0: i32) -> (i32, i32) {
    %c0_i32 = arith.constant 0 : i32
    %c0_i32_0 = arith.constant 0 : i32
    %c0_i32_1 = arith.constant 0 : i32
    return %c0_i32, %c0_i32_0 : i32, i32
  }
  func.func @transform_25(%arg0: i32) -> (i32, i32) {
    %c0_i32 = arith.constant 0 : i32
    %c0_i32_0 = arith.constant 0 : i32
    %c0_i32_1 = arith.constant 0 : i32
    return %c0_i32, %c0_i32_0 : i32, i32
  }
  func.func @transform_26(%arg0: i32) -> (i32, i32) {
    %c0_i32 = arith.constant 0 : i32
    %c0_i32_0 = arith.constant 0 : i32
    %c0_i32_1 = arith.constant 0 : i32
    return %c0_i32, %c0_i32_0 : i32, i32
  }
  func.func @transform_27(%arg0: i32) -> (i32, i32) {
    %c0_i32 = arith.constant 0 : i32
    %c0_i32_0 = arith.constant 0 : i32
    %c0_i32_1 = arith.constant 0 : i32
    return %c0_i32, %c0_i32_0 : i32, i32
  }
  func.func @transform_28(%arg0: i32) -> (i32, i32) {
    %c0_i32 = arith.constant 0 : i32
    %c0_i32_0 = arith.constant 0 : i32
    %c0_i32_1 = arith.constant 0 : i32
    return %c0_i32, %c0_i32_0 : i32, i32
  }
}

module attributes {stable_mosaic.version = 11 : i64} {
  func.func @_cggru_kernel(%arg0: i32, %arg1: memref<16x128xbf16, #tpu.memory_space<vmem>>, %arg2: memref<128x128xbf16, #tpu.memory_space<vmem>>, %arg3: memref<1x128xf32, #tpu.memory_space<vmem>>, %arg4: memref<32x128xbf16, #tpu.memory_space<vmem>>, %arg5: memref<128x128xbf16, #tpu.memory_space<vmem>>, %arg6: memref<1x128xf32, #tpu.memory_space<vmem>>, %arg7: memref<128x128xbf16, #tpu.memory_space<vmem>>, %arg8: memref<1x128xf32, #tpu.memory_space<vmem>>, %arg9: memref<32x1xf32, #tpu.memory_space<vmem>>, %arg10: memref<32x16xbf16, #tpu.memory_space<vmem>>, %arg11: memref<16x32xbf16, #tpu.memory_space<vmem>>, %arg12: memref<128x128xbf16, #tpu.memory_space<vmem>>, %arg13: memref<128x128xbf16, #tpu.memory_space<vmem>>, %arg14: memref<1x128xf32, #tpu.memory_space<vmem>>, %arg15: memref<128x128xbf16, #tpu.memory_space<vmem>>, %arg16: memref<256x256xbf16, #tpu.memory_space<vmem>>, %arg17: memref<128x128xbf16, #tpu.memory_space<vmem>>, %arg18: memref<128x128xbf16, #tpu.memory_space<vmem>>, %arg19: memref<1x256xf32, #tpu.memory_space<vmem>>, %arg20: memref<1x128xf32, #tpu.memory_space<vmem>>, %arg21: memref<1x128xf32, #tpu.memory_space<vmem>>, %arg22: memref<2x16xf32, #tpu.memory_space<vmem>>, %arg23: memref<128x512xbf16, #tpu.memory_space<vmem>>, %arg24: memref<128x512xbf16, #tpu.memory_space<vmem>>, %arg25: memref<1x512xf32, #tpu.memory_space<vmem>>, %arg26: memref<128x128xbf16, #tpu.memory_space<vmem>>, %arg27: memref<128x128xbf16, #tpu.memory_space<vmem>>, %arg28: memref<1x128xf32, #tpu.memory_space<vmem>>, %arg29: memref<2x128xf32, #tpu.memory_space<vmem>>) attributes {dimension_semantics = [#tpu.dimension_semantics<arbitrary>], iteration_bounds = array<i64: 1>, scalar_prefetch = 0 : i64, scratch_operands = 0 : i64, tpu.core_type = #tpu.core_type<tc>, window_params = [{pipeline_mode = #tpu.pipeline_mode<synchronous>, transform_indices = @transform_0, window_bounds = array<i64: 16, 128>}, {pipeline_mode = #tpu.pipeline_mode<synchronous>, transform_indices = @transform_1, window_bounds = array<i64: 128, 128>}, {pipeline_mode = #tpu.pipeline_mode<synchronous>, transform_indices = @transform_2, window_bounds = array<i64: 1, 128>}, {pipeline_mode = #tpu.pipeline_mode<synchronous>, transform_indices = @transform_3, window_bounds = array<i64: 32, 128>}, {pipeline_mode = #tpu.pipeline_mode<synchronous>, transform_indices = @transform_4, window_bounds = array<i64: 128, 128>}, {pipeline_mode = #tpu.pipeline_mode<synchronous>, transform_indices = @transform_5, window_bounds = array<i64: 1, 128>}, {pipeline_mode = #tpu.pipeline_mode<synchronous>, transform_indices = @transform_6, window_bounds = array<i64: 128, 128>}, {pipeline_mode = #tpu.pipeline_mode<synchronous>, transform_indices = @transform_7, window_bounds = array<i64: 1, 128>}, {pipeline_mode = #tpu.pipeline_mode<synchronous>, transform_indices = @transform_8, window_bounds = array<i64: 32, 1>}, {pipeline_mode = #tpu.pipeline_mode<synchronous>, transform_indices = @transform_9, window_bounds = array<i64: 32, 16>}, {pipeline_mode = #tpu.pipeline_mode<synchronous>, transform_indices = @transform_10, window_bounds = array<i64: 16, 32>}, {pipeline_mode = #tpu.pipeline_mode<synchronous>, transform_indices = @transform_11, window_bounds = array<i64: 128, 128>}, {pipeline_mode = #tpu.pipeline_mode<synchronous>, transform_indices = @transform_12, window_bounds = array<i64: 128, 128>}, {pipeline_mode = #tpu.pipeline_mode<synchronous>, transform_indices = @transform_13, window_bounds = array<i64: 1, 128>}, {pipeline_mode = #tpu.pipeline_mode<synchronous>, transform_indices = @transform_14, window_bounds = array<i64: 128, 128>}, {pipeline_mode = #tpu.pipeline_mode<synchronous>, transform_indices = @transform_15, window_bounds = array<i64: 256, 256>}, {pipeline_mode = #tpu.pipeline_mode<synchronous>, transform_indices = @transform_16, window_bounds = array<i64: 128, 128>}, {pipeline_mode = #tpu.pipeline_mode<synchronous>, transform_indices = @transform_17, window_bounds = array<i64: 128, 128>}, {pipeline_mode = #tpu.pipeline_mode<synchronous>, transform_indices = @transform_18, window_bounds = array<i64: 1, 256>}, {pipeline_mode = #tpu.pipeline_mode<synchronous>, transform_indices = @transform_19, window_bounds = array<i64: 1, 128>}, {pipeline_mode = #tpu.pipeline_mode<synchronous>, transform_indices = @transform_20, window_bounds = array<i64: 1, 128>}, {pipeline_mode = #tpu.pipeline_mode<synchronous>, transform_indices = @transform_21, window_bounds = array<i64: 2, 16>}, {pipeline_mode = #tpu.pipeline_mode<synchronous>, transform_indices = @transform_22, window_bounds = array<i64: 128, 512>}, {pipeline_mode = #tpu.pipeline_mode<synchronous>, transform_indices = @transform_23, window_bounds = array<i64: 128, 512>}, {pipeline_mode = #tpu.pipeline_mode<synchronous>, transform_indices = @transform_24, window_bounds = array<i64: 1, 512>}, {pipeline_mode = #tpu.pipeline_mode<synchronous>, transform_indices = @transform_25, window_bounds = array<i64: 128, 128>}, {pipeline_mode = #tpu.pipeline_mode<synchronous>, transform_indices = @transform_26, window_bounds = array<i64: 128, 128>}, {pipeline_mode = #tpu.pipeline_mode<synchronous>, transform_indices = @transform_27, window_bounds = array<i64: 1, 128>}, {pipeline_mode = #tpu.pipeline_mode<synchronous>, transform_indices = @transform_28, window_bounds = array<i64: 2, 128>}]} {
    %c0 = arith.constant 0 : index
    %c0_0 = arith.constant 0 : index
    %0 = vector.load %arg1[%c0, %c0_0] : memref<16x128xbf16, #tpu.memory_space<vmem>>, vector<16x128xbf16>
    %c0_1 = arith.constant 0 : index
    %c0_2 = arith.constant 0 : index
    %1 = vector.load %arg2[%c0_1, %c0_2] : memref<128x128xbf16, #tpu.memory_space<vmem>>, vector<128x128xbf16>
    %cst = arith.constant dense<0.000000e+00> : vector<16x128xf32>
    %2 = tpu.matmul %0, %1, %cst {dimension_numbers = #tpu.dot_dimension_numbers<[1], [0], [0], [1], [0, 0, 1, 1], [], []>} : vector<16x128xbf16>, vector<128x128xbf16>, vector<16x128xf32> -> vector<16x128xf32>
    %c0_3 = arith.constant 0 : index
    %c0_4 = arith.constant 0 : index
    %3 = vector.load %arg3[%c0_3, %c0_4] : memref<1x128xf32, #tpu.memory_space<vmem>>, vector<1x128xf32>
    %4 = vector.broadcast %3 : vector<1x128xf32> to vector<16x128xf32>
    %5 = arith.addf %2, %4 : vector<16x128xf32>
    %cst_5 = arith.constant 0.000000e+00 : f32
    %6 = vector.broadcast %cst_5 : f32 to vector<16x128xf32>
    %7 = arith.maximumf %5, %6 : vector<16x128xf32>
    %c0_6 = arith.constant 0 : index
    %c0_7 = arith.constant 0 : index
    %8 = vector.load %arg4[%c0_6, %c0_7] : memref<32x128xbf16, #tpu.memory_space<vmem>>, vector<32x128xbf16>
    %c0_8 = arith.constant 0 : index
    %c0_9 = arith.constant 0 : index
    %9 = vector.load %arg5[%c0_8, %c0_9] : memref<128x128xbf16, #tpu.memory_space<vmem>>, vector<128x128xbf16>
    %cst_10 = arith.constant dense<0.000000e+00> : vector<32x128xf32>
    %10 = tpu.matmul %8, %9, %cst_10 {dimension_numbers = #tpu.dot_dimension_numbers<[1], [0], [0], [1], [0, 0, 1, 1], [], []>} : vector<32x128xbf16>, vector<128x128xbf16>, vector<32x128xf32> -> vector<32x128xf32>
    %c0_11 = arith.constant 0 : index
    %c0_12 = arith.constant 0 : index
    %11 = vector.load %arg6[%c0_11, %c0_12] : memref<1x128xf32, #tpu.memory_space<vmem>>, vector<1x128xf32>
    %12 = vector.broadcast %11 : vector<1x128xf32> to vector<32x128xf32>
    %13 = arith.addf %10, %12 : vector<32x128xf32>
    %cst_13 = arith.constant 0.000000e+00 : f32
    %14 = vector.broadcast %cst_13 : f32 to vector<32x128xf32>
    %15 = arith.maximumf %13, %14 : vector<32x128xf32>
    %c0_14 = arith.constant 0 : index
    %c0_15 = arith.constant 0 : index
    %16 = vector.load %arg7[%c0_14, %c0_15] : memref<128x128xbf16, #tpu.memory_space<vmem>>, vector<128x128xbf16>
    %17 = arith.truncf %15 : vector<32x128xf32> to vector<32x128xbf16>
    %cst_16 = arith.constant dense<0.000000e+00> : vector<32x128xf32>
    %18 = tpu.matmul %17, %16, %cst_16 {dimension_numbers = #tpu.dot_dimension_numbers<[1], [0], [0], [1], [0, 0, 1, 1], [], []>} : vector<32x128xbf16>, vector<128x128xbf16>, vector<32x128xf32> -> vector<32x128xf32>
    %c0_17 = arith.constant 0 : index
    %c0_18 = arith.constant 0 : index
    %19 = vector.load %arg8[%c0_17, %c0_18] : memref<1x128xf32, #tpu.memory_space<vmem>>, vector<1x128xf32>
    %20 = vector.broadcast %19 : vector<1x128xf32> to vector<32x128xf32>
    %21 = arith.addf %18, %20 : vector<32x128xf32>
    %c0_19 = arith.constant 0 : index
    %c0_20 = arith.constant 0 : index
    %22 = vector.load %arg9[%c0_19, %c0_20] : memref<32x1xf32, #tpu.memory_space<vmem>>, vector<32x1xf32>
    %23 = vector.broadcast %22 : vector<32x1xf32> to vector<32x128xf32>
    %24 = arith.mulf %21, %23 : vector<32x128xf32>
    %c0_21 = arith.constant 0 : index
    %c0_22 = arith.constant 0 : index
    %25 = vector.load %arg10[%c0_21, %c0_22] : memref<32x16xbf16, #tpu.memory_space<vmem>>, vector<32x16xbf16>
    %c0_23 = arith.constant 0 : index
    %c0_24 = arith.constant 0 : index
    %26 = vector.load %arg11[%c0_23, %c0_24] : memref<16x32xbf16, #tpu.memory_space<vmem>>, vector<16x32xbf16>
    %c0_25 = arith.constant 0 : index
    %c0_26 = arith.constant 0 : index
    %27 = vector.load %arg12[%c0_25, %c0_26] : memref<128x128xbf16, #tpu.memory_space<vmem>>, vector<128x128xbf16>
    %c0_27 = arith.constant 0 : index
    %c0_28 = arith.constant 0 : index
    %28 = vector.load %arg13[%c0_27, %c0_28] : memref<128x128xbf16, #tpu.memory_space<vmem>>, vector<128x128xbf16>
    %c0_29 = arith.constant 0 : index
    %c0_30 = arith.constant 0 : index
    %29 = vector.load %arg15[%c0_29, %c0_30] : memref<128x128xbf16, #tpu.memory_space<vmem>>, vector<128x128xbf16>
    %c0_31 = arith.constant 0 : index
    %c0_32 = arith.constant 0 : index
    %30 = vector.load %arg14[%c0_31, %c0_32] : memref<1x128xf32, #tpu.memory_space<vmem>>, vector<1x128xf32>
    %31 = vector.shape_cast %30 : vector<1x128xf32> to vector<1x128xf32>
    %32 = vector.broadcast %31 : vector<1x128xf32> to vector<16x128xf32>
    %c0_33 = arith.constant 0 : index
    %c0_34 = arith.constant 0 : index
    %33 = vector.load %arg16[%c0_33, %c0_34] : memref<256x256xbf16, #tpu.memory_space<vmem>>, vector<256x256xbf16>
    %c0_35 = arith.constant 0 : index
    %c0_36 = arith.constant 0 : index
    %34 = vector.load %arg17[%c0_35, %c0_36] : memref<128x128xbf16, #tpu.memory_space<vmem>>, vector<128x128xbf16>
    %c0_37 = arith.constant 0 : index
    %c0_38 = arith.constant 0 : index
    %35 = vector.load %arg18[%c0_37, %c0_38] : memref<128x128xbf16, #tpu.memory_space<vmem>>, vector<128x128xbf16>
    %c0_39 = arith.constant 0 : index
    %c0_40 = arith.constant 0 : index
    %36 = vector.load %arg19[%c0_39, %c0_40] : memref<1x256xf32, #tpu.memory_space<vmem>>, vector<1x256xf32>
    %37 = vector.shape_cast %36 : vector<1x256xf32> to vector<1x256xf32>
    %38 = vector.broadcast %37 : vector<1x256xf32> to vector<16x256xf32>
    %c0_41 = arith.constant 0 : index
    %c0_42 = arith.constant 0 : index
    %39 = vector.load %arg20[%c0_41, %c0_42] : memref<1x128xf32, #tpu.memory_space<vmem>>, vector<1x128xf32>
    %40 = vector.shape_cast %39 : vector<1x128xf32> to vector<1x128xf32>
    %41 = vector.broadcast %40 : vector<1x128xf32> to vector<16x128xf32>
    %c0_43 = arith.constant 0 : index
    %c0_44 = arith.constant 0 : index
    %42 = vector.load %arg21[%c0_43, %c0_44] : memref<1x128xf32, #tpu.memory_space<vmem>>, vector<1x128xf32>
    %43 = vector.shape_cast %42 : vector<1x128xf32> to vector<1x128xf32>
    %44 = vector.broadcast %43 : vector<1x128xf32> to vector<16x128xf32>
    %45 = arith.truncf %7 : vector<16x128xf32> to vector<16x128xbf16>
    %cst_45 = arith.constant dense<0.000000e+00> : vector<16x128xf32>
    %46 = tpu.matmul %45, %27, %cst_45 {dimension_numbers = #tpu.dot_dimension_numbers<[1], [0], [0], [1], [0, 0, 1, 1], [], []>} : vector<16x128xbf16>, vector<128x128xbf16>, vector<16x128xf32> -> vector<16x128xf32>
    %47 = arith.truncf %46 : vector<16x128xf32> to vector<16x128xbf16>
    %cst_46 = arith.constant dense<0.000000e+00> : vector<32x128xf32>
    %48 = tpu.matmul %25, %47, %cst_46 {dimension_numbers = #tpu.dot_dimension_numbers<[1], [0], [0], [1], [0, 0, 1, 1], [], []>} : vector<32x16xbf16>, vector<16x128xbf16>, vector<32x128xf32> -> vector<32x128xf32>
    %49 = arith.mulf %48, %24 : vector<32x128xf32>
    %50 = arith.truncf %49 : vector<32x128xf32> to vector<32x128xbf16>
    %cst_47 = arith.constant dense<0.000000e+00> : vector<16x128xf32>
    %51 = tpu.matmul %26, %50, %cst_47 {dimension_numbers = #tpu.dot_dimension_numbers<[1], [0], [0], [1], [0, 0, 1, 1], [], []>} : vector<16x32xbf16>, vector<32x128xbf16>, vector<16x128xf32> -> vector<16x128xf32>
    %52 = arith.truncf %51 : vector<16x128xf32> to vector<16x128xbf16>
    %cst_48 = arith.constant dense<0.000000e+00> : vector<16x128xf32>
    %53 = tpu.matmul %52, %28, %cst_48 {dimension_numbers = #tpu.dot_dimension_numbers<[1], [0], [0], [1], [0, 0, 1, 1], [], []>} : vector<16x128xbf16>, vector<128x128xbf16>, vector<16x128xf32> -> vector<16x128xf32>
    %54 = arith.addf %53, %32 : vector<16x128xf32>
    %cst_49 = arith.constant 0.000000e+00 : f32
    %55 = vector.broadcast %cst_49 : f32 to vector<16x128xf32>
    %56 = arith.maximumf %54, %55 : vector<16x128xf32>
    %57 = math.absf %54 : vector<16x128xf32>
    %cst_50 = arith.constant 0.000000e+00 : f32
    %58 = vector.broadcast %cst_50 : f32 to vector<16x128xf32>
    %59 = arith.subf %58, %57 : vector<16x128xf32>
    %60 = math.exp %59 : vector<16x128xf32>
    %61 = math.log1p %60 : vector<16x128xf32>
    %62 = arith.addf %56, %61 : vector<16x128xf32>
    %cst_51 = arith.constant 0.693147182 : f32
    %63 = vector.broadcast %cst_51 : f32 to vector<16x128xf32>
    %64 = arith.subf %62, %63 : vector<16x128xf32>
    %65 = arith.truncf %64 : vector<16x128xf32> to vector<16x128xbf16>
    %cst_52 = arith.constant dense<0.000000e+00> : vector<16x128xf32>
    %66 = tpu.matmul %65, %29, %cst_52 {dimension_numbers = #tpu.dot_dimension_numbers<[1], [0], [0], [1], [0, 0, 1, 1], [], []>} : vector<16x128xbf16>, vector<128x128xbf16>, vector<16x128xf32> -> vector<16x128xf32>
    %cst_53 = arith.constant 0.000000e+00 : f32
    %67 = vector.broadcast %cst_53 : f32 to vector<16x128xf32>
    %68 = arith.maximumf %66, %67 : vector<16x128xf32>
    %69 = arith.truncf %68 : vector<16x128xf32> to vector<16x128xbf16>
    %70 = arith.truncf %7 : vector<16x128xf32> to vector<16x128xbf16>
    %71 = tpu.concatenate %69, %70 in 1 : vector<16x128xbf16>, vector<16x128xbf16> -> vector<16x256xbf16>
    %cst_54 = arith.constant dense<0.000000e+00> : vector<16x256xf32>
    %72 = tpu.matmul %71, %33, %cst_54 {dimension_numbers = #tpu.dot_dimension_numbers<[1], [0], [0], [1], [0, 0, 1, 1], [], []>} : vector<16x256xbf16>, vector<256x256xbf16>, vector<16x256xf32> -> vector<16x256xf32>
    %73 = arith.addf %72, %38 : vector<16x256xf32>
    %74 = vector.extract_strided_slice %73 {offsets = [0, 0], sizes = [16, 128], strides = [1, 1]} : vector<16x256xf32> to vector<16x128xf32>
    %cst_55 = arith.constant 0.000000e+00 : f32
    %75 = vector.broadcast %cst_55 : f32 to vector<16x128xf32>
    %76 = arith.subf %75, %74 : vector<16x128xf32>
    %77 = math.exp %76 : vector<16x128xf32>
    %cst_56 = arith.constant 1.000000e+00 : f32
    %78 = vector.broadcast %cst_56 : f32 to vector<16x128xf32>
    %79 = arith.addf %78, %77 : vector<16x128xf32>
    %80 = tpu.reciprocal %79 {approx = true} : vector<16x128xf32> -> vector<16x128xf32>
    %81 = vector.extract_strided_slice %73 {offsets = [0, 128], sizes = [16, 128], strides = [1, 1]} : vector<16x256xf32> to vector<16x128xf32>
    %cst_57 = arith.constant 0.000000e+00 : f32
    %82 = vector.broadcast %cst_57 : f32 to vector<16x128xf32>
    %83 = arith.subf %82, %81 : vector<16x128xf32>
    %84 = math.exp %83 : vector<16x128xf32>
    %cst_58 = arith.constant 1.000000e+00 : f32
    %85 = vector.broadcast %cst_58 : f32 to vector<16x128xf32>
    %86 = arith.addf %85, %84 : vector<16x128xf32>
    %87 = tpu.reciprocal %86 {approx = true} : vector<16x128xf32> -> vector<16x128xf32>
    %88 = arith.truncf %68 : vector<16x128xf32> to vector<16x128xbf16>
    %cst_59 = arith.constant dense<0.000000e+00> : vector<16x128xf32>
    %89 = tpu.matmul %88, %34, %cst_59 {dimension_numbers = #tpu.dot_dimension_numbers<[1], [0], [0], [1], [0, 0, 1, 1], [], []>} : vector<16x128xbf16>, vector<128x128xbf16>, vector<16x128xf32> -> vector<16x128xf32>
    %90 = arith.addf %89, %41 : vector<16x128xf32>
    %91 = arith.truncf %7 : vector<16x128xf32> to vector<16x128xbf16>
    %cst_60 = arith.constant dense<0.000000e+00> : vector<16x128xf32>
    %92 = tpu.matmul %91, %35, %cst_60 {dimension_numbers = #tpu.dot_dimension_numbers<[1], [0], [0], [1], [0, 0, 1, 1], [], []>} : vector<16x128xbf16>, vector<128x128xbf16>, vector<16x128xf32> -> vector<16x128xf32>
    %93 = arith.addf %92, %44 : vector<16x128xf32>
    %94 = arith.mulf %80, %93 : vector<16x128xf32>
    %95 = arith.addf %90, %94 : vector<16x128xf32>
    %96 = math.tanh %95 : vector<16x128xf32>
    %cst_61 = arith.constant 1.000000e+00 : f32
    %97 = vector.broadcast %cst_61 : f32 to vector<16x128xf32>
    %98 = arith.subf %97, %87 : vector<16x128xf32>
    %99 = arith.mulf %98, %96 : vector<16x128xf32>
    %100 = arith.mulf %87, %7 : vector<16x128xf32>
    %101 = arith.addf %99, %100 : vector<16x128xf32>
    %102 = arith.truncf %101 : vector<16x128xf32> to vector<16x128xbf16>
    %cst_62 = arith.constant dense<0.000000e+00> : vector<16x128xf32>
    %103 = tpu.matmul %102, %27, %cst_62 {dimension_numbers = #tpu.dot_dimension_numbers<[1], [0], [0], [1], [0, 0, 1, 1], [], []>} : vector<16x128xbf16>, vector<128x128xbf16>, vector<16x128xf32> -> vector<16x128xf32>
    %104 = arith.truncf %103 : vector<16x128xf32> to vector<16x128xbf16>
    %cst_63 = arith.constant dense<0.000000e+00> : vector<32x128xf32>
    %105 = tpu.matmul %25, %104, %cst_63 {dimension_numbers = #tpu.dot_dimension_numbers<[1], [0], [0], [1], [0, 0, 1, 1], [], []>} : vector<32x16xbf16>, vector<16x128xbf16>, vector<32x128xf32> -> vector<32x128xf32>
    %106 = arith.mulf %105, %24 : vector<32x128xf32>
    %107 = arith.truncf %106 : vector<32x128xf32> to vector<32x128xbf16>
    %cst_64 = arith.constant dense<0.000000e+00> : vector<16x128xf32>
    %108 = tpu.matmul %26, %107, %cst_64 {dimension_numbers = #tpu.dot_dimension_numbers<[1], [0], [0], [1], [0, 0, 1, 1], [], []>} : vector<16x32xbf16>, vector<32x128xbf16>, vector<16x128xf32> -> vector<16x128xf32>
    %109 = arith.truncf %108 : vector<16x128xf32> to vector<16x128xbf16>
    %cst_65 = arith.constant dense<0.000000e+00> : vector<16x128xf32>
    %110 = tpu.matmul %109, %28, %cst_65 {dimension_numbers = #tpu.dot_dimension_numbers<[1], [0], [0], [1], [0, 0, 1, 1], [], []>} : vector<16x128xbf16>, vector<128x128xbf16>, vector<16x128xf32> -> vector<16x128xf32>
    %111 = arith.addf %110, %32 : vector<16x128xf32>
    %cst_66 = arith.constant 0.000000e+00 : f32
    %112 = vector.broadcast %cst_66 : f32 to vector<16x128xf32>
    %113 = arith.maximumf %111, %112 : vector<16x128xf32>
    %114 = math.absf %111 : vector<16x128xf32>
    %cst_67 = arith.constant 0.000000e+00 : f32
    %115 = vector.broadcast %cst_67 : f32 to vector<16x128xf32>
    %116 = arith.subf %115, %114 : vector<16x128xf32>
    %117 = math.exp %116 : vector<16x128xf32>
    %118 = math.log1p %117 : vector<16x128xf32>
    %119 = arith.addf %113, %118 : vector<16x128xf32>
    %cst_68 = arith.constant 0.693147182 : f32
    %120 = vector.broadcast %cst_68 : f32 to vector<16x128xf32>
    %121 = arith.subf %119, %120 : vector<16x128xf32>
    %122 = arith.truncf %121 : vector<16x128xf32> to vector<16x128xbf16>
    %cst_69 = arith.constant dense<0.000000e+00> : vector<16x128xf32>
    %123 = tpu.matmul %122, %29, %cst_69 {dimension_numbers = #tpu.dot_dimension_numbers<[1], [0], [0], [1], [0, 0, 1, 1], [], []>} : vector<16x128xbf16>, vector<128x128xbf16>, vector<16x128xf32> -> vector<16x128xf32>
    %cst_70 = arith.constant 0.000000e+00 : f32
    %124 = vector.broadcast %cst_70 : f32 to vector<16x128xf32>
    %125 = arith.maximumf %123, %124 : vector<16x128xf32>
    %126 = arith.truncf %125 : vector<16x128xf32> to vector<16x128xbf16>
    %127 = arith.truncf %101 : vector<16x128xf32> to vector<16x128xbf16>
    %128 = tpu.concatenate %126, %127 in 1 : vector<16x128xbf16>, vector<16x128xbf16> -> vector<16x256xbf16>
    %cst_71 = arith.constant dense<0.000000e+00> : vector<16x256xf32>
    %129 = tpu.matmul %128, %33, %cst_71 {dimension_numbers = #tpu.dot_dimension_numbers<[1], [0], [0], [1], [0, 0, 1, 1], [], []>} : vector<16x256xbf16>, vector<256x256xbf16>, vector<16x256xf32> -> vector<16x256xf32>
    %130 = arith.addf %129, %38 : vector<16x256xf32>
    %131 = vector.extract_strided_slice %130 {offsets = [0, 0], sizes = [16, 128], strides = [1, 1]} : vector<16x256xf32> to vector<16x128xf32>
    %cst_72 = arith.constant 0.000000e+00 : f32
    %132 = vector.broadcast %cst_72 : f32 to vector<16x128xf32>
    %133 = arith.subf %132, %131 : vector<16x128xf32>
    %134 = math.exp %133 : vector<16x128xf32>
    %cst_73 = arith.constant 1.000000e+00 : f32
    %135 = vector.broadcast %cst_73 : f32 to vector<16x128xf32>
    %136 = arith.addf %135, %134 : vector<16x128xf32>
    %137 = tpu.reciprocal %136 {approx = true} : vector<16x128xf32> -> vector<16x128xf32>
    %138 = vector.extract_strided_slice %130 {offsets = [0, 128], sizes = [16, 128], strides = [1, 1]} : vector<16x256xf32> to vector<16x128xf32>
    %cst_74 = arith.constant 0.000000e+00 : f32
    %139 = vector.broadcast %cst_74 : f32 to vector<16x128xf32>
    %140 = arith.subf %139, %138 : vector<16x128xf32>
    %141 = math.exp %140 : vector<16x128xf32>
    %cst_75 = arith.constant 1.000000e+00 : f32
    %142 = vector.broadcast %cst_75 : f32 to vector<16x128xf32>
    %143 = arith.addf %142, %141 : vector<16x128xf32>
    %144 = tpu.reciprocal %143 {approx = true} : vector<16x128xf32> -> vector<16x128xf32>
    %145 = arith.truncf %125 : vector<16x128xf32> to vector<16x128xbf16>
    %cst_76 = arith.constant dense<0.000000e+00> : vector<16x128xf32>
    %146 = tpu.matmul %145, %34, %cst_76 {dimension_numbers = #tpu.dot_dimension_numbers<[1], [0], [0], [1], [0, 0, 1, 1], [], []>} : vector<16x128xbf16>, vector<128x128xbf16>, vector<16x128xf32> -> vector<16x128xf32>
    %147 = arith.addf %146, %41 : vector<16x128xf32>
    %148 = arith.truncf %101 : vector<16x128xf32> to vector<16x128xbf16>
    %cst_77 = arith.constant dense<0.000000e+00> : vector<16x128xf32>
    %149 = tpu.matmul %148, %35, %cst_77 {dimension_numbers = #tpu.dot_dimension_numbers<[1], [0], [0], [1], [0, 0, 1, 1], [], []>} : vector<16x128xbf16>, vector<128x128xbf16>, vector<16x128xf32> -> vector<16x128xf32>
    %150 = arith.addf %149, %44 : vector<16x128xf32>
    %151 = arith.mulf %137, %150 : vector<16x128xf32>
    %152 = arith.addf %147, %151 : vector<16x128xf32>
    %153 = math.tanh %152 : vector<16x128xf32>
    %cst_78 = arith.constant 1.000000e+00 : f32
    %154 = vector.broadcast %cst_78 : f32 to vector<16x128xf32>
    %155 = arith.subf %154, %144 : vector<16x128xf32>
    %156 = arith.mulf %155, %153 : vector<16x128xf32>
    %157 = arith.mulf %144, %101 : vector<16x128xf32>
    %158 = arith.addf %156, %157 : vector<16x128xf32>
    %159 = arith.truncf %158 : vector<16x128xf32> to vector<16x128xbf16>
    %cst_79 = arith.constant dense<0.000000e+00> : vector<16x128xf32>
    %160 = tpu.matmul %159, %27, %cst_79 {dimension_numbers = #tpu.dot_dimension_numbers<[1], [0], [0], [1], [0, 0, 1, 1], [], []>} : vector<16x128xbf16>, vector<128x128xbf16>, vector<16x128xf32> -> vector<16x128xf32>
    %161 = arith.truncf %160 : vector<16x128xf32> to vector<16x128xbf16>
    %cst_80 = arith.constant dense<0.000000e+00> : vector<32x128xf32>
    %162 = tpu.matmul %25, %161, %cst_80 {dimension_numbers = #tpu.dot_dimension_numbers<[1], [0], [0], [1], [0, 0, 1, 1], [], []>} : vector<32x16xbf16>, vector<16x128xbf16>, vector<32x128xf32> -> vector<32x128xf32>
    %163 = arith.mulf %162, %24 : vector<32x128xf32>
    %164 = arith.truncf %163 : vector<32x128xf32> to vector<32x128xbf16>
    %cst_81 = arith.constant dense<0.000000e+00> : vector<16x128xf32>
    %165 = tpu.matmul %26, %164, %cst_81 {dimension_numbers = #tpu.dot_dimension_numbers<[1], [0], [0], [1], [0, 0, 1, 1], [], []>} : vector<16x32xbf16>, vector<32x128xbf16>, vector<16x128xf32> -> vector<16x128xf32>
    %166 = arith.truncf %165 : vector<16x128xf32> to vector<16x128xbf16>
    %cst_82 = arith.constant dense<0.000000e+00> : vector<16x128xf32>
    %167 = tpu.matmul %166, %28, %cst_82 {dimension_numbers = #tpu.dot_dimension_numbers<[1], [0], [0], [1], [0, 0, 1, 1], [], []>} : vector<16x128xbf16>, vector<128x128xbf16>, vector<16x128xf32> -> vector<16x128xf32>
    %168 = arith.addf %167, %32 : vector<16x128xf32>
    %cst_83 = arith.constant 0.000000e+00 : f32
    %169 = vector.broadcast %cst_83 : f32 to vector<16x128xf32>
    %170 = arith.maximumf %168, %169 : vector<16x128xf32>
    %171 = math.absf %168 : vector<16x128xf32>
    %cst_84 = arith.constant 0.000000e+00 : f32
    %172 = vector.broadcast %cst_84 : f32 to vector<16x128xf32>
    %173 = arith.subf %172, %171 : vector<16x128xf32>
    %174 = math.exp %173 : vector<16x128xf32>
    %175 = math.log1p %174 : vector<16x128xf32>
    %176 = arith.addf %170, %175 : vector<16x128xf32>
    %cst_85 = arith.constant 0.693147182 : f32
    %177 = vector.broadcast %cst_85 : f32 to vector<16x128xf32>
    %178 = arith.subf %176, %177 : vector<16x128xf32>
    %179 = arith.truncf %178 : vector<16x128xf32> to vector<16x128xbf16>
    %cst_86 = arith.constant dense<0.000000e+00> : vector<16x128xf32>
    %180 = tpu.matmul %179, %29, %cst_86 {dimension_numbers = #tpu.dot_dimension_numbers<[1], [0], [0], [1], [0, 0, 1, 1], [], []>} : vector<16x128xbf16>, vector<128x128xbf16>, vector<16x128xf32> -> vector<16x128xf32>
    %cst_87 = arith.constant 0.000000e+00 : f32
    %181 = vector.broadcast %cst_87 : f32 to vector<16x128xf32>
    %182 = arith.maximumf %180, %181 : vector<16x128xf32>
    %183 = arith.truncf %182 : vector<16x128xf32> to vector<16x128xbf16>
    %184 = arith.truncf %158 : vector<16x128xf32> to vector<16x128xbf16>
    %185 = tpu.concatenate %183, %184 in 1 : vector<16x128xbf16>, vector<16x128xbf16> -> vector<16x256xbf16>
    %cst_88 = arith.constant dense<0.000000e+00> : vector<16x256xf32>
    %186 = tpu.matmul %185, %33, %cst_88 {dimension_numbers = #tpu.dot_dimension_numbers<[1], [0], [0], [1], [0, 0, 1, 1], [], []>} : vector<16x256xbf16>, vector<256x256xbf16>, vector<16x256xf32> -> vector<16x256xf32>
    %187 = arith.addf %186, %38 : vector<16x256xf32>
    %188 = vector.extract_strided_slice %187 {offsets = [0, 0], sizes = [16, 128], strides = [1, 1]} : vector<16x256xf32> to vector<16x128xf32>
    %cst_89 = arith.constant 0.000000e+00 : f32
    %189 = vector.broadcast %cst_89 : f32 to vector<16x128xf32>
    %190 = arith.subf %189, %188 : vector<16x128xf32>
    %191 = math.exp %190 : vector<16x128xf32>
    %cst_90 = arith.constant 1.000000e+00 : f32
    %192 = vector.broadcast %cst_90 : f32 to vector<16x128xf32>
    %193 = arith.addf %192, %191 : vector<16x128xf32>
    %194 = tpu.reciprocal %193 {approx = true} : vector<16x128xf32> -> vector<16x128xf32>
    %195 = vector.extract_strided_slice %187 {offsets = [0, 128], sizes = [16, 128], strides = [1, 1]} : vector<16x256xf32> to vector<16x128xf32>
    %cst_91 = arith.constant 0.000000e+00 : f32
    %196 = vector.broadcast %cst_91 : f32 to vector<16x128xf32>
    %197 = arith.subf %196, %195 : vector<16x128xf32>
    %198 = math.exp %197 : vector<16x128xf32>
    %cst_92 = arith.constant 1.000000e+00 : f32
    %199 = vector.broadcast %cst_92 : f32 to vector<16x128xf32>
    %200 = arith.addf %199, %198 : vector<16x128xf32>
    %201 = tpu.reciprocal %200 {approx = true} : vector<16x128xf32> -> vector<16x128xf32>
    %202 = arith.truncf %182 : vector<16x128xf32> to vector<16x128xbf16>
    %cst_93 = arith.constant dense<0.000000e+00> : vector<16x128xf32>
    %203 = tpu.matmul %202, %34, %cst_93 {dimension_numbers = #tpu.dot_dimension_numbers<[1], [0], [0], [1], [0, 0, 1, 1], [], []>} : vector<16x128xbf16>, vector<128x128xbf16>, vector<16x128xf32> -> vector<16x128xf32>
    %204 = arith.addf %203, %41 : vector<16x128xf32>
    %205 = arith.truncf %158 : vector<16x128xf32> to vector<16x128xbf16>
    %cst_94 = arith.constant dense<0.000000e+00> : vector<16x128xf32>
    %206 = tpu.matmul %205, %35, %cst_94 {dimension_numbers = #tpu.dot_dimension_numbers<[1], [0], [0], [1], [0, 0, 1, 1], [], []>} : vector<16x128xbf16>, vector<128x128xbf16>, vector<16x128xf32> -> vector<16x128xf32>
    %207 = arith.addf %206, %44 : vector<16x128xf32>
    %208 = arith.mulf %194, %207 : vector<16x128xf32>
    %209 = arith.addf %204, %208 : vector<16x128xf32>
    %210 = math.tanh %209 : vector<16x128xf32>
    %cst_95 = arith.constant 1.000000e+00 : f32
    %211 = vector.broadcast %cst_95 : f32 to vector<16x128xf32>
    %212 = arith.subf %211, %201 : vector<16x128xf32>
    %213 = arith.mulf %212, %210 : vector<16x128xf32>
    %214 = arith.mulf %201, %158 : vector<16x128xf32>
    %215 = arith.addf %213, %214 : vector<16x128xf32>
    %216 = arith.truncf %215 : vector<16x128xf32> to vector<16x128xbf16>
    %c0_96 = arith.constant 0 : index
    %c0_97 = arith.constant 0 : index
    %217 = vector.load %arg22[%c0_96, %c0_97] : memref<2x16xf32, #tpu.memory_space<vmem>>, vector<2x16xf32>
    %cst_98 = arith.constant 5.000000e-01 : f32
    %218 = vector.broadcast %cst_98 : f32 to vector<2x16xf32>
    %219 = arith.cmpf ogt, %217, %218 : vector<2x16xf32>
    %c0_99 = arith.constant 0 : index
    %c0_100 = arith.constant 0 : index
    %220 = vector.load %arg23[%c0_99, %c0_100] : memref<128x512xbf16, #tpu.memory_space<vmem>>, vector<128x512xbf16>
    %c0_101 = arith.constant 0 : index
    %c0_102 = arith.constant 0 : index
    %221 = vector.load %arg24[%c0_101, %c0_102] : memref<128x512xbf16, #tpu.memory_space<vmem>>, vector<128x512xbf16>
    %c0_103 = arith.constant 0 : index
    %c0_104 = arith.constant 0 : index
    %222 = vector.load %arg25[%c0_103, %c0_104] : memref<1x512xf32, #tpu.memory_space<vmem>>, vector<1x512xf32>
    %223 = vector.shape_cast %222 : vector<1x512xf32> to vector<1x512xf32>
    %224 = vector.broadcast %223 : vector<1x512xf32> to vector<2x512xf32>
    %cst_105 = arith.constant 0.000000e+00 : f32
    %225 = vector.broadcast %cst_105 : f32 to vector<2x128xf32>
    %cst_106 = arith.constant 0.000000e+00 : f32
    %226 = vector.broadcast %cst_106 : f32 to vector<2x128xf32>
    %cst_107 = arith.constant 0.000000e+00 : f32
    %227 = vector.broadcast %cst_107 : f32 to vector<2x128xf32>
    %228 = arith.truncf %225 : vector<2x128xf32> to vector<2x128xbf16>
    %cst_108 = arith.constant dense<0.000000e+00> : vector<2x512xf32>
    %229 = tpu.matmul %228, %220, %cst_108 {dimension_numbers = #tpu.dot_dimension_numbers<[1], [0], [0], [1], [0, 0, 1, 1], [], []>} : vector<2x128xbf16>, vector<128x512xbf16>, vector<2x512xf32> -> vector<2x512xf32>
    %230 = arith.truncf %227 : vector<2x128xf32> to vector<2x128xbf16>
    %cst_109 = arith.constant dense<0.000000e+00> : vector<2x512xf32>
    %231 = tpu.matmul %230, %221, %cst_109 {dimension_numbers = #tpu.dot_dimension_numbers<[1], [0], [0], [1], [0, 0, 1, 1], [], []>} : vector<2x128xbf16>, vector<128x512xbf16>, vector<2x512xf32> -> vector<2x512xf32>
    %232 = arith.addf %229, %231 : vector<2x512xf32>
    %233 = arith.addf %232, %224 : vector<2x512xf32>
    %234 = vector.extract_strided_slice %233 {offsets = [0, 0], sizes = [2, 128], strides = [1, 1]} : vector<2x512xf32> to vector<2x128xf32>
    %cst_110 = arith.constant 0.000000e+00 : f32
    %235 = vector.broadcast %cst_110 : f32 to vector<2x128xf32>
    %236 = arith.subf %235, %234 : vector<2x128xf32>
    %237 = math.exp %236 : vector<2x128xf32>
    %cst_111 = arith.constant 1.000000e+00 : f32
    %238 = vector.broadcast %cst_111 : f32 to vector<2x128xf32>
    %239 = arith.addf %238, %237 : vector<2x128xf32>
    %240 = tpu.reciprocal %239 {approx = true} : vector<2x128xf32> -> vector<2x128xf32>
    %241 = vector.extract_strided_slice %233 {offsets = [0, 128], sizes = [2, 128], strides = [1, 1]} : vector<2x512xf32> to vector<2x128xf32>
    %cst_112 = arith.constant 0.000000e+00 : f32
    %242 = vector.broadcast %cst_112 : f32 to vector<2x128xf32>
    %243 = arith.subf %242, %241 : vector<2x128xf32>
    %244 = math.exp %243 : vector<2x128xf32>
    %cst_113 = arith.constant 1.000000e+00 : f32
    %245 = vector.broadcast %cst_113 : f32 to vector<2x128xf32>
    %246 = arith.addf %245, %244 : vector<2x128xf32>
    %247 = tpu.reciprocal %246 {approx = true} : vector<2x128xf32> -> vector<2x128xf32>
    %248 = vector.extract_strided_slice %233 {offsets = [0, 256], sizes = [2, 128], strides = [1, 1]} : vector<2x512xf32> to vector<2x128xf32>
    %249 = math.tanh %248 : vector<2x128xf32>
    %250 = vector.extract_strided_slice %233 {offsets = [0, 384], sizes = [2, 128], strides = [1, 1]} : vector<2x512xf32> to vector<2x128xf32>
    %cst_114 = arith.constant 0.000000e+00 : f32
    %251 = vector.broadcast %cst_114 : f32 to vector<2x128xf32>
    %252 = arith.subf %251, %250 : vector<2x128xf32>
    %253 = math.exp %252 : vector<2x128xf32>
    %cst_115 = arith.constant 1.000000e+00 : f32
    %254 = vector.broadcast %cst_115 : f32 to vector<2x128xf32>
    %255 = arith.addf %254, %253 : vector<2x128xf32>
    %256 = tpu.reciprocal %255 {approx = true} : vector<2x128xf32> -> vector<2x128xf32>
    %257 = arith.mulf %247, %226 : vector<2x128xf32>
    %258 = arith.mulf %240, %249 : vector<2x128xf32>
    %259 = arith.addf %257, %258 : vector<2x128xf32>
    %260 = math.tanh %259 : vector<2x128xf32>
    %261 = arith.mulf %256, %260 : vector<2x128xf32>
    %262 = arith.truncf %261 : vector<2x128xf32> to vector<2x128xbf16>
    %cst_116 = arith.constant dense<0.000000e+00> : vector<2x16xf32>
    %263 = tpu.matmul %262, %216, %cst_116 {dimension_numbers = #tpu.dot_dimension_numbers<[1], [1], [0], [0], [0, 0, 1, 0], [], []>} : vector<2x128xbf16>, vector<16x128xbf16>, vector<2x16xf32> -> vector<2x16xf32>
    %cst_117 = arith.constant -1.000000e+30 : f32
    %264 = vector.broadcast %cst_117 : f32 to vector<2x16xf32>
    %265 = arith.select %219, %263, %264 : vector<2x16xi1>, vector<2x16xf32>
    %cst_118 = arith.constant dense<0xFF800000> : vector<2xf32>
    %266 = vector.multi_reduction <maximumf>, %265, %cst_118 [1] : vector<2x16xf32> to vector<2xf32>
    %267 = vector.shape_cast %266 : vector<2xf32> to vector<2x1xf32>
    %268 = vector.broadcast %267 : vector<2x1xf32> to vector<2x16xf32>
    %269 = arith.subf %265, %268 : vector<2x16xf32>
    %270 = math.exp %269 : vector<2x16xf32>
    %271 = arith.mulf %217, %270 : vector<2x16xf32>
    %cst_119 = arith.constant dense<0.000000e+00> : vector<2xf32>
    %272 = vector.multi_reduction <add>, %271, %cst_119 [1] : vector<2x16xf32> to vector<2xf32>
    %273 = vector.shape_cast %272 : vector<2xf32> to vector<2x1xf32>
    %cst_120 = arith.constant 9.99999968E-21 : f32
    %274 = vector.broadcast %cst_120 : f32 to vector<2x1xf32>
    %275 = arith.maximumf %273, %274 : vector<2x1xf32>
    %276 = arith.truncf %271 : vector<2x16xf32> to vector<2x16xbf16>
    %cst_121 = arith.constant dense<0.000000e+00> : vector<2x128xf32>
    %277 = tpu.matmul %276, %216, %cst_121 {dimension_numbers = #tpu.dot_dimension_numbers<[1], [0], [0], [1], [0, 0, 1, 1], [], []>} : vector<2x16xbf16>, vector<16x128xbf16>, vector<2x128xf32> -> vector<2x128xf32>
    %278 = tpu.reciprocal %275 {approx = true} : vector<2x1xf32> -> vector<2x1xf32>
    %279 = vector.broadcast %278 : vector<2x1xf32> to vector<2x128xf32>
    %280 = arith.mulf %277, %279 : vector<2x128xf32>
    %281 = arith.truncf %261 : vector<2x128xf32> to vector<2x128xbf16>
    %cst_122 = arith.constant dense<0.000000e+00> : vector<2x512xf32>
    %282 = tpu.matmul %281, %220, %cst_122 {dimension_numbers = #tpu.dot_dimension_numbers<[1], [0], [0], [1], [0, 0, 1, 1], [], []>} : vector<2x128xbf16>, vector<128x512xbf16>, vector<2x512xf32> -> vector<2x512xf32>
    %283 = arith.truncf %280 : vector<2x128xf32> to vector<2x128xbf16>
    %cst_123 = arith.constant dense<0.000000e+00> : vector<2x512xf32>
    %284 = tpu.matmul %283, %221, %cst_123 {dimension_numbers = #tpu.dot_dimension_numbers<[1], [0], [0], [1], [0, 0, 1, 1], [], []>} : vector<2x128xbf16>, vector<128x512xbf16>, vector<2x512xf32> -> vector<2x512xf32>
    %285 = arith.addf %282, %284 : vector<2x512xf32>
    %286 = arith.addf %285, %224 : vector<2x512xf32>
    %287 = vector.extract_strided_slice %286 {offsets = [0, 0], sizes = [2, 128], strides = [1, 1]} : vector<2x512xf32> to vector<2x128xf32>
    %cst_124 = arith.constant 0.000000e+00 : f32
    %288 = vector.broadcast %cst_124 : f32 to vector<2x128xf32>
    %289 = arith.subf %288, %287 : vector<2x128xf32>
    %290 = math.exp %289 : vector<2x128xf32>
    %cst_125 = arith.constant 1.000000e+00 : f32
    %291 = vector.broadcast %cst_125 : f32 to vector<2x128xf32>
    %292 = arith.addf %291, %290 : vector<2x128xf32>
    %293 = tpu.reciprocal %292 {approx = true} : vector<2x128xf32> -> vector<2x128xf32>
    %294 = vector.extract_strided_slice %286 {offsets = [0, 128], sizes = [2, 128], strides = [1, 1]} : vector<2x512xf32> to vector<2x128xf32>
    %cst_126 = arith.constant 0.000000e+00 : f32
    %295 = vector.broadcast %cst_126 : f32 to vector<2x128xf32>
    %296 = arith.subf %295, %294 : vector<2x128xf32>
    %297 = math.exp %296 : vector<2x128xf32>
    %cst_127 = arith.constant 1.000000e+00 : f32
    %298 = vector.broadcast %cst_127 : f32 to vector<2x128xf32>
    %299 = arith.addf %298, %297 : vector<2x128xf32>
    %300 = tpu.reciprocal %299 {approx = true} : vector<2x128xf32> -> vector<2x128xf32>
    %301 = vector.extract_strided_slice %286 {offsets = [0, 256], sizes = [2, 128], strides = [1, 1]} : vector<2x512xf32> to vector<2x128xf32>
    %302 = math.tanh %301 : vector<2x128xf32>
    %303 = vector.extract_strided_slice %286 {offsets = [0, 384], sizes = [2, 128], strides = [1, 1]} : vector<2x512xf32> to vector<2x128xf32>
    %cst_128 = arith.constant 0.000000e+00 : f32
    %304 = vector.broadcast %cst_128 : f32 to vector<2x128xf32>
    %305 = arith.subf %304, %303 : vector<2x128xf32>
    %306 = math.exp %305 : vector<2x128xf32>
    %cst_129 = arith.constant 1.000000e+00 : f32
    %307 = vector.broadcast %cst_129 : f32 to vector<2x128xf32>
    %308 = arith.addf %307, %306 : vector<2x128xf32>
    %309 = tpu.reciprocal %308 {approx = true} : vector<2x128xf32> -> vector<2x128xf32>
    %310 = arith.mulf %300, %259 : vector<2x128xf32>
    %311 = arith.mulf %293, %302 : vector<2x128xf32>
    %312 = arith.addf %310, %311 : vector<2x128xf32>
    %313 = math.tanh %312 : vector<2x128xf32>
    %314 = arith.mulf %309, %313 : vector<2x128xf32>
    %315 = arith.truncf %314 : vector<2x128xf32> to vector<2x128xbf16>
    %cst_130 = arith.constant dense<0.000000e+00> : vector<2x16xf32>
    %316 = tpu.matmul %315, %216, %cst_130 {dimension_numbers = #tpu.dot_dimension_numbers<[1], [1], [0], [0], [0, 0, 1, 0], [], []>} : vector<2x128xbf16>, vector<16x128xbf16>, vector<2x16xf32> -> vector<2x16xf32>
    %cst_131 = arith.constant -1.000000e+30 : f32
    %317 = vector.broadcast %cst_131 : f32 to vector<2x16xf32>
    %318 = arith.select %219, %316, %317 : vector<2x16xi1>, vector<2x16xf32>
    %cst_132 = arith.constant dense<0xFF800000> : vector<2xf32>
    %319 = vector.multi_reduction <maximumf>, %318, %cst_132 [1] : vector<2x16xf32> to vector<2xf32>
    %320 = vector.shape_cast %319 : vector<2xf32> to vector<2x1xf32>
    %321 = vector.broadcast %320 : vector<2x1xf32> to vector<2x16xf32>
    %322 = arith.subf %318, %321 : vector<2x16xf32>
    %323 = math.exp %322 : vector<2x16xf32>
    %324 = arith.mulf %217, %323 : vector<2x16xf32>
    %cst_133 = arith.constant dense<0.000000e+00> : vector<2xf32>
    %325 = vector.multi_reduction <add>, %324, %cst_133 [1] : vector<2x16xf32> to vector<2xf32>
    %326 = vector.shape_cast %325 : vector<2xf32> to vector<2x1xf32>
    %cst_134 = arith.constant 9.99999968E-21 : f32
    %327 = vector.broadcast %cst_134 : f32 to vector<2x1xf32>
    %328 = arith.maximumf %326, %327 : vector<2x1xf32>
    %329 = arith.truncf %324 : vector<2x16xf32> to vector<2x16xbf16>
    %cst_135 = arith.constant dense<0.000000e+00> : vector<2x128xf32>
    %330 = tpu.matmul %329, %216, %cst_135 {dimension_numbers = #tpu.dot_dimension_numbers<[1], [0], [0], [1], [0, 0, 1, 1], [], []>} : vector<2x16xbf16>, vector<16x128xbf16>, vector<2x128xf32> -> vector<2x128xf32>
    %331 = tpu.reciprocal %328 {approx = true} : vector<2x1xf32> -> vector<2x1xf32>
    %332 = vector.broadcast %331 : vector<2x1xf32> to vector<2x128xf32>
    %333 = arith.mulf %330, %332 : vector<2x128xf32>
    %334 = arith.truncf %314 : vector<2x128xf32> to vector<2x128xbf16>
    %cst_136 = arith.constant dense<0.000000e+00> : vector<2x512xf32>
    %335 = tpu.matmul %334, %220, %cst_136 {dimension_numbers = #tpu.dot_dimension_numbers<[1], [0], [0], [1], [0, 0, 1, 1], [], []>} : vector<2x128xbf16>, vector<128x512xbf16>, vector<2x512xf32> -> vector<2x512xf32>
    %336 = arith.truncf %333 : vector<2x128xf32> to vector<2x128xbf16>
    %cst_137 = arith.constant dense<0.000000e+00> : vector<2x512xf32>
    %337 = tpu.matmul %336, %221, %cst_137 {dimension_numbers = #tpu.dot_dimension_numbers<[1], [0], [0], [1], [0, 0, 1, 1], [], []>} : vector<2x128xbf16>, vector<128x512xbf16>, vector<2x512xf32> -> vector<2x512xf32>
    %338 = arith.addf %335, %337 : vector<2x512xf32>
    %339 = arith.addf %338, %224 : vector<2x512xf32>
    %340 = vector.extract_strided_slice %339 {offsets = [0, 0], sizes = [2, 128], strides = [1, 1]} : vector<2x512xf32> to vector<2x128xf32>
    %cst_138 = arith.constant 0.000000e+00 : f32
    %341 = vector.broadcast %cst_138 : f32 to vector<2x128xf32>
    %342 = arith.subf %341, %340 : vector<2x128xf32>
    %343 = math.exp %342 : vector<2x128xf32>
    %cst_139 = arith.constant 1.000000e+00 : f32
    %344 = vector.broadcast %cst_139 : f32 to vector<2x128xf32>
    %345 = arith.addf %344, %343 : vector<2x128xf32>
    %346 = tpu.reciprocal %345 {approx = true} : vector<2x128xf32> -> vector<2x128xf32>
    %347 = vector.extract_strided_slice %339 {offsets = [0, 128], sizes = [2, 128], strides = [1, 1]} : vector<2x512xf32> to vector<2x128xf32>
    %cst_140 = arith.constant 0.000000e+00 : f32
    %348 = vector.broadcast %cst_140 : f32 to vector<2x128xf32>
    %349 = arith.subf %348, %347 : vector<2x128xf32>
    %350 = math.exp %349 : vector<2x128xf32>
    %cst_141 = arith.constant 1.000000e+00 : f32
    %351 = vector.broadcast %cst_141 : f32 to vector<2x128xf32>
    %352 = arith.addf %351, %350 : vector<2x128xf32>
    %353 = tpu.reciprocal %352 {approx = true} : vector<2x128xf32> -> vector<2x128xf32>
    %354 = vector.extract_strided_slice %339 {offsets = [0, 256], sizes = [2, 128], strides = [1, 1]} : vector<2x512xf32> to vector<2x128xf32>
    %355 = math.tanh %354 : vector<2x128xf32>
    %356 = vector.extract_strided_slice %339 {offsets = [0, 384], sizes = [2, 128], strides = [1, 1]} : vector<2x512xf32> to vector<2x128xf32>
    %cst_142 = arith.constant 0.000000e+00 : f32
    %357 = vector.broadcast %cst_142 : f32 to vector<2x128xf32>
    %358 = arith.subf %357, %356 : vector<2x128xf32>
    %359 = math.exp %358 : vector<2x128xf32>
    %cst_143 = arith.constant 1.000000e+00 : f32
    %360 = vector.broadcast %cst_143 : f32 to vector<2x128xf32>
    %361 = arith.addf %360, %359 : vector<2x128xf32>
    %362 = tpu.reciprocal %361 {approx = true} : vector<2x128xf32> -> vector<2x128xf32>
    %363 = arith.mulf %353, %312 : vector<2x128xf32>
    %364 = arith.mulf %346, %355 : vector<2x128xf32>
    %365 = arith.addf %363, %364 : vector<2x128xf32>
    %366 = math.tanh %365 : vector<2x128xf32>
    %367 = arith.mulf %362, %366 : vector<2x128xf32>
    %368 = arith.truncf %367 : vector<2x128xf32> to vector<2x128xbf16>
    %cst_144 = arith.constant dense<0.000000e+00> : vector<2x16xf32>
    %369 = tpu.matmul %368, %216, %cst_144 {dimension_numbers = #tpu.dot_dimension_numbers<[1], [1], [0], [0], [0, 0, 1, 0], [], []>} : vector<2x128xbf16>, vector<16x128xbf16>, vector<2x16xf32> -> vector<2x16xf32>
    %cst_145 = arith.constant -1.000000e+30 : f32
    %370 = vector.broadcast %cst_145 : f32 to vector<2x16xf32>
    %371 = arith.select %219, %369, %370 : vector<2x16xi1>, vector<2x16xf32>
    %cst_146 = arith.constant dense<0xFF800000> : vector<2xf32>
    %372 = vector.multi_reduction <maximumf>, %371, %cst_146 [1] : vector<2x16xf32> to vector<2xf32>
    %373 = vector.shape_cast %372 : vector<2xf32> to vector<2x1xf32>
    %374 = vector.broadcast %373 : vector<2x1xf32> to vector<2x16xf32>
    %375 = arith.subf %371, %374 : vector<2x16xf32>
    %376 = math.exp %375 : vector<2x16xf32>
    %377 = arith.mulf %217, %376 : vector<2x16xf32>
    %cst_147 = arith.constant dense<0.000000e+00> : vector<2xf32>
    %378 = vector.multi_reduction <add>, %377, %cst_147 [1] : vector<2x16xf32> to vector<2xf32>
    %379 = vector.shape_cast %378 : vector<2xf32> to vector<2x1xf32>
    %cst_148 = arith.constant 9.99999968E-21 : f32
    %380 = vector.broadcast %cst_148 : f32 to vector<2x1xf32>
    %381 = arith.maximumf %379, %380 : vector<2x1xf32>
    %382 = arith.truncf %377 : vector<2x16xf32> to vector<2x16xbf16>
    %cst_149 = arith.constant dense<0.000000e+00> : vector<2x128xf32>
    %383 = tpu.matmul %382, %216, %cst_149 {dimension_numbers = #tpu.dot_dimension_numbers<[1], [0], [0], [1], [0, 0, 1, 1], [], []>} : vector<2x16xbf16>, vector<16x128xbf16>, vector<2x128xf32> -> vector<2x128xf32>
    %384 = tpu.reciprocal %381 {approx = true} : vector<2x1xf32> -> vector<2x1xf32>
    %385 = vector.broadcast %384 : vector<2x1xf32> to vector<2x128xf32>
    %386 = arith.mulf %383, %385 : vector<2x128xf32>
    %c0_150 = arith.constant 0 : index
    %c0_151 = arith.constant 0 : index
    %387 = vector.load %arg26[%c0_150, %c0_151] : memref<128x128xbf16, #tpu.memory_space<vmem>>, vector<128x128xbf16>
    %388 = arith.truncf %367 : vector<2x128xf32> to vector<2x128xbf16>
    %cst_152 = arith.constant dense<0.000000e+00> : vector<2x128xf32>
    %389 = tpu.matmul %388, %387, %cst_152 {dimension_numbers = #tpu.dot_dimension_numbers<[1], [0], [0], [1], [0, 0, 1, 1], [], []>} : vector<2x128xbf16>, vector<128x128xbf16>, vector<2x128xf32> -> vector<2x128xf32>
    %c0_153 = arith.constant 0 : index
    %c0_154 = arith.constant 0 : index
    %390 = vector.load %arg27[%c0_153, %c0_154] : memref<128x128xbf16, #tpu.memory_space<vmem>>, vector<128x128xbf16>
    %391 = arith.truncf %386 : vector<2x128xf32> to vector<2x128xbf16>
    %cst_155 = arith.constant dense<0.000000e+00> : vector<2x128xf32>
    %392 = tpu.matmul %391, %390, %cst_155 {dimension_numbers = #tpu.dot_dimension_numbers<[1], [0], [0], [1], [0, 0, 1, 1], [], []>} : vector<2x128xbf16>, vector<128x128xbf16>, vector<2x128xf32> -> vector<2x128xf32>
    %393 = arith.addf %389, %392 : vector<2x128xf32>
    %c0_156 = arith.constant 0 : index
    %c0_157 = arith.constant 0 : index
    %394 = vector.load %arg28[%c0_156, %c0_157] : memref<1x128xf32, #tpu.memory_space<vmem>>, vector<1x128xf32>
    %395 = vector.broadcast %394 : vector<1x128xf32> to vector<2x128xf32>
    %396 = arith.addf %393, %395 : vector<2x128xf32>
    %cst_158 = arith.constant 0.000000e+00 : f32
    %397 = vector.broadcast %cst_158 : f32 to vector<2x128xf32>
    %398 = arith.maximumf %396, %397 : vector<2x128xf32>
    %c0_159 = arith.constant 0 : index
    %c0_160 = arith.constant 0 : index
    %399 = vector.load %arg29[%c0_159, %c0_160] : memref<2x128xf32, #tpu.memory_space<vmem>>, vector<2x128xf32>
    tpu.vector_store %arg29[%c0_159, %c0_160], %398 {strides = array<i32>} : memref<2x128xf32, #tpu.memory_space<vmem>>, vector<2x128xf32>,
    return
  }
  func.func @transform_0(%arg0: i32) -> (i32, i32) {
    %c0_i32 = arith.constant 0 : i32
    %c0_i32_0 = arith.constant 0 : i32
    %c0_i32_1 = arith.constant 0 : i32
    return %c0_i32, %c0_i32_0 : i32, i32
  }
  func.func @transform_1(%arg0: i32) -> (i32, i32) {
    %c0_i32 = arith.constant 0 : i32
    %c0_i32_0 = arith.constant 0 : i32
    %c0_i32_1 = arith.constant 0 : i32
    return %c0_i32, %c0_i32_0 : i32, i32
  }
  func.func @transform_2(%arg0: i32) -> (i32, i32) {
    %c0_i32 = arith.constant 0 : i32
    %c0_i32_0 = arith.constant 0 : i32
    %c0_i32_1 = arith.constant 0 : i32
    return %c0_i32, %c0_i32_0 : i32, i32
  }
  func.func @transform_3(%arg0: i32) -> (i32, i32) {
    %c0_i32 = arith.constant 0 : i32
    %c0_i32_0 = arith.constant 0 : i32
    %c0_i32_1 = arith.constant 0 : i32
    return %c0_i32, %c0_i32_0 : i32, i32
  }
  func.func @transform_4(%arg0: i32) -> (i32, i32) {
    %c0_i32 = arith.constant 0 : i32
    %c0_i32_0 = arith.constant 0 : i32
    %c0_i32_1 = arith.constant 0 : i32
    return %c0_i32, %c0_i32_0 : i32, i32
  }
  func.func @transform_5(%arg0: i32) -> (i32, i32) {
    %c0_i32 = arith.constant 0 : i32
    %c0_i32_0 = arith.constant 0 : i32
    %c0_i32_1 = arith.constant 0 : i32
    return %c0_i32, %c0_i32_0 : i32, i32
  }
  func.func @transform_6(%arg0: i32) -> (i32, i32) {
    %c0_i32 = arith.constant 0 : i32
    %c0_i32_0 = arith.constant 0 : i32
    %c0_i32_1 = arith.constant 0 : i32
    return %c0_i32, %c0_i32_0 : i32, i32
  }
  func.func @transform_7(%arg0: i32) -> (i32, i32) {
    %c0_i32 = arith.constant 0 : i32
    %c0_i32_0 = arith.constant 0 : i32
    %c0_i32_1 = arith.constant 0 : i32
    return %c0_i32, %c0_i32_0 : i32, i32
  }
  func.func @transform_8(%arg0: i32) -> (i32, i32) {
    %c0_i32 = arith.constant 0 : i32
    %c0_i32_0 = arith.constant 0 : i32
    %c0_i32_1 = arith.constant 0 : i32
    return %c0_i32, %c0_i32_0 : i32, i32
  }
  func.func @transform_9(%arg0: i32) -> (i32, i32) {
    %c0_i32 = arith.constant 0 : i32
    %c0_i32_0 = arith.constant 0 : i32
    %c0_i32_1 = arith.constant 0 : i32
    return %c0_i32, %c0_i32_0 : i32, i32
  }
  func.func @transform_10(%arg0: i32) -> (i32, i32) {
    %c0_i32 = arith.constant 0 : i32
    %c0_i32_0 = arith.constant 0 : i32
    %c0_i32_1 = arith.constant 0 : i32
    return %c0_i32, %c0_i32_0 : i32, i32
  }
  func.func @transform_11(%arg0: i32) -> (i32, i32) {
    %c0_i32 = arith.constant 0 : i32
    %c0_i32_0 = arith.constant 0 : i32
    %c0_i32_1 = arith.constant 0 : i32
    return %c0_i32, %c0_i32_0 : i32, i32
  }
  func.func @transform_12(%arg0: i32) -> (i32, i32) {
    %c0_i32 = arith.constant 0 : i32
    %c0_i32_0 = arith.constant 0 : i32
    %c0_i32_1 = arith.constant 0 : i32
    return %c0_i32, %c0_i32_0 : i32, i32
  }
  func.func @transform_13(%arg0: i32) -> (i32, i32) {
    %c0_i32 = arith.constant 0 : i32
    %c0_i32_0 = arith.constant 0 : i32
    %c0_i32_1 = arith.constant 0 : i32
    return %c0_i32, %c0_i32_0 : i32, i32
  }
  func.func @transform_14(%arg0: i32) -> (i32, i32) {
    %c0_i32 = arith.constant 0 : i32
    %c0_i32_0 = arith.constant 0 : i32
    %c0_i32_1 = arith.constant 0 : i32
    return %c0_i32, %c0_i32_0 : i32, i32
  }
  func.func @transform_15(%arg0: i32) -> (i32, i32) {
    %c0_i32 = arith.constant 0 : i32
    %c0_i32_0 = arith.constant 0 : i32
    %c0_i32_1 = arith.constant 0 : i32
    return %c0_i32, %c0_i32_0 : i32, i32
  }
  func.func @transform_16(%arg0: i32) -> (i32, i32) {
    %c0_i32 = arith.constant 0 : i32
    %c0_i32_0 = arith.constant 0 : i32
    %c0_i32_1 = arith.constant 0 : i32
    return %c0_i32, %c0_i32_0 : i32, i32
  }
  func.func @transform_17(%arg0: i32) -> (i32, i32) {
    %c0_i32 = arith.constant 0 : i32
    %c0_i32_0 = arith.constant 0 : i32
    %c0_i32_1 = arith.constant 0 : i32
    return %c0_i32, %c0_i32_0 : i32, i32
  }
  func.func @transform_18(%arg0: i32) -> (i32, i32) {
    %c0_i32 = arith.constant 0 : i32
    %c0_i32_0 = arith.constant 0 : i32
    %c0_i32_1 = arith.constant 0 : i32
    return %c0_i32, %c0_i32_0 : i32, i32
  }
  func.func @transform_19(%arg0: i32) -> (i32, i32) {
    %c0_i32 = arith.constant 0 : i32
    %c0_i32_0 = arith.constant 0 : i32
    %c0_i32_1 = arith.constant 0 : i32
    return %c0_i32, %c0_i32_0 : i32, i32
  }
  func.func @transform_20(%arg0: i32) -> (i32, i32) {
    %c0_i32 = arith.constant 0 : i32
    %c0_i32_0 = arith.constant 0 : i32
    %c0_i32_1 = arith.constant 0 : i32
    return %c0_i32, %c0_i32_0 : i32, i32
  }
  func.func @transform_21(%arg0: i32) -> (i32, i32) {
    %c0_i32 = arith.constant 0 : i32
    %c0_i32_0 = arith.constant 0 : i32
    %c0_i32_1 = arith.constant 0 : i32
    return %c0_i32, %c0_i32_0 : i32, i32
  }
  func.func @transform_22(%arg0: i32) -> (i32, i32) {
    %c0_i32 = arith.constant 0 : i32
    %c0_i32_0 = arith.constant 0 : i32
    %c0_i32_1 = arith.constant 0 : i32
    return %c0_i32, %c0_i32_0 : i32, i32
  }
  func.func @transform_23(%arg0: i32) -> (i32, i32) {
    %c0_i32 = arith.constant 0 : i32
    %c0_i32_0 = arith.constant 0 : i32
    %c0_i32_1 = arith.constant 0 : i32
    return %c0_i32, %c0_i32_0 : i32, i32
  }
  func.func @transform_24(%arg0: i32) -> (i32, i32) {
    %c0_i32 = arith.constant 0 : i32
    %c0_i32_0 = arith.constant 0 : i32
    %c0_i32_1 = arith.constant 0 : i32
    return %c0_i32, %c0_i32_0 : i32, i32
  }
  func.func @transform_25(%arg0: i32) -> (i32, i32) {
    %c0_i32 = arith.constant 0 : i32
    %c0_i32_0 = arith.constant 0 : i32
    %c0_i32_1 = arith.constant 0 : i32
    return %c0_i32, %c0_i32_0 : i32, i32
  }
  func.func @transform_26(%arg0: i32) -> (i32, i32) {
    %c0_i32 = arith.constant 0 : i32
    %c0_i32_0 = arith.constant 0 : i32
    %c0_i32_1 = arith.constant 0 : i32
    return %c0_i32, %c0_i32_0 : i32, i32
  }
  func.func @transform_27(%arg0: i32) -> (i32, i32) {
    %c0_i32 = arith.constant 0 : i32
    %c0_i32_0 = arith.constant 0 : i32
    %c0_i32_1 = arith.constant 0 : i32
    return %c0_i32, %c0_i32_0 : i32, i32
  }
  func.func @transform_28(%arg0: i32) -> (i32, i32) {
    %c0_i32 = arith.constant 0 : i32
    %c0_i32_0 = arith.constant 0 : i32
    %c0_i32_1 = arith.constant 0 : i32
    return %c0_i32, %c0_i32_0 : i32, i32
  }
}

</mosaic_0001>

<llo_original>
// kernel: tpu_custom_call.1
$region0: #{tpu_custom_call.1}
  #allocation0 [shape = 'u32[]', space=smem, size = 0x4, offset = 0x4, fixed_abs, tag = 'smem constant byte address 0x4 - core index']
  #allocation1 [shape = 'u32[144,128]{1,0:T(1,128)}', space=vmem, size = 0x12000, scoped, tag = 'internal scratch']
  %s0 = inlined_call_operand.hbm [shape: bf16[16,128], index: 0, kind: input, shape index: {}]
  %s1 = inlined_call_operand.hbm [shape: bf16[128,128], index: 1, kind: input, shape index: {}]
  %s2 = inlined_call_operand.hbm [shape: f32[1,128], index: 2, kind: input, shape index: {}]
  %s3 = inlined_call_operand.hbm [shape: bf16[32,128], index: 3, kind: input, shape index: {}]
  %s4 = inlined_call_operand.vmem [shape: bf16[128,128], index: 4, kind: input, shape index: {}]
  %s5 = inlined_call_operand.hbm [shape: f32[1,128], index: 5, kind: input, shape index: {}]
  %s6 = inlined_call_operand.hbm [shape: bf16[128,128], index: 6, kind: input, shape index: {}]
  %s7 = inlined_call_operand.hbm [shape: f32[1,128], index: 7, kind: input, shape index: {}]
  %s8 = inlined_call_operand.vmem [shape: f32[32,1], index: 8, kind: input, shape index: {}]
  %s9 = inlined_call_operand.vmem [shape: bf16[32,16], index: 9, kind: input, shape index: {}]
  %s10 = inlined_call_operand.hbm [shape: bf16[16,32], index: 10, kind: input, shape index: {}]
  %s11 = inlined_call_operand.hbm [shape: bf16[128,128], index: 11, kind: input, shape index: {}]
  %s12 = inlined_call_operand.hbm [shape: bf16[128,128], index: 12, kind: input, shape index: {}]
  %s13 = inlined_call_operand.hbm [shape: f32[1,128], index: 13, kind: input, shape index: {}]
  %s14 = inlined_call_operand.hbm [shape: bf16[128,128], index: 14, kind: input, shape index: {}]
  %s15 = inlined_call_operand.hbm [shape: bf16[256,256], index: 15, kind: input, shape index: {}]
  %s16 = inlined_call_operand.hbm [shape: bf16[128,128], index: 16, kind: input, shape index: {}]
  %s17 = inlined_call_operand.hbm [shape: bf16[128,128], index: 17, kind: input, shape index: {}]
  %s18 = inlined_call_operand.hbm [shape: f32[1,256], index: 18, kind: input, shape index: {}]
  %s19 = inlined_call_operand.hbm [shape: f32[1,128], index: 19, kind: input, shape index: {}]
  %s20 = inlined_call_operand.hbm [shape: f32[1,128], index: 20, kind: input, shape index: {}]
  %s21 = inlined_call_operand.vmem [shape: f32[2,16], index: 21, kind: input, shape index: {}]
  %s22 = inlined_call_operand.hbm [shape: bf16[128,512], index: 22, kind: input, shape index: {}]
  %s23 = inlined_call_operand.hbm [shape: bf16[128,512], index: 23, kind: input, shape index: {}]
  %s24 = inlined_call_operand.vmem [shape: f32[1,512], index: 24, kind: input, shape index: {}]
  %s25 = inlined_call_operand.vmem [shape: bf16[128,128], index: 25, kind: input, shape index: {}]
  %s26 = inlined_call_operand.hbm [shape: bf16[128,128], index: 26, kind: input, shape index: {}]
  %s27 = inlined_call_operand.vmem [shape: f32[1,128], index: 27, kind: input, shape index: {}]
  %s28 = inlined_call_operand.hbm [shape: f32[2,128], index: 28, kind: output, shape index: {}]
  %s29 = sld [smem:[#allocation0]]
  $region206: #{tpu_custom_call.1} parent=0
    _
  %s31 = ssub.s32 1, %s29
  %s32 = scalar_select 0, %s31, %s29
  $region1: #{tpu_custom_call.1} parent=0
    #allocation2 [shape = 'u8[4096]{0}', space=vmem, size = 0x1000, scoped, tag = 'input window, operand 0, single buffered']
    #allocation3 [shape = 's32[1]{0}', space=sflag, size = 0x4, scoped, tag = 'scoped memory for tpu_custom_call.1']
    #allocation4 [shape = 's32[1]{0}', space=sflag, size = 0x4, scoped, tag = 'scoped memory for tpu_custom_call.1']
    #allocation5 [shape = 'u8[32768]{0}', space=vmem, size = 0x8000, scoped, tag = 'input window, operand 1, single buffered']
    #allocation6 [shape = 's32[1]{0}', space=sflag, size = 0x4, scoped, tag = 'scoped memory for tpu_custom_call.1']
    #allocation7 [shape = 'u8[512]{0}', space=vmem, size = 0x400, scoped, tag = 'input window, operand 2, single buffered']
    #allocation8 [shape = 'u8[8192]{0}', space=vmem, size = 0x2000, scoped, tag = 'input window, operand 3, single buffered']
    #allocation9 [shape = 's32[1]{0}', space=sflag, size = 0x4, scoped, tag = 'scoped memory for tpu_custom_call.1']
    #allocation10 [shape = 'u8[512]{0}', space=vmem, size = 0x400, scoped, tag = 'input window, operand 5, single buffered']
    #allocation11 [shape = 'u8[32768]{0}', space=vmem, size = 0x8000, scoped, tag = 'input window, operand 6, single buffered']
    #allocation12 [shape = 's32[1]{0}', space=sflag, size = 0x4, scoped, tag = 'scoped memory for tpu_custom_call.1']
    #allocation13 [shape = 'u8[512]{0}', space=vmem, size = 0x400, scoped, tag = 'input window, operand 7, single buffered']
    #allocation14 [shape = 'u8[4096]{0}', space=vmem, size = 0x1000, scoped, tag = 'input window, operand 10, single buffered']
    #allocation15 [shape = 's32[1]{0}', space=sflag, size = 0x4, scoped, tag = 'scoped memory for tpu_custom_call.1']
    #allocation16 [shape = 'u8[32768]{0}', space=vmem, size = 0x8000, scoped, tag = 'input window, operand 11, single buffered']
    #allocation17 [shape = 'u8[32768]{0}', space=vmem, size = 0x8000, scoped, tag = 'input window, operand 12, single buffered']
    #allocation18 [shape = 's32[1]{0}', space=sflag, size = 0x4, scoped, tag = 'scoped memory for tpu_custom_call.1']
    #allocation19 [shape = 'u8[512]{0}', space=vmem, size = 0x400, scoped, tag = 'input window, operand 13, single buffered']
    #allocation20 [shape = 'u8[32768]{0}', space=vmem, size = 0x8000, scoped, tag = 'input window, operand 14, single buffered']
    #allocation21 [shape = 's32[1]{0}', space=sflag, size = 0x4, scoped, tag = 'scoped memory for tpu_custom_call.1']
    #allocation22 [shape = 'u8[131072]{0}', space=vmem, size = 0x20000, scoped, tag = 'input window, operand 15, single buffered']
    #allocation23 [shape = 'u8[32768]{0}', space=vmem, size = 0x8000, scoped, tag = 'input window, operand 16, single buffered']
    #allocation24 [shape = 's32[1]{0}', space=sflag, size = 0x4, scoped, tag = 'scoped memory for tpu_custom_call.1']
    #allocation25 [shape = 'u8[32768]{0}', space=vmem, size = 0x8000, scoped, tag = 'input window, operand 17, single buffered']
    #allocation26 [shape = 'u8[1024]{0}', space=vmem, size = 0x400, scoped, tag = 'input window, operand 18, single buffered']
    #allocation27 [shape = 's32[1]{0}', space=sflag, size = 0x4, scoped, tag = 'scoped memory for tpu_custom_call.1']
    #allocation28 [shape = 'u8[512]{0}', space=vmem, size = 0x400, scoped, tag = 'input window, operand 19, single buffered']
    #allocation29 [shape = 'u8[512]{0}', space=vmem, size = 0x400, scoped, tag = 'input window, operand 20, single buffered']
    #allocation30 [shape = 's32[1]{0}', space=sflag, size = 0x4, scoped, tag = 'scoped memory for tpu_custom_call.1']
    #allocation31 [shape = 'u8[131072]{0}', space=vmem, size = 0x20000, scoped, tag = 'input window, operand 22, single buffered']
    #allocation32 [shape = 'u8[131072]{0}', space=vmem, size = 0x20000, scoped, tag = 'input window, operand 23, single buffered']
    #allocation33 [shape = 's32[1]{0}', space=sflag, size = 0x4, scoped, tag = 'scoped memory for tpu_custom_call.1']
    #allocation34 [shape = 'u8[32768]{0}', space=vmem, size = 0x8000, scoped, tag = 'input window, operand 26, single buffered']
    #allocation35 [shape = 'u8[1024]{0}', space=vmem, size = 0x400, scoped, tag = 'output window, operand 0, single buffered']
    %33 = vsyncpa [#allocation3], 0
    %34 = vsyncpa [#allocation6], 0
    %35 = vsyncpa [#allocation9], 0
    %36 = vsyncpa [#allocation12], 0
    %37 = vsyncpa [#allocation15], 0
    %38 = vsyncpa [#allocation18], 0
    %39 = vsyncpa [#allocation21], 0
    %40 = vsyncpa [#allocation24], 0
    %41 = vsyncpa [#allocation27], 0
    %42 = vsyncpa [#allocation30], 0
    %43 = vsyncpa [#allocation33], 0
    %44 = vsyncpa [#allocation4], 0
    // Predicated region
    $region2: #{tpu_custom_call.1} parent=1 // pred_check
      _
    $region3: #{tpu_custom_call.1} parent=1 // pred_check_branch
      %46 = sbr.rel (0) target = $region5
    $region4: #{tpu_custom_call.1} parent=1 // pred_region
      %s48 = ssub.s32 128, 128
      %49 = vsyncadd [#allocation3], %s48
      %s50 = sshll.u32 [#allocation2], 4
      %s51 = int_to_ptr.vmem [resolvable:$true] %s50
      %56 = dma.hbm_to_vmem [thread:$0]  %s0, 128, %s51, [#allocation3], 64, 64, 4
    $region5: #{tpu_custom_call.1} parent=1 // pred_fallthru
      _
    // Predicated region
    $region6: #{tpu_custom_call.1} parent=1 // pred_check
      _
    $region7: #{tpu_custom_call.1} parent=1 // pred_check_branch
      %58 = sbr.rel (0) target = $region9
    $region8: #{tpu_custom_call.1} parent=1 // pred_region
      %s60 = ssub.s32 1024, 1024
      %61 = vsyncadd [#allocation6], %s60
      %s62 = sshll.u32 [#allocation5], 4
      %s63 = int_to_ptr.vmem [resolvable:$true] %s62
      %68 = dma.hbm_to_vmem [thread:$0]  %s1, 1024, %s63, [#allocation6], 64, 64, 4
    $region9: #{tpu_custom_call.1} parent=1 // pred_fallthru
      _
    // Predicated region
    $region10: #{tpu_custom_call.1} parent=1 // pred_check
      _
    $region11: #{tpu_custom_call.1} parent=1 // pred_check_branch
      %70 = sbr.rel (0) target = $region13
    $region12: #{tpu_custom_call.1} parent=1 // pred_region
      %s72 = ssub.s32 16, 16
      %73 = vsyncadd [#allocation6], %s72
      %s75 = sshll.u32 [#allocation7], 4
      %s76 = int_to_ptr.vmem [resolvable:$true] %s75
      %78 = dma.hbm_to_vmem [thread:$0]  %s2, 16, %s76, [#allocation6]
    $region13: #{tpu_custom_call.1} parent=1 // pred_fallthru
      _
    // Predicated region
    $region14: #{tpu_custom_call.1} parent=1 // pred_check
      _
    $region15: #{tpu_custom_call.1} parent=1 // pred_check_branch
      %80 = sbr.rel (0) target = $region17
    $region16: #{tpu_custom_call.1} parent=1 // pred_region
      %s82 = ssub.s32 256, 256
      %83 = vsyncadd [#allocation9], %s82
      %s84 = sshll.u32 [#allocation8], 4
      %s85 = int_to_ptr.vmem [resolvable:$true] %s84
      %90 = dma.hbm_to_vmem [thread:$0]  %s3, 256, %s85, [#allocation9], 64, 64, 4
    $region17: #{tpu_custom_call.1} parent=1 // pred_fallthru
      _
    // Predicated region
    $region18: #{tpu_custom_call.1} parent=1 // pred_check
      _
    $region19: #{tpu_custom_call.1} parent=1 // pred_check_branch
      %92 = sbr.rel (0) target = $region21
    $region20: #{tpu_custom_call.1} parent=1 // pred_region
      _
    $region21: #{tpu_custom_call.1} parent=1 // pred_fallthru
      _
    // Predicated region
    $region22: #{tpu_custom_call.1} parent=1 // pred_check
      _
    $region23: #{tpu_custom_call.1} parent=1 // pred_check_branch
      %94 = sbr.rel (0) target = $region25
    $region24: #{tpu_custom_call.1} parent=1 // pred_region
      %s96 = ssub.s32 16, 16
      %97 = vsyncadd [#allocation9], %s96
      %s99 = sshll.u32 [#allocation10], 4
      %s100 = int_to_ptr.vmem [resolvable:$true] %s99
      %102 = dma.hbm_to_vmem [thread:$0]  %s5, 16, %s100, [#allocation9]
    $region25: #{tpu_custom_call.1} parent=1 // pred_fallthru
      _
    // Predicated region
    $region26: #{tpu_custom_call.1} parent=1 // pred_check
      _
    $region27: #{tpu_custom_call.1} parent=1 // pred_check_branch
      %104 = sbr.rel (0) target = $region29
    $region28: #{tpu_custom_call.1} parent=1 // pred_region
      %s106 = ssub.s32 1024, 1024
      %107 = vsyncadd [#allocation12], %s106
      %s108 = sshll.u32 [#allocation11], 4
      %s109 = int_to_ptr.vmem [resolvable:$true] %s108
      %114 = dma.hbm_to_vmem [thread:$0]  %s6, 1024, %s109, [#allocation12], 64, 64, 4
    $region29: #{tpu_custom_call.1} parent=1 // pred_fallthru
      _
    // Predicated region
    $region30: #{tpu_custom_call.1} parent=1 // pred_check
      _
    $region31: #{tpu_custom_call.1} parent=1 // pred_check_branch
      %116 = sbr.rel (0) target = $region33
    $region32: #{tpu_custom_call.1} parent=1 // pred_region
      %s118 = ssub.s32 16, 16
      %119 = vsyncadd [#allocation12], %s118
      %s121 = sshll.u32 [#allocation13], 4
      %s122 = int_to_ptr.vmem [resolvable:$true] %s121
      %124 = dma.hbm_to_vmem [thread:$0]  %s7, 16, %s122, [#allocation12]
    $region33: #{tpu_custom_call.1} parent=1 // pred_fallthru
      _
    // Predicated region
    $region34: #{tpu_custom_call.1} parent=1 // pred_check
      _
    $region35: #{tpu_custom_call.1} parent=1 // pred_check_branch
      %126 = sbr.rel (0) target = $region37
    $region36: #{tpu_custom_call.1} parent=1 // pred_region
      _
    $region37: #{tpu_custom_call.1} parent=1 // pred_fallthru
      _
    // Predicated region
    $region38: #{tpu_custom_call.1} parent=1 // pred_check
      _
    $region39: #{tpu_custom_call.1} parent=1 // pred_check_branch
      %128 = sbr.rel (0) target = $region41
    $region40: #{tpu_custom_call.1} parent=1 // pred_region
      _
    $region41: #{tpu_custom_call.1} parent=1 // pred_fallthru
      _
    // Predicated region
    $region42: #{tpu_custom_call.1} parent=1 // pred_check
      _
    $region43: #{tpu_custom_call.1} parent=1 // pred_check_branch
      %130 = sbr.rel (0) target = $region45
    $region44: #{tpu_custom_call.1} parent=1 // pred_region
      %s132 = ssub.s32 128, 128
      %133 = vsyncadd [#allocation15], %s132
      %s134 = sshll.u32 [#allocation14], 4
      %s135 = int_to_ptr.vmem [resolvable:$true] %s134
      %140 = dma.hbm_to_vmem [thread:$0]  %s10, 128, %s135, [#allocation15], 64, 64, 4
    $region45: #{tpu_custom_call.1} parent=1 // pred_fallthru
      _
    // Predicated region
    $region46: #{tpu_custom_call.1} parent=1 // pred_check
      _
    $region47: #{tpu_custom_call.1} parent=1 // pred_check_branch
      %142 = sbr.rel (0) target = $region49
    $region48: #{tpu_custom_call.1} parent=1 // pred_region
      %s144 = ssub.s32 1024, 1024
      %145 = vsyncadd [#allocation15], %s144
      %s146 = sshll.u32 [#allocation16], 4
      %s147 = int_to_ptr.vmem [resolvable:$true] %s146
      %152 = dma.hbm_to_vmem [thread:$0]  %s11, 1024, %s147, [#allocation15], 64, 64, 4
    $region49: #{tpu_custom_call.1} parent=1 // pred_fallthru
      _
    // Predicated region
    $region50: #{tpu_custom_call.1} parent=1 // pred_check
      _
    $region51: #{tpu_custom_call.1} parent=1 // pred_check_branch
      %154 = sbr.rel (0) target = $region53
    $region52: #{tpu_custom_call.1} parent=1 // pred_region
      %s156 = ssub.s32 1024, 1024
      %157 = vsyncadd [#allocation18], %s156
      %s158 = sshll.u32 [#allocation17], 4
      %s159 = int_to_ptr.vmem [resolvable:$true] %s158
      %164 = dma.hbm_to_vmem [thread:$0]  %s12, 1024, %s159, [#allocation18], 64, 64, 4
    $region53: #{tpu_custom_call.1} parent=1 // pred_fallthru
      _
    // Predicated region
    $region54: #{tpu_custom_call.1} parent=1 // pred_check
      _
    $region55: #{tpu_custom_call.1} parent=1 // pred_check_branch
      %166 = sbr.rel (0) target = $region57
    $region56: #{tpu_custom_call.1} parent=1 // pred_region
      %s168 = ssub.s32 16, 16
      %169 = vsyncadd [#allocation18], %s168
      %s171 = sshll.u32 [#allocation19], 4
      %s172 = int_to_ptr.vmem [resolvable:$true] %s171
      %174 = dma.hbm_to_vmem [thread:$0]  %s13, 16, %s172, [#allocation18]
    $region57: #{tpu_custom_call.1} parent=1 // pred_fallthru
      _
    // Predicated region
    $region58: #{tpu_custom_call.1} parent=1 // pred_check
      _
    $region59: #{tpu_custom_call.1} parent=1 // pred_check_branch
      %176 = sbr.rel (0) target = $region61
    $region60: #{tpu_custom_call.1} parent=1 // pred_region
      %s178 = ssub.s32 1024, 1024
      %179 = vsyncadd [#allocation21], %s178
      %s180 = sshll.u32 [#allocation20], 4
      %s181 = int_to_ptr.vmem [resolvable:$true] %s180
      %186 = dma.hbm_to_vmem [thread:$0]  %s14, 1024, %s181, [#allocation21], 64, 64, 4
    $region61: #{tpu_custom_call.1} parent=1 // pred_fallthru
      _
    // Predicated region
    $region62: #{tpu_custom_call.1} parent=1 // pred_check
      _
    $region63: #{tpu_custom_call.1} parent=1 // pred_check_branch
      %188 = sbr.rel (0) target = $region65
    $region64: #{tpu_custom_call.1} parent=1 // pred_region
      %s190 = ssub.s32 4096, 4096
      %191 = vsyncadd [#allocation21], %s190
      %s192 = sshll.u32 [#allocation22], 4
      %s193 = int_to_ptr.vmem [resolvable:$true] %s192
      %198 = dma.hbm_to_vmem [thread:$0]  %s15, 4096, %s193, [#allocation21], 128, 128, 8
    $region65: #{tpu_custom_call.1} parent=1 // pred_fallthru
      _
    // Predicated region
    $region66: #{tpu_custom_call.1} parent=1 // pred_check
      _
    $region67: #{tpu_custom_call.1} parent=1 // pred_check_branch
      %200 = sbr.rel (0) target = $region69
    $region68: #{tpu_custom_call.1} parent=1 // pred_region
      %s202 = ssub.s32 1024, 1024
      %203 = vsyncadd [#allocation24], %s202
      %s204 = sshll.u32 [#allocation23], 4
      %s205 = int_to_ptr.vmem [resolvable:$true] %s204
      %210 = dma.hbm_to_vmem [thread:$0]  %s16, 1024, %s205, [#allocation24], 64, 64, 4
    $region69: #{tpu_custom_call.1} parent=1 // pred_fallthru
      _
    // Predicated region
    $region70: #{tpu_custom_call.1} parent=1 // pred_check
      _
    $region71: #{tpu_custom_call.1} parent=1 // pred_check_branch
      %212 = sbr.rel (0) target = $region73
    $region72: #{tpu_custom_call.1} parent=1 // pred_region
      %s214 = ssub.s32 1024, 1024
      %215 = vsyncadd [#allocation24], %s214
      %s216 = sshll.u32 [#allocation25], 4
      %s217 = int_to_ptr.vmem [resolvable:$true] %s216
      %222 = dma.hbm_to_vmem [thread:$0]  %s17, 1024, %s217, [#allocation24], 64, 64, 4
    $region73: #{tpu_custom_call.1} parent=1 // pred_fallthru
      _
    // Predicated region
    $region74: #{tpu_custom_call.1} parent=1 // pred_check
      _
    $region75: #{tpu_custom_call.1} parent=1 // pred_check_branch
      %224 = sbr.rel (0) target = $region77
    $region76: #{tpu_custom_call.1} parent=1 // pred_region
      %s226 = ssub.s32 32, 32
      %227 = vsyncadd [#allocation27], %s226
      %s229 = sshll.u32 [#allocation26], 4
      %s230 = int_to_ptr.vmem [resolvable:$true] %s229
      %232 = dma.hbm_to_vmem [thread:$0]  %s18, 32, %s230, [#allocation27]
    $region77: #{tpu_custom_call.1} parent=1 // pred_fallthru
      _
    // Predicated region
    $region78: #{tpu_custom_call.1} parent=1 // pred_check
      _
    $region79: #{tpu_custom_call.1} parent=1 // pred_check_branch
      %234 = sbr.rel (0) target = $region81
    $region80: #{tpu_custom_call.1} parent=1 // pred_region
      %s236 = ssub.s32 16, 16
      %237 = vsyncadd [#allocation27], %s236
      %s239 = sshll.u32 [#allocation28], 4
      %s240 = int_to_ptr.vmem [resolvable:$true] %s239
      %242 = dma.hbm_to_vmem [thread:$0]  %s19, 16, %s240, [#allocation27]
    $region81: #{tpu_custom_call.1} parent=1 // pred_fallthru
      _
    // Predicated region
    $region82: #{tpu_custom_call.1} parent=1 // pred_check
      _
    $region83: #{tpu_custom_call.1} parent=1 // pred_check_branch
      %244 = sbr.rel (0) target = $region85
    $region84: #{tpu_custom_call.1} parent=1 // pred_region
      %s246 = ssub.s32 16, 16
      %247 = vsyncadd [#allocation30], %s246
      %s249 = sshll.u32 [#allocation29], 4
      %s250 = int_to_ptr.vmem [resolvable:$true] %s249
      %252 = dma.hbm_to_vmem [thread:$0]  %s20, 16, %s250, [#allocation30]
    $region85: #{tpu_custom_call.1} parent=1 // pred_fallthru
      _
    // Predicated region
    $region86: #{tpu_custom_call.1} parent=1 // pred_check
      _
    $region87: #{tpu_custom_call.1} parent=1 // pred_check_branch
      %254 = sbr.rel (0) target = $region89
    $region88: #{tpu_custom_call.1} parent=1 // pred_region
      _
    $region89: #{tpu_custom_call.1} parent=1 // pred_fallthru
      _
    // Predicated region
    $region90: #{tpu_custom_call.1} parent=1 // pred_check
      _
    $region91: #{tpu_custom_call.1} parent=1 // pred_check_branch
      %256 = sbr.rel (0) target = $region93
    $region92: #{tpu_custom_call.1} parent=1 // pred_region
      %s258 = ssub.s32 4096, 4096
      %259 = vsyncadd [#allocation30], %s258
      %s260 = sshll.u32 [#allocation31], 4
      %s261 = int_to_ptr.vmem [resolvable:$true] %s260
      %266 = dma.hbm_to_vmem [thread:$0]  %s22, 4096, %s261, [#allocation30], 256, 256, 16
    $region93: #{tpu_custom_call.1} parent=1 // pred_fallthru
      _
    // Predicated region
    $region94: #{tpu_custom_call.1} parent=1 // pred_check
      _
    $region95: #{tpu_custom_call.1} parent=1 // pred_check_branch
      %268 = sbr.rel (0) target = $region97
    $region96: #{tpu_custom_call.1} parent=1 // pred_region
      %s270 = ssub.s32 4096, 4096
      %271 = vsyncadd [#allocation33], %s270
      %s272 = sshll.u32 [#allocation32], 4
      %s273 = int_to_ptr.vmem [resolvable:$true] %s272
      %278 = dma.hbm_to_vmem [thread:$0]  %s23, 4096, %s273, [#allocation33], 256, 256, 16
    $region97: #{tpu_custom_call.1} parent=1 // pred_fallthru
      _
    // Predicated region
    $region98: #{tpu_custom_call.1} parent=1 // pred_check
      _
    $region99: #{tpu_custom_call.1} parent=1 // pred_check_branch
      %280 = sbr.rel (0) target = $region101
    $region100: #{tpu_custom_call.1} parent=1 // pred_region
      _
    $region101: #{tpu_custom_call.1} parent=1 // pred_fallthru
      _
    // Predicated region
    $region102: #{tpu_custom_call.1} parent=1 // pred_check
      _
    $region103: #{tpu_custom_call.1} parent=1 // pred_check_branch
      %282 = sbr.rel (0) target = $region105
    $region104: #{tpu_custom_call.1} parent=1 // pred_region
      _
    $region105: #{tpu_custom_call.1} parent=1 // pred_fallthru
      _
    // Predicated region
    $region106: #{tpu_custom_call.1} parent=1 // pred_check
      _
    $region107: #{tpu_custom_call.1} parent=1 // pred_check_branch
      %284 = sbr.rel (0) target = $region109
    $region108: #{tpu_custom_call.1} parent=1 // pred_region
      %s286 = ssub.s32 1024, 1024
      %287 = vsyncadd [#allocation33], %s286
      %s288 = sshll.u32 [#allocation34], 4
      %s289 = int_to_ptr.vmem [resolvable:$true] %s288
      %294 = dma.hbm_to_vmem [thread:$0]  %s26, 1024, %s289, [#allocation33], 64, 64, 4
    $region109: #{tpu_custom_call.1} parent=1 // pred_fallthru
      _
    // Predicated region
    $region110: #{tpu_custom_call.1} parent=1 // pred_check
      _
    $region111: #{tpu_custom_call.1} parent=1 // pred_check_branch
      %296 = sbr.rel (0) target = $region113
    $region112: #{tpu_custom_call.1} parent=1 // pred_region
      _
    $region113: #{tpu_custom_call.1} parent=1 // pred_fallthru
      _
    // Predicated region
    $region114: #{tpu_custom_call.1} parent=1 // pred_check
      _
    $region115: #{tpu_custom_call.1} parent=1 // pred_check_branch
      %298 = sbr.rel (0) target = $region117
    $region116: #{tpu_custom_call.1} parent=1 // pred_region
      %299 = dma.done [#allocation3], 128
    $region117: #{tpu_custom_call.1} parent=1 // pred_fallthru
      _
    // Predicated region
    $region118: #{tpu_custom_call.1} parent=1 // pred_check
      _
    $region119: #{tpu_custom_call.1} parent=1 // pred_check_branch
      %301 = sbr.rel (0) target = $region121
    $region120: #{tpu_custom_call.1} parent=1 // pred_region
      %302 = dma.done [#allocation6], 1024
    $region121: #{tpu_custom_call.1} parent=1 // pred_fallthru
      _
    // Predicated region
    $region122: #{tpu_custom_call.1} parent=1 // pred_check
      _
    $region123: #{tpu_custom_call.1} parent=1 // pred_check_branch
      %304 = sbr.rel (0) target = $region125
    $region124: #{tpu_custom_call.1} parent=1 // pred_region
      %305 = dma.done [#allocation6], 16
    $region125: #{tpu_custom_call.1} parent=1 // pred_fallthru
      _
    // Predicated region
    $region126: #{tpu_custom_call.1} parent=1 // pred_check
      _
    $region127: #{tpu_custom_call.1} parent=1 // pred_check_branch
      %307 = sbr.rel (0) target = $region129
    $region128: #{tpu_custom_call.1} parent=1 // pred_region
      %308 = dma.done [#allocation9], 256
    $region129: #{tpu_custom_call.1} parent=1 // pred_fallthru
      _
    // Predicated region
    $region130: #{tpu_custom_call.1} parent=1 // pred_check
      _
    $region131: #{tpu_custom_call.1} parent=1 // pred_check_branch
      %310 = sbr.rel (0) target = $region133
    $region132: #{tpu_custom_call.1} parent=1 // pred_region
      %311 = dma.done [#allocation9], 16
    $region133: #{tpu_custom_call.1} parent=1 // pred_fallthru
      _
    // Predicated region
    $region134: #{tpu_custom_call.1} parent=1 // pred_check
      _
    $region135: #{tpu_custom_call.1} parent=1 // pred_check_branch
      %313 = sbr.rel (0) target = $region137
    $region136: #{tpu_custom_call.1} parent=1 // pred_region
      %314 = dma.done [#allocation12], 1024
    $region137: #{tpu_custom_call.1} parent=1 // pred_fallthru
      _
    // Predicated region
    $region138: #{tpu_custom_call.1} parent=1 // pred_check
      _
    $region139: #{tpu_custom_call.1} parent=1 // pred_check_branch
      %316 = sbr.rel (0) target = $region141
    $region140: #{tpu_custom_call.1} parent=1 // pred_region
      %317 = dma.done [#allocation12], 16
    $region141: #{tpu_custom_call.1} parent=1 // pred_fallthru
      _
    // Predicated region
    $region142: #{tpu_custom_call.1} parent=1 // pred_check
      _
    $region143: #{tpu_custom_call.1} parent=1 // pred_check_branch
      %319 = sbr.rel (0) target = $region145
    $region144: #{tpu_custom_call.1} parent=1 // pred_region
      %320 = dma.done [#allocation15], 128
    $region145: #{tpu_custom_call.1} parent=1 // pred_fallthru
      _
    // Predicated region
    $region146: #{tpu_custom_call.1} parent=1 // pred_check
      _
    $region147: #{tpu_custom_call.1} parent=1 // pred_check_branch
      %322 = sbr.rel (0) target = $region149
    $region148: #{tpu_custom_call.1} parent=1 // pred_region
      %323 = dma.done [#allocation15], 1024
    $region149: #{tpu_custom_call.1} parent=1 // pred_fallthru
      _
    // Predicated region
    $region150: #{tpu_custom_call.1} parent=1 // pred_check
      _
    $region151: #{tpu_custom_call.1} parent=1 // pred_check_branch
      %325 = sbr.rel (0) target = $region153
    $region152: #{tpu_custom_call.1} parent=1 // pred_region
      %326 = dma.done [#allocation18], 1024
    $region153: #{tpu_custom_call.1} parent=1 // pred_fallthru
      _
    // Predicated region
    $region154: #{tpu_custom_call.1} parent=1 // pred_check
      _
    $region155: #{tpu_custom_call.1} parent=1 // pred_check_branch
      %328 = sbr.rel (0) target = $region157
    $region156: #{tpu_custom_call.1} parent=1 // pred_region
      %329 = dma.done [#allocation18], 16
    $region157: #{tpu_custom_call.1} parent=1 // pred_fallthru
      _
    // Predicated region
    $region158: #{tpu_custom_call.1} parent=1 // pred_check
      _
    $region159: #{tpu_custom_call.1} parent=1 // pred_check_branch
      %331 = sbr.rel (0) target = $region161
    $region160: #{tpu_custom_call.1} parent=1 // pred_region
      %332 = dma.done [#allocation21], 1024
    $region161: #{tpu_custom_call.1} parent=1 // pred_fallthru
      _
    // Predicated region
    $region162: #{tpu_custom_call.1} parent=1 // pred_check
      _
    $region163: #{tpu_custom_call.1} parent=1 // pred_check_branch
      %334 = sbr.rel (0) target = $region165
    $region164: #{tpu_custom_call.1} parent=1 // pred_region
      %335 = dma.done [#allocation21], 4096
    $region165: #{tpu_custom_call.1} parent=1 // pred_fallthru
      _
    // Predicated region
    $region166: #{tpu_custom_call.1} parent=1 // pred_check
      _
    $region167: #{tpu_custom_call.1} parent=1 // pred_check_branch
      %337 = sbr.rel (0) target = $region169
    $region168: #{tpu_custom_call.1} parent=1 // pred_region
      %338 = dma.done [#allocation24], 1024
    $region169: #{tpu_custom_call.1} parent=1 // pred_fallthru
      _
    // Predicated region
    $region170: #{tpu_custom_call.1} parent=1 // pred_check
      _
    $region171: #{tpu_custom_call.1} parent=1 // pred_check_branch
      %340 = sbr.rel (0) target = $region173
    $region172: #{tpu_custom_call.1} parent=1 // pred_region
      %341 = dma.done [#allocation24], 1024
    $region173: #{tpu_custom_call.1} parent=1 // pred_fallthru
      _
    // Predicated region
    $region174: #{tpu_custom_call.1} parent=1 // pred_check
      _
    $region175: #{tpu_custom_call.1} parent=1 // pred_check_branch
      %343 = sbr.rel (0) target = $region177
    $region176: #{tpu_custom_call.1} parent=1 // pred_region
      %344 = dma.done [#allocation27], 32
    $region177: #{tpu_custom_call.1} parent=1 // pred_fallthru
      _
    // Predicated region
    $region178: #{tpu_custom_call.1} parent=1 // pred_check
      _
    $region179: #{tpu_custom_call.1} parent=1 // pred_check_branch
      %346 = sbr.rel (0) target = $region181
    $region180: #{tpu_custom_call.1} parent=1 // pred_region
      %347 = dma.done [#allocation27], 16
    $region181: #{tpu_custom_call.1} parent=1 // pred_fallthru
      _
    // Predicated region
    $region182: #{tpu_custom_call.1} parent=1 // pred_check
      _
    $region183: #{tpu_custom_call.1} parent=1 // pred_check_branch
      %349 = sbr.rel (0) target = $region185
    $region184: #{tpu_custom_call.1} parent=1 // pred_region
      %350 = dma.done [#allocation30], 16
    $region185: #{tpu_custom_call.1} parent=1 // pred_fallthru
      _
    // Predicated region
    $region186: #{tpu_custom_call.1} parent=1 // pred_check
      _
    $region187: #{tpu_custom_call.1} parent=1 // pred_check_branch
      %352 = sbr.rel (0) target = $region189
    $region188: #{tpu_custom_call.1} parent=1 // pred_region
      %353 = dma.done [#allocation30], 4096
    $region189: #{tpu_custom_call.1} parent=1 // pred_fallthru
      _
    // Predicated region
    $region190: #{tpu_custom_call.1} parent=1 // pred_check
      _
    $region191: #{tpu_custom_call.1} parent=1 // pred_check_branch
      %355 = sbr.rel (0) target = $region193
    $region192: #{tpu_custom_call.1} parent=1 // pred_region
      %356 = dma.done [#allocation33], 4096
    $region193: #{tpu_custom_call.1} parent=1 // pred_fallthru
      _
    // Predicated region
    $region194: #{tpu_custom_call.1} parent=1 // pred_check
      _
    $region195: #{tpu_custom_call.1} parent=1 // pred_check_branch
      %358 = sbr.rel (0) target = $region197
    $region196: #{tpu_custom_call.1} parent=1 // pred_region
      %359 = dma.done [#allocation33], 1024
    $region197: #{tpu_custom_call.1} parent=1 // pred_fallthru
      _
    %v361 = vld [vmem:[#allocation2] sm:$0xf]
    %v362 = vld [vmem:[#allocation2 + $0x4] sm:$0xf]
    %v363 = vld [vmem:[#allocation5] sm:$0xf]
    %v364 = vld [vmem:[#allocation5 + $0x4] sm:$0xf]
    %v365 = vld [vmem:[#allocation5 + $0x8] sm:$0xf]
    %v366 = vld [vmem:[#allocation5 + $0xc] sm:$0xf]
    %v367 = vld [vmem:[#allocation5 + $0x10] sm:$0xf]
    %v368 = vld [vmem:[#allocation5 + $0x14] sm:$0xf]
    %v369 = vld [vmem:[#allocation5 + $0x18] sm:$0xf]
    %v370 = vld [vmem:[#allocation5 + $0x1c] sm:$0xf]
    %v371 = vld [vmem:[#allocation5 + $0x20] sm:$0xf]
    %v372 = vld [vmem:[#allocation5 + $0x24] sm:$0xf]
    %v373 = vld [vmem:[#allocation5 + $0x28] sm:$0xf]
    %v374 = vld [vmem:[#allocation5 + $0x2c] sm:$0xf]
    %v375 = vld [vmem:[#allocation5 + $0x30] sm:$0xf]
    %v376 = vld [vmem:[#allocation5 + $0x34] sm:$0xf]
    %v377 = vld [vmem:[#allocation5 + $0x38] sm:$0xf]
    %v378 = vld [vmem:[#allocation5 + $0x3c] sm:$0xf]
    %v379 = vld [vmem:[#allocation7] sm:$0x1]
    %v381 = vlaneseq
    %v382 = vshrl.u32 %v381, 7
    %v383 = vsub.s32 0, %v382
    %v384 = vrot.slane %v379, %v383
    %v388 = vunpack.c.l.b16 %v361
    %v389 = vunpack.c.l.b16 %v362
    %v390 = vpack.c.b16 %v389, %v388
    %v408 = vunpack.c.l.b16 %v363
    %v409 = vunpack.c.l.b16 %v364
    %v410 = vunpack.c.l.b16 %v365
    %v411 = vunpack.c.l.b16 %v366
    %v412 = vunpack.c.l.b16 %v367
    %v413 = vunpack.c.l.b16 %v368
    %v414 = vunpack.c.l.b16 %v369
    %v415 = vunpack.c.l.b16 %v370
    %v416 = vunpack.c.l.b16 %v371
    %v417 = vunpack.c.l.b16 %v372
    %v418 = vunpack.c.l.b16 %v373
    %v419 = vunpack.c.l.b16 %v374
    %v420 = vunpack.c.l.b16 %v375
    %v421 = vunpack.c.l.b16 %v376
    %v422 = vunpack.c.l.b16 %v377
    %v423 = vunpack.c.l.b16 %v378
    %v424 = vpack.c.b16 %v409, %v408
    %v425 = vpack.c.b16 %v411, %v410
    %v426 = vpack.c.b16 %v413, %v412
    %v427 = vpack.c.b16 %v415, %v414
    %v428 = vpack.c.b16 %v417, %v416
    %v429 = vpack.c.b16 %v419, %v418
    %v430 = vpack.c.b16 %v421, %v420
    %v431 = vpack.c.b16 %v423, %v422
    %440 = vmatprep.subr.bf16.mxu0 0
    %441 = vmatpush1.bf16.msra.mxu0 %v424
    %442 = vmatprep.subr.bf16.mxu0 0
    %443 = vmatpush1.bf16.msra.mxu0 %v425
    %444 = vmatprep.subr.bf16.mxu0 0
    %445 = vmatpush1.bf16.msra.mxu0 %v426
    %446 = vmatprep.subr.bf16.mxu0 0
    %447 = vmatpush1.bf16.msra.mxu0 %v427
    %448 = vmatprep.subr.bf16.mxu0 0
    %449 = vmatpush1.bf16.msra.mxu0 %v428
    %450 = vmatprep.subr.bf16.mxu0 0
    %451 = vmatpush1.bf16.msra.mxu0 %v429
    %452 = vmatprep.subr.bf16.mxu0 0
    %453 = vmatpush1.bf16.msra.mxu0 %v430
    %454 = vmatprep.subr.bf16.mxu0 0
    %455 = vmatpush1.bf16.msra.mxu0 %v431
    %456 = vmatprep.subr.bf16.mxu0 0
    %457 = vmatpush1.bf16.msra.mxu0 0
    %458 = vmatprep.subr.bf16.mxu0 0
    %459 = vmatpush1.bf16.msra.mxu0 0
    %460 = vmatprep.subr.bf16.mxu0 0
    %461 = vmatpush1.bf16.msra.mxu0 0
    %462 = vmatprep.subr.bf16.mxu0 0
    %463 = vmatpush1.bf16.msra.mxu0 0
    %464 = vmatprep.subr.bf16.mxu0 0
    %465 = vmatpush1.bf16.msra.mxu0 0
    %466 = vmatprep.subr.bf16.mxu0 0
    %467 = vmatpush1.bf16.msra.mxu0 0
    %468 = vmatprep.subr.bf16.mxu0 0
    %469 = vmatpush1.bf16.msra.mxu0 0
    %470 = vmatprep.subr.bf16.mxu0 0
    %471 = vmatpush1.bf16.msra.mxu0 0
    %472 = vmatprep.mubr.bf16.mxu0 0
    %473 = vmatmul.mubr.bf16.gmra.mrb[0].mxu0 %v390
    %v474 = vpop.f32.mrb[0].mxu0
    %v475 = vadd.f32 %v384, %v474
    %v476 = vpop.f32.mrb[0].mxu0
    %v477 = vpop.f32.mrb[0].mxu0
    %v478 = vadd.f32 %v384, %v477
    %v479 = vpop.f32.mrb[0].mxu0
    %480 = vdwg.mxu0
    %v481 = vmax.f32 %v475, 0.0
    %v482 = vmax.f32 %v478, 0.0
    %v483 = vld [vmem:[#allocation8] sm:$0xf]
    %v484 = vld [vmem:[#allocation8 + $0x4] sm:$0xf]
    %v485 = vld [vmem:[#allocation8 + $0x8] sm:$0xf]
    %v486 = vld [vmem:[#allocation8 + $0xc] sm:$0xf]
    %v487 = vld [vmem:[%s4] sm:$0xf]
    %v488 = vld [vmem:[%s4 + $0x4] sm:$0xf]
    %v489 = vld [vmem:[%s4 + $0x8] sm:$0xf]
    %v490 = vld [vmem:[%s4 + $0xc] sm:$0xf]
    %v491 = vld [vmem:[%s4 + $0x10] sm:$0xf]
    %v492 = vld [vmem:[%s4 + $0x14] sm:$0xf]
    %v493 = vld [vmem:[%s4 + $0x18] sm:$0xf]
    %v494 = vld [vmem:[%s4 + $0x1c] sm:$0xf]
    %v495 = vld [vmem:[%s4 + $0x20] sm:$0xf]
    %v496 = vld [vmem:[%s4 + $0x24] sm:$0xf]
    %v497 = vld [vmem:[%s4 + $0x28] sm:$0xf]
    %v498 = vld [vmem:[%s4 + $0x2c] sm:$0xf]
    %v499 = vld [vmem:[%s4 + $0x30] sm:$0xf]
    %v500 = vld [vmem:[%s4 + $0x34] sm:$0xf]
    %v501 = vld [vmem:[%s4 + $0x38] sm:$0xf]
    %v502 = vld [vmem:[%s4 + $0x3c] sm:$0xf]
    %v503 = vld [vmem:[#allocation10] sm:$0x1]
    %v505 = vlaneseq
    %v506 = vshrl.u32 %v505, 7
    %v507 = vsub.s32 0, %v506
    %v508 = vrot.slane %v503, %v507
    %v514 = vunpack.c.l.b16 %v483
    %v515 = vunpack.c.l.b16 %v484
    %v516 = vunpack.c.l.b16 %v485
    %v517 = vunpack.c.l.b16 %v486
    %v518 = vpack.c.b16 %v515, %v514
    %v519 = vpack.c.b16 %v517, %v516
    %v538 = vunpack.c.l.b16 %v487
    %v539 = vunpack.c.l.b16 %v488
    %v540 = vunpack.c.l.b16 %v489
    %v541 = vunpack.c.l.b16 %v490
    %v542 = vunpack.c.l.b16 %v491
    %v543 = vunpack.c.l.b16 %v492
    %v544 = vunpack.c.l.b16 %v493
    %v545 = vunpack.c.l.b16 %v494
    %v546 = vunpack.c.l.b16 %v495
    %v547 = vunpack.c.l.b16 %v496
    %v548 = vunpack.c.l.b16 %v497
    %v549 = vunpack.c.l.b16 %v498
    %v550 = vunpack.c.l.b16 %v499
    %v551 = vunpack.c.l.b16 %v500
    %v552 = vunpack.c.l.b16 %v501
    %v553 = vunpack.c.l.b16 %v502
    %v554 = vpack.c.b16 %v539, %v538
    %v555 = vpack.c.b16 %v541, %v540
    %v556 = vpack.c.b16 %v543, %v542
    %v557 = vpack.c.b16 %v545, %v544
    %v558 = vpack.c.b16 %v547, %v546
    %v559 = vpack.c.b16 %v549, %v548
    %v560 = vpack.c.b16 %v551, %v550
    %v561 = vpack.c.b16 %v553, %v552
    %570 = vmatprep.subr.bf16.mxu0 0
    %571 = vmatpush1.bf16.msra.mxu0 %v554
    %572 = vmatprep.subr.bf16.mxu0 0
    %573 = vmatpush1.bf16.msra.mxu0 %v555
    %574 = vmatprep.subr.bf16.mxu0 0
    %575 = vmatpush1.bf16.msra.mxu0 %v556
    %576 = vmatprep.subr.bf16.mxu0 0
    %577 = vmatpush1.bf16.msra.mxu0 %v557
    %578 = vmatprep.subr.bf16.mxu0 0
    %579 = vmatpush1.bf16.msra.mxu0 %v558
    %580 = vmatprep.subr.bf16.mxu0 0
    %581 = vmatpush1.bf16.msra.mxu0 %v559
    %582 = vmatprep.subr.bf16.mxu0 0
    %583 = vmatpush1.bf16.msra.mxu0 %v560
    %584 = vmatprep.subr.bf16.mxu0 0
    %585 = vmatpush1.bf16.msra.mxu0 %v561
    %586 = vmatprep.subr.bf16.mxu0 0
    %587 = vmatpush1.bf16.msra.mxu0 0
    %588 = vmatprep.subr.bf16.mxu0 0
    %589 = vmatpush1.bf16.msra.mxu0 0
    %590 = vmatprep.subr.bf16.mxu0 0
    %591 = vmatpush1.bf16.msra.mxu0 0
    %592 = vmatprep.subr.bf16.mxu0 0
    %593 = vmatpush1.bf16.msra.mxu0 0
    %594 = vmatprep.subr.bf16.mxu0 0
    %595 = vmatpush1.bf16.msra.mxu0 0
    %596 = vmatprep.subr.bf16.mxu0 0
    %597 = vmatpush1.bf16.msra.mxu0 0
    %598 = vmatprep.subr.bf16.mxu0 0
    %599 = vmatpush1.bf16.msra.mxu0 0
    %600 = vmatprep.subr.bf16.mxu0 0
    %601 = vmatpush1.bf16.msra.mxu0 0
    %602 = vmatprep.mubr.bf16.mxu0 0
    %603 = vmatmul.mubr.bf16.gmra.mrb[0].mxu0 %v518
    %v604 = vpop.f32.mrb[0].mxu0
    %v605 = vadd.f32 %v508, %v604
    %v606 = vpop.f32.mrb[0].mxu0
    %v607 = vpop.f32.mrb[0].mxu0
    %v608 = vadd.f32 %v508, %v607
    %v609 = vpop.f32.mrb[0].mxu0
    %610 = vmatprep.mubr.bf16.mxu0 0
    %611 = vmatmul.mubr.bf16.gmra.mrb[0].mxu0 %v519
    %v612 = vpop.f32.mrb[0].mxu0
    %v613 = vadd.f32 %v508, %v612
    %v614 = vpop.f32.mrb[0].mxu0
    %v615 = vpop.f32.mrb[0].mxu0
    %v616 = vadd.f32 %v508, %v615
    %v617 = vpop.f32.mrb[0].mxu0
    %618 = vdwg.mxu0
    %v619 = vmax.f32 %v605, 0.0
    %v620 = vmax.f32 %v608, 0.0
    %v621 = vmax.f32 %v613, 0.0
    %v622 = vmax.f32 %v616, 0.0
    %v623 = vld [vmem:[#allocation11] sm:$0xf]
    %v624 = vld [vmem:[#allocation11 + $0x4] sm:$0xf]
    %v625 = vld [vmem:[#allocation11 + $0x8] sm:$0xf]
    %v626 = vld [vmem:[#allocation11 + $0xc] sm:$0xf]
    %v627 = vld [vmem:[#allocation11 + $0x10] sm:$0xf]
    %v628 = vld [vmem:[#allocation11 + $0x14] sm:$0xf]
    %v629 = vld [vmem:[#allocation11 + $0x18] sm:$0xf]
    %v630 = vld [vmem:[#allocation11 + $0x1c] sm:$0xf]
    %v631 = vld [vmem:[#allocation11 + $0x20] sm:$0xf]
    %v632 = vld [vmem:[#allocation11 + $0x24] sm:$0xf]
    %v633 = vld [vmem:[#allocation11 + $0x28] sm:$0xf]
    %v634 = vld [vmem:[#allocation11 + $0x2c] sm:$0xf]
    %v635 = vld [vmem:[#allocation11 + $0x30] sm:$0xf]
    %v636 = vld [vmem:[#allocation11 + $0x34] sm:$0xf]
    %v637 = vld [vmem:[#allocation11 + $0x38] sm:$0xf]
    %v638 = vld [vmem:[#allocation11 + $0x3c] sm:$0xf]
    %v639 = vpack.c.bf16 %v620, %v619
    %v640 = vpack.c.bf16 %v622, %v621
    %v641 = vld [vmem:[#allocation13] sm:$0x1]
    %v643 = vlaneseq
    %v644 = vshrl.u32 %v643, 7
    %v645 = vsub.s32 0, %v644
    %v646 = vrot.slane %v641, %v645
    %v664 = vunpack.c.l.b16 %v623
    %v665 = vunpack.c.l.b16 %v624
    %v666 = vunpack.c.l.b16 %v625
    %v667 = vunpack.c.l.b16 %v626
    %v668 = vunpack.c.l.b16 %v627
    %v669 = vunpack.c.l.b16 %v628
    %v670 = vunpack.c.l.b16 %v629
    %v671 = vunpack.c.l.b16 %v630
    %v672 = vunpack.c.l.b16 %v631
    %v673 = vunpack.c.l.b16 %v632
    %v674 = vunpack.c.l.b16 %v633
    %v675 = vunpack.c.l.b16 %v634
    %v676 = vunpack.c.l.b16 %v635
    %v677 = vunpack.c.l.b16 %v636
    %v678 = vunpack.c.l.b16 %v637
    %v679 = vunpack.c.l.b16 %v638
    %v680 = vpack.c.b16 %v665, %v664
    %v681 = vpack.c.b16 %v667, %v666
    %v682 = vpack.c.b16 %v669, %v668
    %v683 = vpack.c.b16 %v671, %v670
    %v684 = vpack.c.b16 %v673, %v672
    %v685 = vpack.c.b16 %v675, %v674
    %v686 = vpack.c.b16 %v677, %v676
    %v687 = vpack.c.b16 %v679, %v678
    %696 = vmatprep.subr.bf16.mxu0 0
    %697 = vmatpush1.bf16.msra.mxu0 %v680
    %698 = vmatprep.subr.bf16.mxu0 0
    %699 = vmatpush1.bf16.msra.mxu0 %v681
    %700 = vmatprep.subr.bf16.mxu0 0
    %701 = vmatpush1.bf16.msra.mxu0 %v682
    %702 = vmatprep.subr.bf16.mxu0 0
    %703 = vmatpush1.bf16.msra.mxu0 %v683
    %704 = vmatprep.subr.bf16.mxu0 0
    %705 = vmatpush1.bf16.msra.mxu0 %v684
    %706 = vmatprep.subr.bf16.mxu0 0
    %707 = vmatpush1.bf16.msra.mxu0 %v685
    %708 = vmatprep.subr.bf16.mxu0 0
    %709 = vmatpush1.bf16.msra.mxu0 %v686
    %710 = vmatprep.subr.bf16.mxu0 0
    %711 = vmatpush1.bf16.msra.mxu0 %v687
    %712 = vmatprep.subr.bf16.mxu0 0
    %713 = vmatpush1.bf16.msra.mxu0 0
    %714 = vmatprep.subr.bf16.mxu0 0
    %715 = vmatpush1.bf16.msra.mxu0 0
    %716 = vmatprep.subr.bf16.mxu0 0
    %717 = vmatpush1.bf16.msra.mxu0 0
    %718 = vmatprep.subr.bf16.mxu0 0
    %719 = vmatpush1.bf16.msra.mxu0 0
    %720 = vmatprep.subr.bf16.mxu0 0
    %721 = vmatpush1.bf16.msra.mxu0 0
    %722 = vmatprep.subr.bf16.mxu0 0
    %723 = vmatpush1.bf16.msra.mxu0 0
    %724 = vmatprep.subr.bf16.mxu0 0
    %725 = vmatpush1.bf16.msra.mxu0 0
    %726 = vmatprep.subr.bf16.mxu0 0
    %727 = vmatpush1.bf16.msra.mxu0 0
    %728 = vmatprep.mubr.bf16.mxu0 0
    %729 = vmatmul.mubr.bf16.gmra.mrb[0].mxu0 %v639
    %v730 = vpop.f32.mrb[0].mxu0
    %v731 = vadd.f32 %v646, %v730
    %v732 = vpop.f32.mrb[0].mxu0
    %v733 = vpop.f32.mrb[0].mxu0
    %v734 = vadd.f32 %v646, %v733
    %v735 = vpop.f32.mrb[0].mxu0
    %736 = vmatprep.mubr.bf16.mxu0 0
    %737 = vmatmul.mubr.bf16.gmra.mrb[0].mxu0 %v640
    %v738 = vpop.f32.mrb[0].mxu0
    %v739 = vadd.f32 %v646, %v738
    %v740 = vpop.f32.mrb[0].mxu0
    %v741 = vpop.f32.mrb[0].mxu0
    %v742 = vadd.f32 %v646, %v741
    %v743 = vpop.f32.mrb[0].mxu0
    %744 = vdwg.mxu0
    %v745 = vld [vmem:[%s8] sm:$0xff]
    %v746 = vld [vmem:[%s8 + $0x8] sm:$0xff]
    %v747 = vld [vmem:[%s8 + $0x10] sm:$0xff]
    %v748 = vld [vmem:[%s8 + $0x18] sm:$0xff]
    %750 = vset.pattern.permute.xlu0 0
    %751 = vperm.xlu0 %750, %v745
    %v752 = vpop.permute.xlu0 %751
    %755 = vset.pattern.permute.xlu0 0
    %756 = vperm.xlu0 %755, %v746
    %v757 = vpop.permute.xlu0 %756
    %760 = vset.pattern.permute.xlu0 0
    %761 = vperm.xlu0 %760, %v747
    %v762 = vpop.permute.xlu0 %761
    %765 = vset.pattern.permute.xlu0 0
    %766 = vperm.xlu0 %765, %v748
    %v767 = vpop.permute.xlu0 %766
    %v769 = vmul.f32 %v731, %v752
    %v770 = vmul.f32 %v734, %v757
    %v771 = vmul.f32 %v739, %v762
    %v772 = vmul.f32 %v742, %v767
    %v773 = vld [vmem:[%s9] sm:$0xf]
    %v774 = vld [vmem:[%s9 + $0x4] sm:$0xf]
    %v775 = vld [vmem:[%s9 + $0x8] sm:$0xf]
    %v776 = vld [vmem:[%s9 + $0xc] sm:$0xf]
    %v777 = vld [vmem:[#allocation14] sm:$0xf]
    %v778 = vld [vmem:[#allocation14 + $0x4] sm:$0xf]
    %v779 = vld [vmem:[#allocation16] sm:$0xf]
    %v780 = vld [vmem:[#allocation16 + $0x4] sm:$0xf]
    %v781 = vld [vmem:[#allocation16 + $0x8] sm:$0xf]
    %v782 = vld [vmem:[#allocation16 + $0xc] sm:$0xf]
    %v783 = vld [vmem:[#allocation16 + $0x10] sm:$0xf]
    %v784 = vld [vmem:[#allocation16 + $0x14] sm:$0xf]
    %v785 = vld [vmem:[#allocation16 + $0x18] sm:$0xf]
    %v786 = vld [vmem:[#allocation16 + $0x1c] sm:$0xf]
    %v787 = vld [vmem:[#allocation16 + $0x20] sm:$0xf]
    %v788 = vld [vmem:[#allocation16 + $0x24] sm:$0xf]
    %v789 = vld [vmem:[#allocation16 + $0x28] sm:$0xf]
    %v790 = vld [vmem:[#allocation16 + $0x2c] sm:$0xf]
    %v791 = vld [vmem:[#allocation16 + $0x30] sm:$0xf]
    %v792 = vld [vmem:[#allocation16 + $0x34] sm:$0xf]
    %v793 = vld [vmem:[#allocation16 + $0x38] sm:$0xf]
    %v794 = vld [vmem:[#allocation16 + $0x3c] sm:$0xf]
    %v795 = vld [vmem:[#allocation17] sm:$0xf]
    %v796 = vld [vmem:[#allocation17 + $0x4] sm:$0xf]
    %v797 = vld [vmem:[#allocation17 + $0x8] sm:$0xf]
    %v798 = vld [vmem:[#allocation17 + $0xc] sm:$0xf]
    %v799 = vld [vmem:[#allocation17 + $0x10] sm:$0xf]
    %v800 = vld [vmem:[#allocation17 + $0x14] sm:$0xf]
    %v801 = vld [vmem:[#allocation17 + $0x18] sm:$0xf]
    %v802 = vld [vmem:[#allocation17 + $0x1c] sm:$0xf]
    %v803 = vld [vmem:[#allocation17 + $0x20] sm:$0xf]
    %v804 = vld [vmem:[#allocation17 + $0x24] sm:$0xf]
    %v805 = vld [vmem:[#allocation17 + $0x28] sm:$0xf]
    %v806 = vld [vmem:[#allocation17 + $0x2c] sm:$0xf]
    %v807 = vld [vmem:[#allocation17 + $0x30] sm:$0xf]
    %v808 = vld [vmem:[#allocation17 + $0x34] sm:$0xf]
    %v809 = vld [vmem:[#allocation17 + $0x38] sm:$0xf]
    %v810 = vld [vmem:[#allocation17 + $0x3c] sm:$0xf]
    %v811 = vld [vmem:[#allocation20] sm:$0xf]
    %v812 = vld [vmem:[#allocation20 + $0x4] sm:$0xf]
    %v813 = vld [vmem:[#allocation20 + $0x8] sm:$0xf]
    %v814 = vld [vmem:[#allocation20 + $0xc] sm:$0xf]
    %v815 = vld [vmem:[#allocation20 + $0x10] sm:$0xf]
    %v816 = vld [vmem:[#allocation20 + $0x14] sm:$0xf]
    %v817 = vld [vmem:[#allocation20 + $0x18] sm:$0xf]
    %v818 = vld [vmem:[#allocation20 + $0x1c] sm:$0xf]
    %v819 = vld [vmem:[#allocation20 + $0x20] sm:$0xf]
    %v820 = vld [vmem:[#allocation20 + $0x24] sm:$0xf]
    %v821 = vld [vmem:[#allocation20 + $0x28] sm:$0xf]
    %v822 = vld [vmem:[#allocation20 + $0x2c] sm:$0xf]
    %v823 = vld [vmem:[#allocation20 + $0x30] sm:$0xf]
    %v824 = vld [vmem:[#allocation20 + $0x34] sm:$0xf]
    %v825 = vld [vmem:[#allocation20 + $0x38] sm:$0xf]
    %v826 = vld [vmem:[#allocation20 + $0x3c] sm:$0xf]
    %v827 = vld [vmem:[#allocation19] sm:$0x1]
    %v829 = vlaneseq
    %v830 = vshrl.u32 %v829, 7
    %v831 = vsub.s32 0, %v830
    %v832 = vrot.slane %v827, %v831
    %v834 = vld [vmem:[#allocation22] sm:$0xff]
    %v835 = vld [vmem:[#allocation22 + $0x8] sm:$0xff]
    %v836 = vld [vmem:[#allocation22 + $0x10] sm:$0xff]
    %v837 = vld [vmem:[#allocation22 + $0x18] sm:$0xff]
    %v838 = vld [vmem:[#allocation22 + $0x20] sm:$0xff]
    %v839 = vld [vmem:[#allocation22 + $0x28] sm:$0xff]
    %v840 = vld [vmem:[#allocation22 + $0x30] sm:$0xff]
    %v841 = vld [vmem:[#allocation22 + $0x38] sm:$0xff]
    %v842 = vld [vmem:[#allocation22 + $0x40] sm:$0xff]
    %v843 = vld [vmem:[#allocation22 + $0x48] sm:$0xff]
    %v844 = vld [vmem:[#allocation22 + $0x50] sm:$0xff]
    %v845 = vld [vmem:[#allocation22 + $0x58] sm:$0xff]
    %v846 = vld [vmem:[#allocation22 + $0x60] sm:$0xff]
    %v847 = vld [vmem:[#allocation22 + $0x68] sm:$0xff]
    %v848 = vld [vmem:[#allocation22 + $0x70] sm:$0xff]
    %v849 = vld [vmem:[#allocation22 + $0x78] sm:$0xff]
    %v850 = vld [vmem:[#allocation22 + $0x80] sm:$0xff]
    %v851 = vld [vmem:[#allocation22 + $0x88] sm:$0xff]
    %v852 = vld [vmem:[#allocation22 + $0x90] sm:$0xff]
    %v853 = vld [vmem:[#allocation22 + $0x98] sm:$0xff]
    %v854 = vld [vmem:[#allocation22 + $0xa0] sm:$0xff]
    %v855 = vld [vmem:[#allocation22 + $0xa8] sm:$0xff]
    %v856 = vld [vmem:[#allocation22 + $0xb0] sm:$0xff]
    %v857 = vld [vmem:[#allocation22 + $0xb8] sm:$0xff]
    %v858 = vld [vmem:[#allocation22 + $0xc0] sm:$0xff]
    %v859 = vld [vmem:[#allocation22 + $0xc8] sm:$0xff]
    %v860 = vld [vmem:[#allocation22 + $0xd0] sm:$0xff]
    %v861 = vld [vmem:[#allocation22 + $0xd8] sm:$0xff]
    %v862 = vld [vmem:[#allocation22 + $0xe0] sm:$0xff]
    %v863 = vld [vmem:[#allocation22 + $0xe8] sm:$0xff]
    %v864 = vld [vmem:[#allocation22 + $0xf0] sm:$0xff]
    %v865 = vld [vmem:[#allocation22 + $0xf8] sm:$0xff]
    %v866 = vld [vmem:[#allocation23] sm:$0xf]
    %v867 = vld [vmem:[#allocation23 + $0x4] sm:$0xf]
    %v868 = vld [vmem:[#allocation23 + $0x8] sm:$0xf]
    %v869 = vld [vmem:[#allocation23 + $0xc] sm:$0xf]
    %v870 = vld [vmem:[#allocation23 + $0x10] sm:$0xf]
    %v871 = vld [vmem:[#allocation23 + $0x14] sm:$0xf]
    %v872 = vld [vmem:[#allocation23 + $0x18] sm:$0xf]
    %v873 = vld [vmem:[#allocation23 + $0x1c] sm:$0xf]
    %v874 = vld [vmem:[#allocation23 + $0x20] sm:$0xf]
    %v875 = vld [vmem:[#allocation23 + $0x24] sm:$0xf]
    %v876 = vld [vmem:[#allocation23 + $0x28] sm:$0xf]
    %v877 = vld [vmem:[#allocation23 + $0x2c] sm:$0xf]
    %v878 = vld [vmem:[#allocation23 + $0x30] sm:$0xf]
    %v879 = vld [vmem:[#allocation23 + $0x34] sm:$0xf]
    %v880 = vld [vmem:[#allocation23 + $0x38] sm:$0xf]
    %v881 = vld [vmem:[#allocation23 + $0x3c] sm:$0xf]
    %v882 = vld [vmem:[#allocation25] sm:$0xf]
    %v883 = vld [vmem:[#allocation25 + $0x4] sm:$0xf]
    %v884 = vld [vmem:[#allocation25 + $0x8] sm:$0xf]
    %v885 = vld [vmem:[#allocation25 + $0xc] sm:$0xf]
    %v886 = vld [vmem:[#allocation25 + $0x10] sm:$0xf]
    %v887 = vld [vmem:[#allocation25 + $0x14] sm:$0xf]
    %v888 = vld [vmem:[#allocation25 + $0x18] sm:$0xf]
    %v889 = vld [vmem:[#allocation25 + $0x1c] sm:$0xf]
    %v890 = vld [vmem:[#allocation25 + $0x20] sm:$0xf]
    %v891 = vld [vmem:[#allocation25 + $0x24] sm:$0xf]
    %v892 = vld [vmem:[#allocation25 + $0x28] sm:$0xf]
    %v893 = vld [vmem:[#allocation25 + $0x2c] sm:$0xf]
    %v894 = vld [vmem:[#allocation25 + $0x30] sm:$0xf]
    %v895 = vld [vmem:[#allocation25 + $0x34] sm:$0xf]
    %v896 = vld [vmem:[#allocation25 + $0x38] sm:$0xf]
    %v897 = vld [vmem:[#allocation25 + $0x3c] sm:$0xf]
    %v898 = vld [vmem:[#allocation26] sm:$0x3]
    %v900 = vlaneseq
    %v901 = vshrl.u32 %v900, 7
    %v902 = vsub.s32 0, %v901
    %v903 = vrot.slane %v898, %v902
    %v904 = vlaneseq
    %v905 = vshrl.u32 %v904, 7
    %v906 = vsub.s32 1, %v905
    %v907 = vrot.slane %v898, %v906
    %v910 = vld [vmem:[#allocation28] sm:$0x1]
    %v912 = vlaneseq
    %v913 = vshrl.u32 %v912, 7
    %v914 = vsub.s32 0, %v913
    %v915 = vrot.slane %v910, %v914
    %v917 = vld [vmem:[#allocation29] sm:$0x1]
    %v919 = vlaneseq
    %v920 = vshrl.u32 %v919, 7
    %v921 = vsub.s32 0, %v920
    %v922 = vrot.slane %v917, %v921
    %v924 = vpack.c.bf16 %v482, %v481
    %v941 = vunpack.c.l.b16 %v779
    %v942 = vunpack.c.l.b16 %v780
    %v943 = vunpack.c.l.b16 %v781
    %v944 = vunpack.c.l.b16 %v782
    %v945 = vunpack.c.l.b16 %v783
    %v946 = vunpack.c.l.b16 %v784
    %v947 = vunpack.c.l.b16 %v785
    %v948 = vunpack.c.l.b16 %v786
    %v949 = vunpack.c.l.b16 %v787
    %v950 = vunpack.c.l.b16 %v788
    %v951 = vunpack.c.l.b16 %v789
    %v952 = vunpack.c.l.b16 %v790
    %v953 = vunpack.c.l.b16 %v791
    %v954 = vunpack.c.l.b16 %v792
    %v955 = vunpack.c.l.b16 %v793
    %v956 = vunpack.c.l.b16 %v794
    %v957 = vpack.c.b16 %v942, %v941
    %v958 = vpack.c.b16 %v944, %v943
    %v959 = vpack.c.b16 %v946, %v945
    %v960 = vpack.c.b16 %v948, %v947
    %v961 = vpack.c.b16 %v950, %v949
    %v962 = vpack.c.b16 %v952, %v951
    %v963 = vpack.c.b16 %v954, %v953
    %v964 = vpack.c.b16 %v956, %v955
    %973 = vmatprep.subr.bf16.mxu0 0
    %974 = vmatpush1.bf16.msra.mxu0 %v957
    %975 = vmatprep.subr.bf16.mxu0 0
    %976 = vmatpush1.bf16.msra.mxu0 %v958
    %977 = vmatprep.subr.bf16.mxu0 0
    %978 = vmatpush1.bf16.msra.mxu0 %v959
    %979 = vmatprep.subr.bf16.mxu0 0
    %980 = vmatpush1.bf16.msra.mxu0 %v960
    %981 = vmatprep.subr.bf16.mxu0 0
    %982 = vmatpush1.bf16.msra.mxu0 %v961
    %983 = vmatprep.subr.bf16.mxu0 0
    %984 = vmatpush1.bf16.msra.mxu0 %v962
    %985 = vmatprep.subr.bf16.mxu0 0
    %986 = vmatpush1.bf16.msra.mxu0 %v963
    %987 = vmatprep.subr.bf16.mxu0 0
    %988 = vmatpush1.bf16.msra.mxu0 %v964
    %989 = vmatprep.subr.bf16.mxu0 0
    %990 = vmatpush1.bf16.msra.mxu0 0
    %991 = vmatprep.subr.bf16.mxu0 0
    %992 = vmatpush1.bf16.msra.mxu0 0
    %993 = vmatprep.subr.bf16.mxu0 0
    %994 = vmatpush1.bf16.msra.mxu0 0
    %995 = vmatprep.subr.bf16.mxu0 0
    %996 = vmatpush1.bf16.msra.mxu0 0
    %997 = vmatprep.subr.bf16.mxu0 0
    %998 = vmatpush1.bf16.msra.mxu0 0
    %999 = vmatprep.subr.bf16.mxu0 0
    %1000 = vmatpush1.bf16.msra.mxu0 0
    %1001 = vmatprep.subr.bf16.mxu0 0
    %1002 = vmatpush1.bf16.msra.mxu0 0
    %1003 = vmatprep.subr.bf16.mxu0 0
    %1004 = vmatpush1.bf16.msra.mxu0 0
    %1005 = vmatprep.mubr.bf16.mxu0 0
    %1006 = vmatmul.mubr.bf16.gmra.mrb[0].mxu0 %v924
    %v1007 = vpop.f32.mrb[0].mxu0
    %v1008 = vadd.f32 0.0, %v1007
    %v1009 = vpop.f32.mrb[0].mxu0
    %v1010 = vpop.f32.mrb[0].mxu0
    %v1011 = vadd.f32 0.0, %v1010
    %v1012 = vpop.f32.mrb[0].mxu0
    %1013 = vdwg.mxu0
    %v1014 = vpack.c.bf16 %v1011, %v1008
    %v1019 = vunpack.c.l.b16 %v773
    %v1020 = vunpack.c.l.b16 %v774
    %v1021 = vunpack.c.l.b16 %v775
    %v1022 = vunpack.c.l.b16 %v776
    %v1023 = vpack.c.b16 %v1020, %v1019
    %v1024 = vpack.c.b16 %v1022, %v1021
    %vm1025 = vcmask 130048
    %v1027 = vsel %vm1025, %v1023, 0
    %v1030 = vsel %vm1025, %v1024, 0
    %1032 = vmatprep.subr.bf16.mxu0 0
    %1033 = vmatpush1.bf16.msra.mxu0 %v1014
    %1034 = vmatprep.subr.bf16.mxu0 0
    %1035 = vmatpush1.bf16.msra.mxu0 0
    %1036 = vmatprep.subr.bf16.mxu0 0
    %1037 = vmatpush1.bf16.msra.mxu0 0
    %1038 = vmatprep.subr.bf16.mxu0 0
    %1039 = vmatpush1.bf16.msra.mxu0 0
    %1040 = vmatprep.subr.bf16.mxu0 0
    %1041 = vmatpush1.bf16.msra.mxu0 0
    %1042 = vmatprep.subr.bf16.mxu0 0
    %1043 = vmatpush1.bf16.msra.mxu0 0
    %1044 = vmatprep.subr.bf16.mxu0 0
    %1045 = vmatpush1.bf16.msra.mxu0 0
    %1046 = vmatprep.subr.bf16.mxu0 0
    %1047 = vmatpush1.bf16.msra.mxu0 0
    %1048 = vmatprep.subr.bf16.mxu0 0
    %1049 = vmatpush1.bf16.msra.mxu0 0
    %1050 = vmatprep.subr.bf16.mxu0 0
    %1051 = vmatpush1.bf16.msra.mxu0 0
    %1052 = vmatprep.subr.bf16.mxu0 0
    %1053 = vmatpush1.bf16.msra.mxu0 0
    %1054 = vmatprep.subr.bf16.mxu0 0
    %1055 = vmatpush1.bf16.msra.mxu0 0
    %1056 = vmatprep.subr.bf16.mxu0 0
    %1057 = vmatpush1.bf16.msra.mxu0 0
    %1058 = vmatprep.subr.bf16.mxu0 0
    %1059 = vmatpush1.bf16.msra.mxu0 0
    %1060 = vmatprep.subr.bf16.mxu0 0
    %1061 = vmatpush1.bf16.msra.mxu0 0
    %1062 = vmatprep.subr.bf16.mxu0 0
    %1063 = vmatpush1.bf16.msra.mxu0 0
    %1064 = vmatprep.mubr.bf16.mxu0 0
    %1065 = vmatmul.mubr.bf16.gmra.mrb[0].mxu0 %v1027
    %v1066 = vpop.f32.mrb[0].mxu0
    %v1067 = vadd.f32 0.0, %v1066
    %v1068 = vpop.f32.mrb[0].mxu0
    %v1069 = vpop.f32.mrb[0].mxu0
    %v1070 = vadd.f32 0.0, %v1069
    %v1071 = vpop.f32.mrb[0].mxu0
    %1072 = vmatprep.mubr.bf16.mxu0 0
    %1073 = vmatmul.mubr.bf16.gmra.mrb[0].mxu0 %v1030
    %v1074 = vpop.f32.mrb[0].mxu0
    %v1075 = vadd.f32 0.0, %v1074
    %v1076 = vpop.f32.mrb[0].mxu0
    %v1077 = vpop.f32.mrb[0].mxu0
    %v1078 = vadd.f32 0.0, %v1077
    %v1079 = vpop.f32.mrb[0].mxu0
    %1080 = vdwg.mxu0
    %v1081 = vmul.f32 %v1067, %v769
    %v1082 = vmul.f32 %v1070, %v770
    %v1083 = vmul.f32 %v1075, %v771
    %v1084 = vmul.f32 %v1078, %v772
    %v1085 = vpack.c.bf16 %v1082, %v1081
    %v1086 = vpack.c.bf16 %v1084, %v1083
    %v1089 = vunpack.c.l.b16 %v777
    %v1090 = vunpack.c.l.b16 %v778
    %v1091 = vpack.c.b16 %v1090, %v1089
    %vm1092 = vcmask 261120
    %v1094 = vsel %vm1092, %v1091, 0
    %1096 = vmatprep.subr.bf16.mxu0 0
    %1097 = vmatpush1.bf16.msra.mxu0 %v1085
    %1098 = vmatprep.subr.bf16.mxu0 0
    %1099 = vmatpush1.bf16.msra.mxu0 %v1086
    %1100 = vmatprep.subr.bf16.mxu0 0
    %1101 = vmatpush1.bf16.msra.mxu0 0
    %1102 = vmatprep.subr.bf16.mxu0 0
    %1103 = vmatpush1.bf16.msra.mxu0 0
    %1104 = vmatprep.subr.bf16.mxu0 0
    %1105 = vmatpush1.bf16.msra.mxu0 0
    %1106 = vmatprep.subr.bf16.mxu0 0
    %1107 = vmatpush1.bf16.msra.mxu0 0
    %1108 = vmatprep.subr.bf16.mxu0 0
    %1109 = vmatpush1.bf16.msra.mxu0 0
    %1110 = vmatprep.subr.bf16.mxu0 0
    %1111 = vmatpush1.bf16.msra.mxu0 0
    %1112 = vmatprep.subr.bf16.mxu0 0
    %1113 = vmatpush1.bf16.msra.mxu0 0
    %1114 = vmatprep.subr.bf16.mxu0 0
    %1115 = vmatpush1.bf16.msra.mxu0 0
    %1116 = vmatprep.subr.bf16.mxu0 0
    %1117 = vmatpush1.bf16.msra.mxu0 0
    %1118 = vmatprep.subr.bf16.mxu0 0
    %1119 = vmatpush1.bf16.msra.mxu0 0
    %1120 = vmatprep.subr.bf16.mxu0 0
    %1121 = vmatpush1.bf16.msra.mxu0 0
    %1122 = vmatprep.subr.bf16.mxu0 0
    %1123 = vmatpush1.bf16.msra.mxu0 0
    %1124 = vmatprep.subr.bf16.mxu0 0
    %1125 = vmatpush1.bf16.msra.mxu0 0
    %1126 = vmatprep.subr.bf16.mxu0 0
    %1127 = vmatpush1.bf16.msra.mxu0 0
    %1128 = vmatprep.mubr.bf16.mxu0 0
    %1129 = vmatmul.mubr.bf16.gmra.mrb[0].mxu0 %v1094
    %v1130 = vpop.f32.mrb[0].mxu0
    %v1131 = vadd.f32 0.0, %v1130
    %v1132 = vpop.f32.mrb[0].mxu0
    %v1133 = vpop.f32.mrb[0].mxu0
    %v1134 = vadd.f32 0.0, %v1133
    %v1135 = vpop.f32.mrb[0].mxu0
    %1136 = vdwg.mxu0
    %v1137 = vpack.c.bf16 %v1134, %v1131
    %v1154 = vunpack.c.l.b16 %v795
    %v1155 = vunpack.c.l.b16 %v796
    %v1156 = vunpack.c.l.b16 %v797
    %v1157 = vunpack.c.l.b16 %v798
    %v1158 = vunpack.c.l.b16 %v799
    %v1159 = vunpack.c.l.b16 %v800
    %v1160 = vunpack.c.l.b16 %v801
    %v1161 = vunpack.c.l.b16 %v802
    %v1162 = vunpack.c.l.b16 %v803
    %v1163 = vunpack.c.l.b16 %v804
    %v1164 = vunpack.c.l.b16 %v805
    %v1165 = vunpack.c.l.b16 %v806
    %v1166 = vunpack.c.l.b16 %v807
    %v1167 = vunpack.c.l.b16 %v808
    %v1168 = vunpack.c.l.b16 %v809
    %v1169 = vunpack.c.l.b16 %v810
    %v1170 = vpack.c.b16 %v1155, %v1154
    %v1171 = vpack.c.b16 %v1157, %v1156
    %v1172 = vpack.c.b16 %v1159, %v1158
    %v1173 = vpack.c.b16 %v1161, %v1160
    %v1174 = vpack.c.b16 %v1163, %v1162
    %v1175 = vpack.c.b16 %v1165, %v1164
    %v1176 = vpack.c.b16 %v1167, %v1166
    %v1177 = vpack.c.b16 %v1169, %v1168
    %1186 = vmatprep.subr.bf16.mxu0 0
    %1187 = vmatpush1.bf16.msra.mxu0 %v1170
    %1188 = vmatprep.subr.bf16.mxu0 0
    %1189 = vmatpush1.bf16.msra.mxu0 %v1171
    %1190 = vmatprep.subr.bf16.mxu0 0
    %1191 = vmatpush1.bf16.msra.mxu0 %v1172
    %1192 = vmatprep.subr.bf16.mxu0 0
    %1193 = vmatpush1.bf16.msra.mxu0 %v1173
    %1194 = vmatprep.subr.bf16.mxu0 0
    %1195 = vmatpush1.bf16.msra.mxu0 %v1174
    %1196 = vmatprep.subr.bf16.mxu0 0
    %1197 = vmatpush1.bf16.msra.mxu0 %v1175
    %1198 = vmatprep.subr.bf16.mxu0 0
    %1199 = vmatpush1.bf16.msra.mxu0 %v1176
    %1200 = vmatprep.subr.bf16.mxu0 0
    %1201 = vmatpush1.bf16.msra.mxu0 %v1177
    %1202 = vmatprep.subr.bf16.mxu0 0
    %1203 = vmatpush1.bf16.msra.mxu0 0
    %1204 = vmatprep.subr.bf16.mxu0 0
    %1205 = vmatpush1.bf16.msra.mxu0 0
    %1206 = vmatprep.subr.bf16.mxu0 0
    %1207 = vmatpush1.bf16.msra.mxu0 0
    %1208 = vmatprep.subr.bf16.mxu0 0
    %1209 = vmatpush1.bf16.msra.mxu0 0
    %1210 = vmatprep.subr.bf16.mxu0 0
    %1211 = vmatpush1.bf16.msra.mxu0 0
    %1212 = vmatprep.subr.bf16.mxu0 0
    %1213 = vmatpush1.bf16.msra.mxu0 0
    %1214 = vmatprep.subr.bf16.mxu0 0
    %1215 = vmatpush1.bf16.msra.mxu0 0
    %1216 = vmatprep.subr.bf16.mxu0 0
    %1217 = vmatpush1.bf16.msra.mxu0 0
    %1218 = vmatprep.mubr.bf16.mxu0 0
    %1219 = vmatmul.mubr.bf16.gmra.mrb[0].mxu0 %v1137
    %v1220 = vpop.f32.mrb[0].mxu0
    %v1221 = vadd.f32 %v832, %v1220
    %v1222 = vpop.f32.mrb[0].mxu0
    %v1223 = vpop.f32.mrb[0].mxu0
    %v1224 = vadd.f32 %v832, %v1223
    %v1225 = vpop.f32.mrb[0].mxu0
    %1226 = vdwg.mxu0
    %v1227 = vmax.f32 %v1221, 0.0
    %v1228 = vmax.f32 %v1224, 0.0
    %v1229 = vand.u32 2147483647, %v1221
    %v1230 = vand.u32 2147483647, %v1224
    %v1231 = vsub.f32 0.0, %v1229
    %v1232 = vsub.f32 0.0, %v1230
    %v1233 = vmul.f32 %v1231, 1.442695
    %v1234 = vpow.pop %v1233
    %v1235 = vmul.f32 %v1232, 1.442695
    %v1236 = vpow.pop %v1235
    %v1237 = vadd.f32 %v1234, 1.0
    %v1238 = vlog2.pop %v1237
    %v1239 = vmul.f32 %v1238, 0.6931472
    %v1240 = vmul.f32 -0.5, %v1234
    %v1241 = vadd.f32 %v1240, 1.0
    %v1242 = vmul.f32 %v1241, %v1234
    %v1243 = vand.u32 2147483647, %v1234
    %vm1244 = vcmp.lt.f32.partialorder %v1243, 0.0004427343
    %v1245 = vsel %vm1244, %v1242, %v1239
    %v1246 = vadd.f32 %v1236, 1.0
    %v1247 = vlog2.pop %v1246
    %v1248 = vmul.f32 %v1247, 0.6931472
    %v1249 = vmul.f32 -0.5, %v1236
    %v1250 = vadd.f32 %v1249, 1.0
    %v1251 = vmul.f32 %v1250, %v1236
    %v1252 = vand.u32 2147483647, %v1236
    %vm1253 = vcmp.lt.f32.partialorder %v1252, 0.0004427343
    %v1254 = vsel %vm1253, %v1251, %v1248
    %v1255 = vadd.f32 %v1227, %v1245
    %v1256 = vadd.f32 %v1228, %v1254
    %v1257 = vsub.f32 %v1255, 0.6931472
    %v1258 = vsub.f32 %v1256, 0.6931472
    %v1259 = vpack.c.bf16 %v1258, %v1257
    %v1276 = vunpack.c.l.b16 %v811
    %v1277 = vunpack.c.l.b16 %v812
    %v1278 = vunpack.c.l.b16 %v813
    %v1279 = vunpack.c.l.b16 %v814
    %v1280 = vunpack.c.l.b16 %v815
    %v1281 = vunpack.c.l.b16 %v816
    %v1282 = vunpack.c.l.b16 %v817
    %v1283 = vunpack.c.l.b16 %v818
    %v1284 = vunpack.c.l.b16 %v819
    %v1285 = vunpack.c.l.b16 %v820
    %v1286 = vunpack.c.l.b16 %v821
    %v1287 = vunpack.c.l.b16 %v822
    %v1288 = vunpack.c.l.b16 %v823
    %v1289 = vunpack.c.l.b16 %v824
    %v1290 = vunpack.c.l.b16 %v825
    %v1291 = vunpack.c.l.b16 %v826
    %v1292 = vpack.c.b16 %v1277, %v1276
    %v1293 = vpack.c.b16 %v1279, %v1278
    %v1294 = vpack.c.b16 %v1281, %v1280
    %v1295 = vpack.c.b16 %v1283, %v1282
    %v1296 = vpack.c.b16 %v1285, %v1284
    %v1297 = vpack.c.b16 %v1287, %v1286
    %v1298 = vpack.c.b16 %v1289, %v1288
    %v1299 = vpack.c.b16 %v1291, %v1290
    %1308 = vmatprep.subr.bf16.mxu0 0
    %1309 = vmatpush1.bf16.msra.mxu0 %v1292
    %1310 = vmatprep.subr.bf16.mxu0 0
    %1311 = vmatpush1.bf16.msra.mxu0 %v1293
    %1312 = vmatprep.subr.bf16.mxu0 0
    %1313 = vmatpush1.bf16.msra.mxu0 %v1294
    %1314 = vmatprep.subr.bf16.mxu0 0
    %1315 = vmatpush1.bf16.msra.mxu0 %v1295
    %1316 = vmatprep.subr.bf16.mxu0 0
    %1317 = vmatpush1.bf16.msra.mxu0 %v1296
    %1318 = vmatprep.subr.bf16.mxu0 0
    %1319 = vmatpush1.bf16.msra.mxu0 %v1297
    %1320 = vmatprep.subr.bf16.mxu0 0
    %1321 = vmatpush1.bf16.msra.mxu0 %v1298
    %1322 = vmatprep.subr.bf16.mxu0 0
    %1323 = vmatpush1.bf16.msra.mxu0 %v1299
    %1324 = vmatprep.subr.bf16.mxu0 0
    %1325 = vmatpush1.bf16.msra.mxu0 0
    %1326 = vmatprep.subr.bf16.mxu0 0
    %1327 = vmatpush1.bf16.msra.mxu0 0
    %1328 = vmatprep.subr.bf16.mxu0 0
    %1329 = vmatpush1.bf16.msra.mxu0 0
    %1330 = vmatprep.subr.bf16.mxu0 0
    %1331 = vmatpush1.bf16.msra.mxu0 0
    %1332 = vmatprep.subr.bf16.mxu0 0
    %1333 = vmatpush1.bf16.msra.mxu0 0
    %1334 = vmatprep.subr.bf16.mxu0 0
    %1335 = vmatpush1.bf16.msra.mxu0 0
    %1336 = vmatprep.subr.bf16.mxu0 0
    %1337 = vmatpush1.bf16.msra.mxu0 0
    %1338 = vmatprep.subr.bf16.mxu0 0
    %1339 = vmatpush1.bf16.msra.mxu0 0
    %1340 = vmatprep.mubr.bf16.mxu0 0
    %1341 = vmatmul.mubr.bf16.gmra.mrb[0].mxu0 %v1259
    %v1342 = vpop.f32.mrb[0].mxu0
    %v1343 = vadd.f32 0.0, %v1342
    %v1344 = vpop.f32.mrb[0].mxu0
    %v1345 = vpop.f32.mrb[0].mxu0
    %v1346 = vadd.f32 0.0, %v1345
    %v1347 = vpop.f32.mrb[0].mxu0
    %1348 = vdwg.mxu0
    %v1349 = vmax.f32 %v1343, 0.0
    %v1350 = vmax.f32 %v1346, 0.0
    %v1351 = vpack.c.bf16 %v1350, %v1349
    %v1384 = vunpack.c.l.b16 %v834
    %v1385 = vunpack.c.h.b16 %v834
    %v1386 = vunpack.c.l.b16 %v835
    %v1387 = vunpack.c.h.b16 %v835
    %v1388 = vunpack.c.l.b16 %v836
    %v1389 = vunpack.c.h.b16 %v836
    %v1390 = vunpack.c.l.b16 %v837
    %v1391 = vunpack.c.h.b16 %v837
    %v1392 = vunpack.c.l.b16 %v838
    %v1393 = vunpack.c.h.b16 %v838
    %v1394 = vunpack.c.l.b16 %v839
    %v1395 = vunpack.c.h.b16 %v839
    %v1396 = vunpack.c.l.b16 %v840
    %v1397 = vunpack.c.h.b16 %v840
    %v1398 = vunpack.c.l.b16 %v841
    %v1399 = vunpack.c.h.b16 %v841
    %v1400 = vunpack.c.l.b16 %v842
    %v1401 = vunpack.c.h.b16 %v842
    %v1402 = vunpack.c.l.b16 %v843
    %v1403 = vunpack.c.h.b16 %v843
    %v1404 = vunpack.c.l.b16 %v844
    %v1405 = vunpack.c.h.b16 %v844
    %v1406 = vunpack.c.l.b16 %v845
    %v1407 = vunpack.c.h.b16 %v845
    %v1408 = vunpack.c.l.b16 %v846
    %v1409 = vunpack.c.h.b16 %v846
    %v1410 = vunpack.c.l.b16 %v847
    %v1411 = vunpack.c.h.b16 %v847
    %v1412 = vunpack.c.l.b16 %v848
    %v1413 = vunpack.c.h.b16 %v848
    %v1414 = vunpack.c.l.b16 %v849
    %v1415 = vunpack.c.h.b16 %v849
    %v1416 = vunpack.c.l.b16 %v850
    %v1417 = vunpack.c.h.b16 %v850
    %v1418 = vunpack.c.l.b16 %v851
    %v1419 = vunpack.c.h.b16 %v851
    %v1420 = vunpack.c.l.b16 %v852
    %v1421 = vunpack.c.h.b16 %v852
    %v1422 = vunpack.c.l.b16 %v853
    %v1423 = vunpack.c.h.b16 %v853
    %v1424 = vunpack.c.l.b16 %v854
    %v1425 = vunpack.c.h.b16 %v854
    %v1426 = vunpack.c.l.b16 %v855
    %v1427 = vunpack.c.h.b16 %v855
    %v1428 = vunpack.c.l.b16 %v856
    %v1429 = vunpack.c.h.b16 %v856
    %v1430 = vunpack.c.l.b16 %v857
    %v1431 = vunpack.c.h.b16 %v857
    %v1432 = vunpack.c.l.b16 %v858
    %v1433 = vunpack.c.h.b16 %v858
    %v1434 = vunpack.c.l.b16 %v859
    %v1435 = vunpack.c.h.b16 %v859
    %v1436 = vunpack.c.l.b16 %v860
    %v1437 = vunpack.c.h.b16 %v860
    %v1438 = vunpack.c.l.b16 %v861
    %v1439 = vunpack.c.h.b16 %v861
    %v1440 = vunpack.c.l.b16 %v862
    %v1441 = vunpack.c.h.b16 %v862
    %v1442 = vunpack.c.l.b16 %v863
    %v1443 = vunpack.c.h.b16 %v863
    %v1444 = vunpack.c.l.b16 %v864
    %v1445 = vunpack.c.h.b16 %v864
    %v1446 = vunpack.c.l.b16 %v865
    %v1447 = vunpack.c.h.b16 %v865
    %v1448 = vpack.c.b16 %v1386, %v1384
    %v1449 = vpack.c.b16 %v1387, %v1385
    %v1450 = vpack.c.b16 %v1390, %v1388
    %v1451 = vpack.c.b16 %v1391, %v1389
    %v1452 = vpack.c.b16 %v1394, %v1392
    %v1453 = vpack.c.b16 %v1395, %v1393
    %v1454 = vpack.c.b16 %v1398, %v1396
    %v1455 = vpack.c.b16 %v1399, %v1397
    %v1456 = vpack.c.b16 %v1402, %v1400
    %v1457 = vpack.c.b16 %v1403, %v1401
    %v1458 = vpack.c.b16 %v1406, %v1404
    %v1459 = vpack.c.b16 %v1407, %v1405
    %v1460 = vpack.c.b16 %v1410, %v1408
    %v1461 = vpack.c.b16 %v1411, %v1409
    %v1462 = vpack.c.b16 %v1414, %v1412
    %v1463 = vpack.c.b16 %v1415, %v1413
    %v1464 = vpack.c.b16 %v1418, %v1416
    %v1465 = vpack.c.b16 %v1419, %v1417
    %v1466 = vpack.c.b16 %v1422, %v1420
    %v1467 = vpack.c.b16 %v1423, %v1421
    %v1468 = vpack.c.b16 %v1426, %v1424
    %v1469 = vpack.c.b16 %v1427, %v1425
    %v1470 = vpack.c.b16 %v1430, %v1428
    %v1471 = vpack.c.b16 %v1431, %v1429
    %v1472 = vpack.c.b16 %v1434, %v1432
    %v1473 = vpack.c.b16 %v1435, %v1433
    %v1474 = vpack.c.b16 %v1438, %v1436
    %v1475 = vpack.c.b16 %v1439, %v1437
    %v1476 = vpack.c.b16 %v1442, %v1440
    %v1477 = vpack.c.b16 %v1443, %v1441
    %v1478 = vpack.c.b16 %v1446, %v1444
    %v1479 = vpack.c.b16 %v1447, %v1445
    %1512 = vmatprep.subr.bf16.mxu0 %v1449
    %1513 = vmatpush1.bf16.msra.mxu0 %v1448
    %1514 = vmatprep.subr.bf16.mxu0 %v1451
    %1515 = vmatpush1.bf16.msra.mxu0 %v1450
    %1516 = vmatprep.subr.bf16.mxu0 %v1453
    %1517 = vmatpush1.bf16.msra.mxu0 %v1452
    %1518 = vmatprep.subr.bf16.mxu0 %v1455
    %1519 = vmatpush1.bf16.msra.mxu0 %v1454
    %1520 = vmatprep.subr.bf16.mxu0 %v1457
    %1521 = vmatpush1.bf16.msra.mxu0 %v1456
    %1522 = vmatprep.subr.bf16.mxu0 %v1459
    %1523 = vmatpush1.bf16.msra.mxu0 %v1458
    %1524 = vmatprep.subr.bf16.mxu0 %v1461
    %1525 = vmatpush1.bf16.msra.mxu0 %v1460
    %1526 = vmatprep.subr.bf16.mxu0 %v1463
    %1527 = vmatpush1.bf16.msra.mxu0 %v1462
    %1528 = vmatprep.subr.bf16.mxu0 %v1465
    %1529 = vmatpush1.bf16.msra.mxu0 %v1464
    %1530 = vmatprep.subr.bf16.mxu0 %v1467
    %1531 = vmatpush1.bf16.msra.mxu0 %v1466
    %1532 = vmatprep.subr.bf16.mxu0 %v1469
    %1533 = vmatpush1.bf16.msra.mxu0 %v1468
    %1534 = vmatprep.subr.bf16.mxu0 %v1471
    %1535 = vmatpush1.bf16.msra.mxu0 %v1470
    %1536 = vmatprep.subr.bf16.mxu0 %v1473
    %1537 = vmatpush1.bf16.msra.mxu0 %v1472
    %1538 = vmatprep.subr.bf16.mxu0 %v1475
    %1539 = vmatpush1.bf16.msra.mxu0 %v1474
    %1540 = vmatprep.subr.bf16.mxu0 %v1477
    %1541 = vmatpush1.bf16.msra.mxu0 %v1476
    %1542 = vmatprep.subr.bf16.mxu0 %v1479
    %1543 = vmatpush1.bf16.msra.mxu0 %v1478
    %1544 = vmatprep.mubr.bf16.mxu0 %v924
    %1545 = vmatmul.mubr.bf16.gmra.mrb[0].mxu0 %v1351
    %v1546 = vpop.f32.mrb[0].mxu0
    %v1547 = vadd.f32 %v903, %v1546
    %v1548 = vpop.f32.mrb[0].mxu0
    %v1549 = vadd.f32 %v907, %v1548
    %v1550 = vpop.f32.mrb[0].mxu0
    %v1551 = vadd.f32 %v903, %v1550
    %v1552 = vpop.f32.mrb[0].mxu0
    %v1553 = vadd.f32 %v907, %v1552
    %1554 = vdwg.mxu0
    %v1555 = vsub.f32 0.0, %v1547
    %v1556 = vsub.f32 0.0, %v1551
    %v1557 = vmul.f32 %v1555, 1.442695
    %v1558 = vpow.pop %v1557
    %v1559 = vmul.f32 %v1556, 1.442695
    %v1560 = vpow.pop %v1559
    %v1561 = vadd.f32 %v1558, 1.0
    %v1562 = vadd.f32 %v1560, 1.0
    %v1563 = vrcp.pop %v1561
    %v1564 = vrcp.pop %v1562
    %v1565 = vsub.f32 0.0, %v1549
    %v1566 = vsub.f32 0.0, %v1553
    %v1567 = vmul.f32 %v1565, 1.442695
    %v1568 = vpow.pop %v1567
    %v1569 = vmul.f32 %v1566, 1.442695
    %v1570 = vpow.pop %v1569
    %v1571 = vadd.f32 %v1568, 1.0
    %v1572 = vadd.f32 %v1570, 1.0
    %v1573 = vrcp.pop %v1571
    %v1574 = vrcp.pop %v1572
    %v1591 = vunpack.c.l.b16 %v866
    %v1592 = vunpack.c.l.b16 %v867
    %v1593 = vunpack.c.l.b16 %v868
    %v1594 = vunpack.c.l.b16 %v869
    %v1595 = vunpack.c.l.b16 %v870
    %v1596 = vunpack.c.l.b16 %v871
    %v1597 = vunpack.c.l.b16 %v872
    %v1598 = vunpack.c.l.b16 %v873
    %v1599 = vunpack.c.l.b16 %v874
    %v1600 = vunpack.c.l.b16 %v875
    %v1601 = vunpack.c.l.b16 %v876
    %v1602 = vunpack.c.l.b16 %v877
    %v1603 = vunpack.c.l.b16 %v878
    %v1604 = vunpack.c.l.b16 %v879
    %v1605 = vunpack.c.l.b16 %v880
    %v1606 = vunpack.c.l.b16 %v881
    %v1607 = vpack.c.b16 %v1592, %v1591
    %v1608 = vpack.c.b16 %v1594, %v1593
    %v1609 = vpack.c.b16 %v1596, %v1595
    %v1610 = vpack.c.b16 %v1598, %v1597
    %v1611 = vpack.c.b16 %v1600, %v1599
    %v1612 = vpack.c.b16 %v1602, %v1601
    %v1613 = vpack.c.b16 %v1604, %v1603
    %v1614 = vpack.c.b16 %v1606, %v1605
    %1623 = vmatprep.subr.bf16.mxu0 0
    %1624 = vmatpush1.bf16.msra.mxu0 %v1607
    %1625 = vmatprep.subr.bf16.mxu0 0
    %1626 = vmatpush1.bf16.msra.mxu0 %v1608
    %1627 = vmatprep.subr.bf16.mxu0 0
    %1628 = vmatpush1.bf16.msra.mxu0 %v1609
    %1629 = vmatprep.subr.bf16.mxu0 0
    %1630 = vmatpush1.bf16.msra.mxu0 %v1610
    %1631 = vmatprep.subr.bf16.mxu0 0
    %1632 = vmatpush1.bf16.msra.mxu0 %v1611
    %1633 = vmatprep.subr.bf16.mxu0 0
    %1634 = vmatpush1.bf16.msra.mxu0 %v1612
    %1635 = vmatprep.subr.bf16.mxu0 0
    %1636 = vmatpush1.bf16.msra.mxu0 %v1613
    %1637 = vmatprep.subr.bf16.mxu0 0
    %1638 = vmatpush1.bf16.msra.mxu0 %v1614
    %1639 = vmatprep.subr.bf16.mxu0 0
    %1640 = vmatpush1.bf16.msra.mxu0 0
    %1641 = vmatprep.subr.bf16.mxu0 0
    %1642 = vmatpush1.bf16.msra.mxu0 0
    %1643 = vmatprep.subr.bf16.mxu0 0
    %1644 = vmatpush1.bf16.msra.mxu0 0
    %1645 = vmatprep.subr.bf16.mxu0 0
    %1646 = vmatpush1.bf16.msra.mxu0 0
    %1647 = vmatprep.subr.bf16.mxu0 0
    %1648 = vmatpush1.bf16.msra.mxu0 0
    %1649 = vmatprep.subr.bf16.mxu0 0
    %1650 = vmatpush1.bf16.msra.mxu0 0
    %1651 = vmatprep.subr.bf16.mxu0 0
    %1652 = vmatpush1.bf16.msra.mxu0 0
    %1653 = vmatprep.subr.bf16.mxu0 0
    %1654 = vmatpush1.bf16.msra.mxu0 0
    %1655 = vmatprep.mubr.bf16.mxu0 0
    %1656 = vmatmul.mubr.bf16.gmra.mrb[0].mxu0 %v1351
    %v1657 = vpop.f32.mrb[0].mxu0
    %v1658 = vadd.f32 %v915, %v1657
    %v1659 = vpop.f32.mrb[0].mxu0
    %v1660 = vpop.f32.mrb[0].mxu0
    %v1661 = vadd.f32 %v915, %v1660
    %v1662 = vpop.f32.mrb[0].mxu0
    %1663 = vdwg.mxu0
    %v1680 = vunpack.c.l.b16 %v882
    %v1681 = vunpack.c.l.b16 %v883
    %v1682 = vunpack.c.l.b16 %v884
    %v1683 = vunpack.c.l.b16 %v885
    %v1684 = vunpack.c.l.b16 %v886
    %v1685 = vunpack.c.l.b16 %v887
    %v1686 = vunpack.c.l.b16 %v888
    %v1687 = vunpack.c.l.b16 %v889
    %v1688 = vunpack.c.l.b16 %v890
    %v1689 = vunpack.c.l.b16 %v891
    %v1690 = vunpack.c.l.b16 %v892
    %v1691 = vunpack.c.l.b16 %v893
    %v1692 = vunpack.c.l.b16 %v894
    %v1693 = vunpack.c.l.b16 %v895
    %v1694 = vunpack.c.l.b16 %v896
    %v1695 = vunpack.c.l.b16 %v897
    %v1696 = vpack.c.b16 %v1681, %v1680
    %v1697 = vpack.c.b16 %v1683, %v1682
    %v1698 = vpack.c.b16 %v1685, %v1684
    %v1699 = vpack.c.b16 %v1687, %v1686
    %v1700 = vpack.c.b16 %v1689, %v1688
    %v1701 = vpack.c.b16 %v1691, %v1690
    %v1702 = vpack.c.b16 %v1693, %v1692
    %v1703 = vpack.c.b16 %v1695, %v1694
    %1712 = vmatprep.subr.bf16.mxu0 0
    %1713 = vmatpush1.bf16.msra.mxu0 %v1696
    %1714 = vmatprep.subr.bf16.mxu0 0
    %1715 = vmatpush1.bf16.msra.mxu0 %v1697
    %1716 = vmatprep.subr.bf16.mxu0 0
    %1717 = vmatpush1.bf16.msra.mxu0 %v1698
    %1718 = vmatprep.subr.bf16.mxu0 0
    %1719 = vmatpush1.bf16.msra.mxu0 %v1699
    %1720 = vmatprep.subr.bf16.mxu0 0
    %1721 = vmatpush1.bf16.msra.mxu0 %v1700
    %1722 = vmatprep.subr.bf16.mxu0 0
    %1723 = vmatpush1.bf16.msra.mxu0 %v1701
    %1724 = vmatprep.subr.bf16.mxu0 0
    %1725 = vmatpush1.bf16.msra.mxu0 %v1702
    %1726 = vmatprep.subr.bf16.mxu0 0
    %1727 = vmatpush1.bf16.msra.mxu0 %v1703
    %1728 = vmatprep.subr.bf16.mxu0 0
    %1729 = vmatpush1.bf16.msra.mxu0 0
    %1730 = vmatprep.subr.bf16.mxu0 0
    %1731 = vmatpush1.bf16.msra.mxu0 0
    %1732 = vmatprep.subr.bf16.mxu0 0
    %1733 = vmatpush1.bf16.msra.mxu0 0
    %1734 = vmatprep.subr.bf16.mxu0 0
    %1735 = vmatpush1.bf16.msra.mxu0 0
    %1736 = vmatprep.subr.bf16.mxu0 0
    %1737 = vmatpush1.bf16.msra.mxu0 0
    %1738 = vmatprep.subr.bf16.mxu0 0
    %1739 = vmatpush1.bf16.msra.mxu0 0
    %1740 = vmatprep.subr.bf16.mxu0 0
    %1741 = vmatpush1.bf16.msra.mxu0 0
    %1742 = vmatprep.subr.bf16.mxu0 0
    %1743 = vmatpush1.bf16.msra.mxu0 0
    %1744 = vmatprep.mubr.bf16.mxu0 0
    %1745 = vmatmul.mubr.bf16.gmra.mrb[0].mxu0 %v924
    %v1746 = vpop.f32.mrb[0].mxu0
    %v1747 = vadd.f32 %v922, %v1746
    %v1748 = vpop.f32.mrb[0].mxu0
    %v1749 = vpop.f32.mrb[0].mxu0
    %v1750 = vadd.f32 %v922, %v1749
    %v1751 = vpop.f32.mrb[0].mxu0
    %1752 = vdwg.mxu0
    %v1753 = vmul.f32 %v1563, %v1747
    %v1754 = vmul.f32 %v1564, %v1750
    %v1755 = vadd.f32 %v1658, %v1753
    %v1756 = vadd.f32 %v1661, %v1754
    %v1757 = vtanh.pop %v1755
    %v1758 = vtanh.pop %v1756
    %v1759 = vsub.f32 1.0, %v1573
    %v1760 = vsub.f32 1.0, %v1574
    %v1761 = vmul.f32 %v1759, %v1757
    %v1762 = vmul.f32 %v1760, %v1758
    %v1763 = vmul.f32 %v1573, %v481
    %v1764 = vmul.f32 %v1574, %v482
    %v1765 = vadd.f32 %v1761, %v1763
    %v1766 = vadd.f32 %v1762, %v1764
    %v1767 = vpack.c.bf16 %v1766, %v1765
    %1768 = vmatprep.subr.bf16.mxu0 0
    %1769 = vmatpush1.bf16.msra.mxu0 %v957
    %1770 = vmatprep.subr.bf16.mxu0 0
    %1771 = vmatpush1.bf16.msra.mxu0 %v958
    %1772 = vmatprep.subr.bf16.mxu0 0
    %1773 = vmatpush1.bf16.msra.mxu0 %v959
    %1774 = vmatprep.subr.bf16.mxu0 0
    %1775 = vmatpush1.bf16.msra.mxu0 %v960
    %1776 = vmatprep.subr.bf16.mxu0 0
    %1777 = vmatpush1.bf16.msra.mxu0 %v961
    %1778 = vmatprep.subr.bf16.mxu0 0
    %1779 = vmatpush1.bf16.msra.mxu0 %v962
    %1780 = vmatprep.subr.bf16.mxu0 0
    %1781 = vmatpush1.bf16.msra.mxu0 %v963
    %1782 = vmatprep.subr.bf16.mxu0 0
    %1783 = vmatpush1.bf16.msra.mxu0 %v964
    %1784 = vmatprep.subr.bf16.mxu0 0
    %1785 = vmatpush1.bf16.msra.mxu0 0
    %1786 = vmatprep.subr.bf16.mxu0 0
    %1787 = vmatpush1.bf16.msra.mxu0 0
    %1788 = vmatprep.subr.bf16.mxu0 0
    %1789 = vmatpush1.bf16.msra.mxu0 0
    %1790 = vmatprep.subr.bf16.mxu0 0
    %1791 = vmatpush1.bf16.msra.mxu0 0
    %1792 = vmatprep.subr.bf16.mxu0 0
    %1793 = vmatpush1.bf16.msra.mxu0 0
    %1794 = vmatprep.subr.bf16.mxu0 0
    %1795 = vmatpush1.bf16.msra.mxu0 0
    %1796 = vmatprep.subr.bf16.mxu0 0
    %1797 = vmatpush1.bf16.msra.mxu0 0
    %1798 = vmatprep.subr.bf16.mxu0 0
    %1799 = vmatpush1.bf16.msra.mxu0 0
    %1800 = vmatprep.mubr.bf16.mxu0 0
    %1801 = vmatmul.mubr.bf16.gmra.mrb[0].mxu0 %v1767
    %v1802 = vpop.f32.mrb[0].mxu0
    %v1803 = vadd.f32 0.0, %v1802
    %v1804 = vpop.f32.mrb[0].mxu0
    %v1805 = vpop.f32.mrb[0].mxu0
    %v1806 = vadd.f32 0.0, %v1805
    %v1807 = vpop.f32.mrb[0].mxu0
    %1808 = vdwg.mxu0
    %v1809 = vpack.c.bf16 %v1806, %v1803
    %1810 = vmatprep.subr.bf16.mxu0 0
    %1811 = vmatpush1.bf16.msra.mxu0 %v1809
    %1812 = vmatprep.subr.bf16.mxu0 0
    %1813 = vmatpush1.bf16.msra.mxu0 0
    %1814 = vmatprep.subr.bf16.mxu0 0
    %1815 = vmatpush1.bf16.msra.mxu0 0
    %1816 = vmatprep.subr.bf16.mxu0 0
    %1817 = vmatpush1.bf16.msra.mxu0 0
    %1818 = vmatprep.subr.bf16.mxu0 0
    %1819 = vmatpush1.bf16.msra.mxu0 0
    %1820 = vmatprep.subr.bf16.mxu0 0
    %1821 = vmatpush1.bf16.msra.mxu0 0
    %1822 = vmatprep.subr.bf16.mxu0 0
    %1823 = vmatpush1.bf16.msra.mxu0 0
    %1824 = vmatprep.subr.bf16.mxu0 0
    %1825 = vmatpush1.bf16.msra.mxu0 0
    %1826 = vmatprep.subr.bf16.mxu0 0
    %1827 = vmatpush1.bf16.msra.mxu0 0
    %1828 = vmatprep.subr.bf16.mxu0 0
    %1829 = vmatpush1.bf16.msra.mxu0 0
    %1830 = vmatprep.subr.bf16.mxu0 0
    %1831 = vmatpush1.bf16.msra.mxu0 0
    %1832 = vmatprep.subr.bf16.mxu0 0
    %1833 = vmatpush1.bf16.msra.mxu0 0
    %1834 = vmatprep.subr.bf16.mxu0 0
    %1835 = vmatpush1.bf16.msra.mxu0 0
    %1836 = vmatprep.subr.bf16.mxu0 0
    %1837 = vmatpush1.bf16.msra.mxu0 0
    %1838 = vmatprep.subr.bf16.mxu0 0
    %1839 = vmatpush1.bf16.msra.mxu0 0
    %1840 = vmatprep.subr.bf16.mxu0 0
    %1841 = vmatpush1.bf16.msra.mxu0 0
    %1842 = vmatprep.mubr.bf16.mxu0 0
    %1843 = vmatmul.mubr.bf16.gmra.mrb[0].mxu0 %v1027
    %v1844 = vpop.f32.mrb[0].mxu0
    %v1845 = vadd.f32 0.0, %v1844
    %v1846 = vpop.f32.mrb[0].mxu0
    %v1847 = vpop.f32.mrb[0].mxu0
    %v1848 = vadd.f32 0.0, %v1847
    %v1849 = vpop.f32.mrb[0].mxu0
    %1850 = vmatprep.mubr.bf16.mxu0 0
    %1851 = vmatmul.mubr.bf16.gmra.mrb[0].mxu0 %v1030
    %v1852 = vpop.f32.mrb[0].mxu0
    %v1853 = vadd.f32 0.0, %v1852
    %v1854 = vpop.f32.mrb[0].mxu0
    %v1855 = vpop.f32.mrb[0].mxu0
    %v1856 = vadd.f32 0.0, %v1855
    %v1857 = vpop.f32.mrb[0].mxu0
    %1858 = vdwg.mxu0
    %v1859 = vmul.f32 %v1845, %v769
    %v1860 = vmul.f32 %v1848, %v770
    %v1861 = vmul.f32 %v1853, %v771
    %v1862 = vmul.f32 %v1856, %v772
    %v1863 = vpack.c.bf16 %v1860, %v1859
    %v1864 = vpack.c.bf16 %v1862, %v1861
    %1865 = vmatprep.subr.bf16.mxu0 0
    %1866 = vmatpush1.bf16.msra.mxu0 %v1863
    %1867 = vmatprep.subr.bf16.mxu0 0
    %1868 = vmatpush1.bf16.msra.mxu0 %v1864
    %1869 = vmatprep.subr.bf16.mxu0 0
    %1870 = vmatpush1.bf16.msra.mxu0 0
    %1871 = vmatprep.subr.bf16.mxu0 0
    %1872 = vmatpush1.bf16.msra.mxu0 0
    %1873 = vmatprep.subr.bf16.mxu0 0
    %1874 = vmatpush1.bf16.msra.mxu0 0
    %1875 = vmatprep.subr.bf16.mxu0 0
    %1876 = vmatpush1.bf16.msra.mxu0 0
    %1877 = vmatprep.subr.bf16.mxu0 0
    %1878 = vmatpush1.bf16.msra.mxu0 0
    %1879 = vmatprep.subr.bf16.mxu0 0
    %1880 = vmatpush1.bf16.msra.mxu0 0
    %1881 = vmatprep.subr.bf16.mxu0 0
    %1882 = vmatpush1.bf16.msra.mxu0 0
    %1883 = vmatprep.subr.bf16.mxu0 0
    %1884 = vmatpush1.bf16.msra.mxu0 0
    %1885 = vmatprep.subr.bf16.mxu0 0
    %1886 = vmatpush1.bf16.msra.mxu0 0
    %1887 = vmatprep.subr.bf16.mxu0 0
    %1888 = vmatpush1.bf16.msra.mxu0 0
    %1889 = vmatprep.subr.bf16.mxu0 0
    %1890 = vmatpush1.bf16.msra.mxu0 0
    %1891 = vmatprep.subr.bf16.mxu0 0
    %1892 = vmatpush1.bf16.msra.mxu0 0
    %1893 = vmatprep.subr.bf16.mxu0 0
    %1894 = vmatpush1.bf16.msra.mxu0 0
    %1895 = vmatprep.subr.bf16.mxu0 0
    %1896 = vmatpush1.bf16.msra.mxu0 0
    %1897 = vmatprep.mubr.bf16.mxu0 0
    %1898 = vmatmul.mubr.bf16.gmra.mrb[0].mxu0 %v1094
    %v1899 = vpop.f32.mrb[0].mxu0
    %v1900 = vadd.f32 0.0, %v1899
    %v1901 = vpop.f32.mrb[0].mxu0
    %v1902 = vpop.f32.mrb[0].mxu0
    %v1903 = vadd.f32 0.0, %v1902
    %v1904 = vpop.f32.mrb[0].mxu0
    %1905 = vdwg.mxu0
    %v1906 = vpack.c.bf16 %v1903, %v1900
    %1907 = vmatprep.subr.bf16.mxu0 0
    %1908 = vmatpush1.bf16.msra.mxu0 %v1170
    %1909 = vmatprep.subr.bf16.mxu0 0
    %1910 = vmatpush1.bf16.msra.mxu0 %v1171
    %1911 = vmatprep.subr.bf16.mxu0 0
    %1912 = vmatpush1.bf16.msra.mxu0 %v1172
    %1913 = vmatprep.subr.bf16.mxu0 0
    %1914 = vmatpush1.bf16.msra.mxu0 %v1173
    %1915 = vmatprep.subr.bf16.mxu0 0
    %1916 = vmatpush1.bf16.msra.mxu0 %v1174
    %1917 = vmatprep.subr.bf16.mxu0 0
    %1918 = vmatpush1.bf16.msra.mxu0 %v1175
    %1919 = vmatprep.subr.bf16.mxu0 0
    %1920 = vmatpush1.bf16.msra.mxu0 %v1176
    %1921 = vmatprep.subr.bf16.mxu0 0
    %1922 = vmatpush1.bf16.msra.mxu0 %v1177
    %1923 = vmatprep.subr.bf16.mxu0 0
    %1924 = vmatpush1.bf16.msra.mxu0 0
    %1925 = vmatprep.subr.bf16.mxu0 0
    %1926 = vmatpush1.bf16.msra.mxu0 0
    %1927 = vmatprep.subr.bf16.mxu0 0
    %1928 = vmatpush1.bf16.msra.mxu0 0
    %1929 = vmatprep.subr.bf16.mxu0 0
    %1930 = vmatpush1.bf16.msra.mxu0 0
    %1931 = vmatprep.subr.bf16.mxu0 0
    %1932 = vmatpush1.bf16.msra.mxu0 0
    %1933 = vmatprep.subr.bf16.mxu0 0
    %1934 = vmatpush1.bf16.msra.mxu0 0
    %1935 = vmatprep.subr.bf16.mxu0 0
    %1936 = vmatpush1.bf16.msra.mxu0 0
    %1937 = vmatprep.subr.bf16.mxu0 0
    %1938 = vmatpush1.bf16.msra.mxu0 0
    %1939 = vmatprep.mubr.bf16.mxu0 0
    %1940 = vmatmul.mubr.bf16.gmra.mrb[0].mxu0 %v1906
    %v1941 = vpop.f32.mrb[0].mxu0
    %v1942 = vadd.f32 %v832, %v1941
    %v1943 = vpop.f32.mrb[0].mxu0
    %v1944 = vpop.f32.mrb[0].mxu0
    %v1945 = vadd.f32 %v832, %v1944
    %v1946 = vpop.f32.mrb[0].mxu0
    %1947 = vdwg.mxu0
    %v1948 = vmax.f32 %v1942, 0.0
    %v1949 = vmax.f32 %v1945, 0.0
    %v1950 = vand.u32 2147483647, %v1942
    %v1951 = vand.u32 2147483647, %v1945
    %v1952 = vsub.f32 0.0, %v1950
    %v1953 = vsub.f32 0.0, %v1951
    %v1954 = vmul.f32 %v1952, 1.442695
    %v1955 = vpow.pop %v1954
    %v1956 = vmul.f32 %v1953, 1.442695
    %v1957 = vpow.pop %v1956
    %v1958 = vadd.f32 %v1955, 1.0
    %v1959 = vlog2.pop %v1958
    %v1960 = vmul.f32 %v1959, 0.6931472
    %v1961 = vmul.f32 -0.5, %v1955
    %v1962 = vadd.f32 %v1961, 1.0
    %v1963 = vmul.f32 %v1962, %v1955
    %v1964 = vand.u32 2147483647, %v1955
    %vm1965 = vcmp.lt.f32.partialorder %v1964, 0.0004427343
    %v1966 = vsel %vm1965, %v1963, %v1960
    %v1967 = vadd.f32 %v1957, 1.0
    %v1968 = vlog2.pop %v1967
    %v1969 = vmul.f32 %v1968, 0.6931472
    %v1970 = vmul.f32 -0.5, %v1957
    %v1971 = vadd.f32 %v1970, 1.0
    %v1972 = vmul.f32 %v1971, %v1957
    %v1973 = vand.u32 2147483647, %v1957
    %vm1974 = vcmp.lt.f32.partialorder %v1973, 0.0004427343
    %v1975 = vsel %vm1974, %v1972, %v1969
    %v1976 = vadd.f32 %v1948, %v1966
    %v1977 = vadd.f32 %v1949, %v1975
    %v1978 = vsub.f32 %v1976, 0.6931472
    %v1979 = vsub.f32 %v1977, 0.6931472
    %v1980 = vpack.c.bf16 %v1979, %v1978
    %1981 = vmatprep.subr.bf16.mxu0 0
    %1982 = vmatpush1.bf16.msra.mxu0 %v1292
    %1983 = vmatprep.subr.bf16.mxu0 0
    %1984 = vmatpush1.bf16.msra.mxu0 %v1293
    %1985 = vmatprep.subr.bf16.mxu0 0
    %1986 = vmatpush1.bf16.msra.mxu0 %v1294
    %1987 = vmatprep.subr.bf16.mxu0 0
    %1988 = vmatpush1.bf16.msra.mxu0 %v1295
    %1989 = vmatprep.subr.bf16.mxu0 0
    %1990 = vmatpush1.bf16.msra.mxu0 %v1296
    %1991 = vmatprep.subr.bf16.mxu0 0
    %1992 = vmatpush1.bf16.msra.mxu0 %v1297
    %1993 = vmatprep.subr.bf16.mxu0 0
    %1994 = vmatpush1.bf16.msra.mxu0 %v1298
    %1995 = vmatprep.subr.bf16.mxu0 0
    %1996 = vmatpush1.bf16.msra.mxu0 %v1299
    %1997 = vmatprep.subr.bf16.mxu0 0
    %1998 = vmatpush1.bf16.msra.mxu0 0
    %1999 = vmatprep.subr.bf16.mxu0 0
    %2000 = vmatpush1.bf16.msra.mxu0 0
    %2001 = vmatprep.subr.bf16.mxu0 0
    %2002 = vmatpush1.bf16.msra.mxu0 0
    %2003 = vmatprep.subr.bf16.mxu0 0
    %2004 = vmatpush1.bf16.msra.mxu0 0
    %2005 = vmatprep.subr.bf16.mxu0 0
    %2006 = vmatpush1.bf16.msra.mxu0 0
    %2007 = vmatprep.subr.bf16.mxu0 0
    %2008 = vmatpush1.bf16.msra.mxu0 0
    %2009 = vmatprep.subr.bf16.mxu0 0
    %2010 = vmatpush1.bf16.msra.mxu0 0
    %2011 = vmatprep.subr.bf16.mxu0 0
    %2012 = vmatpush1.bf16.msra.mxu0 0
    %2013 = vmatprep.mubr.bf16.mxu0 0
    %2014 = vmatmul.mubr.bf16.gmra.mrb[0].mxu0 %v1980
    %v2015 = vpop.f32.mrb[0].mxu0
    %v2016 = vadd.f32 0.0, %v2015
    %v2017 = vpop.f32.mrb[0].mxu0
    %v2018 = vpop.f32.mrb[0].mxu0
    %v2019 = vadd.f32 0.0, %v2018
    %v2020 = vpop.f32.mrb[0].mxu0
    %2021 = vdwg.mxu0
    %v2022 = vmax.f32 %v2016, 0.0
    %v2023 = vmax.f32 %v2019, 0.0
    %v2024 = vpack.c.bf16 %v2023, %v2022
    %2025 = vmatprep.subr.bf16.mxu0 %v1449
    %2026 = vmatpush1.bf16.msra.mxu0 %v1448
    %2027 = vmatprep.subr.bf16.mxu0 %v1451
    %2028 = vmatpush1.bf16.msra.mxu0 %v1450
    %2029 = vmatprep.subr.bf16.mxu0 %v1453
    %2030 = vmatpush1.bf16.msra.mxu0 %v1452
    %2031 = vmatprep.subr.bf16.mxu0 %v1455
    %2032 = vmatpush1.bf16.msra.mxu0 %v1454
    %2033 = vmatprep.subr.bf16.mxu0 %v1457
    %2034 = vmatpush1.bf16.msra.mxu0 %v1456
    %2035 = vmatprep.subr.bf16.mxu0 %v1459
    %2036 = vmatpush1.bf16.msra.mxu0 %v1458
    %2037 = vmatprep.subr.bf16.mxu0 %v1461
    %2038 = vmatpush1.bf16.msra.mxu0 %v1460
    %2039 = vmatprep.subr.bf16.mxu0 %v1463
    %2040 = vmatpush1.bf16.msra.mxu0 %v1462
    %2041 = vmatprep.subr.bf16.mxu0 %v1465
    %2042 = vmatpush1.bf16.msra.mxu0 %v1464
    %2043 = vmatprep.subr.bf16.mxu0 %v1467
    %2044 = vmatpush1.bf16.msra.mxu0 %v1466
    %2045 = vmatprep.subr.bf16.mxu0 %v1469
    %2046 = vmatpush1.bf16.msra.mxu0 %v1468
    %2047 = vmatprep.subr.bf16.mxu0 %v1471
    %2048 = vmatpush1.bf16.msra.mxu0 %v1470
    %2049 = vmatprep.subr.bf16.mxu0 %v1473
    %2050 = vmatpush1.bf16.msra.mxu0 %v1472
    %2051 = vmatprep.subr.bf16.mxu0 %v1475
    %2052 = vmatpush1.bf16.msra.mxu0 %v1474
    %2053 = vmatprep.subr.bf16.mxu0 %v1477
    %2054 = vmatpush1.bf16.msra.mxu0 %v1476
    %2055 = vmatprep.subr.bf16.mxu0 %v1479
    %2056 = vmatpush1.bf16.msra.mxu0 %v1478
    %2057 = vmatprep.mubr.bf16.mxu0 %v1767
    %2058 = vmatmul.mubr.bf16.gmra.mrb[0].mxu0 %v2024
    %v2059 = vpop.f32.mrb[0].mxu0
    %v2060 = vadd.f32 %v903, %v2059
    %v2061 = vpop.f32.mrb[0].mxu0
    %v2062 = vadd.f32 %v907, %v2061
    %v2063 = vpop.f32.mrb[0].mxu0
    %v2064 = vadd.f32 %v903, %v2063
    %v2065 = vpop.f32.mrb[0].mxu0
    %v2066 = vadd.f32 %v907, %v2065
    %2067 = vdwg.mxu0
    %v2068 = vsub.f32 0.0, %v2060
    %v2069 = vsub.f32 0.0, %v2064
    %v2070 = vmul.f32 %v2068, 1.442695
    %v2071 = vpow.pop %v2070
    %v2072 = vmul.f32 %v2069, 1.442695
    %v2073 = vpow.pop %v2072
    %v2074 = vadd.f32 %v2071, 1.0
    %v2075 = vadd.f32 %v2073, 1.0
    %v2076 = vrcp.pop %v2074
    %v2077 = vrcp.pop %v2075
    %v2078 = vsub.f32 0.0, %v2062
    %v2079 = vsub.f32 0.0, %v2066
    %v2080 = vmul.f32 %v2078, 1.442695
    %v2081 = vpow.pop %v2080
    %v2082 = vmul.f32 %v2079, 1.442695
    %v2083 = vpow.pop %v2082
    %v2084 = vadd.f32 %v2081, 1.0
    %v2085 = vadd.f32 %v2083, 1.0
    %v2086 = vrcp.pop %v2084
    %v2087 = vrcp.pop %v2085
    %2088 = vmatprep.subr.bf16.mxu0 0
    %2089 = vmatpush1.bf16.msra.mxu0 %v1607
    %2090 = vmatprep.subr.bf16.mxu0 0
    %2091 = vmatpush1.bf16.msra.mxu0 %v1608
    %2092 = vmatprep.subr.bf16.mxu0 0
    %2093 = vmatpush1.bf16.msra.mxu0 %v1609
    %2094 = vmatprep.subr.bf16.mxu0 0
    %2095 = vmatpush1.bf16.msra.mxu0 %v1610
    %2096 = vmatprep.subr.bf16.mxu0 0
    %2097 = vmatpush1.bf16.msra.mxu0 %v1611
    %2098 = vmatprep.subr.bf16.mxu0 0
    %2099 = vmatpush1.bf16.msra.mxu0 %v1612
    %2100 = vmatprep.subr.bf16.mxu0 0
    %2101 = vmatpush1.bf16.msra.mxu0 %v1613
    %2102 = vmatprep.subr.bf16.mxu0 0
    %2103 = vmatpush1.bf16.msra.mxu0 %v1614
    %2104 = vmatprep.subr.bf16.mxu0 0
    %2105 = vmatpush1.bf16.msra.mxu0 0
    %2106 = vmatprep.subr.bf16.mxu0 0
    %2107 = vmatpush1.bf16.msra.mxu0 0
    %2108 = vmatprep.subr.bf16.mxu0 0
    %2109 = vmatpush1.bf16.msra.mxu0 0
    %2110 = vmatprep.subr.bf16.mxu0 0
    %2111 = vmatpush1.bf16.msra.mxu0 0
    %2112 = vmatprep.subr.bf16.mxu0 0
    %2113 = vmatpush1.bf16.msra.mxu0 0
    %2114 = vmatprep.subr.bf16.mxu0 0
    %2115 = vmatpush1.bf16.msra.mxu0 0
    %2116 = vmatprep.subr.bf16.mxu0 0
    %2117 = vmatpush1.bf16.msra.mxu0 0
    %2118 = vmatprep.subr.bf16.mxu0 0
    %2119 = vmatpush1.bf16.msra.mxu0 0
    %2120 = vmatprep.mubr.bf16.mxu0 0
    %2121 = vmatmul.mubr.bf16.gmra.mrb[0].mxu0 %v2024
    %v2122 = vpop.f32.mrb[0].mxu0
    %v2123 = vadd.f32 %v915, %v2122
    %v2124 = vpop.f32.mrb[0].mxu0
    %v2125 = vpop.f32.mrb[0].mxu0
    %v2126 = vadd.f32 %v915, %v2125
    %v2127 = vpop.f32.mrb[0].mxu0
    %2128 = vdwg.mxu0
    %2129 = vmatprep.subr.bf16.mxu0 0
    %2130 = vmatpush1.bf16.msra.mxu0 %v1696
    %2131 = vmatprep.subr.bf16.mxu0 0
    %2132 = vmatpush1.bf16.msra.mxu0 %v1697
    %2133 = vmatprep.subr.bf16.mxu0 0
    %2134 = vmatpush1.bf16.msra.mxu0 %v1698
    %2135 = vmatprep.subr.bf16.mxu0 0
    %2136 = vmatpush1.bf16.msra.mxu0 %v1699
    %2137 = vmatprep.subr.bf16.mxu0 0
    %2138 = vmatpush1.bf16.msra.mxu0 %v1700
    %2139 = vmatprep.subr.bf16.mxu0 0
    %2140 = vmatpush1.bf16.msra.mxu0 %v1701
    %2141 = vmatprep.subr.bf16.mxu0 0
    %2142 = vmatpush1.bf16.msra.mxu0 %v1702
    %2143 = vmatprep.subr.bf16.mxu0 0
    %2144 = vmatpush1.bf16.msra.mxu0 %v1703
    %2145 = vmatprep.subr.bf16.mxu0 0
    %2146 = vmatpush1.bf16.msra.mxu0 0
    %2147 = vmatprep.subr.bf16.mxu0 0
    %2148 = vmatpush1.bf16.msra.mxu0 0
    %2149 = vmatprep.subr.bf16.mxu0 0
    %2150 = vmatpush1.bf16.msra.mxu0 0
    %2151 = vmatprep.subr.bf16.mxu0 0
    %2152 = vmatpush1.bf16.msra.mxu0 0
    %2153 = vmatprep.subr.bf16.mxu0 0
    %2154 = vmatpush1.bf16.msra.mxu0 0
    %2155 = vmatprep.subr.bf16.mxu0 0
    %2156 = vmatpush1.bf16.msra.mxu0 0
    %2157 = vmatprep.subr.bf16.mxu0 0
    %2158 = vmatpush1.bf16.msra.mxu0 0
    %2159 = vmatprep.subr.bf16.mxu0 0
    %2160 = vmatpush1.bf16.msra.mxu0 0
    %2161 = vmatprep.mubr.bf16.mxu0 0
    %2162 = vmatmul.mubr.bf16.gmra.mrb[0].mxu0 %v1767
    %v2163 = vpop.f32.mrb[0].mxu0
    %v2164 = vadd.f32 %v922, %v2163
    %v2165 = vpop.f32.mrb[0].mxu0
    %v2166 = vpop.f32.mrb[0].mxu0
    %v2167 = vadd.f32 %v922, %v2166
    %v2168 = vpop.f32.mrb[0].mxu0
    %2169 = vdwg.mxu0
    %v2170 = vmul.f32 %v2076, %v2164
    %v2171 = vmul.f32 %v2077, %v2167
    %v2172 = vadd.f32 %v2123, %v2170
    %v2173 = vadd.f32 %v2126, %v2171
    %v2174 = vtanh.pop %v2172
    %v2175 = vtanh.pop %v2173
    %v2176 = vsub.f32 1.0, %v2086
    %v2177 = vsub.f32 1.0, %v2087
    %v2178 = vmul.f32 %v2176, %v2174
    %v2179 = vmul.f32 %v2177, %v2175
    %v2180 = vmul.f32 %v2086, %v1765
    %v2181 = vmul.f32 %v2087, %v1766
    %v2182 = vadd.f32 %v2178, %v2180
    %v2183 = vadd.f32 %v2179, %v2181
    %v2184 = vpack.c.bf16 %v2183, %v2182
    %2185 = vmatprep.subr.bf16.mxu0 0
    %2186 = vmatpush1.bf16.msra.mxu0 %v957
    %2187 = vmatprep.subr.bf16.mxu0 0
    %2188 = vmatpush1.bf16.msra.mxu0 %v958
    %2189 = vmatprep.subr.bf16.mxu0 0
    %2190 = vmatpush1.bf16.msra.mxu0 %v959
    %2191 = vmatprep.subr.bf16.mxu0 0
    %2192 = vmatpush1.bf16.msra.mxu0 %v960
    %2193 = vmatprep.subr.bf16.mxu0 0
    %2194 = vmatpush1.bf16.msra.mxu0 %v961
    %2195 = vmatprep.subr.bf16.mxu0 0
    %2196 = vmatpush1.bf16.msra.mxu0 %v962
    %2197 = vmatprep.subr.bf16.mxu0 0
    %2198 = vmatpush1.bf16.msra.mxu0 %v963
    %2199 = vmatprep.subr.bf16.mxu0 0
    %2200 = vmatpush1.bf16.msra.mxu0 %v964
    %2201 = vmatprep.subr.bf16.mxu0 0
    %2202 = vmatpush1.bf16.msra.mxu0 0
    %2203 = vmatprep.subr.bf16.mxu0 0
    %2204 = vmatpush1.bf16.msra.mxu0 0
    %2205 = vmatprep.subr.bf16.mxu0 0
    %2206 = vmatpush1.bf16.msra.mxu0 0
    %2207 = vmatprep.subr.bf16.mxu0 0
    %2208 = vmatpush1.bf16.msra.mxu0 0
    %2209 = vmatprep.subr.bf16.mxu0 0
    %2210 = vmatpush1.bf16.msra.mxu0 0
    %2211 = vmatprep.subr.bf16.mxu0 0
    %2212 = vmatpush1.bf16.msra.mxu0 0
    %2213 = vmatprep.subr.bf16.mxu0 0
    %2214 = vmatpush1.bf16.msra.mxu0 0
    %2215 = vmatprep.subr.bf16.mxu0 0
    %2216 = vmatpush1.bf16.msra.mxu0 0
    %2217 = vmatprep.mubr.bf16.mxu0 0
    %2218 = vmatmul.mubr.bf16.gmra.mrb[0].mxu0 %v2184
    %v2219 = vpop.f32.mrb[0].mxu0
    %v2220 = vadd.f32 0.0, %v2219
    %v2221 = vpop.f32.mrb[0].mxu0
    %v2222 = vpop.f32.mrb[0].mxu0
    %v2223 = vadd.f32 0.0, %v2222
    %v2224 = vpop.f32.mrb[0].mxu0
    %2225 = vdwg.mxu0
    %v2226 = vpack.c.bf16 %v2223, %v2220
    %2227 = vmatprep.subr.bf16.mxu0 0
    %2228 = vmatpush1.bf16.msra.mxu0 %v2226
    %2229 = vmatprep.subr.bf16.mxu0 0
    %2230 = vmatpush1.bf16.msra.mxu0 0
    %2231 = vmatprep.subr.bf16.mxu0 0
    %2232 = vmatpush1.bf16.msra.mxu0 0
    %2233 = vmatprep.subr.bf16.mxu0 0
    %2234 = vmatpush1.bf16.msra.mxu0 0
    %2235 = vmatprep.subr.bf16.mxu0 0
    %2236 = vmatpush1.bf16.msra.mxu0 0
    %2237 = vmatprep.subr.bf16.mxu0 0
    %2238 = vmatpush1.bf16.msra.mxu0 0
    %2239 = vmatprep.subr.bf16.mxu0 0
    %2240 = vmatpush1.bf16.msra.mxu0 0
    %2241 = vmatprep.subr.bf16.mxu0 0
    %2242 = vmatpush1.bf16.msra.mxu0 0
    %2243 = vmatprep.subr.bf16.mxu0 0
    %2244 = vmatpush1.bf16.msra.mxu0 0
    %2245 = vmatprep.subr.bf16.mxu0 0
    %2246 = vmatpush1.bf16.msra.mxu0 0
    %2247 = vmatprep.subr.bf16.mxu0 0
    %2248 = vmatpush1.bf16.msra.mxu0 0
    %2249 = vmatprep.subr.bf16.mxu0 0
    %2250 = vmatpush1.bf16.msra.mxu0 0
    %2251 = vmatprep.subr.bf16.mxu0 0
    %2252 = vmatpush1.bf16.msra.mxu0 0
    %2253 = vmatprep.subr.bf16.mxu0 0
    %2254 = vmatpush1.bf16.msra.mxu0 0
    %2255 = vmatprep.subr.bf16.mxu0 0
    %2256 = vmatpush1.bf16.msra.mxu0 0
    %2257 = vmatprep.subr.bf16.mxu0 0
    %2258 = vmatpush1.bf16.msra.mxu0 0
    %2259 = vmatprep.mubr.bf16.mxu0 0
    %2260 = vmatmul.mubr.bf16.gmra.mrb[0].mxu0 %v1027
    %v2261 = vpop.f32.mrb[0].mxu0
    %v2262 = vadd.f32 0.0, %v2261
    %v2263 = vpop.f32.mrb[0].mxu0
    %v2264 = vpop.f32.mrb[0].mxu0
    %v2265 = vadd.f32 0.0, %v2264
    %v2266 = vpop.f32.mrb[0].mxu0
    %2267 = vmatprep.mubr.bf16.mxu0 0
    %2268 = vmatmul.mubr.bf16.gmra.mrb[0].mxu0 %v1030
    %v2269 = vpop.f32.mrb[0].mxu0
    %v2270 = vadd.f32 0.0, %v2269
    %v2271 = vpop.f32.mrb[0].mxu0
    %v2272 = vpop.f32.mrb[0].mxu0
    %v2273 = vadd.f32 0.0, %v2272
    %v2274 = vpop.f32.mrb[0].mxu0
    %2275 = vdwg.mxu0
    %v2276 = vmul.f32 %v2262, %v769
    %v2277 = vmul.f32 %v2265, %v770
    %v2278 = vmul.f32 %v2270, %v771
    %v2279 = vmul.f32 %v2273, %v772
    %v2280 = vpack.c.bf16 %v2277, %v2276
    %v2281 = vpack.c.bf16 %v2279, %v2278
    %2282 = vmatprep.subr.bf16.mxu0 0
    %2283 = vmatpush1.bf16.msra.mxu0 %v2280
    %2284 = vmatprep.subr.bf16.mxu0 0
    %2285 = vmatpush1.bf16.msra.mxu0 %v2281
    %2286 = vmatprep.subr.bf16.mxu0 0
    %2287 = vmatpush1.bf16.msra.mxu0 0
    %2288 = vmatprep.subr.bf16.mxu0 0
    %2289 = vmatpush1.bf16.msra.mxu0 0
    %2290 = vmatprep.subr.bf16.mxu0 0
    %2291 = vmatpush1.bf16.msra.mxu0 0
    %2292 = vmatprep.subr.bf16.mxu0 0
    %2293 = vmatpush1.bf16.msra.mxu0 0
    %2294 = vmatprep.subr.bf16.mxu0 0
    %2295 = vmatpush1.bf16.msra.mxu0 0
    %2296 = vmatprep.subr.bf16.mxu0 0
    %2297 = vmatpush1.bf16.msra.mxu0 0
    %2298 = vmatprep.subr.bf16.mxu0 0
    %2299 = vmatpush1.bf16.msra.mxu0 0
    %2300 = vmatprep.subr.bf16.mxu0 0
    %2301 = vmatpush1.bf16.msra.mxu0 0
    %2302 = vmatprep.subr.bf16.mxu0 0
    %2303 = vmatpush1.bf16.msra.mxu0 0
    %2304 = vmatprep.subr.bf16.mxu0 0
    %2305 = vmatpush1.bf16.msra.mxu0 0
    %2306 = vmatprep.subr.bf16.mxu0 0
    %2307 = vmatpush1.bf16.msra.mxu0 0
    %2308 = vmatprep.subr.bf16.mxu0 0
    %2309 = vmatpush1.bf16.msra.mxu0 0
    %2310 = vmatprep.subr.bf16.mxu0 0
    %2311 = vmatpush1.bf16.msra.mxu0 0
    %2312 = vmatprep.subr.bf16.mxu0 0
    %2313 = vmatpush1.bf16.msra.mxu0 0
    %2314 = vmatprep.mubr.bf16.mxu0 0
    %2315 = vmatmul.mubr.bf16.gmra.mrb[0].mxu0 %v1094
    %v2316 = vpop.f32.mrb[0].mxu0
    %v2317 = vadd.f32 0.0, %v2316
    %v2318 = vpop.f32.mrb[0].mxu0
    %v2319 = vpop.f32.mrb[0].mxu0
    %v2320 = vadd.f32 0.0, %v2319
    %v2321 = vpop.f32.mrb[0].mxu0
    %2322 = vdwg.mxu0
    %v2323 = vpack.c.bf16 %v2320, %v2317
    %2324 = vmatprep.subr.bf16.mxu0 0
    %2325 = vmatpush1.bf16.msra.mxu0 %v1170
    %2326 = vmatprep.subr.bf16.mxu0 0
    %2327 = vmatpush1.bf16.msra.mxu0 %v1171
    %2328 = vmatprep.subr.bf16.mxu0 0
    %2329 = vmatpush1.bf16.msra.mxu0 %v1172
    %2330 = vmatprep.subr.bf16.mxu0 0
    %2331 = vmatpush1.bf16.msra.mxu0 %v1173
    %2332 = vmatprep.subr.bf16.mxu0 0
    %2333 = vmatpush1.bf16.msra.mxu0 %v1174
    %2334 = vmatprep.subr.bf16.mxu0 0
    %2335 = vmatpush1.bf16.msra.mxu0 %v1175
    %2336 = vmatprep.subr.bf16.mxu0 0
    %2337 = vmatpush1.bf16.msra.mxu0 %v1176
    %2338 = vmatprep.subr.bf16.mxu0 0
    %2339 = vmatpush1.bf16.msra.mxu0 %v1177
    %2340 = vmatprep.subr.bf16.mxu0 0
    %2341 = vmatpush1.bf16.msra.mxu0 0
    %2342 = vmatprep.subr.bf16.mxu0 0
    %2343 = vmatpush1.bf16.msra.mxu0 0
    %2344 = vmatprep.subr.bf16.mxu0 0
    %2345 = vmatpush1.bf16.msra.mxu0 0
    %2346 = vmatprep.subr.bf16.mxu0 0
    %2347 = vmatpush1.bf16.msra.mxu0 0
    %2348 = vmatprep.subr.bf16.mxu0 0
    %2349 = vmatpush1.bf16.msra.mxu0 0
    %2350 = vmatprep.subr.bf16.mxu0 0
    %2351 = vmatpush1.bf16.msra.mxu0 0
    %2352 = vmatprep.subr.bf16.mxu0 0
    %2353 = vmatpush1.bf16.msra.mxu0 0
    %2354 = vmatprep.subr.bf16.mxu0 0
    %2355 = vmatpush1.bf16.msra.mxu0 0
    %2356 = vmatprep.mubr.bf16.mxu0 0
    %2357 = vmatmul.mubr.bf16.gmra.mrb[0].mxu0 %v2323
    %v2358 = vpop.f32.mrb[0].mxu0
    %v2359 = vadd.f32 %v832, %v2358
    %v2360 = vpop.f32.mrb[0].mxu0
    %v2361 = vpop.f32.mrb[0].mxu0
    %v2362 = vadd.f32 %v832, %v2361
    %v2363 = vpop.f32.mrb[0].mxu0
    %2364 = vdwg.mxu0
    %v2365 = vmax.f32 %v2359, 0.0
    %v2366 = vmax.f32 %v2362, 0.0
    %v2367 = vand.u32 2147483647, %v2359
    %v2368 = vand.u32 2147483647, %v2362
    %v2369 = vsub.f32 0.0, %v2367
    %v2370 = vsub.f32 0.0, %v2368
    %v2371 = vmul.f32 %v2369, 1.442695
    %v2372 = vpow.pop %v2371
    %v2373 = vmul.f32 %v2370, 1.442695
    %v2374 = vpow.pop %v2373
    %v2375 = vadd.f32 %v2372, 1.0
    %v2376 = vlog2.pop %v2375
    %v2377 = vmul.f32 %v2376, 0.6931472
    %v2378 = vmul.f32 -0.5, %v2372
    %v2379 = vadd.f32 %v2378, 1.0
    %v2380 = vmul.f32 %v2379, %v2372
    %v2381 = vand.u32 2147483647, %v2372
    %vm2382 = vcmp.lt.f32.partialorder %v2381, 0.0004427343
    %v2383 = vsel %vm2382, %v2380, %v2377
    %v2384 = vadd.f32 %v2374, 1.0
    %v2385 = vlog2.pop %v2384
    %v2386 = vmul.f32 %v2385, 0.6931472
    %v2387 = vmul.f32 -0.5, %v2374
    %v2388 = vadd.f32 %v2387, 1.0
    %v2389 = vmul.f32 %v2388, %v2374
    %v2390 = vand.u32 2147483647, %v2374
    %vm2391 = vcmp.lt.f32.partialorder %v2390, 0.0004427343
    %v2392 = vsel %vm2391, %v2389, %v2386
    %v2393 = vadd.f32 %v2365, %v2383
    %v2394 = vadd.f32 %v2366, %v2392
    %v2395 = vsub.f32 %v2393, 0.6931472
    %v2396 = vsub.f32 %v2394, 0.6931472
    %v2397 = vpack.c.bf16 %v2396, %v2395
    %2398 = vmatprep.subr.bf16.mxu0 0
    %2399 = vmatpush1.bf16.msra.mxu0 %v1292
    %2400 = vmatprep.subr.bf16.mxu0 0
    %2401 = vmatpush1.bf16.msra.mxu0 %v1293
    %2402 = vmatprep.subr.bf16.mxu0 0
    %2403 = vmatpush1.bf16.msra.mxu0 %v1294
    %2404 = vmatprep.subr.bf16.mxu0 0
    %2405 = vmatpush1.bf16.msra.mxu0 %v1295
    %2406 = vmatprep.subr.bf16.mxu0 0
    %2407 = vmatpush1.bf16.msra.mxu0 %v1296
    %2408 = vmatprep.subr.bf16.mxu0 0
    %2409 = vmatpush1.bf16.msra.mxu0 %v1297
    %2410 = vmatprep.subr.bf16.mxu0 0
    %2411 = vmatpush1.bf16.msra.mxu0 %v1298
    %2412 = vmatprep.subr.bf16.mxu0 0
    %2413 = vmatpush1.bf16.msra.mxu0 %v1299
    %2414 = vmatprep.subr.bf16.mxu0 0
    %2415 = vmatpush1.bf16.msra.mxu0 0
    %2416 = vmatprep.subr.bf16.mxu0 0
    %2417 = vmatpush1.bf16.msra.mxu0 0
    %2418 = vmatprep.subr.bf16.mxu0 0
    %2419 = vmatpush1.bf16.msra.mxu0 0
    %2420 = vmatprep.subr.bf16.mxu0 0
    %2421 = vmatpush1.bf16.msra.mxu0 0
    %2422 = vmatprep.subr.bf16.mxu0 0
    %2423 = vmatpush1.bf16.msra.mxu0 0
    %2424 = vmatprep.subr.bf16.mxu0 0
    %2425 = vmatpush1.bf16.msra.mxu0 0
    %2426 = vmatprep.subr.bf16.mxu0 0
    %2427 = vmatpush1.bf16.msra.mxu0 0
    %2428 = vmatprep.subr.bf16.mxu0 0
    %2429 = vmatpush1.bf16.msra.mxu0 0
    %2430 = vmatprep.mubr.bf16.mxu0 0
    %2431 = vmatmul.mubr.bf16.gmra.mrb[0].mxu0 %v2397
    %v2432 = vpop.f32.mrb[0].mxu0
    %v2433 = vadd.f32 0.0, %v2432
    %v2434 = vpop.f32.mrb[0].mxu0
    %v2435 = vpop.f32.mrb[0].mxu0
    %v2436 = vadd.f32 0.0, %v2435
    %v2437 = vpop.f32.mrb[0].mxu0
    %2438 = vdwg.mxu0
    %v2439 = vmax.f32 %v2433, 0.0
    %v2440 = vmax.f32 %v2436, 0.0
    %v2441 = vpack.c.bf16 %v2440, %v2439
    %2442 = vmatprep.subr.bf16.mxu0 %v1449
    %2443 = vmatpush1.bf16.msra.mxu0 %v1448
    %2444 = vmatprep.subr.bf16.mxu0 %v1451
    %2445 = vmatpush1.bf16.msra.mxu0 %v1450
    %2446 = vmatprep.subr.bf16.mxu0 %v1453
    %2447 = vmatpush1.bf16.msra.mxu0 %v1452
    %2448 = vmatprep.subr.bf16.mxu0 %v1455
    %2449 = vmatpush1.bf16.msra.mxu0 %v1454
    %2450 = vmatprep.subr.bf16.mxu0 %v1457
    %2451 = vmatpush1.bf16.msra.mxu0 %v1456
    %2452 = vmatprep.subr.bf16.mxu0 %v1459
    %2453 = vmatpush1.bf16.msra.mxu0 %v1458
    %2454 = vmatprep.subr.bf16.mxu0 %v1461
    %2455 = vmatpush1.bf16.msra.mxu0 %v1460
    %2456 = vmatprep.subr.bf16.mxu0 %v1463
    %2457 = vmatpush1.bf16.msra.mxu0 %v1462
    %2458 = vmatprep.subr.bf16.mxu0 %v1465
    %2459 = vmatpush1.bf16.msra.mxu0 %v1464
    %2460 = vmatprep.subr.bf16.mxu0 %v1467
    %2461 = vmatpush1.bf16.msra.mxu0 %v1466
    %2462 = vmatprep.subr.bf16.mxu0 %v1469
    %2463 = vmatpush1.bf16.msra.mxu0 %v1468
    %2464 = vmatprep.subr.bf16.mxu0 %v1471
    %2465 = vmatpush1.bf16.msra.mxu0 %v1470
    %2466 = vmatprep.subr.bf16.mxu0 %v1473
    %2467 = vmatpush1.bf16.msra.mxu0 %v1472
    %2468 = vmatprep.subr.bf16.mxu0 %v1475
    %2469 = vmatpush1.bf16.msra.mxu0 %v1474
    %2470 = vmatprep.subr.bf16.mxu0 %v1477
    %2471 = vmatpush1.bf16.msra.mxu0 %v1476
    %2472 = vmatprep.subr.bf16.mxu0 %v1479
    %2473 = vmatpush1.bf16.msra.mxu0 %v1478
    %2474 = vmatprep.mubr.bf16.mxu0 %v2184
    %2475 = vmatmul.mubr.bf16.gmra.mrb[0].mxu0 %v2441
    %v2476 = vpop.f32.mrb[0].mxu0
    %v2477 = vadd.f32 %v903, %v2476
    %v2478 = vpop.f32.mrb[0].mxu0
    %v2479 = vadd.f32 %v907, %v2478
    %v2480 = vpop.f32.mrb[0].mxu0
    %v2481 = vadd.f32 %v903, %v2480
    %v2482 = vpop.f32.mrb[0].mxu0
    %v2483 = vadd.f32 %v907, %v2482
    %2484 = vdwg.mxu0
    %v2485 = vsub.f32 0.0, %v2477
    %v2486 = vsub.f32 0.0, %v2481
    %v2487 = vmul.f32 %v2485, 1.442695
    %v2488 = vpow.pop %v2487
    %v2489 = vmul.f32 %v2486, 1.442695
    %v2490 = vpow.pop %v2489
    %v2491 = vadd.f32 %v2488, 1.0
    %v2492 = vadd.f32 %v2490, 1.0
    %v2493 = vrcp.pop %v2491
    %v2494 = vrcp.pop %v2492
    %v2495 = vsub.f32 0.0, %v2479
    %v2496 = vsub.f32 0.0, %v2483
    %v2497 = vmul.f32 %v2495, 1.442695
    %v2498 = vpow.pop %v2497
    %v2499 = vmul.f32 %v2496, 1.442695
    %v2500 = vpow.pop %v2499
    %v2501 = vadd.f32 %v2498, 1.0
    %v2502 = vadd.f32 %v2500, 1.0
    %v2503 = vrcp.pop %v2501
    %v2504 = vrcp.pop %v2502
    %2505 = vmatprep.subr.bf16.mxu0 0
    %2506 = vmatpush1.bf16.msra.mxu0 %v1607
    %2507 = vmatprep.subr.bf16.mxu0 0
    %2508 = vmatpush1.bf16.msra.mxu0 %v1608
    %2509 = vmatprep.subr.bf16.mxu0 0
    %2510 = vmatpush1.bf16.msra.mxu0 %v1609
    %2511 = vmatprep.subr.bf16.mxu0 0
    %2512 = vmatpush1.bf16.msra.mxu0 %v1610
    %2513 = vmatprep.subr.bf16.mxu0 0
    %2514 = vmatpush1.bf16.msra.mxu0 %v1611
    %2515 = vmatprep.subr.bf16.mxu0 0
    %2516 = vmatpush1.bf16.msra.mxu0 %v1612
    %2517 = vmatprep.subr.bf16.mxu0 0
    %2518 = vmatpush1.bf16.msra.mxu0 %v1613
    %2519 = vmatprep.subr.bf16.mxu0 0
    %2520 = vmatpush1.bf16.msra.mxu0 %v1614
    %2521 = vmatprep.subr.bf16.mxu0 0
    %2522 = vmatpush1.bf16.msra.mxu0 0
    %2523 = vmatprep.subr.bf16.mxu0 0
    %2524 = vmatpush1.bf16.msra.mxu0 0
    %2525 = vmatprep.subr.bf16.mxu0 0
    %2526 = vmatpush1.bf16.msra.mxu0 0
    %2527 = vmatprep.subr.bf16.mxu0 0
    %2528 = vmatpush1.bf16.msra.mxu0 0
    %2529 = vmatprep.subr.bf16.mxu0 0
    %2530 = vmatpush1.bf16.msra.mxu0 0
    %2531 = vmatprep.subr.bf16.mxu0 0
    %2532 = vmatpush1.bf16.msra.mxu0 0
    %2533 = vmatprep.subr.bf16.mxu0 0
    %2534 = vmatpush1.bf16.msra.mxu0 0
    %2535 = vmatprep.subr.bf16.mxu0 0
    %2536 = vmatpush1.bf16.msra.mxu0 0
    %2537 = vmatprep.mubr.bf16.mxu0 0
    %2538 = vmatmul.mubr.bf16.gmra.mrb[0].mxu0 %v2441
    %v2539 = vpop.f32.mrb[0].mxu0
    %v2540 = vadd.f32 %v915, %v2539
    %v2541 = vpop.f32.mrb[0].mxu0
    %v2542 = vpop.f32.mrb[0].mxu0
    %v2543 = vadd.f32 %v915, %v2542
    %v2544 = vpop.f32.mrb[0].mxu0
    %2545 = vdwg.mxu0
    %2546 = vmatprep.subr.bf16.mxu0 0
    %2547 = vmatpush1.bf16.msra.mxu0 %v1696
    %2548 = vmatprep.subr.bf16.mxu0 0
    %2549 = vmatpush1.bf16.msra.mxu0 %v1697
    %2550 = vmatprep.subr.bf16.mxu0 0
    %2551 = vmatpush1.bf16.msra.mxu0 %v1698
    %2552 = vmatprep.subr.bf16.mxu0 0
    %2553 = vmatpush1.bf16.msra.mxu0 %v1699
    %2554 = vmatprep.subr.bf16.mxu0 0
    %2555 = vmatpush1.bf16.msra.mxu0 %v1700
    %2556 = vmatprep.subr.bf16.mxu0 0
    %2557 = vmatpush1.bf16.msra.mxu0 %v1701
    %2558 = vmatprep.subr.bf16.mxu0 0
    %2559 = vmatpush1.bf16.msra.mxu0 %v1702
    %2560 = vmatprep.subr.bf16.mxu0 0
    %2561 = vmatpush1.bf16.msra.mxu0 %v1703
    %2562 = vmatprep.subr.bf16.mxu0 0
    %2563 = vmatpush1.bf16.msra.mxu0 0
    %2564 = vmatprep.subr.bf16.mxu0 0
    %2565 = vmatpush1.bf16.msra.mxu0 0
    %2566 = vmatprep.subr.bf16.mxu0 0
    %2567 = vmatpush1.bf16.msra.mxu0 0
    %2568 = vmatprep.subr.bf16.mxu0 0
    %2569 = vmatpush1.bf16.msra.mxu0 0
    %2570 = vmatprep.subr.bf16.mxu0 0
    %2571 = vmatpush1.bf16.msra.mxu0 0
    %2572 = vmatprep.subr.bf16.mxu0 0
    %2573 = vmatpush1.bf16.msra.mxu0 0
    %2574 = vmatprep.subr.bf16.mxu0 0
    %2575 = vmatpush1.bf16.msra.mxu0 0
    %2576 = vmatprep.subr.bf16.mxu0 0
    %2577 = vmatpush1.bf16.msra.mxu0 0
    %2578 = vmatprep.mubr.bf16.mxu0 0
    %2579 = vmatmul.mubr.bf16.gmra.mrb[0].mxu0 %v2184
    %v2580 = vpop.f32.mrb[0].mxu0
    %v2581 = vadd.f32 %v922, %v2580
    %v2582 = vpop.f32.mrb[0].mxu0
    %v2583 = vpop.f32.mrb[0].mxu0
    %v2584 = vadd.f32 %v922, %v2583
    %v2585 = vpop.f32.mrb[0].mxu0
    %2586 = vdwg.mxu0
    %v2587 = vmul.f32 %v2493, %v2581
    %v2588 = vmul.f32 %v2494, %v2584
    %v2589 = vadd.f32 %v2540, %v2587
    %v2590 = vadd.f32 %v2543, %v2588
    %v2591 = vtanh.pop %v2589
    %v2592 = vtanh.pop %v2590
    %v2593 = vsub.f32 1.0, %v2503
    %v2594 = vsub.f32 1.0, %v2504
    %v2595 = vmul.f32 %v2593, %v2591
    %v2596 = vmul.f32 %v2594, %v2592
    %v2597 = vmul.f32 %v2503, %v2182
    %v2598 = vmul.f32 %v2504, %v2183
    %v2599 = vadd.f32 %v2595, %v2597
    %v2600 = vadd.f32 %v2596, %v2598
    %v2601 = vpack.c.bf16 %v2600, %v2599
    %v2602 = vld [vmem:[%s21] sm:$0x3]
    %vm2603 = vcmp.gt.f32.partialorder %v2602, 0.5
    %v2604 = vld [vmem:[#allocation31] sm:$0xff]
    %v2605 = vld [vmem:[#allocation31 + $0x8] sm:$0xff]
    %v2606 = vld [vmem:[#allocation31 + $0x10] sm:$0xff]
    %v2607 = vld [vmem:[#allocation31 + $0x18] sm:$0xff]
    %v2608 = vld [vmem:[#allocation31 + $0x20] sm:$0xff]
    %v2609 = vld [vmem:[#allocation31 + $0x28] sm:$0xff]
    %v2610 = vld [vmem:[#allocation31 + $0x30] sm:$0xff]
    %v2611 = vld [vmem:[#allocation31 + $0x38] sm:$0xff]
    %v2612 = vld [vmem:[#allocation31 + $0x40] sm:$0xff]
    %v2613 = vld [vmem:[#allocation31 + $0x48] sm:$0xff]
    %v2614 = vld [vmem:[#allocation31 + $0x50] sm:$0xff]
    %v2615 = vld [vmem:[#allocation31 + $0x58] sm:$0xff]
    %v2616 = vld [vmem:[#allocation31 + $0x60] sm:$0xff]
    %v2617 = vld [vmem:[#allocation31 + $0x68] sm:$0xff]
    %v2618 = vld [vmem:[#allocation31 + $0x70] sm:$0xff]
    %v2619 = vld [vmem:[#allocation31 + $0x78] sm:$0xff]
    %v2620 = vld [vmem:[#allocation31 + $0x80] sm:$0xff]
    %v2621 = vld [vmem:[#allocation31 + $0x88] sm:$0xff]
    %v2622 = vld [vmem:[#allocation31 + $0x90] sm:$0xff]
    %v2623 = vld [vmem:[#allocation31 + $0x98] sm:$0xff]
    %v2624 = vld [vmem:[#allocation31 + $0xa0] sm:$0xff]
    %v2625 = vld [vmem:[#allocation31 + $0xa8] sm:$0xff]
    %v2626 = vld [vmem:[#allocation31 + $0xb0] sm:$0xff]
    %v2627 = vld [vmem:[#allocation31 + $0xb8] sm:$0xff]
    %v2628 = vld [vmem:[#allocation31 + $0xc0] sm:$0xff]
    %v2629 = vld [vmem:[#allocation31 + $0xc8] sm:$0xff]
    %v2630 = vld [vmem:[#allocation31 + $0xd0] sm:$0xff]
    %v2631 = vld [vmem:[#allocation31 + $0xd8] sm:$0xff]
    %v2632 = vld [vmem:[#allocation31 + $0xe0] sm:$0xff]
    %v2633 = vld [vmem:[#allocation31 + $0xe8] sm:$0xff]
    %v2634 = vld [vmem:[#allocation31 + $0xf0] sm:$0xff]
    %v2635 = vld [vmem:[#allocation31 + $0xf8] sm:$0xff]
    %v2636 = vld [vmem:[#allocation32] sm:$0xff]
    %v2637 = vld [vmem:[#allocation32 + $0x8] sm:$0xff]
    %v2638 = vld [vmem:[#allocation32 + $0x10] sm:$0xff]
    %v2639 = vld [vmem:[#allocation32 + $0x18] sm:$0xff]
    %v2640 = vld [vmem:[#allocation32 + $0x20] sm:$0xff]
    %v2641 = vld [vmem:[#allocation32 + $0x28] sm:$0xff]
    %v2642 = vld [vmem:[#allocation32 + $0x30] sm:$0xff]
    %v2643 = vld [vmem:[#allocation32 + $0x38] sm:$0xff]
    %v2644 = vld [vmem:[#allocation32 + $0x40] sm:$0xff]
    %v2645 = vld [vmem:[#allocation32 + $0x48] sm:$0xff]
    %v2646 = vld [vmem:[#allocation32 + $0x50] sm:$0xff]
    %v2647 = vld [vmem:[#allocation32 + $0x58] sm:$0xff]
    %v2648 = vld [vmem:[#allocation32 + $0x60] sm:$0xff]
    %v2649 = vld [vmem:[#allocation32 + $0x68] sm:$0xff]
    %v2650 = vld [vmem:[#allocation32 + $0x70] sm:$0xff]
    %v2651 = vld [vmem:[#allocation32 + $0x78] sm:$0xff]
    %v2652 = vld [vmem:[#allocation32 + $0x80] sm:$0xff]
    %v2653 = vld [vmem:[#allocation32 + $0x88] sm:$0xff]
    %v2654 = vld [vmem:[#allocation32 + $0x90] sm:$0xff]
    %v2655 = vld [vmem:[#allocation32 + $0x98] sm:$0xff]
    %v2656 = vld [vmem:[#allocation32 + $0xa0] sm:$0xff]
    %v2657 = vld [vmem:[#allocation32 + $0xa8] sm:$0xff]
    %v2658 = vld [vmem:[#allocation32 + $0xb0] sm:$0xff]
    %v2659 = vld [vmem:[#allocation32 + $0xb8] sm:$0xff]
    %v2660 = vld [vmem:[#allocation32 + $0xc0] sm:$0xff]
    %v2661 = vld [vmem:[#allocation32 + $0xc8] sm:$0xff]
    %v2662 = vld [vmem:[#allocation32 + $0xd0] sm:$0xff]
    %v2663 = vld [vmem:[#allocation32 + $0xd8] sm:$0xff]
    %v2664 = vld [vmem:[#allocation32 + $0xe0] sm:$0xff]
    %v2665 = vld [vmem:[#allocation32 + $0xe8] sm:$0xff]
    %v2666 = vld [vmem:[#allocation32 + $0xf0] sm:$0xff]
    %v2667 = vld [vmem:[#allocation32 + $0xf8] sm:$0xff]
    %v2668 = vld [vmem:[%s24] sm:$0xf]
    %v2670 = vlaneseq
    %v2671 = vshrl.u32 %v2670, 7
    %v2672 = vsub.s32 0, %v2671
    %v2673 = vrot.slane %v2668, %v2672
    %v2674 = vlaneseq
    %v2675 = vshrl.u32 %v2674, 7
    %v2676 = vsub.s32 1, %v2675
    %v2677 = vrot.slane %v2668, %v2676
    %v2678 = vlaneseq
    %v2679 = vshrl.u32 %v2678, 7
    %v2680 = vsub.s32 2, %v2679
    %v2681 = vrot.slane %v2668, %v2680
    %v2682 = vlaneseq
    %v2683 = vshrl.u32 %v2682, 7
    %v2684 = vsub.s32 3, %v2683
    %v2685 = vrot.slane %v2668, %v2684
    %v2722 = vunpack.c.l.b16 %v2636
    %v2723 = vunpack.c.h.b16 %v2636
    %v2724 = vunpack.c.l.b16 %v2637
    %v2725 = vunpack.c.h.b16 %v2637
    %v2726 = vunpack.c.l.b16 %v2638
    %v2727 = vunpack.c.h.b16 %v2638
    %v2728 = vunpack.c.l.b16 %v2639
    %v2729 = vunpack.c.h.b16 %v2639
    %v2730 = vunpack.c.l.b16 %v2640
    %v2731 = vunpack.c.h.b16 %v2640
    %v2732 = vunpack.c.l.b16 %v2641
    %v2733 = vunpack.c.h.b16 %v2641
    %v2734 = vunpack.c.l.b16 %v2642
    %v2735 = vunpack.c.h.b16 %v2642
    %v2736 = vunpack.c.l.b16 %v2643
    %v2737 = vunpack.c.h.b16 %v2643
    %v2738 = vunpack.c.l.b16 %v2644
    %v2739 = vunpack.c.h.b16 %v2644
    %v2740 = vunpack.c.l.b16 %v2645
    %v2741 = vunpack.c.h.b16 %v2645
    %v2742 = vunpack.c.l.b16 %v2646
    %v2743 = vunpack.c.h.b16 %v2646
    %v2744 = vunpack.c.l.b16 %v2647
    %v2745 = vunpack.c.h.b16 %v2647
    %v2746 = vunpack.c.l.b16 %v2648
    %v2747 = vunpack.c.h.b16 %v2648
    %v2748 = vunpack.c.l.b16 %v2649
    %v2749 = vunpack.c.h.b16 %v2649
    %v2750 = vunpack.c.l.b16 %v2650
    %v2751 = vunpack.c.h.b16 %v2650
    %v2752 = vunpack.c.l.b16 %v2651
    %v2753 = vunpack.c.h.b16 %v2651
    %v2754 = vunpack.c.l.b16 %v2652
    %v2755 = vunpack.c.h.b16 %v2652
    %v2756 = vunpack.c.l.b16 %v2653
    %v2757 = vunpack.c.h.b16 %v2653
    %v2758 = vunpack.c.l.b16 %v2654
    %v2759 = vunpack.c.h.b16 %v2654
    %v2760 = vunpack.c.l.b16 %v2655
    %v2761 = vunpack.c.h.b16 %v2655
    %v2762 = vunpack.c.l.b16 %v2656
    %v2763 = vunpack.c.h.b16 %v2656
    %v2764 = vunpack.c.l.b16 %v2657
    %v2765 = vunpack.c.h.b16 %v2657
    %v2766 = vunpack.c.l.b16 %v2658
    %v2767 = vunpack.c.h.b16 %v2658
    %v2768 = vunpack.c.l.b16 %v2659
    %v2769 = vunpack.c.h.b16 %v2659
    %v2770 = vunpack.c.l.b16 %v2660
    %v2771 = vunpack.c.h.b16 %v2660
    %v2772 = vunpack.c.l.b16 %v2661
    %v2773 = vunpack.c.h.b16 %v2661
    %v2774 = vunpack.c.l.b16 %v2662
    %v2775 = vunpack.c.h.b16 %v2662
    %v2776 = vunpack.c.l.b16 %v2663
    %v2777 = vunpack.c.h.b16 %v2663
    %v2778 = vunpack.c.l.b16 %v2664
    %v2779 = vunpack.c.h.b16 %v2664
    %v2780 = vunpack.c.l.b16 %v2665
    %v2781 = vunpack.c.h.b16 %v2665
    %v2782 = vunpack.c.l.b16 %v2666
    %v2783 = vunpack.c.h.b16 %v2666
    %v2784 = vunpack.c.l.b16 %v2667
    %v2785 = vunpack.c.h.b16 %v2667
    %v2786 = vpack.c.b16 %v2726, %v2722
    %v2787 = vpack.c.b16 %v2727, %v2723
    %v2788 = vpack.c.b16 %v2728, %v2724
    %v2789 = vpack.c.b16 %v2729, %v2725
    %v2790 = vpack.c.b16 %v2734, %v2730
    %v2791 = vpack.c.b16 %v2735, %v2731
    %v2792 = vpack.c.b16 %v2736, %v2732
    %v2793 = vpack.c.b16 %v2737, %v2733
    %v2794 = vpack.c.b16 %v2742, %v2738
    %v2795 = vpack.c.b16 %v2743, %v2739
    %v2796 = vpack.c.b16 %v2744, %v2740
    %v2797 = vpack.c.b16 %v2745, %v2741
    %v2798 = vpack.c.b16 %v2750, %v2746
    %v2799 = vpack.c.b16 %v2751, %v2747
    %v2800 = vpack.c.b16 %v2752, %v2748
    %v2801 = vpack.c.b16 %v2753, %v2749
    %v2802 = vpack.c.b16 %v2758, %v2754
    %v2803 = vpack.c.b16 %v2759, %v2755
    %v2804 = vpack.c.b16 %v2760, %v2756
    %v2805 = vpack.c.b16 %v2761, %v2757
    %v2806 = vpack.c.b16 %v2766, %v2762
    %v2807 = vpack.c.b16 %v2767, %v2763
    %v2808 = vpack.c.b16 %v2768, %v2764
    %v2809 = vpack.c.b16 %v2769, %v2765
    %v2810 = vpack.c.b16 %v2774, %v2770
    %v2811 = vpack.c.b16 %v2775, %v2771
    %v2812 = vpack.c.b16 %v2776, %v2772
    %v2813 = vpack.c.b16 %v2777, %v2773
    %v2814 = vpack.c.b16 %v2782, %v2778
    %v2815 = vpack.c.b16 %v2783, %v2779
    %v2816 = vpack.c.b16 %v2784, %v2780
    %v2817 = vpack.c.b16 %v2785, %v2781
    %2850 = vmatprep.subr.bf16.mxu0 %v2787
    %2851 = vmatpush1.bf16.msra.mxu0 %v2786
    %2852 = vmatprep.subr.bf16.mxu0 %v2791
    %2853 = vmatpush1.bf16.msra.mxu0 %v2790
    %2854 = vmatprep.subr.bf16.mxu0 %v2795
    %2855 = vmatpush1.bf16.msra.mxu0 %v2794
    %2856 = vmatprep.subr.bf16.mxu0 %v2799
    %2857 = vmatpush1.bf16.msra.mxu0 %v2798
    %2858 = vmatprep.subr.bf16.mxu0 %v2803
    %2859 = vmatpush1.bf16.msra.mxu0 %v2802
    %2860 = vmatprep.subr.bf16.mxu0 %v2807
    %2861 = vmatpush1.bf16.msra.mxu0 %v2806
    %2862 = vmatprep.subr.bf16.mxu0 %v2811
    %2863 = vmatpush1.bf16.msra.mxu0 %v2810
    %2864 = vmatprep.subr.bf16.mxu0 %v2815
    %2865 = vmatpush1.bf16.msra.mxu0 %v2814
    %2866 = vmatprep.subr.bf16.mxu0 0
    %2867 = vmatpush1.bf16.msra.mxu0 0
    %2868 = vmatprep.subr.bf16.mxu0 0
    %2869 = vmatpush1.bf16.msra.mxu0 0
    %2870 = vmatprep.subr.bf16.mxu0 0
    %2871 = vmatpush1.bf16.msra.mxu0 0
    %2872 = vmatprep.subr.bf16.mxu0 0
    %2873 = vmatpush1.bf16.msra.mxu0 0
    %2874 = vmatprep.subr.bf16.mxu0 0
    %2875 = vmatpush1.bf16.msra.mxu0 0
    %2876 = vmatprep.subr.bf16.mxu0 0
    %2877 = vmatpush1.bf16.msra.mxu0 0
    %2878 = vmatprep.subr.bf16.mxu0 0
    %2879 = vmatpush1.bf16.msra.mxu0 0
    %2880 = vmatprep.subr.bf16.mxu0 0
    %2881 = vmatpush1.bf16.msra.mxu0 0
    %2882 = vmatprep.mubr.bf16.mxu0 0
    %2883 = vmatmul.mubr.bf16.gmra.mrb[0].mxu0 0
    %v2884 = vpop.f32.mrb[0].mxu0
    %v2885 = vadd.f32 0.0, %v2884
    %v2886 = vpop.f32.mrb[0].mxu0
    %v2887 = vadd.f32 0.0, %v2886
    %v2888 = vpop.f32.mrb[0].mxu0
    %v2889 = vpop.f32.mrb[0].mxu0
    %2890 = vdwg.mxu0
    %2891 = vmatprep.subr.bf16.mxu0 %v2789
    %2892 = vmatpush1.bf16.msra.mxu0 %v2788
    %2893 = vmatprep.subr.bf16.mxu0 %v2793
    %2894 = vmatpush1.bf16.msra.mxu0 %v2792
    %2895 = vmatprep.subr.bf16.mxu0 %v2797
    %2896 = vmatpush1.bf16.msra.mxu0 %v2796
    %2897 = vmatprep.subr.bf16.mxu0 %v2801
    %2898 = vmatpush1.bf16.msra.mxu0 %v2800
    %2899 = vmatprep.subr.bf16.mxu0 %v2805
    %2900 = vmatpush1.bf16.msra.mxu0 %v2804
    %2901 = vmatprep.subr.bf16.mxu0 %v2809
    %2902 = vmatpush1.bf16.msra.mxu0 %v2808
    %2903 = vmatprep.subr.bf16.mxu0 %v2813
    %2904 = vmatpush1.bf16.msra.mxu0 %v2812
    %2905 = vmatprep.subr.bf16.mxu0 %v2817
    %2906 = vmatpush1.bf16.msra.mxu0 %v2816
    %2907 = vmatprep.subr.bf16.mxu0 0
    %2908 = vmatpush1.bf16.msra.mxu0 0
    %2909 = vmatprep.subr.bf16.mxu0 0
    %2910 = vmatpush1.bf16.msra.mxu0 0
    %2911 = vmatprep.subr.bf16.mxu0 0
    %2912 = vmatpush1.bf16.msra.mxu0 0
    %2913 = vmatprep.subr.bf16.mxu0 0
    %2914 = vmatpush1.bf16.msra.mxu0 0
    %2915 = vmatprep.subr.bf16.mxu0 0
    %2916 = vmatpush1.bf16.msra.mxu0 0
    %2917 = vmatprep.subr.bf16.mxu0 0
    %2918 = vmatpush1.bf16.msra.mxu0 0
    %2919 = vmatprep.subr.bf16.mxu0 0
    %2920 = vmatpush1.bf16.msra.mxu0 0
    %2921 = vmatprep.subr.bf16.mxu0 0
    %2922 = vmatpush1.bf16.msra.mxu0 0
    %2923 = vmatprep.mubr.bf16.mxu0 0
    %2924 = vmatmul.mubr.bf16.gmra.mrb[0].mxu0 0
    %v2925 = vpop.f32.mrb[0].mxu0
    %v2926 = vadd.f32 0.0, %v2925
    %v2927 = vpop.f32.mrb[0].mxu0
    %v2928 = vadd.f32 0.0, %v2927
    %v2929 = vpop.f32.mrb[0].mxu0
    %v2930 = vpop.f32.mrb[0].mxu0
    %2931 = vdwg.mxu0
    %v2964 = vunpack.c.l.b16 %v2604
    %v2965 = vunpack.c.h.b16 %v2604
    %v2966 = vunpack.c.l.b16 %v2605
    %v2967 = vunpack.c.h.b16 %v2605
    %v2968 = vunpack.c.l.b16 %v2606
    %v2969 = vunpack.c.h.b16 %v2606
    %v2970 = vunpack.c.l.b16 %v2607
    %v2971 = vunpack.c.h.b16 %v2607
    %v2972 = vunpack.c.l.b16 %v2608
    %v2973 = vunpack.c.h.b16 %v2608
    %v2974 = vunpack.c.l.b16 %v2609
    %v2975 = vunpack.c.h.b16 %v2609
    %v2976 = vunpack.c.l.b16 %v2610
    %v2977 = vunpack.c.h.b16 %v2610
    %v2978 = vunpack.c.l.b16 %v2611
    %v2979 = vunpack.c.h.b16 %v2611
    %v2980 = vunpack.c.l.b16 %v2612
    %v2981 = vunpack.c.h.b16 %v2612
    %v2982 = vunpack.c.l.b16 %v2613
    %v2983 = vunpack.c.h.b16 %v2613
    %v2984 = vunpack.c.l.b16 %v2614
    %v2985 = vunpack.c.h.b16 %v2614
    %v2986 = vunpack.c.l.b16 %v2615
    %v2987 = vunpack.c.h.b16 %v2615
    %v2988 = vunpack.c.l.b16 %v2616
    %v2989 = vunpack.c.h.b16 %v2616
    %v2990 = vunpack.c.l.b16 %v2617
    %v2991 = vunpack.c.h.b16 %v2617
    %v2992 = vunpack.c.l.b16 %v2618
    %v2993 = vunpack.c.h.b16 %v2618
    %v2994 = vunpack.c.l.b16 %v2619
    %v2995 = vunpack.c.h.b16 %v2619
    %v2996 = vunpack.c.l.b16 %v2620
    %v2997 = vunpack.c.h.b16 %v2620
    %v2998 = vunpack.c.l.b16 %v2621
    %v2999 = vunpack.c.h.b16 %v2621
    %v3000 = vunpack.c.l.b16 %v2622
    %v3001 = vunpack.c.h.b16 %v2622
    %v3002 = vunpack.c.l.b16 %v2623
    %v3003 = vunpack.c.h.b16 %v2623
    %v3004 = vunpack.c.l.b16 %v2624
    %v3005 = vunpack.c.h.b16 %v2624
    %v3006 = vunpack.c.l.b16 %v2625
    %v3007 = vunpack.c.h.b16 %v2625
    %v3008 = vunpack.c.l.b16 %v2626
    %v3009 = vunpack.c.h.b16 %v2626
    %v3010 = vunpack.c.l.b16 %v2627
    %v3011 = vunpack.c.h.b16 %v2627
    %v3012 = vunpack.c.l.b16 %v2628
    %v3013 = vunpack.c.h.b16 %v2628
    %v3014 = vunpack.c.l.b16 %v2629
    %v3015 = vunpack.c.h.b16 %v2629
    %v3016 = vunpack.c.l.b16 %v2630
    %v3017 = vunpack.c.h.b16 %v2630
    %v3018 = vunpack.c.l.b16 %v2631
    %v3019 = vunpack.c.h.b16 %v2631
    %v3020 = vunpack.c.l.b16 %v2632
    %v3021 = vunpack.c.h.b16 %v2632
    %v3022 = vunpack.c.l.b16 %v2633
    %v3023 = vunpack.c.h.b16 %v2633
    %v3024 = vunpack.c.l.b16 %v2634
    %v3025 = vunpack.c.h.b16 %v2634
    %v3026 = vunpack.c.l.b16 %v2635
    %v3027 = vunpack.c.h.b16 %v2635
    %v3028 = vpack.c.b16 %v2968, %v2964
    %v3029 = vpack.c.b16 %v2969, %v2965
    %v3030 = vpack.c.b16 %v2970, %v2966
    %v3031 = vpack.c.b16 %v2971, %v2967
    %v3032 = vpack.c.b16 %v2976, %v2972
    %v3033 = vpack.c.b16 %v2977, %v2973
    %v3034 = vpack.c.b16 %v2978, %v2974
    %v3035 = vpack.c.b16 %v2979, %v2975
    %v3036 = vpack.c.b16 %v2984, %v2980
    %v3037 = vpack.c.b16 %v2985, %v2981
    %v3038 = vpack.c.b16 %v2986, %v2982
    %v3039 = vpack.c.b16 %v2987, %v2983
    %v3040 = vpack.c.b16 %v2992, %v2988
    %v3041 = vpack.c.b16 %v2993, %v2989
    %v3042 = vpack.c.b16 %v2994, %v2990
    %v3043 = vpack.c.b16 %v2995, %v2991
    %v3044 = vpack.c.b16 %v3000, %v2996
    %v3045 = vpack.c.b16 %v3001, %v2997
    %v3046 = vpack.c.b16 %v3002, %v2998
    %v3047 = vpack.c.b16 %v3003, %v2999
    %v3048 = vpack.c.b16 %v3008, %v3004
    %v3049 = vpack.c.b16 %v3009, %v3005
    %v3050 = vpack.c.b16 %v3010, %v3006
    %v3051 = vpack.c.b16 %v3011, %v3007
    %v3052 = vpack.c.b16 %v3016, %v3012
    %v3053 = vpack.c.b16 %v3017, %v3013
    %v3054 = vpack.c.b16 %v3018, %v3014
    %v3055 = vpack.c.b16 %v3019, %v3015
    %v3056 = vpack.c.b16 %v3024, %v3020
    %v3057 = vpack.c.b16 %v3025, %v3021
    %v3058 = vpack.c.b16 %v3026, %v3022
    %v3059 = vpack.c.b16 %v3027, %v3023
    %3092 = vmatprep.subr.bf16.mxu0 %v3029
    %3093 = vmatpush1.bf16.msra.mxu0 %v3028
    %3094 = vmatprep.subr.bf16.mxu0 %v3033
    %3095 = vmatpush1.bf16.msra.mxu0 %v3032
    %3096 = vmatprep.subr.bf16.mxu0 %v3037
    %3097 = vmatpush1.bf16.msra.mxu0 %v3036
    %3098 = vmatprep.subr.bf16.mxu0 %v3041
    %3099 = vmatpush1.bf16.msra.mxu0 %v3040
    %3100 = vmatprep.subr.bf16.mxu0 %v3045
    %3101 = vmatpush1.bf16.msra.mxu0 %v3044
    %3102 = vmatprep.subr.bf16.mxu0 %v3049
    %3103 = vmatpush1.bf16.msra.mxu0 %v3048
    %3104 = vmatprep.subr.bf16.mxu0 %v3053
    %3105 = vmatpush1.bf16.msra.mxu0 %v3052
    %3106 = vmatprep.subr.bf16.mxu0 %v3057
    %3107 = vmatpush1.bf16.msra.mxu0 %v3056
    %3108 = vmatprep.subr.bf16.mxu0 0
    %3109 = vmatpush1.bf16.msra.mxu0 0
    %3110 = vmatprep.subr.bf16.mxu0 0
    %3111 = vmatpush1.bf16.msra.mxu0 0
    %3112 = vmatprep.subr.bf16.mxu0 0
    %3113 = vmatpush1.bf16.msra.mxu0 0
    %3114 = vmatprep.subr.bf16.mxu0 0
    %3115 = vmatpush1.bf16.msra.mxu0 0
    %3116 = vmatprep.subr.bf16.mxu0 0
    %3117 = vmatpush1.bf16.msra.mxu0 0
    %3118 = vmatprep.subr.bf16.mxu0 0
    %3119 = vmatpush1.bf16.msra.mxu0 0
    %3120 = vmatprep.subr.bf16.mxu0 0
    %3121 = vmatpush1.bf16.msra.mxu0 0
    %3122 = vmatprep.subr.bf16.mxu0 0
    %3123 = vmatpush1.bf16.msra.mxu0 0
    %3124 = vmatprep.mubr.bf16.mxu0 0
    %3125 = vmatmul.mubr.bf16.gmra.mrb[0].mxu0 0
    %v3126 = vpop.f32.mrb[0].mxu0
    %v3127 = vadd.f32 %v2885, %v3126
    %v3128 = vpop.f32.mrb[0].mxu0
    %v3129 = vadd.f32 %v2887, %v3128
    %v3130 = vpop.f32.mrb[0].mxu0
    %v3131 = vpop.f32.mrb[0].mxu0
    %3132 = vdwg.mxu0
    %3133 = vmatprep.subr.bf16.mxu0 %v3031
    %3134 = vmatpush1.bf16.msra.mxu0 %v3030
    %3135 = vmatprep.subr.bf16.mxu0 %v3035
    %3136 = vmatpush1.bf16.msra.mxu0 %v3034
    %3137 = vmatprep.subr.bf16.mxu0 %v3039
    %3138 = vmatpush1.bf16.msra.mxu0 %v3038
    %3139 = vmatprep.subr.bf16.mxu0 %v3043
    %3140 = vmatpush1.bf16.msra.mxu0 %v3042
    %3141 = vmatprep.subr.bf16.mxu0 %v3047
    %3142 = vmatpush1.bf16.msra.mxu0 %v3046
    %3143 = vmatprep.subr.bf16.mxu0 %v3051
    %3144 = vmatpush1.bf16.msra.mxu0 %v3050
    %3145 = vmatprep.subr.bf16.mxu0 %v3055
    %3146 = vmatpush1.bf16.msra.mxu0 %v3054
    %3147 = vmatprep.subr.bf16.mxu0 %v3059
    %3148 = vmatpush1.bf16.msra.mxu0 %v3058
    %3149 = vmatprep.subr.bf16.mxu0 0
    %3150 = vmatpush1.bf16.msra.mxu0 0
    %3151 = vmatprep.subr.bf16.mxu0 0
    %3152 = vmatpush1.bf16.msra.mxu0 0
    %3153 = vmatprep.subr.bf16.mxu0 0
    %3154 = vmatpush1.bf16.msra.mxu0 0
    %3155 = vmatprep.subr.bf16.mxu0 0
    %3156 = vmatpush1.bf16.msra.mxu0 0
    %3157 = vmatprep.subr.bf16.mxu0 0
    %3158 = vmatpush1.bf16.msra.mxu0 0
    %3159 = vmatprep.subr.bf16.mxu0 0
    %3160 = vmatpush1.bf16.msra.mxu0 0
    %3161 = vmatprep.subr.bf16.mxu0 0
    %3162 = vmatpush1.bf16.msra.mxu0 0
    %3163 = vmatprep.subr.bf16.mxu0 0
    %3164 = vmatpush1.bf16.msra.mxu0 0
    %3165 = vmatprep.mubr.bf16.mxu0 0
    %3166 = vmatmul.mubr.bf16.gmra.mrb[0].mxu0 0
    %v3167 = vpop.f32.mrb[0].mxu0
    %v3168 = vadd.f32 %v2926, %v3167
    %v3169 = vpop.f32.mrb[0].mxu0
    %v3170 = vadd.f32 %v2928, %v3169
    %v3171 = vpop.f32.mrb[0].mxu0
    %v3172 = vpop.f32.mrb[0].mxu0
    %3173 = vdwg.mxu0
    %v3174 = vadd.f32 %v3127, %v2673
    %v3175 = vadd.f32 %v3129, %v2677
    %v3176 = vadd.f32 %v3168, %v2681
    %v3177 = vadd.f32 %v3170, %v2685
    %v3178 = vsub.f32 0.0, %v3174
    %v3179 = vmul.f32 %v3178, 1.442695
    %v3180 = vpow.pop %v3179
    %v3181 = vadd.f32 %v3180, 1.0
    %v3182 = vrcp.pop %v3181
    %v3183 = vsub.f32 0.0, %v3175
    %v3184 = vmul.f32 %v3183, 1.442695
    %v3185 = vpow.pop %v3184
    %v3186 = vadd.f32 %v3185, 1.0
    %v3187 = vrcp.pop %v3186
    %v3188 = vtanh.pop %v3176
    %v3189 = vsub.f32 0.0, %v3177
    %v3190 = vmul.f32 %v3189, 1.442695
    %v3191 = vpow.pop %v3190
    %v3192 = vadd.f32 %v3191, 1.0
    %v3193 = vrcp.pop %v3192
    %v3194 = vmul.f32 %v3187, 0.0
    %v3195 = vmul.f32 %v3182, %v3188
    %v3196 = vadd.f32 %v3194, %v3195
    %v3197 = vtanh.pop %v3196
    %v3198 = vmul.f32 %v3193, %v3197
    %v3199 = vpack.c.bf16 %v3198, %v3198
    %3200 = vmatprep.subr.bf16.mxu0 0
    %3201 = vmatpush1.bf16.xpose.msra.mxu0 %v2601
    %3202 = vmatprep.subr.bf16.mxu0 0
    %3203 = vmatpush1.bf16.xpose.msra.mxu0 0
    %3204 = vmatprep.subr.bf16.mxu0 0
    %3205 = vmatpush1.bf16.xpose.msra.mxu0 0
    %3206 = vmatprep.subr.bf16.mxu0 0
    %3207 = vmatpush1.bf16.xpose.msra.mxu0 0
    %3208 = vmatprep.subr.bf16.mxu0 0
    %3209 = vmatpush1.bf16.xpose.msra.mxu0 0
    %3210 = vmatprep.subr.bf16.mxu0 0
    %3211 = vmatpush1.bf16.xpose.msra.mxu0 0
    %3212 = vmatprep.subr.bf16.mxu0 0
    %3213 = vmatpush1.bf16.xpose.msra.mxu0 0
    %3214 = vmatprep.subr.bf16.mxu0 0
    %3215 = vmatpush1.bf16.xpose.msra.mxu0 0
    %3216 = vmatprep.subr.bf16.mxu0 0
    %3217 = vmatpush1.bf16.xpose.msra.mxu0 0
    %3218 = vmatprep.subr.bf16.mxu0 0
    %3219 = vmatpush1.bf16.xpose.msra.mxu0 0
    %3220 = vmatprep.subr.bf16.mxu0 0
    %3221 = vmatpush1.bf16.xpose.msra.mxu0 0
    %3222 = vmatprep.subr.bf16.mxu0 0
    %3223 = vmatpush1.bf16.xpose.msra.mxu0 0
    %3224 = vmatprep.subr.bf16.mxu0 0
    %3225 = vmatpush1.bf16.xpose.msra.mxu0 0
    %3226 = vmatprep.subr.bf16.mxu0 0
    %3227 = vmatpush1.bf16.xpose.msra.mxu0 0
    %3228 = vmatprep.subr.bf16.mxu0 0
    %3229 = vmatpush1.bf16.xpose.msra.mxu0 0
    %3230 = vmatprep.subr.bf16.mxu0 0
    %3231 = vmatpush1.bf16.xpose.msra.mxu0 0
    %3232 = vmatprep.mubr.bf16.mxu0 0
    %3233 = vmatmul.mubr.bf16.gmra.mrb[0].mxu0 %v3199
    %v3234 = vpop.f32.mrb[0].mxu0
    %v3235 = vadd.f32 0.0, %v3234
    %v3236 = vpop.f32.mrb[0].mxu0
    %v3237 = vpop.f32.mrb[0].mxu0
    %v3238 = vpop.f32.mrb[0].mxu0
    %3239 = vdwg.mxu0
    %v3240 = vsel %vm2603, %v3235, -1e+30
    %vm3241 = vcmask 123904
    %v3242 = vsel %vm3241, %v3240, -inf
    %3243 = vmax.xlane.f32.xlu0 %v3242
    %v3244 = vpop.xlane.xlu0 %3243
    %v3245 = vsub.f32 %v3240, %v3244
    %v3246 = vmul.f32 %v3245, 1.442695
    %v3247 = vpow.pop %v3246
    %v3248 = vmul.f32 %v2602, %v3247
    %v3249 = vsel %vm3241, %v3248, 0.0
    %3250 = vadd.xlane.f32.xlu0 %v3249
    %v3251 = vpop.xlane.xlu0 %3250
    %v3252 = vmax.f32 %v3251, 1e-20
    %v3253 = vpack.c.bf16 %v3248, %v3248
    %v3255 = vsel %vm1025, %v3253, 0
    %3257 = vmatprep.subr.bf16.mxu0 0
    %3258 = vmatpush1.bf16.msra.mxu0 %v2601
    %3259 = vmatprep.subr.bf16.mxu0 0
    %3260 = vmatpush1.bf16.msra.mxu0 0
    %3261 = vmatprep.subr.bf16.mxu0 0
    %3262 = vmatpush1.bf16.msra.mxu0 0
    %3263 = vmatprep.subr.bf16.mxu0 0
    %3264 = vmatpush1.bf16.msra.mxu0 0
    %3265 = vmatprep.subr.bf16.mxu0 0
    %3266 = vmatpush1.bf16.msra.mxu0 0
    %3267 = vmatprep.subr.bf16.mxu0 0
    %3268 = vmatpush1.bf16.msra.mxu0 0
    %3269 = vmatprep.subr.bf16.mxu0 0
    %3270 = vmatpush1.bf16.msra.mxu0 0
    %3271 = vmatprep.subr.bf16.mxu0 0
    %3272 = vmatpush1.bf16.msra.mxu0 0
    %3273 = vmatprep.subr.bf16.mxu0 0
    %3274 = vmatpush1.bf16.msra.mxu0 0
    %3275 = vmatprep.subr.bf16.mxu0 0
    %3276 = vmatpush1.bf16.msra.mxu0 0
    %3277 = vmatprep.subr.bf16.mxu0 0
    %3278 = vmatpush1.bf16.msra.mxu0 0
    %3279 = vmatprep.subr.bf16.mxu0 0
    %3280 = vmatpush1.bf16.msra.mxu0 0
    %3281 = vmatprep.subr.bf16.mxu0 0
    %3282 = vmatpush1.bf16.msra.mxu0 0
    %3283 = vmatprep.subr.bf16.mxu0 0
    %3284 = vmatpush1.bf16.msra.mxu0 0
    %3285 = vmatprep.subr.bf16.mxu0 0
    %3286 = vmatpush1.bf16.msra.mxu0 0
    %3287 = vmatprep.subr.bf16.mxu0 0
    %3288 = vmatpush1.bf16.msra.mxu0 0
    %3289 = vmatprep.mubr.bf16.mxu0 0
    %3290 = vmatmul.mubr.bf16.gmra.mrb[0].mxu0 %v3255
    %v3291 = vpop.f32.mrb[0].mxu0
    %v3292 = vadd.f32 0.0, %v3291
    %v3293 = vpop.f32.mrb[0].mxu0
    %v3294 = vpop.f32.mrb[0].mxu0
    %v3295 = vpop.f32.mrb[0].mxu0
    %3296 = vdwg.mxu0
    %v3297 = vrcp.pop %v3252
    %v3298 = vmul.f32 %v3292, %v3297
    %v3299 = vpack.c.bf16 %v3298, %v3298
    %3300 = vmatprep.subr.bf16.mxu0 %v2787
    %3301 = vmatpush1.bf16.msra.mxu0 %v2786
    %3302 = vmatprep.subr.bf16.mxu0 %v2791
    %3303 = vmatpush1.bf16.msra.mxu0 %v2790
    %3304 = vmatprep.subr.bf16.mxu0 %v2795
    %3305 = vmatpush1.bf16.msra.mxu0 %v2794
    %3306 = vmatprep.subr.bf16.mxu0 %v2799
    %3307 = vmatpush1.bf16.msra.mxu0 %v2798
    %3308 = vmatprep.subr.bf16.mxu0 %v2803
    %3309 = vmatpush1.bf16.msra.mxu0 %v2802
    %3310 = vmatprep.subr.bf16.mxu0 %v2807
    %3311 = vmatpush1.bf16.msra.mxu0 %v2806
    %3312 = vmatprep.subr.bf16.mxu0 %v2811
    %3313 = vmatpush1.bf16.msra.mxu0 %v2810
    %3314 = vmatprep.subr.bf16.mxu0 %v2815
    %3315 = vmatpush1.bf16.msra.mxu0 %v2814
    %3316 = vmatprep.subr.bf16.mxu0 0
    %3317 = vmatpush1.bf16.msra.mxu0 0
    %3318 = vmatprep.subr.bf16.mxu0 0
    %3319 = vmatpush1.bf16.msra.mxu0 0
    %3320 = vmatprep.subr.bf16.mxu0 0
    %3321 = vmatpush1.bf16.msra.mxu0 0
    %3322 = vmatprep.subr.bf16.mxu0 0
    %3323 = vmatpush1.bf16.msra.mxu0 0
    %3324 = vmatprep.subr.bf16.mxu0 0
    %3325 = vmatpush1.bf16.msra.mxu0 0
    %3326 = vmatprep.subr.bf16.mxu0 0
    %3327 = vmatpush1.bf16.msra.mxu0 0
    %3328 = vmatprep.subr.bf16.mxu0 0
    %3329 = vmatpush1.bf16.msra.mxu0 0
    %3330 = vmatprep.subr.bf16.mxu0 0
    %3331 = vmatpush1.bf16.msra.mxu0 0
    %3332 = vmatprep.mubr.bf16.mxu0 0
    %3333 = vmatmul.mubr.bf16.gmra.mrb[0].mxu0 %v3299
    %v3334 = vpop.f32.mrb[0].mxu0
    %v3335 = vadd.f32 0.0, %v3334
    %v3336 = vpop.f32.mrb[0].mxu0
    %v3337 = vadd.f32 0.0, %v3336
    %v3338 = vpop.f32.mrb[0].mxu0
    %v3339 = vpop.f32.mrb[0].mxu0
    %3340 = vdwg.mxu0
    %3341 = vmatprep.subr.bf16.mxu0 %v2789
    %3342 = vmatpush1.bf16.msra.mxu0 %v2788
    %3343 = vmatprep.subr.bf16.mxu0 %v2793
    %3344 = vmatpush1.bf16.msra.mxu0 %v2792
    %3345 = vmatprep.subr.bf16.mxu0 %v2797
    %3346 = vmatpush1.bf16.msra.mxu0 %v2796
    %3347 = vmatprep.subr.bf16.mxu0 %v2801
    %3348 = vmatpush1.bf16.msra.mxu0 %v2800
    %3349 = vmatprep.subr.bf16.mxu0 %v2805
    %3350 = vmatpush1.bf16.msra.mxu0 %v2804
    %3351 = vmatprep.subr.bf16.mxu0 %v2809
    %3352 = vmatpush1.bf16.msra.mxu0 %v2808
    %3353 = vmatprep.subr.bf16.mxu0 %v2813
    %3354 = vmatpush1.bf16.msra.mxu0 %v2812
    %3355 = vmatprep.subr.bf16.mxu0 %v2817
    %3356 = vmatpush1.bf16.msra.mxu0 %v2816
    %3357 = vmatprep.subr.bf16.mxu0 0
    %3358 = vmatpush1.bf16.msra.mxu0 0
    %3359 = vmatprep.subr.bf16.mxu0 0
    %3360 = vmatpush1.bf16.msra.mxu0 0
    %3361 = vmatprep.subr.bf16.mxu0 0
    %3362 = vmatpush1.bf16.msra.mxu0 0
    %3363 = vmatprep.subr.bf16.mxu0 0
    %3364 = vmatpush1.bf16.msra.mxu0 0
    %3365 = vmatprep.subr.bf16.mxu0 0
    %3366 = vmatpush1.bf16.msra.mxu0 0
    %3367 = vmatprep.subr.bf16.mxu0 0
    %3368 = vmatpush1.bf16.msra.mxu0 0
    %3369 = vmatprep.subr.bf16.mxu0 0
    %3370 = vmatpush1.bf16.msra.mxu0 0
    %3371 = vmatprep.subr.bf16.mxu0 0
    %3372 = vmatpush1.bf16.msra.mxu0 0
    %3373 = vmatprep.mubr.bf16.mxu0 0
    %3374 = vmatmul.mubr.bf16.gmra.mrb[0].mxu0 %v3299
    %v3375 = vpop.f32.mrb[0].mxu0
    %v3376 = vadd.f32 0.0, %v3375
    %v3377 = vpop.f32.mrb[0].mxu0
    %v3378 = vadd.f32 0.0, %v3377
    %v3379 = vpop.f32.mrb[0].mxu0
    %v3380 = vpop.f32.mrb[0].mxu0
    %3381 = vdwg.mxu0
    %3382 = vmatprep.subr.bf16.mxu0 %v3029
    %3383 = vmatpush1.bf16.msra.mxu0 %v3028
    %3384 = vmatprep.subr.bf16.mxu0 %v3033
    %3385 = vmatpush1.bf16.msra.mxu0 %v3032
    %3386 = vmatprep.subr.bf16.mxu0 %v3037
    %3387 = vmatpush1.bf16.msra.mxu0 %v3036
    %3388 = vmatprep.subr.bf16.mxu0 %v3041
    %3389 = vmatpush1.bf16.msra.mxu0 %v3040
    %3390 = vmatprep.subr.bf16.mxu0 %v3045
    %3391 = vmatpush1.bf16.msra.mxu0 %v3044
    %3392 = vmatprep.subr.bf16.mxu0 %v3049
    %3393 = vmatpush1.bf16.msra.mxu0 %v3048
    %3394 = vmatprep.subr.bf16.mxu0 %v3053
    %3395 = vmatpush1.bf16.msra.mxu0 %v3052
    %3396 = vmatprep.subr.bf16.mxu0 %v3057
    %3397 = vmatpush1.bf16.msra.mxu0 %v3056
    %3398 = vmatprep.subr.bf16.mxu0 0
    %3399 = vmatpush1.bf16.msra.mxu0 0
    %3400 = vmatprep.subr.bf16.mxu0 0
    %3401 = vmatpush1.bf16.msra.mxu0 0
    %3402 = vmatprep.subr.bf16.mxu0 0
    %3403 = vmatpush1.bf16.msra.mxu0 0
    %3404 = vmatprep.subr.bf16.mxu0 0
    %3405 = vmatpush1.bf16.msra.mxu0 0
    %3406 = vmatprep.subr.bf16.mxu0 0
    %3407 = vmatpush1.bf16.msra.mxu0 0
    %3408 = vmatprep.subr.bf16.mxu0 0
    %3409 = vmatpush1.bf16.msra.mxu0 0
    %3410 = vmatprep.subr.bf16.mxu0 0
    %3411 = vmatpush1.bf16.msra.mxu0 0
    %3412 = vmatprep.subr.bf16.mxu0 0
    %3413 = vmatpush1.bf16.msra.mxu0 0
    %3414 = vmatprep.mubr.bf16.mxu0 0
    %3415 = vmatmul.mubr.bf16.gmra.mrb[0].mxu0 %v3199
    %v3416 = vpop.f32.mrb[0].mxu0
    %v3417 = vadd.f32 %v3335, %v3416
    %v3418 = vpop.f32.mrb[0].mxu0
    %v3419 = vadd.f32 %v3337, %v3418
    %v3420 = vpop.f32.mrb[0].mxu0
    %v3421 = vpop.f32.mrb[0].mxu0
    %3422 = vdwg.mxu0
    %3423 = vmatprep.subr.bf16.mxu0 %v3031
    %3424 = vmatpush1.bf16.msra.mxu0 %v3030
    %3425 = vmatprep.subr.bf16.mxu0 %v3035
    %3426 = vmatpush1.bf16.msra.mxu0 %v3034
    %3427 = vmatprep.subr.bf16.mxu0 %v3039
    %3428 = vmatpush1.bf16.msra.mxu0 %v3038
    %3429 = vmatprep.subr.bf16.mxu0 %v3043
    %3430 = vmatpush1.bf16.msra.mxu0 %v3042
    %3431 = vmatprep.subr.bf16.mxu0 %v3047
    %3432 = vmatpush1.bf16.msra.mxu0 %v3046
    %3433 = vmatprep.subr.bf16.mxu0 %v3051
    %3434 = vmatpush1.bf16.msra.mxu0 %v3050
    %3435 = vmatprep.subr.bf16.mxu0 %v3055
    %3436 = vmatpush1.bf16.msra.mxu0 %v3054
    %3437 = vmatprep.subr.bf16.mxu0 %v3059
    %3438 = vmatpush1.bf16.msra.mxu0 %v3058
    %3439 = vmatprep.subr.bf16.mxu0 0
    %3440 = vmatpush1.bf16.msra.mxu0 0
    %3441 = vmatprep.subr.bf16.mxu0 0
    %3442 = vmatpush1.bf16.msra.mxu0 0
    %3443 = vmatprep.subr.bf16.mxu0 0
    %3444 = vmatpush1.bf16.msra.mxu0 0
    %3445 = vmatprep.subr.bf16.mxu0 0
    %3446 = vmatpush1.bf16.msra.mxu0 0
    %3447 = vmatprep.subr.bf16.mxu0 0
    %3448 = vmatpush1.bf16.msra.mxu0 0
    %3449 = vmatprep.subr.bf16.mxu0 0
    %3450 = vmatpush1.bf16.msra.mxu0 0
    %3451 = vmatprep.subr.bf16.mxu0 0
    %3452 = vmatpush1.bf16.msra.mxu0 0
    %3453 = vmatprep.subr.bf16.mxu0 0
    %3454 = vmatpush1.bf16.msra.mxu0 0
    %3455 = vmatprep.mubr.bf16.mxu0 0
    %3456 = vmatmul.mubr.bf16.gmra.mrb[0].mxu0 %v3199
    %v3457 = vpop.f32.mrb[0].mxu0
    %v3458 = vadd.f32 %v3376, %v3457
    %v3459 = vpop.f32.mrb[0].mxu0
    %v3460 = vadd.f32 %v3378, %v3459
    %v3461 = vpop.f32.mrb[0].mxu0
    %v3462 = vpop.f32.mrb[0].mxu0
    %3463 = vdwg.mxu0
    %v3464 = vadd.f32 %v3417, %v2673
    %v3465 = vadd.f32 %v3419, %v2677
    %v3466 = vadd.f32 %v3458, %v2681
    %v3467 = vadd.f32 %v3460, %v2685
    %v3468 = vsub.f32 0.0, %v3464
    %v3469 = vmul.f32 %v3468, 1.442695
    %v3470 = vpow.pop %v3469
    %v3471 = vadd.f32 %v3470, 1.0
    %v3472 = vrcp.pop %v3471
    %v3473 = vsub.f32 0.0, %v3465
    %v3474 = vmul.f32 %v3473, 1.442695
    %v3475 = vpow.pop %v3474
    %v3476 = vadd.f32 %v3475, 1.0
    %v3477 = vrcp.pop %v3476
    %v3478 = vtanh.pop %v3466
    %v3479 = vsub.f32 0.0, %v3467
    %v3480 = vmul.f32 %v3479, 1.442695
    %v3481 = vpow.pop %v3480
    %v3482 = vadd.f32 %v3481, 1.0
    %v3483 = vrcp.pop %v3482
    %v3484 = vmul.f32 %v3477, %v3196
    %v3485 = vmul.f32 %v3472, %v3478
    %v3486 = vadd.f32 %v3484, %v3485
    %v3487 = vtanh.pop %v3486
    %v3488 = vmul.f32 %v3483, %v3487
    %v3489 = vpack.c.bf16 %v3488, %v3488
    %3490 = vmatprep.subr.bf16.mxu0 0
    %3491 = vmatpush1.bf16.xpose.msra.mxu0 %v2601
    %3492 = vmatprep.subr.bf16.mxu0 0
    %3493 = vmatpush1.bf16.xpose.msra.mxu0 0
    %3494 = vmatprep.subr.bf16.mxu0 0
    %3495 = vmatpush1.bf16.xpose.msra.mxu0 0
    %3496 = vmatprep.subr.bf16.mxu0 0
    %3497 = vmatpush1.bf16.xpose.msra.mxu0 0
    %3498 = vmatprep.subr.bf16.mxu0 0
    %3499 = vmatpush1.bf16.xpose.msra.mxu0 0
    %3500 = vmatprep.subr.bf16.mxu0 0
    %3501 = vmatpush1.bf16.xpose.msra.mxu0 0
    %3502 = vmatprep.subr.bf16.mxu0 0
    %3503 = vmatpush1.bf16.xpose.msra.mxu0 0
    %3504 = vmatprep.subr.bf16.mxu0 0
    %3505 = vmatpush1.bf16.xpose.msra.mxu0 0
    %3506 = vmatprep.subr.bf16.mxu0 0
    %3507 = vmatpush1.bf16.xpose.msra.mxu0 0
    %3508 = vmatprep.subr.bf16.mxu0 0
    %3509 = vmatpush1.bf16.xpose.msra.mxu0 0
    %3510 = vmatprep.subr.bf16.mxu0 0
    %3511 = vmatpush1.bf16.xpose.msra.mxu0 0
    %3512 = vmatprep.subr.bf16.mxu0 0
    %3513 = vmatpush1.bf16.xpose.msra.mxu0 0
    %3514 = vmatprep.subr.bf16.mxu0 0
    %3515 = vmatpush1.bf16.xpose.msra.mxu0 0
    %3516 = vmatprep.subr.bf16.mxu0 0
    %3517 = vmatpush1.bf16.xpose.msra.mxu0 0
    %3518 = vmatprep.subr.bf16.mxu0 0
    %3519 = vmatpush1.bf16.xpose.msra.mxu0 0
    %3520 = vmatprep.subr.bf16.mxu0 0
    %3521 = vmatpush1.bf16.xpose.msra.mxu0 0
    %3522 = vmatprep.mubr.bf16.mxu0 0
    %3523 = vmatmul.mubr.bf16.gmra.mrb[0].mxu0 %v3489
    %v3524 = vpop.f32.mrb[0].mxu0
    %v3525 = vadd.f32 0.0, %v3524
    %v3526 = vpop.f32.mrb[0].mxu0
    %v3527 = vpop.f32.mrb[0].mxu0
    %v3528 = vpop.f32.mrb[0].mxu0
    %3529 = vdwg.mxu0
    %v3530 = vsel %vm2603, %v3525, -1e+30
    %v3531 = vsel %vm3241, %v3530, -inf
    %3532 = vmax.xlane.f32.xlu0 %v3531
    %v3533 = vpop.xlane.xlu0 %3532
    %v3534 = vsub.f32 %v3530, %v3533
    %v3535 = vmul.f32 %v3534, 1.442695
    %v3536 = vpow.pop %v3535
    %v3537 = vmul.f32 %v2602, %v3536
    %v3538 = vsel %vm3241, %v3537, 0.0
    %3539 = vadd.xlane.f32.xlu0 %v3538
    %v3540 = vpop.xlane.xlu0 %3539
    %v3541 = vmax.f32 %v3540, 1e-20
    %v3542 = vpack.c.bf16 %v3537, %v3537
    %v3544 = vsel %vm1025, %v3542, 0
    %3546 = vmatprep.subr.bf16.mxu0 0
    %3547 = vmatpush1.bf16.msra.mxu0 %v2601
    %3548 = vmatprep.subr.bf16.mxu0 0
    %3549 = vmatpush1.bf16.msra.mxu0 0
    %3550 = vmatprep.subr.bf16.mxu0 0
    %3551 = vmatpush1.bf16.msra.mxu0 0
    %3552 = vmatprep.subr.bf16.mxu0 0
    %3553 = vmatpush1.bf16.msra.mxu0 0
    %3554 = vmatprep.subr.bf16.mxu0 0
    %3555 = vmatpush1.bf16.msra.mxu0 0
    %3556 = vmatprep.subr.bf16.mxu0 0
    %3557 = vmatpush1.bf16.msra.mxu0 0
    %3558 = vmatprep.subr.bf16.mxu0 0
    %3559 = vmatpush1.bf16.msra.mxu0 0
    %3560 = vmatprep.subr.bf16.mxu0 0
    %3561 = vmatpush1.bf16.msra.mxu0 0
    %3562 = vmatprep.subr.bf16.mxu0 0
    %3563 = vmatpush1.bf16.msra.mxu0 0
    %3564 = vmatprep.subr.bf16.mxu0 0
    %3565 = vmatpush1.bf16.msra.mxu0 0
    %3566 = vmatprep.subr.bf16.mxu0 0
    %3567 = vmatpush1.bf16.msra.mxu0 0
    %3568 = vmatprep.subr.bf16.mxu0 0
    %3569 = vmatpush1.bf16.msra.mxu0 0
    %3570 = vmatprep.subr.bf16.mxu0 0
    %3571 = vmatpush1.bf16.msra.mxu0 0
    %3572 = vmatprep.subr.bf16.mxu0 0
    %3573 = vmatpush1.bf16.msra.mxu0 0
    %3574 = vmatprep.subr.bf16.mxu0 0
    %3575 = vmatpush1.bf16.msra.mxu0 0
    %3576 = vmatprep.subr.bf16.mxu0 0
    %3577 = vmatpush1.bf16.msra.mxu0 0
    %3578 = vmatprep.mubr.bf16.mxu0 0
    %3579 = vmatmul.mubr.bf16.gmra.mrb[0].mxu0 %v3544
    %v3580 = vpop.f32.mrb[0].mxu0
    %v3581 = vadd.f32 0.0, %v3580
    %v3582 = vpop.f32.mrb[0].mxu0
    %v3583 = vpop.f32.mrb[0].mxu0
    %v3584 = vpop.f32.mrb[0].mxu0
    %3585 = vdwg.mxu0
    %v3586 = vrcp.pop %v3541
    %v3587 = vmul.f32 %v3581, %v3586
    %v3588 = vpack.c.bf16 %v3587, %v3587
    %3589 = vmatprep.subr.bf16.mxu0 %v2787
    %3590 = vmatpush1.bf16.msra.mxu0 %v2786
    %3591 = vmatprep.subr.bf16.mxu0 %v2791
    %3592 = vmatpush1.bf16.msra.mxu0 %v2790
    %3593 = vmatprep.subr.bf16.mxu0 %v2795
    %3594 = vmatpush1.bf16.msra.mxu0 %v2794
    %3595 = vmatprep.subr.bf16.mxu0 %v2799
    %3596 = vmatpush1.bf16.msra.mxu0 %v2798
    %3597 = vmatprep.subr.bf16.mxu0 %v2803
    %3598 = vmatpush1.bf16.msra.mxu0 %v2802
    %3599 = vmatprep.subr.bf16.mxu0 %v2807
    %3600 = vmatpush1.bf16.msra.mxu0 %v2806
    %3601 = vmatprep.subr.bf16.mxu0 %v2811
    %3602 = vmatpush1.bf16.msra.mxu0 %v2810
    %3603 = vmatprep.subr.bf16.mxu0 %v2815
    %3604 = vmatpush1.bf16.msra.mxu0 %v2814
    %3605 = vmatprep.subr.bf16.mxu0 0
    %3606 = vmatpush1.bf16.msra.mxu0 0
    %3607 = vmatprep.subr.bf16.mxu0 0
    %3608 = vmatpush1.bf16.msra.mxu0 0
    %3609 = vmatprep.subr.bf16.mxu0 0
    %3610 = vmatpush1.bf16.msra.mxu0 0
    %3611 = vmatprep.subr.bf16.mxu0 0
    %3612 = vmatpush1.bf16.msra.mxu0 0
    %3613 = vmatprep.subr.bf16.mxu0 0
    %3614 = vmatpush1.bf16.msra.mxu0 0
    %3615 = vmatprep.subr.bf16.mxu0 0
    %3616 = vmatpush1.bf16.msra.mxu0 0
    %3617 = vmatprep.subr.bf16.mxu0 0
    %3618 = vmatpush1.bf16.msra.mxu0 0
    %3619 = vmatprep.subr.bf16.mxu0 0
    %3620 = vmatpush1.bf16.msra.mxu0 0
    %3621 = vmatprep.mubr.bf16.mxu0 0
    %3622 = vmatmul.mubr.bf16.gmra.mrb[0].mxu0 %v3588
    %v3623 = vpop.f32.mrb[0].mxu0
    %v3624 = vadd.f32 0.0, %v3623
    %v3625 = vpop.f32.mrb[0].mxu0
    %v3626 = vadd.f32 0.0, %v3625
    %v3627 = vpop.f32.mrb[0].mxu0
    %v3628 = vpop.f32.mrb[0].mxu0
    %3629 = vdwg.mxu0
    %3630 = vmatprep.subr.bf16.mxu0 %v2789
    %3631 = vmatpush1.bf16.msra.mxu0 %v2788
    %3632 = vmatprep.subr.bf16.mxu0 %v2793
    %3633 = vmatpush1.bf16.msra.mxu0 %v2792
    %3634 = vmatprep.subr.bf16.mxu0 %v2797
    %3635 = vmatpush1.bf16.msra.mxu0 %v2796
    %3636 = vmatprep.subr.bf16.mxu0 %v2801
    %3637 = vmatpush1.bf16.msra.mxu0 %v2800
    %3638 = vmatprep.subr.bf16.mxu0 %v2805
    %3639 = vmatpush1.bf16.msra.mxu0 %v2804
    %3640 = vmatprep.subr.bf16.mxu0 %v2809
    %3641 = vmatpush1.bf16.msra.mxu0 %v2808
    %3642 = vmatprep.subr.bf16.mxu0 %v2813
    %3643 = vmatpush1.bf16.msra.mxu0 %v2812
    %3644 = vmatprep.subr.bf16.mxu0 %v2817
    %3645 = vmatpush1.bf16.msra.mxu0 %v2816
    %3646 = vmatprep.subr.bf16.mxu0 0
    %3647 = vmatpush1.bf16.msra.mxu0 0
    %3648 = vmatprep.subr.bf16.mxu0 0
    %3649 = vmatpush1.bf16.msra.mxu0 0
    %3650 = vmatprep.subr.bf16.mxu0 0
    %3651 = vmatpush1.bf16.msra.mxu0 0
    %3652 = vmatprep.subr.bf16.mxu0 0
    %3653 = vmatpush1.bf16.msra.mxu0 0
    %3654 = vmatprep.subr.bf16.mxu0 0
    %3655 = vmatpush1.bf16.msra.mxu0 0
    %3656 = vmatprep.subr.bf16.mxu0 0
    %3657 = vmatpush1.bf16.msra.mxu0 0
    %3658 = vmatprep.subr.bf16.mxu0 0
    %3659 = vmatpush1.bf16.msra.mxu0 0
    %3660 = vmatprep.subr.bf16.mxu0 0
    %3661 = vmatpush1.bf16.msra.mxu0 0
    %3662 = vmatprep.mubr.bf16.mxu0 0
    %3663 = vmatmul.mubr.bf16.gmra.mrb[0].mxu0 %v3588
    %v3664 = vpop.f32.mrb[0].mxu0
    %v3665 = vadd.f32 0.0, %v3664
    %v3666 = vpop.f32.mrb[0].mxu0
    %v3667 = vadd.f32 0.0, %v3666
    %v3668 = vpop.f32.mrb[0].mxu0
    %v3669 = vpop.f32.mrb[0].mxu0
    %3670 = vdwg.mxu0
    %3671 = vmatprep.subr.bf16.mxu0 %v3029
    %3672 = vmatpush1.bf16.msra.mxu0 %v3028
    %3673 = vmatprep.subr.bf16.mxu0 %v3033
    %3674 = vmatpush1.bf16.msra.mxu0 %v3032
    %3675 = vmatprep.subr.bf16.mxu0 %v3037
    %3676 = vmatpush1.bf16.msra.mxu0 %v3036
    %3677 = vmatprep.subr.bf16.mxu0 %v3041
    %3678 = vmatpush1.bf16.msra.mxu0 %v3040
    %3679 = vmatprep.subr.bf16.mxu0 %v3045
    %3680 = vmatpush1.bf16.msra.mxu0 %v3044
    %3681 = vmatprep.subr.bf16.mxu0 %v3049
    %3682 = vmatpush1.bf16.msra.mxu0 %v3048
    %3683 = vmatprep.subr.bf16.mxu0 %v3053
    %3684 = vmatpush1.bf16.msra.mxu0 %v3052
    %3685 = vmatprep.subr.bf16.mxu0 %v3057
    %3686 = vmatpush1.bf16.msra.mxu0 %v3056
    %3687 = vmatprep.subr.bf16.mxu0 0
    %3688 = vmatpush1.bf16.msra.mxu0 0
    %3689 = vmatprep.subr.bf16.mxu0 0
    %3690 = vmatpush1.bf16.msra.mxu0 0
    %3691 = vmatprep.subr.bf16.mxu0 0
    %3692 = vmatpush1.bf16.msra.mxu0 0
    %3693 = vmatprep.subr.bf16.mxu0 0
    %3694 = vmatpush1.bf16.msra.mxu0 0
    %3695 = vmatprep.subr.bf16.mxu0 0
    %3696 = vmatpush1.bf16.msra.mxu0 0
    %3697 = vmatprep.subr.bf16.mxu0 0
    %3698 = vmatpush1.bf16.msra.mxu0 0
    %3699 = vmatprep.subr.bf16.mxu0 0
    %3700 = vmatpush1.bf16.msra.mxu0 0
    %3701 = vmatprep.subr.bf16.mxu0 0
    %3702 = vmatpush1.bf16.msra.mxu0 0
    %3703 = vmatprep.mubr.bf16.mxu0 0
    %3704 = vmatmul.mubr.bf16.gmra.mrb[0].mxu0 %v3489
    %v3705 = vpop.f32.mrb[0].mxu0
    %v3706 = vadd.f32 %v3624, %v3705
    %v3707 = vpop.f32.mrb[0].mxu0
    %v3708 = vadd.f32 %v3626, %v3707
    %v3709 = vpop.f32.mrb[0].mxu0
    %v3710 = vpop.f32.mrb[0].mxu0
    %3711 = vdwg.mxu0
    %3712 = vmatprep.subr.bf16.mxu0 %v3031
    %3713 = vmatpush1.bf16.msra.mxu0 %v3030
    %3714 = vmatprep.subr.bf16.mxu0 %v3035
    %3715 = vmatpush1.bf16.msra.mxu0 %v3034
    %3716 = vmatprep.subr.bf16.mxu0 %v3039
    %3717 = vmatpush1.bf16.msra.mxu0 %v3038
    %3718 = vmatprep.subr.bf16.mxu0 %v3043
    %3719 = vmatpush1.bf16.msra.mxu0 %v3042
    %3720 = vmatprep.subr.bf16.mxu0 %v3047
    %3721 = vmatpush1.bf16.msra.mxu0 %v3046
    %3722 = vmatprep.subr.bf16.mxu0 %v3051
    %3723 = vmatpush1.bf16.msra.mxu0 %v3050
    %3724 = vmatprep.subr.bf16.mxu0 %v3055
    %3725 = vmatpush1.bf16.msra.mxu0 %v3054
    %3726 = vmatprep.subr.bf16.mxu0 %v3059
    %3727 = vmatpush1.bf16.msra.mxu0 %v3058
    %3728 = vmatprep.subr.bf16.mxu0 0
    %3729 = vmatpush1.bf16.msra.mxu0 0
    %3730 = vmatprep.subr.bf16.mxu0 0
    %3731 = vmatpush1.bf16.msra.mxu0 0
    %3732 = vmatprep.subr.bf16.mxu0 0
    %3733 = vmatpush1.bf16.msra.mxu0 0
    %3734 = vmatprep.subr.bf16.mxu0 0
    %3735 = vmatpush1.bf16.msra.mxu0 0
    %3736 = vmatprep.subr.bf16.mxu0 0
    %3737 = vmatpush1.bf16.msra.mxu0 0
    %3738 = vmatprep.subr.bf16.mxu0 0
    %3739 = vmatpush1.bf16.msra.mxu0 0
    %3740 = vmatprep.subr.bf16.mxu0 0
    %3741 = vmatpush1.bf16.msra.mxu0 0
    %3742 = vmatprep.subr.bf16.mxu0 0
    %3743 = vmatpush1.bf16.msra.mxu0 0
    %3744 = vmatprep.mubr.bf16.mxu0 0
    %3745 = vmatmul.mubr.bf16.gmra.mrb[0].mxu0 %v3489
    %v3746 = vpop.f32.mrb[0].mxu0
    %v3747 = vadd.f32 %v3665, %v3746
    %v3748 = vpop.f32.mrb[0].mxu0
    %v3749 = vadd.f32 %v3667, %v3748
    %v3750 = vpop.f32.mrb[0].mxu0
    %v3751 = vpop.f32.mrb[0].mxu0
    %3752 = vdwg.mxu0
    %v3753 = vadd.f32 %v3706, %v2673
    %v3754 = vadd.f32 %v3708, %v2677
    %v3755 = vadd.f32 %v3747, %v2681
    %v3756 = vadd.f32 %v3749, %v2685
    %v3757 = vsub.f32 0.0, %v3753
    %v3758 = vmul.f32 %v3757, 1.442695
    %v3759 = vpow.pop %v3758
    %v3760 = vadd.f32 %v3759, 1.0
    %v3761 = vrcp.pop %v3760
    %v3762 = vsub.f32 0.0, %v3754
    %v3763 = vmul.f32 %v3762, 1.442695
    %v3764 = vpow.pop %v3763
    %v3765 = vadd.f32 %v3764, 1.0
    %v3766 = vrcp.pop %v3765
    %v3767 = vtanh.pop %v3755
    %v3768 = vsub.f32 0.0, %v3756
    %v3769 = vmul.f32 %v3768, 1.442695
    %v3770 = vpow.pop %v3769
    %v3771 = vadd.f32 %v3770, 1.0
    %v3772 = vrcp.pop %v3771
    %v3773 = vmul.f32 %v3766, %v3486
    %v3774 = vmul.f32 %v3761, %v3767
    %v3775 = vadd.f32 %v3773, %v3774
    %v3776 = vtanh.pop %v3775
    %v3777 = vmul.f32 %v3772, %v3776
    %v3778 = vpack.c.bf16 %v3777, %v3777
    %3779 = vmatprep.subr.bf16.mxu0 0
    %3780 = vmatpush1.bf16.xpose.msra.mxu0 %v2601
    %3781 = vmatprep.subr.bf16.mxu0 0
    %3782 = vmatpush1.bf16.xpose.msra.mxu0 0
    %3783 = vmatprep.subr.bf16.mxu0 0
    %3784 = vmatpush1.bf16.xpose.msra.mxu0 0
    %3785 = vmatprep.subr.bf16.mxu0 0
    %3786 = vmatpush1.bf16.xpose.msra.mxu0 0
    %3787 = vmatprep.subr.bf16.mxu0 0
    %3788 = vmatpush1.bf16.xpose.msra.mxu0 0
    %3789 = vmatprep.subr.bf16.mxu0 0
    %3790 = vmatpush1.bf16.xpose.msra.mxu0 0
    %3791 = vmatprep.subr.bf16.mxu0 0
    %3792 = vmatpush1.bf16.xpose.msra.mxu0 0
    %3793 = vmatprep.subr.bf16.mxu0 0
    %3794 = vmatpush1.bf16.xpose.msra.mxu0 0
    %3795 = vmatprep.subr.bf16.mxu0 0
    %3796 = vmatpush1.bf16.xpose.msra.mxu0 0
    %3797 = vmatprep.subr.bf16.mxu0 0
    %3798 = vmatpush1.bf16.xpose.msra.mxu0 0
    %3799 = vmatprep.subr.bf16.mxu0 0
    %3800 = vmatpush1.bf16.xpose.msra.mxu0 0
    %3801 = vmatprep.subr.bf16.mxu0 0
    %3802 = vmatpush1.bf16.xpose.msra.mxu0 0
    %3803 = vmatprep.subr.bf16.mxu0 0
    %3804 = vmatpush1.bf16.xpose.msra.mxu0 0
    %3805 = vmatprep.subr.bf16.mxu0 0
    %3806 = vmatpush1.bf16.xpose.msra.mxu0 0
    %3807 = vmatprep.subr.bf16.mxu0 0
    %3808 = vmatpush1.bf16.xpose.msra.mxu0 0
    %3809 = vmatprep.subr.bf16.mxu0 0
    %3810 = vmatpush1.bf16.xpose.msra.mxu0 0
    %3811 = vmatprep.mubr.bf16.mxu0 0
    %3812 = vmatmul.mubr.bf16.gmra.mrb[0].mxu0 %v3778
    %v3813 = vpop.f32.mrb[0].mxu0
    %v3814 = vadd.f32 0.0, %v3813
    %v3815 = vpop.f32.mrb[0].mxu0
    %v3816 = vpop.f32.mrb[0].mxu0
    %v3817 = vpop.f32.mrb[0].mxu0
    %3818 = vdwg.mxu0
    %v3819 = vsel %vm2603, %v3814, -1e+30
    %v3820 = vsel %vm3241, %v3819, -inf
    %3821 = vmax.xlane.f32.xlu0 %v3820
    %v3822 = vpop.xlane.xlu0 %3821
    %v3823 = vsub.f32 %v3819, %v3822
    %v3824 = vmul.f32 %v3823, 1.442695
    %v3825 = vpow.pop %v3824
    %v3826 = vmul.f32 %v2602, %v3825
    %v3827 = vsel %vm3241, %v3826, 0.0
    %3828 = vadd.xlane.f32.xlu0 %v3827
    %v3829 = vpop.xlane.xlu0 %3828
    %v3830 = vmax.f32 %v3829, 1e-20
    %v3831 = vpack.c.bf16 %v3826, %v3826
    %v3833 = vsel %vm1025, %v3831, 0
    %3835 = vmatprep.subr.bf16.mxu0 0
    %3836 = vmatpush1.bf16.msra.mxu0 %v2601
    %3837 = vmatprep.subr.bf16.mxu0 0
    %3838 = vmatpush1.bf16.msra.mxu0 0
    %3839 = vmatprep.subr.bf16.mxu0 0
    %3840 = vmatpush1.bf16.msra.mxu0 0
    %3841 = vmatprep.subr.bf16.mxu0 0
    %3842 = vmatpush1.bf16.msra.mxu0 0
    %3843 = vmatprep.subr.bf16.mxu0 0
    %3844 = vmatpush1.bf16.msra.mxu0 0
    %3845 = vmatprep.subr.bf16.mxu0 0
    %3846 = vmatpush1.bf16.msra.mxu0 0
    %3847 = vmatprep.subr.bf16.mxu0 0
    %3848 = vmatpush1.bf16.msra.mxu0 0
    %3849 = vmatprep.subr.bf16.mxu0 0
    %3850 = vmatpush1.bf16.msra.mxu0 0
    %3851 = vmatprep.subr.bf16.mxu0 0
    %3852 = vmatpush1.bf16.msra.mxu0 0
    %3853 = vmatprep.subr.bf16.mxu0 0
    %3854 = vmatpush1.bf16.msra.mxu0 0
    %3855 = vmatprep.subr.bf16.mxu0 0
    %3856 = vmatpush1.bf16.msra.mxu0 0
    %3857 = vmatprep.subr.bf16.mxu0 0
    %3858 = vmatpush1.bf16.msra.mxu0 0
    %3859 = vmatprep.subr.bf16.mxu0 0
    %3860 = vmatpush1.bf16.msra.mxu0 0
    %3861 = vmatprep.subr.bf16.mxu0 0
    %3862 = vmatpush1.bf16.msra.mxu0 0
    %3863 = vmatprep.subr.bf16.mxu0 0
    %3864 = vmatpush1.bf16.msra.mxu0 0
    %3865 = vmatprep.subr.bf16.mxu0 0
    %3866 = vmatpush1.bf16.msra.mxu0 0
    %3867 = vmatprep.mubr.bf16.mxu0 0
    %3868 = vmatmul.mubr.bf16.gmra.mrb[0].mxu0 %v3833
    %v3869 = vpop.f32.mrb[0].mxu0
    %v3870 = vadd.f32 0.0, %v3869
    %v3871 = vpop.f32.mrb[0].mxu0
    %v3872 = vpop.f32.mrb[0].mxu0
    %v3873 = vpop.f32.mrb[0].mxu0
    %3874 = vdwg.mxu0
    %v3875 = vrcp.pop %v3830
    %v3876 = vmul.f32 %v3870, %v3875
    %v3877 = vld [vmem:[%s25] sm:$0xf]
    %v3878 = vld [vmem:[%s25 + $0x4] sm:$0xf]
    %v3879 = vld [vmem:[%s25 + $0x8] sm:$0xf]
    %v3880 = vld [vmem:[%s25 + $0xc] sm:$0xf]
    %v3881 = vld [vmem:[%s25 + $0x10] sm:$0xf]
    %v3882 = vld [vmem:[%s25 + $0x14] sm:$0xf]
    %v3883 = vld [vmem:[%s25 + $0x18] sm:$0xf]
    %v3884 = vld [vmem:[%s25 + $0x1c] sm:$0xf]
    %v3885 = vld [vmem:[%s25 + $0x20] sm:$0xf]
    %v3886 = vld [vmem:[%s25 + $0x24] sm:$0xf]
    %v3887 = vld [vmem:[%s25 + $0x28] sm:$0xf]
    %v3888 = vld [vmem:[%s25 + $0x2c] sm:$0xf]
    %v3889 = vld [vmem:[%s25 + $0x30] sm:$0xf]
    %v3890 = vld [vmem:[%s25 + $0x34] sm:$0xf]
    %v3891 = vld [vmem:[%s25 + $0x38] sm:$0xf]
    %v3892 = vld [vmem:[%s25 + $0x3c] sm:$0xf]
    %v3893 = vld [vmem:[#allocation34] sm:$0xf]
    %v3894 = vld [vmem:[#allocation34 + $0x4] sm:$0xf]
    %v3895 = vld [vmem:[#allocation34 + $0x8] sm:$0xf]
    %v3896 = vld [vmem:[#allocation34 + $0xc] sm:$0xf]
    %v3897 = vld [vmem:[#allocation34 + $0x10] sm:$0xf]
    %v3898 = vld [vmem:[#allocation34 + $0x14] sm:$0xf]
    %v3899 = vld [vmem:[#allocation34 + $0x18] sm:$0xf]
    %v3900 = vld [vmem:[#allocation34 + $0x1c] sm:$0xf]
    %v3901 = vld [vmem:[#allocation34 + $0x20] sm:$0xf]
    %v3902 = vld [vmem:[#allocation34 + $0x24] sm:$0xf]
    %v3903 = vld [vmem:[#allocation34 + $0x28] sm:$0xf]
    %v3904 = vld [vmem:[#allocation34 + $0x2c] sm:$0xf]
    %v3905 = vld [vmem:[#allocation34 + $0x30] sm:$0xf]
    %v3906 = vld [vmem:[#allocation34 + $0x34] sm:$0xf]
    %v3907 = vld [vmem:[#allocation34 + $0x38] sm:$0xf]
    %v3908 = vld [vmem:[#allocation34 + $0x3c] sm:$0xf]
    %v3909 = vpack.c.bf16 %v3876, %v3876
    %v3926 = vunpack.c.l.b16 %v3893
    %v3927 = vunpack.c.l.b16 %v3894
    %v3928 = vunpack.c.l.b16 %v3895
    %v3929 = vunpack.c.l.b16 %v3896
    %v3930 = vunpack.c.l.b16 %v3897
    %v3931 = vunpack.c.l.b16 %v3898
    %v3932 = vunpack.c.l.b16 %v3899
    %v3933 = vunpack.c.l.b16 %v3900
    %v3934 = vunpack.c.l.b16 %v3901
    %v3935 = vunpack.c.l.b16 %v3902
    %v3936 = vunpack.c.l.b16 %v3903
    %v3937 = vunpack.c.l.b16 %v3904
    %v3938 = vunpack.c.l.b16 %v3905
    %v3939 = vunpack.c.l.b16 %v3906
    %v3940 = vunpack.c.l.b16 %v3907
    %v3941 = vunpack.c.l.b16 %v3908
    %v3942 = vpack.c.b16 %v3927, %v3926
    %v3943 = vpack.c.b16 %v3929, %v3928
    %v3944 = vpack.c.b16 %v3931, %v3930
    %v3945 = vpack.c.b16 %v3933, %v3932
    %v3946 = vpack.c.b16 %v3935, %v3934
    %v3947 = vpack.c.b16 %v3937, %v3936
    %v3948 = vpack.c.b16 %v3939, %v3938
    %v3949 = vpack.c.b16 %v3941, %v3940
    %3958 = vmatprep.subr.bf16.mxu0 0
    %3959 = vmatpush1.bf16.msra.mxu0 %v3942
    %3960 = vmatprep.subr.bf16.mxu0 0
    %3961 = vmatpush1.bf16.msra.mxu0 %v3943
    %3962 = vmatprep.subr.bf16.mxu0 0
    %3963 = vmatpush1.bf16.msra.mxu0 %v3944
    %3964 = vmatprep.subr.bf16.mxu0 0
    %3965 = vmatpush1.bf16.msra.mxu0 %v3945
    %3966 = vmatprep.subr.bf16.mxu0 0
    %3967 = vmatpush1.bf16.msra.mxu0 %v3946
    %3968 = vmatprep.subr.bf16.mxu0 0
    %3969 = vmatpush1.bf16.msra.mxu0 %v3947
    %3970 = vmatprep.subr.bf16.mxu0 0
    %3971 = vmatpush1.bf16.msra.mxu0 %v3948
    %3972 = vmatprep.subr.bf16.mxu0 0
    %3973 = vmatpush1.bf16.msra.mxu0 %v3949
    %3974 = vmatprep.subr.bf16.mxu0 0
    %3975 = vmatpush1.bf16.msra.mxu0 0
    %3976 = vmatprep.subr.bf16.mxu0 0
    %3977 = vmatpush1.bf16.msra.mxu0 0
    %3978 = vmatprep.subr.bf16.mxu0 0
    %3979 = vmatpush1.bf16.msra.mxu0 0
    %3980 = vmatprep.subr.bf16.mxu0 0
    %3981 = vmatpush1.bf16.msra.mxu0 0
    %3982 = vmatprep.subr.bf16.mxu0 0
    %3983 = vmatpush1.bf16.msra.mxu0 0
    %3984 = vmatprep.subr.bf16.mxu0 0
    %3985 = vmatpush1.bf16.msra.mxu0 0
    %3986 = vmatprep.subr.bf16.mxu0 0
    %3987 = vmatpush1.bf16.msra.mxu0 0
    %3988 = vmatprep.subr.bf16.mxu0 0
    %3989 = vmatpush1.bf16.msra.mxu0 0
    %3990 = vmatprep.mubr.bf16.mxu0 0
    %3991 = vmatmul.mubr.bf16.gmra.mrb[0].mxu0 %v3909
    %v3992 = vpop.f32.mrb[0].mxu0
    %v3993 = vadd.f32 0.0, %v3992
    %v3994 = vpop.f32.mrb[0].mxu0
    %v3995 = vpop.f32.mrb[0].mxu0
    %v3996 = vpop.f32.mrb[0].mxu0
    %3997 = vdwg.mxu0
    %v4014 = vunpack.c.l.b16 %v3877
    %v4015 = vunpack.c.l.b16 %v3878
    %v4016 = vunpack.c.l.b16 %v3879
    %v4017 = vunpack.c.l.b16 %v3880
    %v4018 = vunpack.c.l.b16 %v3881
    %v4019 = vunpack.c.l.b16 %v3882
    %v4020 = vunpack.c.l.b16 %v3883
    %v4021 = vunpack.c.l.b16 %v3884
    %v4022 = vunpack.c.l.b16 %v3885
    %v4023 = vunpack.c.l.b16 %v3886
    %v4024 = vunpack.c.l.b16 %v3887
    %v4025 = vunpack.c.l.b16 %v3888
    %v4026 = vunpack.c.l.b16 %v3889
    %v4027 = vunpack.c.l.b16 %v3890
    %v4028 = vunpack.c.l.b16 %v3891
    %v4029 = vunpack.c.l.b16 %v3892
    %v4030 = vpack.c.b16 %v4015, %v4014
    %v4031 = vpack.c.b16 %v4017, %v4016
    %v4032 = vpack.c.b16 %v4019, %v4018
    %v4033 = vpack.c.b16 %v4021, %v4020
    %v4034 = vpack.c.b16 %v4023, %v4022
    %v4035 = vpack.c.b16 %v4025, %v4024
    %v4036 = vpack.c.b16 %v4027, %v4026
    %v4037 = vpack.c.b16 %v4029, %v4028
    %4046 = vmatprep.subr.bf16.mxu0 0
    %4047 = vmatpush1.bf16.msra.mxu0 %v4030
    %4048 = vmatprep.subr.bf16.mxu0 0
    %4049 = vmatpush1.bf16.msra.mxu0 %v4031
    %4050 = vmatprep.subr.bf16.mxu0 0
    %4051 = vmatpush1.bf16.msra.mxu0 %v4032
    %4052 = vmatprep.subr.bf16.mxu0 0
    %4053 = vmatpush1.bf16.msra.mxu0 %v4033
    %4054 = vmatprep.subr.bf16.mxu0 0
    %4055 = vmatpush1.bf16.msra.mxu0 %v4034
    %4056 = vmatprep.subr.bf16.mxu0 0
    %4057 = vmatpush1.bf16.msra.mxu0 %v4035
    %4058 = vmatprep.subr.bf16.mxu0 0
    %4059 = vmatpush1.bf16.msra.mxu0 %v4036
    %4060 = vmatprep.subr.bf16.mxu0 0
    %4061 = vmatpush1.bf16.msra.mxu0 %v4037
    %4062 = vmatprep.subr.bf16.mxu0 0
    %4063 = vmatpush1.bf16.msra.mxu0 0
    %4064 = vmatprep.subr.bf16.mxu0 0
    %4065 = vmatpush1.bf16.msra.mxu0 0
    %4066 = vmatprep.subr.bf16.mxu0 0
    %4067 = vmatpush1.bf16.msra.mxu0 0
    %4068 = vmatprep.subr.bf16.mxu0 0
    %4069 = vmatpush1.bf16.msra.mxu0 0
    %4070 = vmatprep.subr.bf16.mxu0 0
    %4071 = vmatpush1.bf16.msra.mxu0 0
    %4072 = vmatprep.subr.bf16.mxu0 0
    %4073 = vmatpush1.bf16.msra.mxu0 0
    %4074 = vmatprep.subr.bf16.mxu0 0
    %4075 = vmatpush1.bf16.msra.mxu0 0
    %4076 = vmatprep.subr.bf16.mxu0 0
    %4077 = vmatpush1.bf16.msra.mxu0 0
    %4078 = vmatprep.mubr.bf16.mxu0 0
    %4079 = vmatmul.mubr.bf16.gmra.mrb[0].mxu0 %v3778
    %v4080 = vpop.f32.mrb[0].mxu0
    %v4081 = vadd.f32 %v3993, %v4080
    %v4082 = vpop.f32.mrb[0].mxu0
    %v4083 = vpop.f32.mrb[0].mxu0
    %v4084 = vpop.f32.mrb[0].mxu0
    %4085 = vdwg.mxu0
    %v4086 = vld [vmem:[%s27] sm:$0x1]
    %v4088 = vlaneseq
    %v4089 = vshrl.u32 %v4088, 7
    %v4090 = vsub.s32 0, %v4089
    %v4091 = vrot.slane %v4086, %v4090
    %v4093 = vadd.f32 %v4081, %v4091
    %v4094 = vmax.f32 %v4093, 0.0
    %4095 = vst [vmem:[#allocation35] sm:$0x3] %v4094
    // Predicated region
    $region198: #{tpu_custom_call.1} parent=1 // pred_check
      _
    $region199: #{tpu_custom_call.1} parent=1 // pred_check_branch
      %4097 = sbr.rel (0) target = $region201
    $region200: #{tpu_custom_call.1} parent=1 // pred_region
      %s4099 = ssub.s32 32, 32
      %4100 = vsyncadd [#allocation4], %s4099
      %s4102 = sshll.u32 [#allocation35], 4
      %s4103 = int_to_ptr.vmem [resolvable:$true] %s4102
      %4105 = dma.vmem_to_hbm [thread:$0]  %s4103, 32, %s28, [#allocation4]
    $region201: #{tpu_custom_call.1} parent=1 // pred_fallthru
      _
    // Predicated region
    $region202: #{tpu_custom_call.1} parent=1 // pred_check
      _
    $region203: #{tpu_custom_call.1} parent=1 // pred_check_branch
      %4107 = sbr.rel (0) target = $region205
    $region204: #{tpu_custom_call.1} parent=1 // pred_region
      %4108 = dma.done [#allocation4], 32
    $region205: #{tpu_custom_call.1} parent=1 // pred_fallthru
      _
    %4109 = vsyncpa [#allocation3], 1
    %4110 = vsyncpa [#allocation6], 1
    %4111 = vsyncpa [#allocation9], 1
    %4112 = vsyncpa [#allocation12], 1
    %4113 = vsyncpa [#allocation15], 1
    %4114 = vsyncpa [#allocation18], 1
    %4115 = vsyncpa [#allocation21], 1
    %4116 = vsyncpa [#allocation24], 1
    %4117 = vsyncpa [#allocation27], 1
    %4118 = vsyncpa [#allocation30], 1
    %4119 = vsyncpa [#allocation33], 1
    %4120 = vsyncpa [#allocation4], 1

// kernel: tpu_custom_call.1
$region0: #{tpu_custom_call.1}
  #allocation0 [shape = 'u32[]', space=smem, size = 0x4, offset = 0x4, fixed_abs, tag = 'smem constant byte address 0x4 - core index']
  #allocation1 [shape = 'u32[144,128]{1,0:T(1,128)}', space=vmem, size = 0x12000, scoped, tag = 'internal scratch']
  %s0 = inlined_call_operand.hbm [shape: bf16[16,128], index: 0, kind: input, shape index: {}]
  %s1 = inlined_call_operand.hbm [shape: bf16[128,128], index: 1, kind: input, shape index: {}]
  %s2 = inlined_call_operand.hbm [shape: f32[1,128], index: 2, kind: input, shape index: {}]
  %s3 = inlined_call_operand.hbm [shape: bf16[32,128], index: 3, kind: input, shape index: {}]
  %s4 = inlined_call_operand.vmem [shape: bf16[128,128], index: 4, kind: input, shape index: {}]
  %s5 = inlined_call_operand.hbm [shape: f32[1,128], index: 5, kind: input, shape index: {}]
  %s6 = inlined_call_operand.hbm [shape: bf16[128,128], index: 6, kind: input, shape index: {}]
  %s7 = inlined_call_operand.hbm [shape: f32[1,128], index: 7, kind: input, shape index: {}]
  %s8 = inlined_call_operand.vmem [shape: f32[32,1], index: 8, kind: input, shape index: {}]
  %s9 = inlined_call_operand.vmem [shape: bf16[32,16], index: 9, kind: input, shape index: {}]
  %s10 = inlined_call_operand.hbm [shape: bf16[16,32], index: 10, kind: input, shape index: {}]
  %s11 = inlined_call_operand.hbm [shape: bf16[128,128], index: 11, kind: input, shape index: {}]
  %s12 = inlined_call_operand.hbm [shape: bf16[128,128], index: 12, kind: input, shape index: {}]
  %s13 = inlined_call_operand.hbm [shape: f32[1,128], index: 13, kind: input, shape index: {}]
  %s14 = inlined_call_operand.hbm [shape: bf16[128,128], index: 14, kind: input, shape index: {}]
  %s15 = inlined_call_operand.hbm [shape: bf16[256,256], index: 15, kind: input, shape index: {}]
  %s16 = inlined_call_operand.hbm [shape: bf16[128,128], index: 16, kind: input, shape index: {}]
  %s17 = inlined_call_operand.hbm [shape: bf16[128,128], index: 17, kind: input, shape index: {}]
  %s18 = inlined_call_operand.hbm [shape: f32[1,256], index: 18, kind: input, shape index: {}]
  %s19 = inlined_call_operand.hbm [shape: f32[1,128], index: 19, kind: input, shape index: {}]
  %s20 = inlined_call_operand.hbm [shape: f32[1,128], index: 20, kind: input, shape index: {}]
  %s21 = inlined_call_operand.vmem [shape: f32[2,16], index: 21, kind: input, shape index: {}]
  %s22 = inlined_call_operand.hbm [shape: bf16[128,512], index: 22, kind: input, shape index: {}]
  %s23 = inlined_call_operand.hbm [shape: bf16[128,512], index: 23, kind: input, shape index: {}]
  %s24 = inlined_call_operand.vmem [shape: f32[1,512], index: 24, kind: input, shape index: {}]
  %s25 = inlined_call_operand.vmem [shape: bf16[128,128], index: 25, kind: input, shape index: {}]
  %s26 = inlined_call_operand.hbm [shape: bf16[128,128], index: 26, kind: input, shape index: {}]
  %s27 = inlined_call_operand.vmem [shape: f32[1,128], index: 27, kind: input, shape index: {}]
  %s28 = inlined_call_operand.hbm [shape: f32[2,128], index: 28, kind: output, shape index: {}]
  %s29 = sld [smem:[#allocation0]]
  $region206: #{tpu_custom_call.1} parent=0
    _
  %s31 = ssub.s32 1, %s29
  %s32 = scalar_select 0, %s31, %s29
  $region1: #{tpu_custom_call.1} parent=0
    #allocation2 [shape = 'u8[4096]{0}', space=vmem, size = 0x1000, scoped, tag = 'input window, operand 0, single buffered']
    #allocation3 [shape = 's32[1]{0}', space=sflag, size = 0x4, scoped, tag = 'scoped memory for tpu_custom_call.1']
    #allocation4 [shape = 's32[1]{0}', space=sflag, size = 0x4, scoped, tag = 'scoped memory for tpu_custom_call.1']
    #allocation5 [shape = 'u8[32768]{0}', space=vmem, size = 0x8000, scoped, tag = 'input window, operand 1, single buffered']
    #allocation6 [shape = 's32[1]{0}', space=sflag, size = 0x4, scoped, tag = 'scoped memory for tpu_custom_call.1']
    #allocation7 [shape = 'u8[512]{0}', space=vmem, size = 0x400, scoped, tag = 'input window, operand 2, single buffered']
    #allocation8 [shape = 'u8[8192]{0}', space=vmem, size = 0x2000, scoped, tag = 'input window, operand 3, single buffered']
    #allocation9 [shape = 's32[1]{0}', space=sflag, size = 0x4, scoped, tag = 'scoped memory for tpu_custom_call.1']
    #allocation10 [shape = 'u8[512]{0}', space=vmem, size = 0x400, scoped, tag = 'input window, operand 5, single buffered']
    #allocation11 [shape = 'u8[32768]{0}', space=vmem, size = 0x8000, scoped, tag = 'input window, operand 6, single buffered']
    #allocation12 [shape = 's32[1]{0}', space=sflag, size = 0x4, scoped, tag = 'scoped memory for tpu_custom_call.1']
    #allocation13 [shape = 'u8[512]{0}', space=vmem, size = 0x400, scoped, tag = 'input window, operand 7, single buffered']
    #allocation14 [shape = 'u8[4096]{0}', space=vmem, size = 0x1000, scoped, tag = 'input window, operand 10, single buffered']
    #allocation15 [shape = 's32[1]{0}', space=sflag, size = 0x4, scoped, tag = 'scoped memory for tpu_custom_call.1']
    #allocation16 [shape = 'u8[32768]{0}', space=vmem, size = 0x8000, scoped, tag = 'input window, operand 11, single buffered']
    #allocation17 [shape = 'u8[32768]{0}', space=vmem, size = 0x8000, scoped, tag = 'input window, operand 12, single buffered']
    #allocation18 [shape = 's32[1]{0}', space=sflag, size = 0x4, scoped, tag = 'scoped memory for tpu_custom_call.1']
    #allocation19 [shape = 'u8[512]{0}', space=vmem, size = 0x400, scoped, tag = 'input window, operand 13, single buffered']
    #allocation20 [shape = 'u8[32768]{0}', space=vmem, size = 0x8000, scoped, tag = 'input window, operand 14, single buffered']
    #allocation21 [shape = 's32[1]{0}', space=sflag, size = 0x4, scoped, tag = 'scoped memory for tpu_custom_call.1']
    #allocation22 [shape = 'u8[131072]{0}', space=vmem, size = 0x20000, scoped, tag = 'input window, operand 15, single buffered']
    #allocation23 [shape = 'u8[32768]{0}', space=vmem, size = 0x8000, scoped, tag = 'input window, operand 16, single buffered']
    #allocation24 [shape = 's32[1]{0}', space=sflag, size = 0x4, scoped, tag = 'scoped memory for tpu_custom_call.1']
    #allocation25 [shape = 'u8[32768]{0}', space=vmem, size = 0x8000, scoped, tag = 'input window, operand 17, single buffered']
    #allocation26 [shape = 'u8[1024]{0}', space=vmem, size = 0x400, scoped, tag = 'input window, operand 18, single buffered']
    #allocation27 [shape = 's32[1]{0}', space=sflag, size = 0x4, scoped, tag = 'scoped memory for tpu_custom_call.1']
    #allocation28 [shape = 'u8[512]{0}', space=vmem, size = 0x400, scoped, tag = 'input window, operand 19, single buffered']
    #allocation29 [shape = 'u8[512]{0}', space=vmem, size = 0x400, scoped, tag = 'input window, operand 20, single buffered']
    #allocation30 [shape = 's32[1]{0}', space=sflag, size = 0x4, scoped, tag = 'scoped memory for tpu_custom_call.1']
    #allocation31 [shape = 'u8[131072]{0}', space=vmem, size = 0x20000, scoped, tag = 'input window, operand 22, single buffered']
    #allocation32 [shape = 'u8[131072]{0}', space=vmem, size = 0x20000, scoped, tag = 'input window, operand 23, single buffered']
    #allocation33 [shape = 's32[1]{0}', space=sflag, size = 0x4, scoped, tag = 'scoped memory for tpu_custom_call.1']
    #allocation34 [shape = 'u8[32768]{0}', space=vmem, size = 0x8000, scoped, tag = 'input window, operand 26, single buffered']
    #allocation35 [shape = 'u8[1024]{0}', space=vmem, size = 0x400, scoped, tag = 'output window, operand 0, single buffered']
    %33 = vsyncpa [#allocation3], 0
    %34 = vsyncpa [#allocation6], 0
    %35 = vsyncpa [#allocation9], 0
    %36 = vsyncpa [#allocation12], 0
    %37 = vsyncpa [#allocation15], 0
    %38 = vsyncpa [#allocation18], 0
    %39 = vsyncpa [#allocation21], 0
    %40 = vsyncpa [#allocation24], 0
    %41 = vsyncpa [#allocation27], 0
    %42 = vsyncpa [#allocation30], 0
    %43 = vsyncpa [#allocation33], 0
    %44 = vsyncpa [#allocation4], 0
    // Predicated region
    $region2: #{tpu_custom_call.1} parent=1 // pred_check
      _
    $region3: #{tpu_custom_call.1} parent=1 // pred_check_branch
      %46 = sbr.rel (0) target = $region5
    $region4: #{tpu_custom_call.1} parent=1 // pred_region
      %s48 = ssub.s32 128, 128
      %49 = vsyncadd [#allocation3], %s48
      %s50 = sshll.u32 [#allocation2], 4
      %s51 = int_to_ptr.vmem [resolvable:$true] %s50
      %56 = dma.hbm_to_vmem [thread:$0]  %s0, 128, %s51, [#allocation3], 64, 64, 4
    $region5: #{tpu_custom_call.1} parent=1 // pred_fallthru
      _
    // Predicated region
    $region6: #{tpu_custom_call.1} parent=1 // pred_check
      _
    $region7: #{tpu_custom_call.1} parent=1 // pred_check_branch
      %58 = sbr.rel (0) target = $region9
    $region8: #{tpu_custom_call.1} parent=1 // pred_region
      %s60 = ssub.s32 1024, 1024
      %61 = vsyncadd [#allocation6], %s60
      %s62 = sshll.u32 [#allocation5], 4
      %s63 = int_to_ptr.vmem [resolvable:$true] %s62
      %68 = dma.hbm_to_vmem [thread:$0]  %s1, 1024, %s63, [#allocation6], 64, 64, 4
    $region9: #{tpu_custom_call.1} parent=1 // pred_fallthru
      _
    // Predicated region
    $region10: #{tpu_custom_call.1} parent=1 // pred_check
      _
    $region11: #{tpu_custom_call.1} parent=1 // pred_check_branch
      %70 = sbr.rel (0) target = $region13
    $region12: #{tpu_custom_call.1} parent=1 // pred_region
      %s72 = ssub.s32 16, 16
      %73 = vsyncadd [#allocation6], %s72
      %s75 = sshll.u32 [#allocation7], 4
      %s76 = int_to_ptr.vmem [resolvable:$true] %s75
      %78 = dma.hbm_to_vmem [thread:$0]  %s2, 16, %s76, [#allocation6]
    $region13: #{tpu_custom_call.1} parent=1 // pred_fallthru
      _
    // Predicated region
    $region14: #{tpu_custom_call.1} parent=1 // pred_check
      _
    $region15: #{tpu_custom_call.1} parent=1 // pred_check_branch
      %80 = sbr.rel (0) target = $region17
    $region16: #{tpu_custom_call.1} parent=1 // pred_region
      %s82 = ssub.s32 256, 256
      %83 = vsyncadd [#allocation9], %s82
      %s84 = sshll.u32 [#allocation8], 4
      %s85 = int_to_ptr.vmem [resolvable:$true] %s84
      %90 = dma.hbm_to_vmem [thread:$0]  %s3, 256, %s85, [#allocation9], 64, 64, 4
    $region17: #{tpu_custom_call.1} parent=1 // pred_fallthru
      _
    // Predicated region
    $region18: #{tpu_custom_call.1} parent=1 // pred_check
      _
    $region19: #{tpu_custom_call.1} parent=1 // pred_check_branch
      %92 = sbr.rel (0) target = $region21
    $region20: #{tpu_custom_call.1} parent=1 // pred_region
      _
    $region21: #{tpu_custom_call.1} parent=1 // pred_fallthru
      _
    // Predicated region
    $region22: #{tpu_custom_call.1} parent=1 // pred_check
      _
    $region23: #{tpu_custom_call.1} parent=1 // pred_check_branch
      %94 = sbr.rel (0) target = $region25
    $region24: #{tpu_custom_call.1} parent=1 // pred_region
      %s96 = ssub.s32 16, 16
      %97 = vsyncadd [#allocation9], %s96
      %s99 = sshll.u32 [#allocation10], 4
      %s100 = int_to_ptr.vmem [resolvable:$true] %s99
      %102 = dma.hbm_to_vmem [thread:$0]  %s5, 16, %s100, [#allocation9]
    $region25: #{tpu_custom_call.1} parent=1 // pred_fallthru
      _
    // Predicated region
    $region26: #{tpu_custom_call.1} parent=1 // pred_check
      _
    $region27: #{tpu_custom_call.1} parent=1 // pred_check_branch
      %104 = sbr.rel (0) target = $region29
    $region28: #{tpu_custom_call.1} parent=1 // pred_region
      %s106 = ssub.s32 1024, 1024
      %107 = vsyncadd [#allocation12], %s106
      %s108 = sshll.u32 [#allocation11], 4
      %s109 = int_to_ptr.vmem [resolvable:$true] %s108
      %114 = dma.hbm_to_vmem [thread:$0]  %s6, 1024, %s109, [#allocation12], 64, 64, 4
    $region29: #{tpu_custom_call.1} parent=1 // pred_fallthru
      _
    // Predicated region
    $region30: #{tpu_custom_call.1} parent=1 // pred_check
      _
    $region31: #{tpu_custom_call.1} parent=1 // pred_check_branch
      %116 = sbr.rel (0) target = $region33
    $region32: #{tpu_custom_call.1} parent=1 // pred_region
      %s118 = ssub.s32 16, 16
      %119 = vsyncadd [#allocation12], %s118
      %s121 = sshll.u32 [#allocation13], 4
      %s122 = int_to_ptr.vmem [resolvable:$true] %s121
      %124 = dma.hbm_to_vmem [thread:$0]  %s7, 16, %s122, [#allocation12]
    $region33: #{tpu_custom_call.1} parent=1 // pred_fallthru
      _
    // Predicated region
    $region34: #{tpu_custom_call.1} parent=1 // pred_check
      _
    $region35: #{tpu_custom_call.1} parent=1 // pred_check_branch
      %126 = sbr.rel (0) target = $region37
    $region36: #{tpu_custom_call.1} parent=1 // pred_region
      _
    $region37: #{tpu_custom_call.1} parent=1 // pred_fallthru
      _
    // Predicated region
    $region38: #{tpu_custom_call.1} parent=1 // pred_check
      _
    $region39: #{tpu_custom_call.1} parent=1 // pred_check_branch
      %128 = sbr.rel (0) target = $region41
    $region40: #{tpu_custom_call.1} parent=1 // pred_region
      _
    $region41: #{tpu_custom_call.1} parent=1 // pred_fallthru
      _
    // Predicated region
    $region42: #{tpu_custom_call.1} parent=1 // pred_check
      _
    $region43: #{tpu_custom_call.1} parent=1 // pred_check_branch
      %130 = sbr.rel (0) target = $region45
    $region44: #{tpu_custom_call.1} parent=1 // pred_region
      %s132 = ssub.s32 128, 128
      %133 = vsyncadd [#allocation15], %s132
      %s134 = sshll.u32 [#allocation14], 4
      %s135 = int_to_ptr.vmem [resolvable:$true] %s134
      %140 = dma.hbm_to_vmem [thread:$0]  %s10, 128, %s135, [#allocation15], 64, 64, 4
    $region45: #{tpu_custom_call.1} parent=1 // pred_fallthru
      _
    // Predicated region
    $region46: #{tpu_custom_call.1} parent=1 // pred_check
      _
    $region47: #{tpu_custom_call.1} parent=1 // pred_check_branch
      %142 = sbr.rel (0) target = $region49
    $region48: #{tpu_custom_call.1} parent=1 // pred_region
      %s144 = ssub.s32 1024, 1024
      %145 = vsyncadd [#allocation15], %s144
      %s146 = sshll.u32 [#allocation16], 4
      %s147 = int_to_ptr.vmem [resolvable:$true] %s146
      %152 = dma.hbm_to_vmem [thread:$0]  %s11, 1024, %s147, [#allocation15], 64, 64, 4
    $region49: #{tpu_custom_call.1} parent=1 // pred_fallthru
      _
    // Predicated region
    $region50: #{tpu_custom_call.1} parent=1 // pred_check
      _
    $region51: #{tpu_custom_call.1} parent=1 // pred_check_branch
      %154 = sbr.rel (0) target = $region53
    $region52: #{tpu_custom_call.1} parent=1 // pred_region
      %s156 = ssub.s32 1024, 1024
      %157 = vsyncadd [#allocation18], %s156
      %s158 = sshll.u32 [#allocation17], 4
      %s159 = int_to_ptr.vmem [resolvable:$true] %s158
      %164 = dma.hbm_to_vmem [thread:$0]  %s12, 1024, %s159, [#allocation18], 64, 64, 4
    $region53: #{tpu_custom_call.1} parent=1 // pred_fallthru
      _
    // Predicated region
    $region54: #{tpu_custom_call.1} parent=1 // pred_check
      _
    $region55: #{tpu_custom_call.1} parent=1 // pred_check_branch
      %166 = sbr.rel (0) target = $region57
    $region56: #{tpu_custom_call.1} parent=1 // pred_region
      %s168 = ssub.s32 16, 16
      %169 = vsyncadd [#allocation18], %s168
      %s171 = sshll.u32 [#allocation19], 4
      %s172 = int_to_ptr.vmem [resolvable:$true] %s171
      %174 = dma.hbm_to_vmem [thread:$0]  %s13, 16, %s172, [#allocation18]
    $region57: #{tpu_custom_call.1} parent=1 // pred_fallthru
      _
    // Predicated region
    $region58: #{tpu_custom_call.1} parent=1 // pred_check
      _
    $region59: #{tpu_custom_call.1} parent=1 // pred_check_branch
      %176 = sbr.rel (0) target = $region61
    $region60: #{tpu_custom_call.1} parent=1 // pred_region
      %s178 = ssub.s32 1024, 1024
      %179 = vsyncadd [#allocation21], %s178
      %s180 = sshll.u32 [#allocation20], 4
      %s181 = int_to_ptr.vmem [resolvable:$true] %s180
      %186 = dma.hbm_to_vmem [thread:$0]  %s14, 1024, %s181, [#allocation21], 64, 64, 4
    $region61: #{tpu_custom_call.1} parent=1 // pred_fallthru
      _
    // Predicated region
    $region62: #{tpu_custom_call.1} parent=1 // pred_check
      _
    $region63: #{tpu_custom_call.1} parent=1 // pred_check_branch
      %188 = sbr.rel (0) target = $region65
    $region64: #{tpu_custom_call.1} parent=1 // pred_region
      %s190 = ssub.s32 4096, 4096
      %191 = vsyncadd [#allocation21], %s190
      %s192 = sshll.u32 [#allocation22], 4
      %s193 = int_to_ptr.vmem [resolvable:$true] %s192
      %198 = dma.hbm_to_vmem [thread:$0]  %s15, 4096, %s193, [#allocation21], 128, 128, 8
    $region65: #{tpu_custom_call.1} parent=1 // pred_fallthru
      _
    // Predicated region
    $region66: #{tpu_custom_call.1} parent=1 // pred_check
      _
    $region67: #{tpu_custom_call.1} parent=1 // pred_check_branch
      %200 = sbr.rel (0) target = $region69
    $region68: #{tpu_custom_call.1} parent=1 // pred_region
      %s202 = ssub.s32 1024, 1024
      %203 = vsyncadd [#allocation24], %s202
      %s204 = sshll.u32 [#allocation23], 4
      %s205 = int_to_ptr.vmem [resolvable:$true] %s204
      %210 = dma.hbm_to_vmem [thread:$0]  %s16, 1024, %s205, [#allocation24], 64, 64, 4
    $region69: #{tpu_custom_call.1} parent=1 // pred_fallthru
      _
    // Predicated region
    $region70: #{tpu_custom_call.1} parent=1 // pred_check
      _
    $region71: #{tpu_custom_call.1} parent=1 // pred_check_branch
      %212 = sbr.rel (0) target = $region73
    $region72: #{tpu_custom_call.1} parent=1 // pred_region
      %s214 = ssub.s32 1024, 1024
      %215 = vsyncadd [#allocation24], %s214
      %s216 = sshll.u32 [#allocation25], 4
      %s217 = int_to_ptr.vmem [resolvable:$true] %s216
      %222 = dma.hbm_to_vmem [thread:$0]  %s17, 1024, %s217, [#allocation24], 64, 64, 4
    $region73: #{tpu_custom_call.1} parent=1 // pred_fallthru
      _
    // Predicated region
    $region74: #{tpu_custom_call.1} parent=1 // pred_check
      _
    $region75: #{tpu_custom_call.1} parent=1 // pred_check_branch
      %224 = sbr.rel (0) target = $region77
    $region76: #{tpu_custom_call.1} parent=1 // pred_region
      %s226 = ssub.s32 32, 32
      %227 = vsyncadd [#allocation27], %s226
      %s229 = sshll.u32 [#allocation26], 4
      %s230 = int_to_ptr.vmem [resolvable:$true] %s229
      %232 = dma.hbm_to_vmem [thread:$0]  %s18, 32, %s230, [#allocation27]
    $region77: #{tpu_custom_call.1} parent=1 // pred_fallthru
      _
    // Predicated region
    $region78: #{tpu_custom_call.1} parent=1 // pred_check
      _
    $region79: #{tpu_custom_call.1} parent=1 // pred_check_branch
      %234 = sbr.rel (0) target = $region81
    $region80: #{tpu_custom_call.1} parent=1 // pred_region
      %s236 = ssub.s32 16, 16
      %237 = vsyncadd [#allocation27], %s236
      %s239 = sshll.u32 [#allocation28], 4
      %s240 = int_to_ptr.vmem [resolvable:$true] %s239
      %242 = dma.hbm_to_vmem [thread:$0]  %s19, 16, %s240, [#allocation27]
    $region81: #{tpu_custom_call.1} parent=1 // pred_fallthru
      _
    // Predicated region
    $region82: #{tpu_custom_call.1} parent=1 // pred_check
      _
    $region83: #{tpu_custom_call.1} parent=1 // pred_check_branch
      %244 = sbr.rel (0) target = $region85
    $region84: #{tpu_custom_call.1} parent=1 // pred_region
      %s246 = ssub.s32 16, 16
      %247 = vsyncadd [#allocation30], %s246
      %s249 = sshll.u32 [#allocation29], 4
      %s250 = int_to_ptr.vmem [resolvable:$true] %s249
      %252 = dma.hbm_to_vmem [thread:$0]  %s20, 16, %s250, [#allocation30]
    $region85: #{tpu_custom_call.1} parent=1 // pred_fallthru
      _
    // Predicated region
    $region86: #{tpu_custom_call.1} parent=1 // pred_check
      _
    $region87: #{tpu_custom_call.1} parent=1 // pred_check_branch
      %254 = sbr.rel (0) target = $region89
    $region88: #{tpu_custom_call.1} parent=1 // pred_region
      _
    $region89: #{tpu_custom_call.1} parent=1 // pred_fallthru
      _
    // Predicated region
    $region90: #{tpu_custom_call.1} parent=1 // pred_check
      _
    $region91: #{tpu_custom_call.1} parent=1 // pred_check_branch
      %256 = sbr.rel (0) target = $region93
    $region92: #{tpu_custom_call.1} parent=1 // pred_region
      %s258 = ssub.s32 4096, 4096
      %259 = vsyncadd [#allocation30], %s258
      %s260 = sshll.u32 [#allocation31], 4
      %s261 = int_to_ptr.vmem [resolvable:$true] %s260
      %266 = dma.hbm_to_vmem [thread:$0]  %s22, 4096, %s261, [#allocation30], 256, 256, 16
    $region93: #{tpu_custom_call.1} parent=1 // pred_fallthru
      _
    // Predicated region
    $region94: #{tpu_custom_call.1} parent=1 // pred_check
      _
    $region95: #{tpu_custom_call.1} parent=1 // pred_check_branch
      %268 = sbr.rel (0) target = $region97
    $region96: #{tpu_custom_call.1} parent=1 // pred_region
      %s270 = ssub.s32 4096, 4096
      %271 = vsyncadd [#allocation33], %s270
      %s272 = sshll.u32 [#allocation32], 4
      %s273 = int_to_ptr.vmem [resolvable:$true] %s272
      %278 = dma.hbm_to_vmem [thread:$0]  %s23, 4096, %s273, [#allocation33], 256, 256, 16
    $region97: #{tpu_custom_call.1} parent=1 // pred_fallthru
      _
    // Predicated region
    $region98: #{tpu_custom_call.1} parent=1 // pred_check
      _
    $region99: #{tpu_custom_call.1} parent=1 // pred_check_branch
      %280 = sbr.rel (0) target = $region101
    $region100: #{tpu_custom_call.1} parent=1 // pred_region
      _
    $region101: #{tpu_custom_call.1} parent=1 // pred_fallthru
      _
    // Predicated region
    $region102: #{tpu_custom_call.1} parent=1 // pred_check
      _
    $region103: #{tpu_custom_call.1} parent=1 // pred_check_branch
      %282 = sbr.rel (0) target = $region105
    $region104: #{tpu_custom_call.1} parent=1 // pred_region
      _
    $region105: #{tpu_custom_call.1} parent=1 // pred_fallthru
      _
    // Predicated region
    $region106: #{tpu_custom_call.1} parent=1 // pred_check
      _
    $region107: #{tpu_custom_call.1} parent=1 // pred_check_branch
      %284 = sbr.rel (0) target = $region109
    $region108: #{tpu_custom_call.1} parent=1 // pred_region
      %s286 = ssub.s32 1024, 1024
      %287 = vsyncadd [#allocation33], %s286
      %s288 = sshll.u32 [#allocation34], 4
      %s289 = int_to_ptr.vmem [resolvable:$true] %s288
      %294 = dma.hbm_to_vmem [thread:$0]  %s26, 1024, %s289, [#allocation33], 64, 64, 4
    $region109: #{tpu_custom_call.1} parent=1 // pred_fallthru
      _
    // Predicated region
    $region110: #{tpu_custom_call.1} parent=1 // pred_check
      _
    $region111: #{tpu_custom_call.1} parent=1 // pred_check_branch
      %296 = sbr.rel (0) target = $region113
    $region112: #{tpu_custom_call.1} parent=1 // pred_region
      _
    $region113: #{tpu_custom_call.1} parent=1 // pred_fallthru
      _
    // Predicated region
    $region114: #{tpu_custom_call.1} parent=1 // pred_check
      _
    $region115: #{tpu_custom_call.1} parent=1 // pred_check_branch
      %298 = sbr.rel (0) target = $region117
    $region116: #{tpu_custom_call.1} parent=1 // pred_region
      %299 = dma.done [#allocation3], 128
    $region117: #{tpu_custom_call.1} parent=1 // pred_fallthru
      _
    // Predicated region
    $region118: #{tpu_custom_call.1} parent=1 // pred_check
      _
    $region119: #{tpu_custom_call.1} parent=1 // pred_check_branch
      %301 = sbr.rel (0) target = $region121
    $region120: #{tpu_custom_call.1} parent=1 // pred_region
      %302 = dma.done [#allocation6], 1024
    $region121: #{tpu_custom_call.1} parent=1 // pred_fallthru
      _
    // Predicated region
    $region122: #{tpu_custom_call.1} parent=1 // pred_check
      _
    $region123: #{tpu_custom_call.1} parent=1 // pred_check_branch
      %304 = sbr.rel (0) target = $region125
    $region124: #{tpu_custom_call.1} parent=1 // pred_region
      %305 = dma.done [#allocation6], 16
    $region125: #{tpu_custom_call.1} parent=1 // pred_fallthru
      _
    // Predicated region
    $region126: #{tpu_custom_call.1} parent=1 // pred_check
      _
    $region127: #{tpu_custom_call.1} parent=1 // pred_check_branch
      %307 = sbr.rel (0) target = $region129
    $region128: #{tpu_custom_call.1} parent=1 // pred_region
      %308 = dma.done [#allocation9], 256
    $region129: #{tpu_custom_call.1} parent=1 // pred_fallthru
      _
    // Predicated region
    $region130: #{tpu_custom_call.1} parent=1 // pred_check
      _
    $region131: #{tpu_custom_call.1} parent=1 // pred_check_branch
      %310 = sbr.rel (0) target = $region133
    $region132: #{tpu_custom_call.1} parent=1 // pred_region
      %311 = dma.done [#allocation9], 16
    $region133: #{tpu_custom_call.1} parent=1 // pred_fallthru
      _
    // Predicated region
    $region134: #{tpu_custom_call.1} parent=1 // pred_check
      _
    $region135: #{tpu_custom_call.1} parent=1 // pred_check_branch
      %313 = sbr.rel (0) target = $region137
    $region136: #{tpu_custom_call.1} parent=1 // pred_region
      %314 = dma.done [#allocation12], 1024
    $region137: #{tpu_custom_call.1} parent=1 // pred_fallthru
      _
    // Predicated region
    $region138: #{tpu_custom_call.1} parent=1 // pred_check
      _
    $region139: #{tpu_custom_call.1} parent=1 // pred_check_branch
      %316 = sbr.rel (0) target = $region141
    $region140: #{tpu_custom_call.1} parent=1 // pred_region
      %317 = dma.done [#allocation12], 16
    $region141: #{tpu_custom_call.1} parent=1 // pred_fallthru
      _
    // Predicated region
    $region142: #{tpu_custom_call.1} parent=1 // pred_check
      _
    $region143: #{tpu_custom_call.1} parent=1 // pred_check_branch
      %319 = sbr.rel (0) target = $region145
    $region144: #{tpu_custom_call.1} parent=1 // pred_region
      %320 = dma.done [#allocation15], 128
    $region145: #{tpu_custom_call.1} parent=1 // pred_fallthru
      _
    // Predicated region
    $region146: #{tpu_custom_call.1} parent=1 // pred_check
      _
    $region147: #{tpu_custom_call.1} parent=1 // pred_check_branch
      %322 = sbr.rel (0) target = $region149
    $region148: #{tpu_custom_call.1} parent=1 // pred_region
      %323 = dma.done [#allocation15], 1024
    $region149: #{tpu_custom_call.1} parent=1 // pred_fallthru
      _
    // Predicated region
    $region150: #{tpu_custom_call.1} parent=1 // pred_check
      _
    $region151: #{tpu_custom_call.1} parent=1 // pred_check_branch
      %325 = sbr.rel (0) target = $region153
    $region152: #{tpu_custom_call.1} parent=1 // pred_region
      %326 = dma.done [#allocation18], 1024
    $region153: #{tpu_custom_call.1} parent=1 // pred_fallthru
      _
    // Predicated region
    $region154: #{tpu_custom_call.1} parent=1 // pred_check
      _
    $region155: #{tpu_custom_call.1} parent=1 // pred_check_branch
      %328 = sbr.rel (0) target = $region157
    $region156: #{tpu_custom_call.1} parent=1 // pred_region
      %329 = dma.done [#allocation18], 16
    $region157: #{tpu_custom_call.1} parent=1 // pred_fallthru
      _
    // Predicated region
    $region158: #{tpu_custom_call.1} parent=1 // pred_check
      _
    $region159: #{tpu_custom_call.1} parent=1 // pred_check_branch
      %331 = sbr.rel (0) target = $region161
    $region160: #{tpu_custom_call.1} parent=1 // pred_region
      %332 = dma.done [#allocation21], 1024
    $region161: #{tpu_custom_call.1} parent=1 // pred_fallthru
      _
    // Predicated region
    $region162: #{tpu_custom_call.1} parent=1 // pred_check
      _
    $region163: #{tpu_custom_call.1} parent=1 // pred_check_branch
      %334 = sbr.rel (0) target = $region165
    $region164: #{tpu_custom_call.1} parent=1 // pred_region
      %335 = dma.done [#allocation21], 4096
    $region165: #{tpu_custom_call.1} parent=1 // pred_fallthru
      _
    // Predicated region
    $region166: #{tpu_custom_call.1} parent=1 // pred_check
      _
    $region167: #{tpu_custom_call.1} parent=1 // pred_check_branch
      %337 = sbr.rel (0) target = $region169
    $region168: #{tpu_custom_call.1} parent=1 // pred_region
      %338 = dma.done [#allocation24], 1024
    $region169: #{tpu_custom_call.1} parent=1 // pred_fallthru
      _
    // Predicated region
    $region170: #{tpu_custom_call.1} parent=1 // pred_check
      _
    $region171: #{tpu_custom_call.1} parent=1 // pred_check_branch
      %340 = sbr.rel (0) target = $region173
    $region172: #{tpu_custom_call.1} parent=1 // pred_region
      %341 = dma.done [#allocation24], 1024
    $region173: #{tpu_custom_call.1} parent=1 // pred_fallthru
      _
    // Predicated region
    $region174: #{tpu_custom_call.1} parent=1 // pred_check
      _
    $region175: #{tpu_custom_call.1} parent=1 // pred_check_branch
      %343 = sbr.rel (0) target = $region177
    $region176: #{tpu_custom_call.1} parent=1 // pred_region
      %344 = dma.done [#allocation27], 32
    $region177: #{tpu_custom_call.1} parent=1 // pred_fallthru
      _
    // Predicated region
    $region178: #{tpu_custom_call.1} parent=1 // pred_check
      _
    $region179: #{tpu_custom_call.1} parent=1 // pred_check_branch
      %346 = sbr.rel (0) target = $region181
    $region180: #{tpu_custom_call.1} parent=1 // pred_region
      %347 = dma.done [#allocation27], 16
    $region181: #{tpu_custom_call.1} parent=1 // pred_fallthru
      _
    // Predicated region
    $region182: #{tpu_custom_call.1} parent=1 // pred_check
      _
    $region183: #{tpu_custom_call.1} parent=1 // pred_check_branch
      %349 = sbr.rel (0) target = $region185
    $region184: #{tpu_custom_call.1} parent=1 // pred_region
      %350 = dma.done [#allocation30], 16
    $region185: #{tpu_custom_call.1} parent=1 // pred_fallthru
      _
    // Predicated region
    $region186: #{tpu_custom_call.1} parent=1 // pred_check
      _
    $region187: #{tpu_custom_call.1} parent=1 // pred_check_branch
      %352 = sbr.rel (0) target = $region189
    $region188: #{tpu_custom_call.1} parent=1 // pred_region
      %353 = dma.done [#allocation30], 4096
    $region189: #{tpu_custom_call.1} parent=1 // pred_fallthru
      _
    // Predicated region
    $region190: #{tpu_custom_call.1} parent=1 // pred_check
      _
    $region191: #{tpu_custom_call.1} parent=1 // pred_check_branch
      %355 = sbr.rel (0) target = $region193
    $region192: #{tpu_custom_call.1} parent=1 // pred_region
      %356 = dma.done [#allocation33], 4096
    $region193: #{tpu_custom_call.1} parent=1 // pred_fallthru
      _
    // Predicated region
    $region194: #{tpu_custom_call.1} parent=1 // pred_check
      _
    $region195: #{tpu_custom_call.1} parent=1 // pred_check_branch
      %358 = sbr.rel (0) target = $region197
    $region196: #{tpu_custom_call.1} parent=1 // pred_region
      %359 = dma.done [#allocation33], 1024
    $region197: #{tpu_custom_call.1} parent=1 // pred_fallthru
      _
    %v361 = vld [vmem:[#allocation2] sm:$0xf]
    %v362 = vld [vmem:[#allocation2 + $0x4] sm:$0xf]
    %v363 = vld [vmem:[#allocation5] sm:$0xf]
    %v364 = vld [vmem:[#allocation5 + $0x4] sm:$0xf]
    %v365 = vld [vmem:[#allocation5 + $0x8] sm:$0xf]
    %v366 = vld [vmem:[#allocation5 + $0xc] sm:$0xf]
    %v367 = vld [vmem:[#allocation5 + $0x10] sm:$0xf]
    %v368 = vld [vmem:[#allocation5 + $0x14] sm:$0xf]
    %v369 = vld [vmem:[#allocation5 + $0x18] sm:$0xf]
    %v370 = vld [vmem:[#allocation5 + $0x1c] sm:$0xf]
    %v371 = vld [vmem:[#allocation5 + $0x20] sm:$0xf]
    %v372 = vld [vmem:[#allocation5 + $0x24] sm:$0xf]
    %v373 = vld [vmem:[#allocation5 + $0x28] sm:$0xf]
    %v374 = vld [vmem:[#allocation5 + $0x2c] sm:$0xf]
    %v375 = vld [vmem:[#allocation5 + $0x30] sm:$0xf]
    %v376 = vld [vmem:[#allocation5 + $0x34] sm:$0xf]
    %v377 = vld [vmem:[#allocation5 + $0x38] sm:$0xf]
    %v378 = vld [vmem:[#allocation5 + $0x3c] sm:$0xf]
    %v379 = vld [vmem:[#allocation7] sm:$0x1]
    %v381 = vlaneseq
    %v382 = vshrl.u32 %v381, 7
    %v383 = vsub.s32 0, %v382
    %v384 = vrot.slane %v379, %v383
    %v388 = vunpack.c.l.b16 %v361
    %v389 = vunpack.c.l.b16 %v362
    %v390 = vpack.c.b16 %v389, %v388
    %v408 = vunpack.c.l.b16 %v363
    %v409 = vunpack.c.l.b16 %v364
    %v410 = vunpack.c.l.b16 %v365
    %v411 = vunpack.c.l.b16 %v366
    %v412 = vunpack.c.l.b16 %v367
    %v413 = vunpack.c.l.b16 %v368
    %v414 = vunpack.c.l.b16 %v369
    %v415 = vunpack.c.l.b16 %v370
    %v416 = vunpack.c.l.b16 %v371
    %v417 = vunpack.c.l.b16 %v372
    %v418 = vunpack.c.l.b16 %v373
    %v419 = vunpack.c.l.b16 %v374
    %v420 = vunpack.c.l.b16 %v375
    %v421 = vunpack.c.l.b16 %v376
    %v422 = vunpack.c.l.b16 %v377
    %v423 = vunpack.c.l.b16 %v378
    %v424 = vpack.c.b16 %v409, %v408
    %v425 = vpack.c.b16 %v411, %v410
    %v426 = vpack.c.b16 %v413, %v412
    %v427 = vpack.c.b16 %v415, %v414
    %v428 = vpack.c.b16 %v417, %v416
    %v429 = vpack.c.b16 %v419, %v418
    %v430 = vpack.c.b16 %v421, %v420
    %v431 = vpack.c.b16 %v423, %v422
    %440 = vmatprep.subr.bf16.mxu0 0
    %441 = vmatpush1.bf16.msra.mxu0 %v424
    %442 = vmatprep.subr.bf16.mxu0 0
    %443 = vmatpush1.bf16.msra.mxu0 %v425
    %444 = vmatprep.subr.bf16.mxu0 0
    %445 = vmatpush1.bf16.msra.mxu0 %v426
    %446 = vmatprep.subr.bf16.mxu0 0
    %447 = vmatpush1.bf16.msra.mxu0 %v427
    %448 = vmatprep.subr.bf16.mxu0 0
    %449 = vmatpush1.bf16.msra.mxu0 %v428
    %450 = vmatprep.subr.bf16.mxu0 0
    %451 = vmatpush1.bf16.msra.mxu0 %v429
    %452 = vmatprep.subr.bf16.mxu0 0
    %453 = vmatpush1.bf16.msra.mxu0 %v430
    %454 = vmatprep.subr.bf16.mxu0 0
    %455 = vmatpush1.bf16.msra.mxu0 %v431
    %456 = vmatprep.subr.bf16.mxu0 0
    %457 = vmatpush1.bf16.msra.mxu0 0
    %458 = vmatprep.subr.bf16.mxu0 0
    %459 = vmatpush1.bf16.msra.mxu0 0
    %460 = vmatprep.subr.bf16.mxu0 0
    %461 = vmatpush1.bf16.msra.mxu0 0
    %462 = vmatprep.subr.bf16.mxu0 0
    %463 = vmatpush1.bf16.msra.mxu0 0
    %464 = vmatprep.subr.bf16.mxu0 0
    %465 = vmatpush1.bf16.msra.mxu0 0
    %466 = vmatprep.subr.bf16.mxu0 0
    %467 = vmatpush1.bf16.msra.mxu0 0
    %468 = vmatprep.subr.bf16.mxu0 0
    %469 = vmatpush1.bf16.msra.mxu0 0
    %470 = vmatprep.subr.bf16.mxu0 0
    %471 = vmatpush1.bf16.msra.mxu0 0
    %472 = vmatprep.mubr.bf16.mxu0 0
    %473 = vmatmul.mubr.bf16.gmra.mrb[0].mxu0 %v390
    %v474 = vpop.f32.mrb[0].mxu0
    %v475 = vadd.f32 %v384, %v474
    %v476 = vpop.f32.mrb[0].mxu0
    %v477 = vpop.f32.mrb[0].mxu0
    %v478 = vadd.f32 %v384, %v477
    %v479 = vpop.f32.mrb[0].mxu0
    %480 = vdwg.mxu0
    %v481 = vmax.f32 %v475, 0.0
    %v482 = vmax.f32 %v478, 0.0
    %v483 = vld [vmem:[#allocation8] sm:$0xf]
    %v484 = vld [vmem:[#allocation8 + $0x4] sm:$0xf]
    %v485 = vld [vmem:[#allocation8 + $0x8] sm:$0xf]
    %v486 = vld [vmem:[#allocation8 + $0xc] sm:$0xf]
    %v487 = vld [vmem:[%s4] sm:$0xf]
    %v488 = vld [vmem:[%s4 + $0x4] sm:$0xf]
    %v489 = vld [vmem:[%s4 + $0x8] sm:$0xf]
    %v490 = vld [vmem:[%s4 + $0xc] sm:$0xf]
    %v491 = vld [vmem:[%s4 + $0x10] sm:$0xf]
    %v492 = vld [vmem:[%s4 + $0x14] sm:$0xf]
    %v493 = vld [vmem:[%s4 + $0x18] sm:$0xf]
    %v494 = vld [vmem:[%s4 + $0x1c] sm:$0xf]
    %v495 = vld [vmem:[%s4 + $0x20] sm:$0xf]
    %v496 = vld [vmem:[%s4 + $0x24] sm:$0xf]
    %v497 = vld [vmem:[%s4 + $0x28] sm:$0xf]
    %v498 = vld [vmem:[%s4 + $0x2c] sm:$0xf]
    %v499 = vld [vmem:[%s4 + $0x30] sm:$0xf]
    %v500 = vld [vmem:[%s4 + $0x34] sm:$0xf]
    %v501 = vld [vmem:[%s4 + $0x38] sm:$0xf]
    %v502 = vld [vmem:[%s4 + $0x3c] sm:$0xf]
    %v503 = vld [vmem:[#allocation10] sm:$0x1]
    %v505 = vlaneseq
    %v506 = vshrl.u32 %v505, 7
    %v507 = vsub.s32 0, %v506
    %v508 = vrot.slane %v503, %v507
    %v514 = vunpack.c.l.b16 %v483
    %v515 = vunpack.c.l.b16 %v484
    %v516 = vunpack.c.l.b16 %v485
    %v517 = vunpack.c.l.b16 %v486
    %v518 = vpack.c.b16 %v515, %v514
    %v519 = vpack.c.b16 %v517, %v516
    %v538 = vunpack.c.l.b16 %v487
    %v539 = vunpack.c.l.b16 %v488
    %v540 = vunpack.c.l.b16 %v489
    %v541 = vunpack.c.l.b16 %v490
    %v542 = vunpack.c.l.b16 %v491
    %v543 = vunpack.c.l.b16 %v492
    %v544 = vunpack.c.l.b16 %v493
    %v545 = vunpack.c.l.b16 %v494
    %v546 = vunpack.c.l.b16 %v495
    %v547 = vunpack.c.l.b16 %v496
    %v548 = vunpack.c.l.b16 %v497
    %v549 = vunpack.c.l.b16 %v498
    %v550 = vunpack.c.l.b16 %v499
    %v551 = vunpack.c.l.b16 %v500
    %v552 = vunpack.c.l.b16 %v501
    %v553 = vunpack.c.l.b16 %v502
    %v554 = vpack.c.b16 %v539, %v538
    %v555 = vpack.c.b16 %v541, %v540
    %v556 = vpack.c.b16 %v543, %v542
    %v557 = vpack.c.b16 %v545, %v544
    %v558 = vpack.c.b16 %v547, %v546
    %v559 = vpack.c.b16 %v549, %v548
    %v560 = vpack.c.b16 %v551, %v550
    %v561 = vpack.c.b16 %v553, %v552
    %570 = vmatprep.subr.bf16.mxu0 0
    %571 = vmatpush1.bf16.msra.mxu0 %v554
    %572 = vmatprep.subr.bf16.mxu0 0
    %573 = vmatpush1.bf16.msra.mxu0 %v555
    %574 = vmatprep.subr.bf16.mxu0 0
    %575 = vmatpush1.bf16.msra.mxu0 %v556
    %576 = vmatprep.subr.bf16.mxu0 0
    %577 = vmatpush1.bf16.msra.mxu0 %v557
    %578 = vmatprep.subr.bf16.mxu0 0
    %579 = vmatpush1.bf16.msra.mxu0 %v558
    %580 = vmatprep.subr.bf16.mxu0 0
    %581 = vmatpush1.bf16.msra.mxu0 %v559
    %582 = vmatprep.subr.bf16.mxu0 0
    %583 = vmatpush1.bf16.msra.mxu0 %v560
    %584 = vmatprep.subr.bf16.mxu0 0
    %585 = vmatpush1.bf16.msra.mxu0 %v561
    %586 = vmatprep.subr.bf16.mxu0 0
    %587 = vmatpush1.bf16.msra.mxu0 0
    %588 = vmatprep.subr.bf16.mxu0 0
    %589 = vmatpush1.bf16.msra.mxu0 0
    %590 = vmatprep.subr.bf16.mxu0 0
    %591 = vmatpush1.bf16.msra.mxu0 0
    %592 = vmatprep.subr.bf16.mxu0 0
    %593 = vmatpush1.bf16.msra.mxu0 0
    %594 = vmatprep.subr.bf16.mxu0 0
    %595 = vmatpush1.bf16.msra.mxu0 0
    %596 = vmatprep.subr.bf16.mxu0 0
    %597 = vmatpush1.bf16.msra.mxu0 0
    %598 = vmatprep.subr.bf16.mxu0 0
    %599 = vmatpush1.bf16.msra.mxu0 0
    %600 = vmatprep.subr.bf16.mxu0 0
    %601 = vmatpush1.bf16.msra.mxu0 0
    %602 = vmatprep.mubr.bf16.mxu0 0
    %603 = vmatmul.mubr.bf16.gmra.mrb[0].mxu0 %v518
    %v604 = vpop.f32.mrb[0].mxu0
    %v605 = vadd.f32 %v508, %v604
    %v606 = vpop.f32.mrb[0].mxu0
    %v607 = vpop.f32.mrb[0].mxu0
    %v608 = vadd.f32 %v508, %v607
    %v609 = vpop.f32.mrb[0].mxu0
    %610 = vmatprep.mubr.bf16.mxu0 0
    %611 = vmatmul.mubr.bf16.gmra.mrb[0].mxu0 %v519
    %v612 = vpop.f32.mrb[0].mxu0
    %v613 = vadd.f32 %v508, %v612
    %v614 = vpop.f32.mrb[0].mxu0
    %v615 = vpop.f32.mrb[0].mxu0
    %v616 = vadd.f32 %v508, %v615
    %v617 = vpop.f32.mrb[0].mxu0
    %618 = vdwg.mxu0
    %v619 = vmax.f32 %v605, 0.0
    %v620 = vmax.f32 %v608, 0.0
    %v621 = vmax.f32 %v613, 0.0
    %v622 = vmax.f32 %v616, 0.0
    %v623 = vld [vmem:[#allocation11] sm:$0xf]
    %v624 = vld [vmem:[#allocation11 + $0x4] sm:$0xf]
    %v625 = vld [vmem:[#allocation11 + $0x8] sm:$0xf]
    %v626 = vld [vmem:[#allocation11 + $0xc] sm:$0xf]
    %v627 = vld [vmem:[#allocation11 + $0x10] sm:$0xf]
    %v628 = vld [vmem:[#allocation11 + $0x14] sm:$0xf]
    %v629 = vld [vmem:[#allocation11 + $0x18] sm:$0xf]
    %v630 = vld [vmem:[#allocation11 + $0x1c] sm:$0xf]
    %v631 = vld [vmem:[#allocation11 + $0x20] sm:$0xf]
    %v632 = vld [vmem:[#allocation11 + $0x24] sm:$0xf]
    %v633 = vld [vmem:[#allocation11 + $0x28] sm:$0xf]
    %v634 = vld [vmem:[#allocation11 + $0x2c] sm:$0xf]
    %v635 = vld [vmem:[#allocation11 + $0x30] sm:$0xf]
    %v636 = vld [vmem:[#allocation11 + $0x34] sm:$0xf]
    %v637 = vld [vmem:[#allocation11 + $0x38] sm:$0xf]
    %v638 = vld [vmem:[#allocation11 + $0x3c] sm:$0xf]
    %v639 = vpack.c.bf16 %v620, %v619
    %v640 = vpack.c.bf16 %v622, %v621
    %v641 = vld [vmem:[#allocation13] sm:$0x1]
    %v643 = vlaneseq
    %v644 = vshrl.u32 %v643, 7
    %v645 = vsub.s32 0, %v644
    %v646 = vrot.slane %v641, %v645
    %v664 = vunpack.c.l.b16 %v623
    %v665 = vunpack.c.l.b16 %v624
    %v666 = vunpack.c.l.b16 %v625
    %v667 = vunpack.c.l.b16 %v626
    %v668 = vunpack.c.l.b16 %v627
    %v669 = vunpack.c.l.b16 %v628
    %v670 = vunpack.c.l.b16 %v629
    %v671 = vunpack.c.l.b16 %v630
    %v672 = vunpack.c.l.b16 %v631
    %v673 = vunpack.c.l.b16 %v632
    %v674 = vunpack.c.l.b16 %v633
    %v675 = vunpack.c.l.b16 %v634
    %v676 = vunpack.c.l.b16 %v635
    %v677 = vunpack.c.l.b16 %v636
    %v678 = vunpack.c.l.b16 %v637
    %v679 = vunpack.c.l.b16 %v638
    %v680 = vpack.c.b16 %v665, %v664
    %v681 = vpack.c.b16 %v667, %v666
    %v682 = vpack.c.b16 %v669, %v668
    %v683 = vpack.c.b16 %v671, %v670
    %v684 = vpack.c.b16 %v673, %v672
    %v685 = vpack.c.b16 %v675, %v674
    %v686 = vpack.c.b16 %v677, %v676
    %v687 = vpack.c.b16 %v679, %v678
    %696 = vmatprep.subr.bf16.mxu0 0
    %697 = vmatpush1.bf16.msra.mxu0 %v680
    %698 = vmatprep.subr.bf16.mxu0 0
    %699 = vmatpush1.bf16.msra.mxu0 %v681
    %700 = vmatprep.subr.bf16.mxu0 0
    %701 = vmatpush1.bf16.msra.mxu0 %v682
    %702 = vmatprep.subr.bf16.mxu0 0
    %703 = vmatpush1.bf16.msra.mxu0 %v683
    %704 = vmatprep.subr.bf16.mxu0 0
    %705 = vmatpush1.bf16.msra.mxu0 %v684
    %706 = vmatprep.subr.bf16.mxu0 0
    %707 = vmatpush1.bf16.msra.mxu0 %v685
    %708 = vmatprep.subr.bf16.mxu0 0
    %709 = vmatpush1.bf16.msra.mxu0 %v686
    %710 = vmatprep.subr.bf16.mxu0 0
    %711 = vmatpush1.bf16.msra.mxu0 %v687
    %712 = vmatprep.subr.bf16.mxu0 0
    %713 = vmatpush1.bf16.msra.mxu0 0
    %714 = vmatprep.subr.bf16.mxu0 0
    %715 = vmatpush1.bf16.msra.mxu0 0
    %716 = vmatprep.subr.bf16.mxu0 0
    %717 = vmatpush1.bf16.msra.mxu0 0
    %718 = vmatprep.subr.bf16.mxu0 0
    %719 = vmatpush1.bf16.msra.mxu0 0
    %720 = vmatprep.subr.bf16.mxu0 0
    %721 = vmatpush1.bf16.msra.mxu0 0
    %722 = vmatprep.subr.bf16.mxu0 0
    %723 = vmatpush1.bf16.msra.mxu0 0
    %724 = vmatprep.subr.bf16.mxu0 0
    %725 = vmatpush1.bf16.msra.mxu0 0
    %726 = vmatprep.subr.bf16.mxu0 0
    %727 = vmatpush1.bf16.msra.mxu0 0
    %728 = vmatprep.mubr.bf16.mxu0 0
    %729 = vmatmul.mubr.bf16.gmra.mrb[0].mxu0 %v639
    %v730 = vpop.f32.mrb[0].mxu0
    %v731 = vadd.f32 %v646, %v730
    %v732 = vpop.f32.mrb[0].mxu0
    %v733 = vpop.f32.mrb[0].mxu0
    %v734 = vadd.f32 %v646, %v733
    %v735 = vpop.f32.mrb[0].mxu0
    %736 = vmatprep.mubr.bf16.mxu0 0
    %737 = vmatmul.mubr.bf16.gmra.mrb[0].mxu0 %v640
    %v738 = vpop.f32.mrb[0].mxu0
    %v739 = vadd.f32 %v646, %v738
    %v740 = vpop.f32.mrb[0].mxu0
    %v741 = vpop.f32.mrb[0].mxu0
    %v742 = vadd.f32 %v646, %v741
    %v743 = vpop.f32.mrb[0].mxu0
    %744 = vdwg.mxu0
    %v745 = vld [vmem:[%s8] sm:$0xff]
    %v746 = vld [vmem:[%s8 + $0x8] sm:$0xff]
    %v747 = vld [vmem:[%s8 + $0x10] sm:$0xff]
    %v748 = vld [vmem:[%s8 + $0x18] sm:$0xff]
    %750 = vset.pattern.permute.xlu0 0
    %751 = vperm.xlu0 %750, %v745
    %v752 = vpop.permute.xlu0 %751
    %755 = vset.pattern.permute.xlu0 0
    %756 = vperm.xlu0 %755, %v746
    %v757 = vpop.permute.xlu0 %756
    %760 = vset.pattern.permute.xlu0 0
    %761 = vperm.xlu0 %760, %v747
    %v762 = vpop.permute.xlu0 %761
    %765 = vset.pattern.permute.xlu0 0
    %766 = vperm.xlu0 %765, %v748
    %v767 = vpop.permute.xlu0 %766
    %v769 = vmul.f32 %v731, %v752
    %v770 = vmul.f32 %v734, %v757
    %v771 = vmul.f32 %v739, %v762
    %v772 = vmul.f32 %v742, %v767
    %v773 = vld [vmem:[%s9] sm:$0xf]
    %v774 = vld [vmem:[%s9 + $0x4] sm:$0xf]
    %v775 = vld [vmem:[%s9 + $0x8] sm:$0xf]
    %v776 = vld [vmem:[%s9 + $0xc] sm:$0xf]
    %v777 = vld [vmem:[#allocation14] sm:$0xf]
    %v778 = vld [vmem:[#allocation14 + $0x4] sm:$0xf]
    %v779 = vld [vmem:[#allocation16] sm:$0xf]
    %v780 = vld [vmem:[#allocation16 + $0x4] sm:$0xf]
    %v781 = vld [vmem:[#allocation16 + $0x8] sm:$0xf]
    %v782 = vld [vmem:[#allocation16 + $0xc] sm:$0xf]
    %v783 = vld [vmem:[#allocation16 + $0x10] sm:$0xf]
    %v784 = vld [vmem:[#allocation16 + $0x14] sm:$0xf]
    %v785 = vld [vmem:[#allocation16 + $0x18] sm:$0xf]
    %v786 = vld [vmem:[#allocation16 + $0x1c] sm:$0xf]
    %v787 = vld [vmem:[#allocation16 + $0x20] sm:$0xf]
    %v788 = vld [vmem:[#allocation16 + $0x24] sm:$0xf]
    %v789 = vld [vmem:[#allocation16 + $0x28] sm:$0xf]
    %v790 = vld [vmem:[#allocation16 + $0x2c] sm:$0xf]
    %v791 = vld [vmem:[#allocation16 + $0x30] sm:$0xf]
    %v792 = vld [vmem:[#allocation16 + $0x34] sm:$0xf]
    %v793 = vld [vmem:[#allocation16 + $0x38] sm:$0xf]
    %v794 = vld [vmem:[#allocation16 + $0x3c] sm:$0xf]
    %v795 = vld [vmem:[#allocation17] sm:$0xf]
    %v796 = vld [vmem:[#allocation17 + $0x4] sm:$0xf]
    %v797 = vld [vmem:[#allocation17 + $0x8] sm:$0xf]
    %v798 = vld [vmem:[#allocation17 + $0xc] sm:$0xf]
    %v799 = vld [vmem:[#allocation17 + $0x10] sm:$0xf]
    %v800 = vld [vmem:[#allocation17 + $0x14] sm:$0xf]
    %v801 = vld [vmem:[#allocation17 + $0x18] sm:$0xf]
    %v802 = vld [vmem:[#allocation17 + $0x1c] sm:$0xf]
    %v803 = vld [vmem:[#allocation17 + $0x20] sm:$0xf]
    %v804 = vld [vmem:[#allocation17 + $0x24] sm:$0xf]
    %v805 = vld [vmem:[#allocation17 + $0x28] sm:$0xf]
    %v806 = vld [vmem:[#allocation17 + $0x2c] sm:$0xf]
    %v807 = vld [vmem:[#allocation17 + $0x30] sm:$0xf]
    %v808 = vld [vmem:[#allocation17 + $0x34] sm:$0xf]
    %v809 = vld [vmem:[#allocation17 + $0x38] sm:$0xf]
    %v810 = vld [vmem:[#allocation17 + $0x3c] sm:$0xf]
    %v811 = vld [vmem:[#allocation20] sm:$0xf]
    %v812 = vld [vmem:[#allocation20 + $0x4] sm:$0xf]
    %v813 = vld [vmem:[#allocation20 + $0x8] sm:$0xf]
    %v814 = vld [vmem:[#allocation20 + $0xc] sm:$0xf]
    %v815 = vld [vmem:[#allocation20 + $0x10] sm:$0xf]
    %v816 = vld [vmem:[#allocation20 + $0x14] sm:$0xf]
    %v817 = vld [vmem:[#allocation20 + $0x18] sm:$0xf]
    %v818 = vld [vmem:[#allocation20 + $0x1c] sm:$0xf]
    %v819 = vld [vmem:[#allocation20 + $0x20] sm:$0xf]
    %v820 = vld [vmem:[#allocation20 + $0x24] sm:$0xf]
    %v821 = vld [vmem:[#allocation20 + $0x28] sm:$0xf]
    %v822 = vld [vmem:[#allocation20 + $0x2c] sm:$0xf]
    %v823 = vld [vmem:[#allocation20 + $0x30] sm:$0xf]
    %v824 = vld [vmem:[#allocation20 + $0x34] sm:$0xf]
    %v825 = vld [vmem:[#allocation20 + $0x38] sm:$0xf]
    %v826 = vld [vmem:[#allocation20 + $0x3c] sm:$0xf]
    %v827 = vld [vmem:[#allocation19] sm:$0x1]
    %v829 = vlaneseq
    %v830 = vshrl.u32 %v829, 7
    %v831 = vsub.s32 0, %v830
    %v832 = vrot.slane %v827, %v831
    %v834 = vld [vmem:[#allocation22] sm:$0xff]
    %v835 = vld [vmem:[#allocation22 + $0x8] sm:$0xff]
    %v836 = vld [vmem:[#allocation22 + $0x10] sm:$0xff]
    %v837 = vld [vmem:[#allocation22 + $0x18] sm:$0xff]
    %v838 = vld [vmem:[#allocation22 + $0x20] sm:$0xff]
    %v839 = vld [vmem:[#allocation22 + $0x28] sm:$0xff]
    %v840 = vld [vmem:[#allocation22 + $0x30] sm:$0xff]
    %v841 = vld [vmem:[#allocation22 + $0x38] sm:$0xff]
    %v842 = vld [vmem:[#allocation22 + $0x40] sm:$0xff]
    %v843 = vld [vmem:[#allocation22 + $0x48] sm:$0xff]
    %v844 = vld [vmem:[#allocation22 + $0x50] sm:$0xff]
    %v845 = vld [vmem:[#allocation22 + $0x58] sm:$0xff]
    %v846 = vld [vmem:[#allocation22 + $0x60] sm:$0xff]
    %v847 = vld [vmem:[#allocation22 + $0x68] sm:$0xff]
    %v848 = vld [vmem:[#allocation22 + $0x70] sm:$0xff]
    %v849 = vld [vmem:[#allocation22 + $0x78] sm:$0xff]
    %v850 = vld [vmem:[#allocation22 + $0x80] sm:$0xff]
    %v851 = vld [vmem:[#allocation22 + $0x88] sm:$0xff]
    %v852 = vld [vmem:[#allocation22 + $0x90] sm:$0xff]
    %v853 = vld [vmem:[#allocation22 + $0x98] sm:$0xff]
    %v854 = vld [vmem:[#allocation22 + $0xa0] sm:$0xff]
    %v855 = vld [vmem:[#allocation22 + $0xa8] sm:$0xff]
    %v856 = vld [vmem:[#allocation22 + $0xb0] sm:$0xff]
    %v857 = vld [vmem:[#allocation22 + $0xb8] sm:$0xff]
    %v858 = vld [vmem:[#allocation22 + $0xc0] sm:$0xff]
    %v859 = vld [vmem:[#allocation22 + $0xc8] sm:$0xff]
    %v860 = vld [vmem:[#allocation22 + $0xd0] sm:$0xff]
    %v861 = vld [vmem:[#allocation22 + $0xd8] sm:$0xff]
    %v862 = vld [vmem:[#allocation22 + $0xe0] sm:$0xff]
    %v863 = vld [vmem:[#allocation22 + $0xe8] sm:$0xff]
    %v864 = vld [vmem:[#allocation22 + $0xf0] sm:$0xff]
    %v865 = vld [vmem:[#allocation22 + $0xf8] sm:$0xff]
    %v866 = vld [vmem:[#allocation23] sm:$0xf]
    %v867 = vld [vmem:[#allocation23 + $0x4] sm:$0xf]
    %v868 = vld [vmem:[#allocation23 + $0x8] sm:$0xf]
    %v869 = vld [vmem:[#allocation23 + $0xc] sm:$0xf]
    %v870 = vld [vmem:[#allocation23 + $0x10] sm:$0xf]
    %v871 = vld [vmem:[#allocation23 + $0x14] sm:$0xf]
    %v872 = vld [vmem:[#allocation23 + $0x18] sm:$0xf]
    %v873 = vld [vmem:[#allocation23 + $0x1c] sm:$0xf]
    %v874 = vld [vmem:[#allocation23 + $0x20] sm:$0xf]
    %v875 = vld [vmem:[#allocation23 + $0x24] sm:$0xf]
    %v876 = vld [vmem:[#allocation23 + $0x28] sm:$0xf]
    %v877 = vld [vmem:[#allocation23 + $0x2c] sm:$0xf]
    %v878 = vld [vmem:[#allocation23 + $0x30] sm:$0xf]
    %v879 = vld [vmem:[#allocation23 + $0x34] sm:$0xf]
    %v880 = vld [vmem:[#allocation23 + $0x38] sm:$0xf]
    %v881 = vld [vmem:[#allocation23 + $0x3c] sm:$0xf]
    %v882 = vld [vmem:[#allocation25] sm:$0xf]
    %v883 = vld [vmem:[#allocation25 + $0x4] sm:$0xf]
    %v884 = vld [vmem:[#allocation25 + $0x8] sm:$0xf]
    %v885 = vld [vmem:[#allocation25 + $0xc] sm:$0xf]
    %v886 = vld [vmem:[#allocation25 + $0x10] sm:$0xf]
    %v887 = vld [vmem:[#allocation25 + $0x14] sm:$0xf]
    %v888 = vld [vmem:[#allocation25 + $0x18] sm:$0xf]
    %v889 = vld [vmem:[#allocation25 + $0x1c] sm:$0xf]
    %v890 = vld [vmem:[#allocation25 + $0x20] sm:$0xf]
    %v891 = vld [vmem:[#allocation25 + $0x24] sm:$0xf]
    %v892 = vld [vmem:[#allocation25 + $0x28] sm:$0xf]
    %v893 = vld [vmem:[#allocation25 + $0x2c] sm:$0xf]
    %v894 = vld [vmem:[#allocation25 + $0x30] sm:$0xf]
    %v895 = vld [vmem:[#allocation25 + $0x34] sm:$0xf]
    %v896 = vld [vmem:[#allocation25 + $0x38] sm:$0xf]
    %v897 = vld [vmem:[#allocation25 + $0x3c] sm:$0xf]
    %v898 = vld [vmem:[#allocation26] sm:$0x3]
    %v900 = vlaneseq
    %v901 = vshrl.u32 %v900, 7
    %v902 = vsub.s32 0, %v901
    %v903 = vrot.slane %v898, %v902
    %v904 = vlaneseq
    %v905 = vshrl.u32 %v904, 7
    %v906 = vsub.s32 1, %v905
    %v907 = vrot.slane %v898, %v906
    %v910 = vld [vmem:[#allocation28] sm:$0x1]
    %v912 = vlaneseq
    %v913 = vshrl.u32 %v912, 7
    %v914 = vsub.s32 0, %v913
    %v915 = vrot.slane %v910, %v914
    %v917 = vld [vmem:[#allocation29] sm:$0x1]
    %v919 = vlaneseq
    %v920 = vshrl.u32 %v919, 7
    %v921 = vsub.s32 0, %v920
    %v922 = vrot.slane %v917, %v921
    %v924 = vpack.c.bf16 %v482, %v481
    %v941 = vunpack.c.l.b16 %v779
    %v942 = vunpack.c.l.b16 %v780
    %v943 = vunpack.c.l.b16 %v781
    %v944 = vunpack.c.l.b16 %v782
    %v945 = vunpack.c.l.b16 %v783
    %v946 = vunpack.c.l.b16 %v784
    %v947 = vunpack.c.l.b16 %v785
    %v948 = vunpack.c.l.b16 %v786
    %v949 = vunpack.c.l.b16 %v787
    %v950 = vunpack.c.l.b16 %v788
    %v951 = vunpack.c.l.b16 %v789
    %v952 = vunpack.c.l.b16 %v790
    %v953 = vunpack.c.l.b16 %v791
    %v954 = vunpack.c.l.b16 %v792
    %v955 = vunpack.c.l.b16 %v793
    %v956 = vunpack.c.l.b16 %v794
    %v957 = vpack.c.b16 %v942, %v941
    %v958 = vpack.c.b16 %v944, %v943
    %v959 = vpack.c.b16 %v946, %v945
    %v960 = vpack.c.b16 %v948, %v947
    %v961 = vpack.c.b16 %v950, %v949
    %v962 = vpack.c.b16 %v952, %v951
    %v963 = vpack.c.b16 %v954, %v953
    %v964 = vpack.c.b16 %v956, %v955
    %973 = vmatprep.subr.bf16.mxu0 0
    %974 = vmatpush1.bf16.msra.mxu0 %v957
    %975 = vmatprep.subr.bf16.mxu0 0
    %976 = vmatpush1.bf16.msra.mxu0 %v958
    %977 = vmatprep.subr.bf16.mxu0 0
    %978 = vmatpush1.bf16.msra.mxu0 %v959
    %979 = vmatprep.subr.bf16.mxu0 0
    %980 = vmatpush1.bf16.msra.mxu0 %v960
    %981 = vmatprep.subr.bf16.mxu0 0
    %982 = vmatpush1.bf16.msra.mxu0 %v961
    %983 = vmatprep.subr.bf16.mxu0 0
    %984 = vmatpush1.bf16.msra.mxu0 %v962
    %985 = vmatprep.subr.bf16.mxu0 0
    %986 = vmatpush1.bf16.msra.mxu0 %v963
    %987 = vmatprep.subr.bf16.mxu0 0
    %988 = vmatpush1.bf16.msra.mxu0 %v964
    %989 = vmatprep.subr.bf16.mxu0 0
    %990 = vmatpush1.bf16.msra.mxu0 0
    %991 = vmatprep.subr.bf16.mxu0 0
    %992 = vmatpush1.bf16.msra.mxu0 0
    %993 = vmatprep.subr.bf16.mxu0 0
    %994 = vmatpush1.bf16.msra.mxu0 0
    %995 = vmatprep.subr.bf16.mxu0 0
    %996 = vmatpush1.bf16.msra.mxu0 0
    %997 = vmatprep.subr.bf16.mxu0 0
    %998 = vmatpush1.bf16.msra.mxu0 0
    %999 = vmatprep.subr.bf16.mxu0 0
    %1000 = vmatpush1.bf16.msra.mxu0 0
    %1001 = vmatprep.subr.bf16.mxu0 0
    %1002 = vmatpush1.bf16.msra.mxu0 0
    %1003 = vmatprep.subr.bf16.mxu0 0
    %1004 = vmatpush1.bf16.msra.mxu0 0
    %1005 = vmatprep.mubr.bf16.mxu0 0
    %1006 = vmatmul.mubr.bf16.gmra.mrb[0].mxu0 %v924
    %v1007 = vpop.f32.mrb[0].mxu0
    %v1008 = vadd.f32 0.0, %v1007
    %v1009 = vpop.f32.mrb[0].mxu0
    %v1010 = vpop.f32.mrb[0].mxu0
    %v1011 = vadd.f32 0.0, %v1010
    %v1012 = vpop.f32.mrb[0].mxu0
    %1013 = vdwg.mxu0
    %v1014 = vpack.c.bf16 %v1011, %v1008
    %v1019 = vunpack.c.l.b16 %v773
    %v1020 = vunpack.c.l.b16 %v774
    %v1021 = vunpack.c.l.b16 %v775
    %v1022 = vunpack.c.l.b16 %v776
    %v1023 = vpack.c.b16 %v1020, %v1019
    %v1024 = vpack.c.b16 %v1022, %v1021
    %vm1025 = vcmask 130048
    %v1027 = vsel %vm1025, %v1023, 0
    %v1030 = vsel %vm1025, %v1024, 0
    %1032 = vmatprep.subr.bf16.mxu0 0
    %1033 = vmatpush1.bf16.msra.mxu0 %v1014
    %1034 = vmatprep.subr.bf16.mxu0 0
    %1035 = vmatpush1.bf16.msra.mxu0 0
    %1036 = vmatprep.subr.bf16.mxu0 0
    %1037 = vmatpush1.bf16.msra.mxu0 0
    %1038 = vmatprep.subr.bf16.mxu0 0
    %1039 = vmatpush1.bf16.msra.mxu0 0
    %1040 = vmatprep.subr.bf16.mxu0 0
    %1041 = vmatpush1.bf16.msra.mxu0 0
    %1042 = vmatprep.subr.bf16.mxu0 0
    %1043 = vmatpush1.bf16.msra.mxu0 0
    %1044 = vmatprep.subr.bf16.mxu0 0
    %1045 = vmatpush1.bf16.msra.mxu0 0
    %1046 = vmatprep.subr.bf16.mxu0 0
    %1047 = vmatpush1.bf16.msra.mxu0 0
    %1048 = vmatprep.subr.bf16.mxu0 0
    %1049 = vmatpush1.bf16.msra.mxu0 0
    %1050 = vmatprep.subr.bf16.mxu0 0
    %1051 = vmatpush1.bf16.msra.mxu0 0
    %1052 = vmatprep.subr.bf16.mxu0 0
    %1053 = vmatpush1.bf16.msra.mxu0 0
    %1054 = vmatprep.subr.bf16.mxu0 0
    %1055 = vmatpush1.bf16.msra.mxu0 0
    %1056 = vmatprep.subr.bf16.mxu0 0
    %1057 = vmatpush1.bf16.msra.mxu0 0
    %1058 = vmatprep.subr.bf16.mxu0 0
    %1059 = vmatpush1.bf16.msra.mxu0 0
    %1060 = vmatprep.subr.bf16.mxu0 0
    %1061 = vmatpush1.bf16.msra.mxu0 0
    %1062 = vmatprep.subr.bf16.mxu0 0
    %1063 = vmatpush1.bf16.msra.mxu0 0
    %1064 = vmatprep.mubr.bf16.mxu0 0
    %1065 = vmatmul.mubr.bf16.gmra.mrb[0].mxu0 %v1027
    %v1066 = vpop.f32.mrb[0].mxu0
    %v1067 = vadd.f32 0.0, %v1066
    %v1068 = vpop.f32.mrb[0].mxu0
    %v1069 = vpop.f32.mrb[0].mxu0
    %v1070 = vadd.f32 0.0, %v1069
    %v1071 = vpop.f32.mrb[0].mxu0
    %1072 = vmatprep.mubr.bf16.mxu0 0
    %1073 = vmatmul.mubr.bf16.gmra.mrb[0].mxu0 %v1030
    %v1074 = vpop.f32.mrb[0].mxu0
    %v1075 = vadd.f32 0.0, %v1074
    %v1076 = vpop.f32.mrb[0].mxu0
    %v1077 = vpop.f32.mrb[0].mxu0
    %v1078 = vadd.f32 0.0, %v1077
    %v1079 = vpop.f32.mrb[0].mxu0
    %1080 = vdwg.mxu0
    %v1081 = vmul.f32 %v1067, %v769
    %v1082 = vmul.f32 %v1070, %v770
    %v1083 = vmul.f32 %v1075, %v771
    %v1084 = vmul.f32 %v1078, %v772
    %v1085 = vpack.c.bf16 %v1082, %v1081
    %v1086 = vpack.c.bf16 %v1084, %v1083
    %v1089 = vunpack.c.l.b16 %v777
    %v1090 = vunpack.c.l.b16 %v778
    %v1091 = vpack.c.b16 %v1090, %v1089
    %vm1092 = vcmask 261120
    %v1094 = vsel %vm1092, %v1091, 0
    %1096 = vmatprep.subr.bf16.mxu0 0
    %1097 = vmatpush1.bf16.msra.mxu0 %v1085
    %1098 = vmatprep.subr.bf16.mxu0 0
    %1099 = vmatpush1.bf16.msra.mxu0 %v1086
    %1100 = vmatprep.subr.bf16.mxu0 0
    %1101 = vmatpush1.bf16.msra.mxu0 0
    %1102 = vmatprep.subr.bf16.mxu0 0
    %1103 = vmatpush1.bf16.msra.mxu0 0
    %1104 = vmatprep.subr.bf16.mxu0 0
    %1105 = vmatpush1.bf16.msra.mxu0 0
    %1106 = vmatprep.subr.bf16.mxu0 0
    %1107 = vmatpush1.bf16.msra.mxu0 0
    %1108 = vmatprep.subr.bf16.mxu0 0
    %1109 = vmatpush1.bf16.msra.mxu0 0
    %1110 = vmatprep.subr.bf16.mxu0 0
    %1111 = vmatpush1.bf16.msra.mxu0 0
    %1112 = vmatprep.subr.bf16.mxu0 0
    %1113 = vmatpush1.bf16.msra.mxu0 0
    %1114 = vmatprep.subr.bf16.mxu0 0
    %1115 = vmatpush1.bf16.msra.mxu0 0
    %1116 = vmatprep.subr.bf16.mxu0 0
    %1117 = vmatpush1.bf16.msra.mxu0 0
    %1118 = vmatprep.subr.bf16.mxu0 0
    %1119 = vmatpush1.bf16.msra.mxu0 0
    %1120 = vmatprep.subr.bf16.mxu0 0
    %1121 = vmatpush1.bf16.msra.mxu0 0
    %1122 = vmatprep.subr.bf16.mxu0 0
    %1123 = vmatpush1.bf16.msra.mxu0 0
    %1124 = vmatprep.subr.bf16.mxu0 0
    %1125 = vmatpush1.bf16.msra.mxu0 0
    %1126 = vmatprep.subr.bf16.mxu0 0
    %1127 = vmatpush1.bf16.msra.mxu0 0
    %1128 = vmatprep.mubr.bf16.mxu0 0
    %1129 = vmatmul.mubr.bf16.gmra.mrb[0].mxu0 %v1094
    %v1130 = vpop.f32.mrb[0].mxu0
    %v1131 = vadd.f32 0.0, %v1130
    %v1132 = vpop.f32.mrb[0].mxu0
    %v1133 = vpop.f32.mrb[0].mxu0
    %v1134 = vadd.f32 0.0, %v1133
    %v1135 = vpop.f32.mrb[0].mxu0
    %1136 = vdwg.mxu0
    %v1137 = vpack.c.bf16 %v1134, %v1131
    %v1154 = vunpack.c.l.b16 %v795
    %v1155 = vunpack.c.l.b16 %v796
    %v1156 = vunpack.c.l.b16 %v797
    %v1157 = vunpack.c.l.b16 %v798
    %v1158 = vunpack.c.l.b16 %v799
    %v1159 = vunpack.c.l.b16 %v800
    %v1160 = vunpack.c.l.b16 %v801
    %v1161 = vunpack.c.l.b16 %v802
    %v1162 = vunpack.c.l.b16 %v803
    %v1163 = vunpack.c.l.b16 %v804
    %v1164 = vunpack.c.l.b16 %v805
    %v1165 = vunpack.c.l.b16 %v806
    %v1166 = vunpack.c.l.b16 %v807
    %v1167 = vunpack.c.l.b16 %v808
    %v1168 = vunpack.c.l.b16 %v809
    %v1169 = vunpack.c.l.b16 %v810
    %v1170 = vpack.c.b16 %v1155, %v1154
    %v1171 = vpack.c.b16 %v1157, %v1156
    %v1172 = vpack.c.b16 %v1159, %v1158
    %v1173 = vpack.c.b16 %v1161, %v1160
    %v1174 = vpack.c.b16 %v1163, %v1162
    %v1175 = vpack.c.b16 %v1165, %v1164
    %v1176 = vpack.c.b16 %v1167, %v1166
    %v1177 = vpack.c.b16 %v1169, %v1168
    %1186 = vmatprep.subr.bf16.mxu0 0
    %1187 = vmatpush1.bf16.msra.mxu0 %v1170
    %1188 = vmatprep.subr.bf16.mxu0 0
    %1189 = vmatpush1.bf16.msra.mxu0 %v1171
    %1190 = vmatprep.subr.bf16.mxu0 0
    %1191 = vmatpush1.bf16.msra.mxu0 %v1172
    %1192 = vmatprep.subr.bf16.mxu0 0
    %1193 = vmatpush1.bf16.msra.mxu0 %v1173
    %1194 = vmatprep.subr.bf16.mxu0 0
    %1195 = vmatpush1.bf16.msra.mxu0 %v1174
    %1196 = vmatprep.subr.bf16.mxu0 0
    %1197 = vmatpush1.bf16.msra.mxu0 %v1175
    %1198 = vmatprep.subr.bf16.mxu0 0
    %1199 = vmatpush1.bf16.msra.mxu0 %v1176
    %1200 = vmatprep.subr.bf16.mxu0 0
    %1201 = vmatpush1.bf16.msra.mxu0 %v1177
    %1202 = vmatprep.subr.bf16.mxu0 0
    %1203 = vmatpush1.bf16.msra.mxu0 0
    %1204 = vmatprep.subr.bf16.mxu0 0
    %1205 = vmatpush1.bf16.msra.mxu0 0
    %1206 = vmatprep.subr.bf16.mxu0 0
    %1207 = vmatpush1.bf16.msra.mxu0 0
    %1208 = vmatprep.subr.bf16.mxu0 0
    %1209 = vmatpush1.bf16.msra.mxu0 0
    %1210 = vmatprep.subr.bf16.mxu0 0
    %1211 = vmatpush1.bf16.msra.mxu0 0
    %1212 = vmatprep.subr.bf16.mxu0 0
    %1213 = vmatpush1.bf16.msra.mxu0 0
    %1214 = vmatprep.subr.bf16.mxu0 0
    %1215 = vmatpush1.bf16.msra.mxu0 0
    %1216 = vmatprep.subr.bf16.mxu0 0
    %1217 = vmatpush1.bf16.msra.mxu0 0
    %1218 = vmatprep.mubr.bf16.mxu0 0
    %1219 = vmatmul.mubr.bf16.gmra.mrb[0].mxu0 %v1137
    %v1220 = vpop.f32.mrb[0].mxu0
    %v1221 = vadd.f32 %v832, %v1220
    %v1222 = vpop.f32.mrb[0].mxu0
    %v1223 = vpop.f32.mrb[0].mxu0
    %v1224 = vadd.f32 %v832, %v1223
    %v1225 = vpop.f32.mrb[0].mxu0
    %1226 = vdwg.mxu0
    %v1227 = vmax.f32 %v1221, 0.0
    %v1228 = vmax.f32 %v1224, 0.0
    %v1229 = vand.u32 2147483647, %v1221
    %v1230 = vand.u32 2147483647, %v1224
    %v1231 = vsub.f32 0.0, %v1229
    %v1232 = vsub.f32 0.0, %v1230
    %v1233 = vmul.f32 %v1231, 1.442695
    %v1234 = vpow.pop %v1233
    %v1235 = vmul.f32 %v1232, 1.442695
    %v1236 = vpow.pop %v1235
    %v1237 = vadd.f32 %v1234, 1.0
    %v1238 = vlog2.pop %v1237
    %v1239 = vmul.f32 %v1238, 0.6931472
    %v1240 = vmul.f32 -0.5, %v1234
    %v1241 = vadd.f32 %v1240, 1.0
    %v1242 = vmul.f32 %v1241, %v1234
    %v1243 = vand.u32 2147483647, %v1234
    %vm1244 = vcmp.lt.f32.partialorder %v1243, 0.0004427343
    %v1245 = vsel %vm1244, %v1242, %v1239
    %v1246 = vadd.f32 %v1236, 1.0
    %v1247 = vlog2.pop %v1246
    %v1248 = vmul.f32 %v1247, 0.6931472
    %v1249 = vmul.f32 -0.5, %v1236
    %v1250 = vadd.f32 %v1249, 1.0
    %v1251 = vmul.f32 %v1250, %v1236
    %v1252 = vand.u32 2147483647, %v1236
    %vm1253 = vcmp.lt.f32.partialorder %v1252, 0.0004427343
    %v1254 = vsel %vm1253, %v1251, %v1248
    %v1255 = vadd.f32 %v1227, %v1245
    %v1256 = vadd.f32 %v1228, %v1254
    %v1257 = vsub.f32 %v1255, 0.6931472
    %v1258 = vsub.f32 %v1256, 0.6931472
    %v1259 = vpack.c.bf16 %v1258, %v1257
    %v1276 = vunpack.c.l.b16 %v811
    %v1277 = vunpack.c.l.b16 %v812
    %v1278 = vunpack.c.l.b16 %v813
    %v1279 = vunpack.c.l.b16 %v814
    %v1280 = vunpack.c.l.b16 %v815
    %v1281 = vunpack.c.l.b16 %v816
    %v1282 = vunpack.c.l.b16 %v817
    %v1283 = vunpack.c.l.b16 %v818
    %v1284 = vunpack.c.l.b16 %v819
    %v1285 = vunpack.c.l.b16 %v820
    %v1286 = vunpack.c.l.b16 %v821
    %v1287 = vunpack.c.l.b16 %v822
    %v1288 = vunpack.c.l.b16 %v823
    %v1289 = vunpack.c.l.b16 %v824
    %v1290 = vunpack.c.l.b16 %v825
    %v1291 = vunpack.c.l.b16 %v826
    %v1292 = vpack.c.b16 %v1277, %v1276
    %v1293 = vpack.c.b16 %v1279, %v1278
    %v1294 = vpack.c.b16 %v1281, %v1280
    %v1295 = vpack.c.b16 %v1283, %v1282
    %v1296 = vpack.c.b16 %v1285, %v1284
    %v1297 = vpack.c.b16 %v1287, %v1286
    %v1298 = vpack.c.b16 %v1289, %v1288
    %v1299 = vpack.c.b16 %v1291, %v1290
    %1308 = vmatprep.subr.bf16.mxu0 0
    %1309 = vmatpush1.bf16.msra.mxu0 %v1292
    %1310 = vmatprep.subr.bf16.mxu0 0
    %1311 = vmatpush1.bf16.msra.mxu0 %v1293
    %1312 = vmatprep.subr.bf16.mxu0 0
    %1313 = vmatpush1.bf16.msra.mxu0 %v1294
    %1314 = vmatprep.subr.bf16.mxu0 0
    %1315 = vmatpush1.bf16.msra.mxu0 %v1295
    %1316 = vmatprep.subr.bf16.mxu0 0
    %1317 = vmatpush1.bf16.msra.mxu0 %v1296
    %1318 = vmatprep.subr.bf16.mxu0 0
    %1319 = vmatpush1.bf16.msra.mxu0 %v1297
    %1320 = vmatprep.subr.bf16.mxu0 0
    %1321 = vmatpush1.bf16.msra.mxu0 %v1298
    %1322 = vmatprep.subr.bf16.mxu0 0
    %1323 = vmatpush1.bf16.msra.mxu0 %v1299
    %1324 = vmatprep.subr.bf16.mxu0 0
    %1325 = vmatpush1.bf16.msra.mxu0 0
    %1326 = vmatprep.subr.bf16.mxu0 0
    %1327 = vmatpush1.bf16.msra.mxu0 0
    %1328 = vmatprep.subr.bf16.mxu0 0
    %1329 = vmatpush1.bf16.msra.mxu0 0
    %1330 = vmatprep.subr.bf16.mxu0 0
    %1331 = vmatpush1.bf16.msra.mxu0 0
    %1332 = vmatprep.subr.bf16.mxu0 0
    %1333 = vmatpush1.bf16.msra.mxu0 0
    %1334 = vmatprep.subr.bf16.mxu0 0
    %1335 = vmatpush1.bf16.msra.mxu0 0
    %1336 = vmatprep.subr.bf16.mxu0 0
    %1337 = vmatpush1.bf16.msra.mxu0 0
    %1338 = vmatprep.subr.bf16.mxu0 0
    %1339 = vmatpush1.bf16.msra.mxu0 0
    %1340 = vmatprep.mubr.bf16.mxu0 0
    %1341 = vmatmul.mubr.bf16.gmra.mrb[0].mxu0 %v1259
    %v1342 = vpop.f32.mrb[0].mxu0
    %v1343 = vadd.f32 0.0, %v1342
    %v1344 = vpop.f32.mrb[0].mxu0
    %v1345 = vpop.f32.mrb[0].mxu0
    %v1346 = vadd.f32 0.0, %v1345
    %v1347 = vpop.f32.mrb[0].mxu0
    %1348 = vdwg.mxu0
    %v1349 = vmax.f32 %v1343, 0.0
    %v1350 = vmax.f32 %v1346, 0.0
    %v1351 = vpack.c.bf16 %v1350, %v1349
    %v1384 = vunpack.c.l.b16 %v834
    %v1385 = vunpack.c.h.b16 %v834
    %v1386 = vunpack.c.l.b16 %v835
    %v1387 = vunpack.c.h.b16 %v835
    %v1388 = vunpack.c.l.b16 %v836
    %v1389 = vunpack.c.h.b16 %v836
    %v1390 = vunpack.c.l.b16 %v837
    %v1391 = vunpack.c.h.b16 %v837
    %v1392 = vunpack.c.l.b16 %v838
    %v1393 = vunpack.c.h.b16 %v838
    %v1394 = vunpack.c.l.b16 %v839
    %v1395 = vunpack.c.h.b16 %v839
    %v1396 = vunpack.c.l.b16 %v840
    %v1397 = vunpack.c.h.b16 %v840
    %v1398 = vunpack.c.l.b16 %v841
    %v1399 = vunpack.c.h.b16 %v841
    %v1400 = vunpack.c.l.b16 %v842
    %v1401 = vunpack.c.h.b16 %v842
    %v1402 = vunpack.c.l.b16 %v843
    %v1403 = vunpack.c.h.b16 %v843
    %v1404 = vunpack.c.l.b16 %v844
    %v1405 = vunpack.c.h.b16 %v844
    %v1406 = vunpack.c.l.b16 %v845
    %v1407 = vunpack.c.h.b16 %v845
    %v1408 = vunpack.c.l.b16 %v846
    %v1409 = vunpack.c.h.b16 %v846
    %v1410 = vunpack.c.l.b16 %v847
    %v1411 = vunpack.c.h.b16 %v847
    %v1412 = vunpack.c.l.b16 %v848
    %v1413 = vunpack.c.h.b16 %v848
    %v1414 = vunpack.c.l.b16 %v849
    %v1415 = vunpack.c.h.b16 %v849
    %v1416 = vunpack.c.l.b16 %v850
    %v1417 = vunpack.c.h.b16 %v850
    %v1418 = vunpack.c.l.b16 %v851
    %v1419 = vunpack.c.h.b16 %v851
    %v1420 = vunpack.c.l.b16 %v852
    %v1421 = vunpack.c.h.b16 %v852
    %v1422 = vunpack.c.l.b16 %v853
    %v1423 = vunpack.c.h.b16 %v853
    %v1424 = vunpack.c.l.b16 %v854
    %v1425 = vunpack.c.h.b16 %v854
    %v1426 = vunpack.c.l.b16 %v855
    %v1427 = vunpack.c.h.b16 %v855
    %v1428 = vunpack.c.l.b16 %v856
    %v1429 = vunpack.c.h.b16 %v856
    %v1430 = vunpack.c.l.b16 %v857
    %v1431 = vunpack.c.h.b16 %v857
    %v1432 = vunpack.c.l.b16 %v858
    %v1433 = vunpack.c.h.b16 %v858
    %v1434 = vunpack.c.l.b16 %v859
    %v1435 = vunpack.c.h.b16 %v859
    %v1436 = vunpack.c.l.b16 %v860
    %v1437 = vunpack.c.h.b16 %v860
    %v1438 = vunpack.c.l.b16 %v861
    %v1439 = vunpack.c.h.b16 %v861
    %v1440 = vunpack.c.l.b16 %v862
    %v1441 = vunpack.c.h.b16 %v862
    %v1442 = vunpack.c.l.b16 %v863
    %v1443 = vunpack.c.h.b16 %v863
    %v1444 = vunpack.c.l.b16 %v864
    %v1445 = vunpack.c.h.b16 %v864
    %v1446 = vunpack.c.l.b16 %v865
    %v1447 = vunpack.c.h.b16 %v865
    %v1448 = vpack.c.b16 %v1386, %v1384
    %v1449 = vpack.c.b16 %v1387, %v1385
    %v1450 = vpack.c.b16 %v1390, %v1388
    %v1451 = vpack.c.b16 %v1391, %v1389
    %v1452 = vpack.c.b16 %v1394, %v1392
    %v1453 = vpack.c.b16 %v1395, %v1393
    %v1454 = vpack.c.b16 %v1398, %v1396
    %v1455 = vpack.c.b16 %v1399, %v1397
    %v1456 = vpack.c.b16 %v1402, %v1400
    %v1457 = vpack.c.b16 %v1403, %v1401
    %v1458 = vpack.c.b16 %v1406, %v1404
    %v1459 = vpack.c.b16 %v1407, %v1405
    %v1460 = vpack.c.b16 %v1410, %v1408
    %v1461 = vpack.c.b16 %v1411, %v1409
    %v1462 = vpack.c.b16 %v1414, %v1412
    %v1463 = vpack.c.b16 %v1415, %v1413
    %v1464 = vpack.c.b16 %v1418, %v1416
    %v1465 = vpack.c.b16 %v1419, %v1417
    %v1466 = vpack.c.b16 %v1422, %v1420
    %v1467 = vpack.c.b16 %v1423, %v1421
    %v1468 = vpack.c.b16 %v1426, %v1424
    %v1469 = vpack.c.b16 %v1427, %v1425
    %v1470 = vpack.c.b16 %v1430, %v1428
    %v1471 = vpack.c.b16 %v1431, %v1429
    %v1472 = vpack.c.b16 %v1434, %v1432
    %v1473 = vpack.c.b16 %v1435, %v1433
    %v1474 = vpack.c.b16 %v1438, %v1436
    %v1475 = vpack.c.b16 %v1439, %v1437
    %v1476 = vpack.c.b16 %v1442, %v1440
    %v1477 = vpack.c.b16 %v1443, %v1441
    %v1478 = vpack.c.b16 %v1446, %v1444
    %v1479 = vpack.c.b16 %v1447, %v1445
    %1512 = vmatprep.subr.bf16.mxu0 %v1449
    %1513 = vmatpush1.bf16.msra.mxu0 %v1448
    %1514 = vmatprep.subr.bf16.mxu0 %v1451
    %1515 = vmatpush1.bf16.msra.mxu0 %v1450
    %1516 = vmatprep.subr.bf16.mxu0 %v1453
    %1517 = vmatpush1.bf16.msra.mxu0 %v1452
    %1518 = vmatprep.subr.bf16.mxu0 %v1455
    %1519 = vmatpush1.bf16.msra.mxu0 %v1454
    %1520 = vmatprep.subr.bf16.mxu0 %v1457
    %1521 = vmatpush1.bf16.msra.mxu0 %v1456
    %1522 = vmatprep.subr.bf16.mxu0 %v1459
    %1523 = vmatpush1.bf16.msra.mxu0 %v1458
    %1524 = vmatprep.subr.bf16.mxu0 %v1461
    %1525 = vmatpush1.bf16.msra.mxu0 %v1460
    %1526 = vmatprep.subr.bf16.mxu0 %v1463
    %1527 = vmatpush1.bf16.msra.mxu0 %v1462
    %1528 = vmatprep.subr.bf16.mxu0 %v1465
    %1529 = vmatpush1.bf16.msra.mxu0 %v1464
    %1530 = vmatprep.subr.bf16.mxu0 %v1467
    %1531 = vmatpush1.bf16.msra.mxu0 %v1466
    %1532 = vmatprep.subr.bf16.mxu0 %v1469
    %1533 = vmatpush1.bf16.msra.mxu0 %v1468
    %1534 = vmatprep.subr.bf16.mxu0 %v1471
    %1535 = vmatpush1.bf16.msra.mxu0 %v1470
    %1536 = vmatprep.subr.bf16.mxu0 %v1473
    %1537 = vmatpush1.bf16.msra.mxu0 %v1472
    %1538 = vmatprep.subr.bf16.mxu0 %v1475
    %1539 = vmatpush1.bf16.msra.mxu0 %v1474
    %1540 = vmatprep.subr.bf16.mxu0 %v1477
    %1541 = vmatpush1.bf16.msra.mxu0 %v1476
    %1542 = vmatprep.subr.bf16.mxu0 %v1479
    %1543 = vmatpush1.bf16.msra.mxu0 %v1478
    %1544 = vmatprep.mubr.bf16.mxu0 %v924
    %1545 = vmatmul.mubr.bf16.gmra.mrb[0].mxu0 %v1351
    %v1546 = vpop.f32.mrb[0].mxu0
    %v1547 = vadd.f32 %v903, %v1546
    %v1548 = vpop.f32.mrb[0].mxu0
    %v1549 = vadd.f32 %v907, %v1548
    %v1550 = vpop.f32.mrb[0].mxu0
    %v1551 = vadd.f32 %v903, %v1550
    %v1552 = vpop.f32.mrb[0].mxu0
    %v1553 = vadd.f32 %v907, %v1552
    %1554 = vdwg.mxu0
    %v1555 = vsub.f32 0.0, %v1547
    %v1556 = vsub.f32 0.0, %v1551
    %v1557 = vmul.f32 %v1555, 1.442695
    %v1558 = vpow.pop %v1557
    %v1559 = vmul.f32 %v1556, 1.442695
    %v1560 = vpow.pop %v1559
    %v1561 = vadd.f32 %v1558, 1.0
    %v1562 = vadd.f32 %v1560, 1.0
    %v1563 = vrcp.pop %v1561
    %v1564 = vrcp.pop %v1562
    %v1565 = vsub.f32 0.0, %v1549
    %v1566 = vsub.f32 0.0, %v1553
    %v1567 = vmul.f32 %v1565, 1.442695
    %v1568 = vpow.pop %v1567
    %v1569 = vmul.f32 %v1566, 1.442695
    %v1570 = vpow.pop %v1569
    %v1571 = vadd.f32 %v1568, 1.0
    %v1572 = vadd.f32 %v1570, 1.0
    %v1573 = vrcp.pop %v1571
    %v1574 = vrcp.pop %v1572
    %v1591 = vunpack.c.l.b16 %v866
    %v1592 = vunpack.c.l.b16 %v867
    %v1593 = vunpack.c.l.b16 %v868
    %v1594 = vunpack.c.l.b16 %v869
    %v1595 = vunpack.c.l.b16 %v870
    %v1596 = vunpack.c.l.b16 %v871
    %v1597 = vunpack.c.l.b16 %v872
    %v1598 = vunpack.c.l.b16 %v873
    %v1599 = vunpack.c.l.b16 %v874
    %v1600 = vunpack.c.l.b16 %v875
    %v1601 = vunpack.c.l.b16 %v876
    %v1602 = vunpack.c.l.b16 %v877
    %v1603 = vunpack.c.l.b16 %v878
    %v1604 = vunpack.c.l.b16 %v879
    %v1605 = vunpack.c.l.b16 %v880
    %v1606 = vunpack.c.l.b16 %v881
    %v1607 = vpack.c.b16 %v1592, %v1591
    %v1608 = vpack.c.b16 %v1594, %v1593
    %v1609 = vpack.c.b16 %v1596, %v1595
    %v1610 = vpack.c.b16 %v1598, %v1597
    %v1611 = vpack.c.b16 %v1600, %v1599
    %v1612 = vpack.c.b16 %v1602, %v1601
    %v1613 = vpack.c.b16 %v1604, %v1603
    %v1614 = vpack.c.b16 %v1606, %v1605
    %1623 = vmatprep.subr.bf16.mxu0 0
    %1624 = vmatpush1.bf16.msra.mxu0 %v1607
    %1625 = vmatprep.subr.bf16.mxu0 0
    %1626 = vmatpush1.bf16.msra.mxu0 %v1608
    %1627 = vmatprep.subr.bf16.mxu0 0
    %1628 = vmatpush1.bf16.msra.mxu0 %v1609
    %1629 = vmatprep.subr.bf16.mxu0 0
    %1630 = vmatpush1.bf16.msra.mxu0 %v1610
    %1631 = vmatprep.subr.bf16.mxu0 0
    %1632 = vmatpush1.bf16.msra.mxu0 %v1611
    %1633 = vmatprep.subr.bf16.mxu0 0
    %1634 = vmatpush1.bf16.msra.mxu0 %v1612
    %1635 = vmatprep.subr.bf16.mxu0 0
    %1636 = vmatpush1.bf16.msra.mxu0 %v1613
    %1637 = vmatprep.subr.bf16.mxu0 0
    %1638 = vmatpush1.bf16.msra.mxu0 %v1614
    %1639 = vmatprep.subr.bf16.mxu0 0
    %1640 = vmatpush1.bf16.msra.mxu0 0
    %1641 = vmatprep.subr.bf16.mxu0 0
    %1642 = vmatpush1.bf16.msra.mxu0 0
    %1643 = vmatprep.subr.bf16.mxu0 0
    %1644 = vmatpush1.bf16.msra.mxu0 0
    %1645 = vmatprep.subr.bf16.mxu0 0
    %1646 = vmatpush1.bf16.msra.mxu0 0
    %1647 = vmatprep.subr.bf16.mxu0 0
    %1648 = vmatpush1.bf16.msra.mxu0 0
    %1649 = vmatprep.subr.bf16.mxu0 0
    %1650 = vmatpush1.bf16.msra.mxu0 0
    %1651 = vmatprep.subr.bf16.mxu0 0
    %1652 = vmatpush1.bf16.msra.mxu0 0
    %1653 = vmatprep.subr.bf16.mxu0 0
    %1654 = vmatpush1.bf16.msra.mxu0 0
    %1655 = vmatprep.mubr.bf16.mxu0 0
    %1656 = vmatmul.mubr.bf16.gmra.mrb[0].mxu0 %v1351
    %v1657 = vpop.f32.mrb[0].mxu0
    %v1658 = vadd.f32 %v915, %v1657
    %v1659 = vpop.f32.mrb[0].mxu0
    %v1660 = vpop.f32.mrb[0].mxu0
    %v1661 = vadd.f32 %v915, %v1660
    %v1662 = vpop.f32.mrb[0].mxu0
    %1663 = vdwg.mxu0
    %v1680 = vunpack.c.l.b16 %v882
    %v1681 = vunpack.c.l.b16 %v883
    %v1682 = vunpack.c.l.b16 %v884
    %v1683 = vunpack.c.l.b16 %v885
    %v1684 = vunpack.c.l.b16 %v886
    %v1685 = vunpack.c.l.b16 %v887
    %v1686 = vunpack.c.l.b16 %v888
    %v1687 = vunpack.c.l.b16 %v889
    %v1688 = vunpack.c.l.b16 %v890
    %v1689 = vunpack.c.l.b16 %v891
    %v1690 = vunpack.c.l.b16 %v892
    %v1691 = vunpack.c.l.b16 %v893
    %v1692 = vunpack.c.l.b16 %v894
    %v1693 = vunpack.c.l.b16 %v895
    %v1694 = vunpack.c.l.b16 %v896
    %v1695 = vunpack.c.l.b16 %v897
    %v1696 = vpack.c.b16 %v1681, %v1680
    %v1697 = vpack.c.b16 %v1683, %v1682
    %v1698 = vpack.c.b16 %v1685, %v1684
    %v1699 = vpack.c.b16 %v1687, %v1686
    %v1700 = vpack.c.b16 %v1689, %v1688
    %v1701 = vpack.c.b16 %v1691, %v1690
    %v1702 = vpack.c.b16 %v1693, %v1692
    %v1703 = vpack.c.b16 %v1695, %v1694
    %1712 = vmatprep.subr.bf16.mxu0 0
    %1713 = vmatpush1.bf16.msra.mxu0 %v1696
    %1714 = vmatprep.subr.bf16.mxu0 0
    %1715 = vmatpush1.bf16.msra.mxu0 %v1697
    %1716 = vmatprep.subr.bf16.mxu0 0
    %1717 = vmatpush1.bf16.msra.mxu0 %v1698
    %1718 = vmatprep.subr.bf16.mxu0 0
    %1719 = vmatpush1.bf16.msra.mxu0 %v1699
    %1720 = vmatprep.subr.bf16.mxu0 0
    %1721 = vmatpush1.bf16.msra.mxu0 %v1700
    %1722 = vmatprep.subr.bf16.mxu0 0
    %1723 = vmatpush1.bf16.msra.mxu0 %v1701
    %1724 = vmatprep.subr.bf16.mxu0 0
    %1725 = vmatpush1.bf16.msra.mxu0 %v1702
    %1726 = vmatprep.subr.bf16.mxu0 0
    %1727 = vmatpush1.bf16.msra.mxu0 %v1703
    %1728 = vmatprep.subr.bf16.mxu0 0
    %1729 = vmatpush1.bf16.msra.mxu0 0
    %1730 = vmatprep.subr.bf16.mxu0 0
    %1731 = vmatpush1.bf16.msra.mxu0 0
    %1732 = vmatprep.subr.bf16.mxu0 0
    %1733 = vmatpush1.bf16.msra.mxu0 0
    %1734 = vmatprep.subr.bf16.mxu0 0
    %1735 = vmatpush1.bf16.msra.mxu0 0
    %1736 = vmatprep.subr.bf16.mxu0 0
    %1737 = vmatpush1.bf16.msra.mxu0 0
    %1738 = vmatprep.subr.bf16.mxu0 0
    %1739 = vmatpush1.bf16.msra.mxu0 0
    %1740 = vmatprep.subr.bf16.mxu0 0
    %1741 = vmatpush1.bf16.msra.mxu0 0
    %1742 = vmatprep.subr.bf16.mxu0 0
    %1743 = vmatpush1.bf16.msra.mxu0 0
    %1744 = vmatprep.mubr.bf16.mxu0 0
    %1745 = vmatmul.mubr.bf16.gmra.mrb[0].mxu0 %v924
    %v1746 = vpop.f32.mrb[0].mxu0
    %v1747 = vadd.f32 %v922, %v1746
    %v1748 = vpop.f32.mrb[0].mxu0
    %v1749 = vpop.f32.mrb[0].mxu0
    %v1750 = vadd.f32 %v922, %v1749
    %v1751 = vpop.f32.mrb[0].mxu0
    %1752 = vdwg.mxu0
    %v1753 = vmul.f32 %v1563, %v1747
    %v1754 = vmul.f32 %v1564, %v1750
    %v1755 = vadd.f32 %v1658, %v1753
    %v1756 = vadd.f32 %v1661, %v1754
    %v1757 = vtanh.pop %v1755
    %v1758 = vtanh.pop %v1756
    %v1759 = vsub.f32 1.0, %v1573
    %v1760 = vsub.f32 1.0, %v1574
    %v1761 = vmul.f32 %v1759, %v1757
    %v1762 = vmul.f32 %v1760, %v1758
    %v1763 = vmul.f32 %v1573, %v481
    %v1764 = vmul.f32 %v1574, %v482
    %v1765 = vadd.f32 %v1761, %v1763
    %v1766 = vadd.f32 %v1762, %v1764
    %v1767 = vpack.c.bf16 %v1766, %v1765
    %1768 = vmatprep.subr.bf16.mxu0 0
    %1769 = vmatpush1.bf16.msra.mxu0 %v957
    %1770 = vmatprep.subr.bf16.mxu0 0
    %1771 = vmatpush1.bf16.msra.mxu0 %v958
    %1772 = vmatprep.subr.bf16.mxu0 0
    %1773 = vmatpush1.bf16.msra.mxu0 %v959
    %1774 = vmatprep.subr.bf16.mxu0 0
    %1775 = vmatpush1.bf16.msra.mxu0 %v960
    %1776 = vmatprep.subr.bf16.mxu0 0
    %1777 = vmatpush1.bf16.msra.mxu0 %v961
    %1778 = vmatprep.subr.bf16.mxu0 0
    %1779 = vmatpush1.bf16.msra.mxu0 %v962
    %1780 = vmatprep.subr.bf16.mxu0 0
    %1781 = vmatpush1.bf16.msra.mxu0 %v963
    %1782 = vmatprep.subr.bf16.mxu0 0
    %1783 = vmatpush1.bf16.msra.mxu0 %v964
    %1784 = vmatprep.subr.bf16.mxu0 0
    %1785 = vmatpush1.bf16.msra.mxu0 0
    %1786 = vmatprep.subr.bf16.mxu0 0
    %1787 = vmatpush1.bf16.msra.mxu0 0
    %1788 = vmatprep.subr.bf16.mxu0 0
    %1789 = vmatpush1.bf16.msra.mxu0 0
    %1790 = vmatprep.subr.bf16.mxu0 0
    %1791 = vmatpush1.bf16.msra.mxu0 0
    %1792 = vmatprep.subr.bf16.mxu0 0
    %1793 = vmatpush1.bf16.msra.mxu0 0
    %1794 = vmatprep.subr.bf16.mxu0 0
    %1795 = vmatpush1.bf16.msra.mxu0 0
    %1796 = vmatprep.subr.bf16.mxu0 0
    %1797 = vmatpush1.bf16.msra.mxu0 0
    %1798 = vmatprep.subr.bf16.mxu0 0
    %1799 = vmatpush1.bf16.msra.mxu0 0
    %1800 = vmatprep.mubr.bf16.mxu0 0
    %1801 = vmatmul.mubr.bf16.gmra.mrb[0].mxu0 %v1767
    %v1802 = vpop.f32.mrb[0].mxu0
    %v1803 = vadd.f32 0.0, %v1802
    %v1804 = vpop.f32.mrb[0].mxu0
    %v1805 = vpop.f32.mrb[0].mxu0
    %v1806 = vadd.f32 0.0, %v1805
    %v1807 = vpop.f32.mrb[0].mxu0
    %1808 = vdwg.mxu0
    %v1809 = vpack.c.bf16 %v1806, %v1803
    %1810 = vmatprep.subr.bf16.mxu0 0
    %1811 = vmatpush1.bf16.msra.mxu0 %v1809
    %1812 = vmatprep.subr.bf16.mxu0 0
    %1813 = vmatpush1.bf16.msra.mxu0 0
    %1814 = vmatprep.subr.bf16.mxu0 0
    %1815 = vmatpush1.bf16.msra.mxu0 0
    %1816 = vmatprep.subr.bf16.mxu0 0
    %1817 = vmatpush1.bf16.msra.mxu0 0
    %1818 = vmatprep.subr.bf16.mxu0 0
    %1819 = vmatpush1.bf16.msra.mxu0 0
    %1820 = vmatprep.subr.bf16.mxu0 0
    %1821 = vmatpush1.bf16.msra.mxu0 0
    %1822 = vmatprep.subr.bf16.mxu0 0
    %1823 = vmatpush1.bf16.msra.mxu0 0
    %1824 = vmatprep.subr.bf16.mxu0 0
    %1825 = vmatpush1.bf16.msra.mxu0 0
    %1826 = vmatprep.subr.bf16.mxu0 0
    %1827 = vmatpush1.bf16.msra.mxu0 0
    %1828 = vmatprep.subr.bf16.mxu0 0
    %1829 = vmatpush1.bf16.msra.mxu0 0
    %1830 = vmatprep.subr.bf16.mxu0 0
    %1831 = vmatpush1.bf16.msra.mxu0 0
    %1832 = vmatprep.subr.bf16.mxu0 0
    %1833 = vmatpush1.bf16.msra.mxu0 0
    %1834 = vmatprep.subr.bf16.mxu0 0
    %1835 = vmatpush1.bf16.msra.mxu0 0
    %1836 = vmatprep.subr.bf16.mxu0 0
    %1837 = vmatpush1.bf16.msra.mxu0 0
    %1838 = vmatprep.subr.bf16.mxu0 0
    %1839 = vmatpush1.bf16.msra.mxu0 0
    %1840 = vmatprep.subr.bf16.mxu0 0
    %1841 = vmatpush1.bf16.msra.mxu0 0
    %1842 = vmatprep.mubr.bf16.mxu0 0
    %1843 = vmatmul.mubr.bf16.gmra.mrb[0].mxu0 %v1027
    %v1844 = vpop.f32.mrb[0].mxu0
    %v1845 = vadd.f32 0.0, %v1844
    %v1846 = vpop.f32.mrb[0].mxu0
    %v1847 = vpop.f32.mrb[0].mxu0
    %v1848 = vadd.f32 0.0, %v1847
    %v1849 = vpop.f32.mrb[0].mxu0
    %1850 = vmatprep.mubr.bf16.mxu0 0
    %1851 = vmatmul.mubr.bf16.gmra.mrb[0].mxu0 %v1030
    %v1852 = vpop.f32.mrb[0].mxu0
    %v1853 = vadd.f32 0.0, %v1852
    %v1854 = vpop.f32.mrb[0].mxu0
    %v1855 = vpop.f32.mrb[0].mxu0
    %v1856 = vadd.f32 0.0, %v1855
    %v1857 = vpop.f32.mrb[0].mxu0
    %1858 = vdwg.mxu0
    %v1859 = vmul.f32 %v1845, %v769
    %v1860 = vmul.f32 %v1848, %v770
    %v1861 = vmul.f32 %v1853, %v771
    %v1862 = vmul.f32 %v1856, %v772
    %v1863 = vpack.c.bf16 %v1860, %v1859
    %v1864 = vpack.c.bf16 %v1862, %v1861
    %1865 = vmatprep.subr.bf16.mxu0 0
    %1866 = vmatpush1.bf16.msra.mxu0 %v1863
    %1867 = vmatprep.subr.bf16.mxu0 0
    %1868 = vmatpush1.bf16.msra.mxu0 %v1864
    %1869 = vmatprep.subr.bf16.mxu0 0
    %1870 = vmatpush1.bf16.msra.mxu0 0
    %1871 = vmatprep.subr.bf16.mxu0 0
    %1872 = vmatpush1.bf16.msra.mxu0 0
    %1873 = vmatprep.subr.bf16.mxu0 0
    %1874 = vmatpush1.bf16.msra.mxu0 0
    %1875 = vmatprep.subr.bf16.mxu0 0
    %1876 = vmatpush1.bf16.msra.mxu0 0
    %1877 = vmatprep.subr.bf16.mxu0 0
    %1878 = vmatpush1.bf16.msra.mxu0 0
    %1879 = vmatprep.subr.bf16.mxu0 0
    %1880 = vmatpush1.bf16.msra.mxu0 0
    %1881 = vmatprep.subr.bf16.mxu0 0
    %1882 = vmatpush1.bf16.msra.mxu0 0
    %1883 = vmatprep.subr.bf16.mxu0 0
    %1884 = vmatpush1.bf16.msra.mxu0 0
    %1885 = vmatprep.subr.bf16.mxu0 0
    %1886 = vmatpush1.bf16.msra.mxu0 0
    %1887 = vmatprep.subr.bf16.mxu0 0
    %1888 = vmatpush1.bf16.msra.mxu0 0
    %1889 = vmatprep.subr.bf16.mxu0 0
    %1890 = vmatpush1.bf16.msra.mxu0 0
    %1891 = vmatprep.subr.bf16.mxu0 0
    %1892 = vmatpush1.bf16.msra.mxu0 0
    %1893 = vmatprep.subr.bf16.mxu0 0
    %1894 = vmatpush1.bf16.msra.mxu0 0
    %1895 = vmatprep.subr.bf16.mxu0 0
    %1896 = vmatpush1.bf16.msra.mxu0 0
    %1897 = vmatprep.mubr.bf16.mxu0 0
    %1898 = vmatmul.mubr.bf16.gmra.mrb[0].mxu0 %v1094
    %v1899 = vpop.f32.mrb[0].mxu0
    %v1900 = vadd.f32 0.0, %v1899
    %v1901 = vpop.f32.mrb[0].mxu0
    %v1902 = vpop.f32.mrb[0].mxu0
    %v1903 = vadd.f32 0.0, %v1902
    %v1904 = vpop.f32.mrb[0].mxu0
    %1905 = vdwg.mxu0
    %v1906 = vpack.c.bf16 %v1903, %v1900
    %1907 = vmatprep.subr.bf16.mxu0 0
    %1908 = vmatpush1.bf16.msra.mxu0 %v1170
    %1909 = vmatprep.subr.bf16.mxu0 0
    %1910 = vmatpush1.bf16.msra.mxu0 %v1171
    %1911 = vmatprep.subr.bf16.mxu0 0
    %1912 = vmatpush1.bf16.msra.mxu0 %v1172
    %1913 = vmatprep.subr.bf16.mxu0 0
    %1914 = vmatpush1.bf16.msra.mxu0 %v1173
    %1915 = vmatprep.subr.bf16.mxu0 0
    %1916 = vmatpush1.bf16.msra.mxu0 %v1174
    %1917 = vmatprep.subr.bf16.mxu0 0
    %1918 = vmatpush1.bf16.msra.mxu0 %v1175
    %1919 = vmatprep.subr.bf16.mxu0 0
    %1920 = vmatpush1.bf16.msra.mxu0 %v1176
    %1921 = vmatprep.subr.bf16.mxu0 0
    %1922 = vmatpush1.bf16.msra.mxu0 %v1177
    %1923 = vmatprep.subr.bf16.mxu0 0
    %1924 = vmatpush1.bf16.msra.mxu0 0
    %1925 = vmatprep.subr.bf16.mxu0 0
    %1926 = vmatpush1.bf16.msra.mxu0 0
    %1927 = vmatprep.subr.bf16.mxu0 0
    %1928 = vmatpush1.bf16.msra.mxu0 0
    %1929 = vmatprep.subr.bf16.mxu0 0
    %1930 = vmatpush1.bf16.msra.mxu0 0
    %1931 = vmatprep.subr.bf16.mxu0 0
    %1932 = vmatpush1.bf16.msra.mxu0 0
    %1933 = vmatprep.subr.bf16.mxu0 0
    %1934 = vmatpush1.bf16.msra.mxu0 0
    %1935 = vmatprep.subr.bf16.mxu0 0
    %1936 = vmatpush1.bf16.msra.mxu0 0
    %1937 = vmatprep.subr.bf16.mxu0 0
    %1938 = vmatpush1.bf16.msra.mxu0 0
    %1939 = vmatprep.mubr.bf16.mxu0 0
    %1940 = vmatmul.mubr.bf16.gmra.mrb[0].mxu0 %v1906
    %v1941 = vpop.f32.mrb[0].mxu0
    %v1942 = vadd.f32 %v832, %v1941
    %v1943 = vpop.f32.mrb[0].mxu0
    %v1944 = vpop.f32.mrb[0].mxu0
    %v1945 = vadd.f32 %v832, %v1944
    %v1946 = vpop.f32.mrb[0].mxu0
    %1947 = vdwg.mxu0
    %v1948 = vmax.f32 %v1942, 0.0
    %v1949 = vmax.f32 %v1945, 0.0
    %v1950 = vand.u32 2147483647, %v1942
    %v1951 = vand.u32 2147483647, %v1945
    %v1952 = vsub.f32 0.0, %v1950
    %v1953 = vsub.f32 0.0, %v1951
    %v1954 = vmul.f32 %v1952, 1.442695
    %v1955 = vpow.pop %v1954
    %v1956 = vmul.f32 %v1953, 1.442695
    %v1957 = vpow.pop %v1956
    %v1958 = vadd.f32 %v1955, 1.0
    %v1959 = vlog2.pop %v1958
    %v1960 = vmul.f32 %v1959, 0.6931472
    %v1961 = vmul.f32 -0.5, %v1955
    %v1962 = vadd.f32 %v1961, 1.0
    %v1963 = vmul.f32 %v1962, %v1955
    %v1964 = vand.u32 2147483647, %v1955
    %vm1965 = vcmp.lt.f32.partialorder %v1964, 0.0004427343
    %v1966 = vsel %vm1965, %v1963, %v1960
    %v1967 = vadd.f32 %v1957, 1.0
    %v1968 = vlog2.pop %v1967
    %v1969 = vmul.f32 %v1968, 0.6931472
    %v1970 = vmul.f32 -0.5, %v1957
    %v1971 = vadd.f32 %v1970, 1.0
    %v1972 = vmul.f32 %v1971, %v1957
    %v1973 = vand.u32 2147483647, %v1957
    %vm1974 = vcmp.lt.f32.partialorder %v1973, 0.0004427343
    %v1975 = vsel %vm1974, %v1972, %v1969
    %v1976 = vadd.f32 %v1948, %v1966
    %v1977 = vadd.f32 %v1949, %v1975
    %v1978 = vsub.f32 %v1976, 0.6931472
    %v1979 = vsub.f32 %v1977, 0.6931472
    %v1980 = vpack.c.bf16 %v1979, %v1978
    %1981 = vmatprep.subr.bf16.mxu0 0
    %1982 = vmatpush1.bf16.msra.mxu0 %v1292
    %1983 = vmatprep.subr.bf16.mxu0 0
    %1984 = vmatpush1.bf16.msra.mxu0 %v1293
    %1985 = vmatprep.subr.bf16.mxu0 0
    %1986 = vmatpush1.bf16.msra.mxu0 %v1294
    %1987 = vmatprep.subr.bf16.mxu0 0
    %1988 = vmatpush1.bf16.msra.mxu0 %v1295
    %1989 = vmatprep.subr.bf16.mxu0 0
    %1990 = vmatpush1.bf16.msra.mxu0 %v1296
    %1991 = vmatprep.subr.bf16.mxu0 0
    %1992 = vmatpush1.bf16.msra.mxu0 %v1297
    %1993 = vmatprep.subr.bf16.mxu0 0
    %1994 = vmatpush1.bf16.msra.mxu0 %v1298
    %1995 = vmatprep.subr.bf16.mxu0 0
    %1996 = vmatpush1.bf16.msra.mxu0 %v1299
    %1997 = vmatprep.subr.bf16.mxu0 0
    %1998 = vmatpush1.bf16.msra.mxu0 0
    %1999 = vmatprep.subr.bf16.mxu0 0
    %2000 = vmatpush1.bf16.msra.mxu0 0
    %2001 = vmatprep.subr.bf16.mxu0 0
    %2002 = vmatpush1.bf16.msra.mxu0 0
    %2003 = vmatprep.subr.bf16.mxu0 0
    %2004 = vmatpush1.bf16.msra.mxu0 0
    %2005 = vmatprep.subr.bf16.mxu0 0
    %2006 = vmatpush1.bf16.msra.mxu0 0
    %2007 = vmatprep.subr.bf16.mxu0 0
    %2008 = vmatpush1.bf16.msra.mxu0 0
    %2009 = vmatprep.subr.bf16.mxu0 0
    %2010 = vmatpush1.bf16.msra.mxu0 0
    %2011 = vmatprep.subr.bf16.mxu0 0
    %2012 = vmatpush1.bf16.msra.mxu0 0
    %2013 = vmatprep.mubr.bf16.mxu0 0
    %2014 = vmatmul.mubr.bf16.gmra.mrb[0].mxu0 %v1980
    %v2015 = vpop.f32.mrb[0].mxu0
    %v2016 = vadd.f32 0.0, %v2015
    %v2017 = vpop.f32.mrb[0].mxu0
    %v2018 = vpop.f32.mrb[0].mxu0
    %v2019 = vadd.f32 0.0, %v2018
    %v2020 = vpop.f32.mrb[0].mxu0
    %2021 = vdwg.mxu0
    %v2022 = vmax.f32 %v2016, 0.0
    %v2023 = vmax.f32 %v2019, 0.0
    %v2024 = vpack.c.bf16 %v2023, %v2022
    %2025 = vmatprep.subr.bf16.mxu0 %v1449
    %2026 = vmatpush1.bf16.msra.mxu0 %v1448
    %2027 = vmatprep.subr.bf16.mxu0 %v1451
    %2028 = vmatpush1.bf16.msra.mxu0 %v1450
    %2029 = vmatprep.subr.bf16.mxu0 %v1453
    %2030 = vmatpush1.bf16.msra.mxu0 %v1452
    %2031 = vmatprep.subr.bf16.mxu0 %v1455
    %2032 = vmatpush1.bf16.msra.mxu0 %v1454
    %2033 = vmatprep.subr.bf16.mxu0 %v1457
    %2034 = vmatpush1.bf16.msra.mxu0 %v1456
    %2035 = vmatprep.subr.bf16.mxu0 %v1459
    %2036 = vmatpush1.bf16.msra.mxu0 %v1458
    %2037 = vmatprep.subr.bf16.mxu0 %v1461
    %2038 = vmatpush1.bf16.msra.mxu0 %v1460
    %2039 = vmatprep.subr.bf16.mxu0 %v1463
    %2040 = vmatpush1.bf16.msra.mxu0 %v1462
    %2041 = vmatprep.subr.bf16.mxu0 %v1465
    %2042 = vmatpush1.bf16.msra.mxu0 %v1464
    %2043 = vmatprep.subr.bf16.mxu0 %v1467
    %2044 = vmatpush1.bf16.msra.mxu0 %v1466
    %2045 = vmatprep.subr.bf16.mxu0 %v1469
    %2046 = vmatpush1.bf16.msra.mxu0 %v1468
    %2047 = vmatprep.subr.bf16.mxu0 %v1471
    %2048 = vmatpush1.bf16.msra.mxu0 %v1470
    %2049 = vmatprep.subr.bf16.mxu0 %v1473
    %2050 = vmatpush1.bf16.msra.mxu0 %v1472
    %2051 = vmatprep.subr.bf16.mxu0 %v1475
    %2052 = vmatpush1.bf16.msra.mxu0 %v1474
    %2053 = vmatprep.subr.bf16.mxu0 %v1477
    %2054 = vmatpush1.bf16.msra.mxu0 %v1476
    %2055 = vmatprep.subr.bf16.mxu0 %v1479
    %2056 = vmatpush1.bf16.msra.mxu0 %v1478
    %2057 = vmatprep.mubr.bf16.mxu0 %v1767
    %2058 = vmatmul.mubr.bf16.gmra.mrb[0].mxu0 %v2024
    %v2059 = vpop.f32.mrb[0].mxu0
    %v2060 = vadd.f32 %v903, %v2059
    %v2061 = vpop.f32.mrb[0].mxu0
    %v2062 = vadd.f32 %v907, %v2061
    %v2063 = vpop.f32.mrb[0].mxu0
    %v2064 = vadd.f32 %v903, %v2063
    %v2065 = vpop.f32.mrb[0].mxu0
    %v2066 = vadd.f32 %v907, %v2065
    %2067 = vdwg.mxu0
    %v2068 = vsub.f32 0.0, %v2060
    %v2069 = vsub.f32 0.0, %v2064
    %v2070 = vmul.f32 %v2068, 1.442695
    %v2071 = vpow.pop %v2070
    %v2072 = vmul.f32 %v2069, 1.442695
    %v2073 = vpow.pop %v2072
    %v2074 = vadd.f32 %v2071, 1.0
    %v2075 = vadd.f32 %v2073, 1.0
    %v2076 = vrcp.pop %v2074
    %v2077 = vrcp.pop %v2075
    %v2078 = vsub.f32 0.0, %v2062
    %v2079 = vsub.f32 0.0, %v2066
    %v2080 = vmul.f32 %v2078, 1.442695
    %v2081 = vpow.pop %v2080
    %v2082 = vmul.f32 %v2079, 1.442695
    %v2083 = vpow.pop %v2082
    %v2084 = vadd.f32 %v2081, 1.0
    %v2085 = vadd.f32 %v2083, 1.0
    %v2086 = vrcp.pop %v2084
    %v2087 = vrcp.pop %v2085
    %2088 = vmatprep.subr.bf16.mxu0 0
    %2089 = vmatpush1.bf16.msra.mxu0 %v1607
    %2090 = vmatprep.subr.bf16.mxu0 0
    %2091 = vmatpush1.bf16.msra.mxu0 %v1608
    %2092 = vmatprep.subr.bf16.mxu0 0
    %2093 = vmatpush1.bf16.msra.mxu0 %v1609
    %2094 = vmatprep.subr.bf16.mxu0 0
    %2095 = vmatpush1.bf16.msra.mxu0 %v1610
    %2096 = vmatprep.subr.bf16.mxu0 0
    %2097 = vmatpush1.bf16.msra.mxu0 %v1611
    %2098 = vmatprep.subr.bf16.mxu0 0
    %2099 = vmatpush1.bf16.msra.mxu0 %v1612
    %2100 = vmatprep.subr.bf16.mxu0 0
    %2101 = vmatpush1.bf16.msra.mxu0 %v1613
    %2102 = vmatprep.subr.bf16.mxu0 0
    %2103 = vmatpush1.bf16.msra.mxu0 %v1614
    %2104 = vmatprep.subr.bf16.mxu0 0
    %2105 = vmatpush1.bf16.msra.mxu0 0
    %2106 = vmatprep.subr.bf16.mxu0 0
    %2107 = vmatpush1.bf16.msra.mxu0 0
    %2108 = vmatprep.subr.bf16.mxu0 0
    %2109 = vmatpush1.bf16.msra.mxu0 0
    %2110 = vmatprep.subr.bf16.mxu0 0
    %2111 = vmatpush1.bf16.msra.mxu0 0
    %2112 = vmatprep.subr.bf16.mxu0 0
    %2113 = vmatpush1.bf16.msra.mxu0 0
    %2114 = vmatprep.subr.bf16.mxu0 0
    %2115 = vmatpush1.bf16.msra.mxu0 0
    %2116 = vmatprep.subr.bf16.mxu0 0
    %2117 = vmatpush1.bf16.msra.mxu0 0
    %2118 = vmatprep.subr.bf16.mxu0 0
    %2119 = vmatpush1.bf16.msra.mxu0 0
    %2120 = vmatprep.mubr.bf16.mxu0 0
    %2121 = vmatmul.mubr.bf16.gmra.mrb[0].mxu0 %v2024
    %v2122 = vpop.f32.mrb[0].mxu0
    %v2123 = vadd.f32 %v915, %v2122
    %v2124 = vpop.f32.mrb[0].mxu0
    %v2125 = vpop.f32.mrb[0].mxu0
    %v2126 = vadd.f32 %v915, %v2125
    %v2127 = vpop.f32.mrb[0].mxu0
    %2128 = vdwg.mxu0
    %2129 = vmatprep.subr.bf16.mxu0 0
    %2130 = vmatpush1.bf16.msra.mxu0 %v1696
    %2131 = vmatprep.subr.bf16.mxu0 0
    %2132 = vmatpush1.bf16.msra.mxu0 %v1697
    %2133 = vmatprep.subr.bf16.mxu0 0
    %2134 = vmatpush1.bf16.msra.mxu0 %v1698
    %2135 = vmatprep.subr.bf16.mxu0 0
    %2136 = vmatpush1.bf16.msra.mxu0 %v1699
    %2137 = vmatprep.subr.bf16.mxu0 0
    %2138 = vmatpush1.bf16.msra.mxu0 %v1700
    %2139 = vmatprep.subr.bf16.mxu0 0
    %2140 = vmatpush1.bf16.msra.mxu0 %v1701
    %2141 = vmatprep.subr.bf16.mxu0 0
    %2142 = vmatpush1.bf16.msra.mxu0 %v1702
    %2143 = vmatprep.subr.bf16.mxu0 0
    %2144 = vmatpush1.bf16.msra.mxu0 %v1703
    %2145 = vmatprep.subr.bf16.mxu0 0
    %2146 = vmatpush1.bf16.msra.mxu0 0
    %2147 = vmatprep.subr.bf16.mxu0 0
    %2148 = vmatpush1.bf16.msra.mxu0 0
    %2149 = vmatprep.subr.bf16.mxu0 0
    %2150 = vmatpush1.bf16.msra.mxu0 0
    %2151 = vmatprep.subr.bf16.mxu0 0
    %2152 = vmatpush1.bf16.msra.mxu0 0
    %2153 = vmatprep.subr.bf16.mxu0 0
    %2154 = vmatpush1.bf16.msra.mxu0 0
    %2155 = vmatprep.subr.bf16.mxu0 0
    %2156 = vmatpush1.bf16.msra.mxu0 0
    %2157 = vmatprep.subr.bf16.mxu0 0
    %2158 = vmatpush1.bf16.msra.mxu0 0
    %2159 = vmatprep.subr.bf16.mxu0 0
    %2160 = vmatpush1.bf16.msra.mxu0 0
    %2161 = vmatprep.mubr.bf16.mxu0 0
    %2162 = vmatmul.mubr.bf16.gmra.mrb[0].mxu0 %v1767
    %v2163 = vpop.f32.mrb[0].mxu0
    %v2164 = vadd.f32 %v922, %v2163
    %v2165 = vpop.f32.mrb[0].mxu0
    %v2166 = vpop.f32.mrb[0].mxu0
    %v2167 = vadd.f32 %v922, %v2166
    %v2168 = vpop.f32.mrb[0].mxu0
    %2169 = vdwg.mxu0
    %v2170 = vmul.f32 %v2076, %v2164
    %v2171 = vmul.f32 %v2077, %v2167
    %v2172 = vadd.f32 %v2123, %v2170
    %v2173 = vadd.f32 %v2126, %v2171
    %v2174 = vtanh.pop %v2172
    %v2175 = vtanh.pop %v2173
    %v2176 = vsub.f32 1.0, %v2086
    %v2177 = vsub.f32 1.0, %v2087
    %v2178 = vmul.f32 %v2176, %v2174
    %v2179 = vmul.f32 %v2177, %v2175
    %v2180 = vmul.f32 %v2086, %v1765
    %v2181 = vmul.f32 %v2087, %v1766
    %v2182 = vadd.f32 %v2178, %v2180
    %v2183 = vadd.f32 %v2179, %v2181
    %v2184 = vpack.c.bf16 %v2183, %v2182
    %2185 = vmatprep.subr.bf16.mxu0 0
    %2186 = vmatpush1.bf16.msra.mxu0 %v957
    %2187 = vmatprep.subr.bf16.mxu0 0
    %2188 = vmatpush1.bf16.msra.mxu0 %v958
    %2189 = vmatprep.subr.bf16.mxu0 0
    %2190 = vmatpush1.bf16.msra.mxu0 %v959
    %2191 = vmatprep.subr.bf16.mxu0 0
    %2192 = vmatpush1.bf16.msra.mxu0 %v960
    %2193 = vmatprep.subr.bf16.mxu0 0
    %2194 = vmatpush1.bf16.msra.mxu0 %v961
    %2195 = vmatprep.subr.bf16.mxu0 0
    %2196 = vmatpush1.bf16.msra.mxu0 %v962
    %2197 = vmatprep.subr.bf16.mxu0 0
    %2198 = vmatpush1.bf16.msra.mxu0 %v963
    %2199 = vmatprep.subr.bf16.mxu0 0
    %2200 = vmatpush1.bf16.msra.mxu0 %v964
    %2201 = vmatprep.subr.bf16.mxu0 0
    %2202 = vmatpush1.bf16.msra.mxu0 0
    %2203 = vmatprep.subr.bf16.mxu0 0
    %2204 = vmatpush1.bf16.msra.mxu0 0
    %2205 = vmatprep.subr.bf16.mxu0 0
    %2206 = vmatpush1.bf16.msra.mxu0 0
    %2207 = vmatprep.subr.bf16.mxu0 0
    %2208 = vmatpush1.bf16.msra.mxu0 0
    %2209 = vmatprep.subr.bf16.mxu0 0
    %2210 = vmatpush1.bf16.msra.mxu0 0
    %2211 = vmatprep.subr.bf16.mxu0 0
    %2212 = vmatpush1.bf16.msra.mxu0 0
    %2213 = vmatprep.subr.bf16.mxu0 0
    %2214 = vmatpush1.bf16.msra.mxu0 0
    %2215 = vmatprep.subr.bf16.mxu0 0
    %2216 = vmatpush1.bf16.msra.mxu0 0
    %2217 = vmatprep.mubr.bf16.mxu0 0
    %2218 = vmatmul.mubr.bf16.gmra.mrb[0].mxu0 %v2184
    %v2219 = vpop.f32.mrb[0].mxu0
    %v2220 = vadd.f32 0.0, %v2219
    %v2221 = vpop.f32.mrb[0].mxu0
    %v2222 = vpop.f32.mrb[0].mxu0
    %v2223 = vadd.f32 0.0, %v2222
    %v2224 = vpop.f32.mrb[0].mxu0
    %2225 = vdwg.mxu0
    %v2226 = vpack.c.bf16 %v2223, %v2220
    %2227 = vmatprep.subr.bf16.mxu0 0
    %2228 = vmatpush1.bf16.msra.mxu0 %v2226
    %2229 = vmatprep.subr.bf16.mxu0 0
    %2230 = vmatpush1.bf16.msra.mxu0 0
    %2231 = vmatprep.subr.bf16.mxu0 0
    %2232 = vmatpush1.bf16.msra.mxu0 0
    %2233 = vmatprep.subr.bf16.mxu0 0
    %2234 = vmatpush1.bf16.msra.mxu0 0
    %2235 = vmatprep.subr.bf16.mxu0 0
    %2236 = vmatpush1.bf16.msra.mxu0 0
    %2237 = vmatprep.subr.bf16.mxu0 0
    %2238 = vmatpush1.bf16.msra.mxu0 0
    %2239 = vmatprep.subr.bf16.mxu0 0
    %2240 = vmatpush1.bf16.msra.mxu0 0
    %2241 = vmatprep.subr.bf16.mxu0 0
    %2242 = vmatpush1.bf16.msra.mxu0 0
    %2243 = vmatprep.subr.bf16.mxu0 0
    %2244 = vmatpush1.bf16.msra.mxu0 0
    %2245 = vmatprep.subr.bf16.mxu0 0
    %2246 = vmatpush1.bf16.msra.mxu0 0
    %2247 = vmatprep.subr.bf16.mxu0 0
    %2248 = vmatpush1.bf16.msra.mxu0 0
    %2249 = vmatprep.subr.bf16.mxu0 0
    %2250 = vmatpush1.bf16.msra.mxu0 0
    %2251 = vmatprep.subr.bf16.mxu0 0
    %2252 = vmatpush1.bf16.msra.mxu0 0
    %2253 = vmatprep.subr.bf16.mxu0 0
    %2254 = vmatpush1.bf16.msra.mxu0 0
    %2255 = vmatprep.subr.bf16.mxu0 0
    %2256 = vmatpush1.bf16.msra.mxu0 0
    %2257 = vmatprep.subr.bf16.mxu0 0
    %2258 = vmatpush1.bf16.msra.mxu0 0
    %2259 = vmatprep.mubr.bf16.mxu0 0
    %2260 = vmatmul.mubr.bf16.gmra.mrb[0].mxu0 %v1027
    %v2261 = vpop.f32.mrb[0].mxu0
    %v2262 = vadd.f32 0.0, %v2261
    %v2263 = vpop.f32.mrb[0].mxu0
    %v2264 = vpop.f32.mrb[0].mxu0
    %v2265 = vadd.f32 0.0, %v2264
    %v2266 = vpop.f32.mrb[0].mxu0
    %2267 = vmatprep.mubr.bf16.mxu0 0
    %2268 = vmatmul.mubr.bf16.gmra.mrb[0].mxu0 %v1030
    %v2269 = vpop.f32.mrb[0].mxu0
    %v2270 = vadd.f32 0.0, %v2269
    %v2271 = vpop.f32.mrb[0].mxu0
    %v2272 = vpop.f32.mrb[0].mxu0
    %v2273 = vadd.f32 0.0, %v2272
    %v2274 = vpop.f32.mrb[0].mxu0
    %2275 = vdwg.mxu0
    %v2276 = vmul.f32 %v2262, %v769
    %v2277 = vmul.f32 %v2265, %v770
    %v2278 = vmul.f32 %v2270, %v771
    %v2279 = vmul.f32 %v2273, %v772
    %v2280 = vpack.c.bf16 %v2277, %v2276
    %v2281 = vpack.c.bf16 %v2279, %v2278
    %2282 = vmatprep.subr.bf16.mxu0 0
    %2283 = vmatpush1.bf16.msra.mxu0 %v2280
    %2284 = vmatprep.subr.bf16.mxu0 0
    %2285 = vmatpush1.bf16.msra.mxu0 %v2281
    %2286 = vmatprep.subr.bf16.mxu0 0
    %2287 = vmatpush1.bf16.msra.mxu0 0
    %2288 = vmatprep.subr.bf16.mxu0 0
    %2289 = vmatpush1.bf16.msra.mxu0 0
    %2290 = vmatprep.subr.bf16.mxu0 0
    %2291 = vmatpush1.bf16.msra.mxu0 0
    %2292 = vmatprep.subr.bf16.mxu0 0
    %2293 = vmatpush1.bf16.msra.mxu0 0
    %2294 = vmatprep.subr.bf16.mxu0 0
    %2295 = vmatpush1.bf16.msra.mxu0 0
    %2296 = vmatprep.subr.bf16.mxu0 0
    %2297 = vmatpush1.bf16.msra.mxu0 0
    %2298 = vmatprep.subr.bf16.mxu0 0
    %2299 = vmatpush1.bf16.msra.mxu0 0
    %2300 = vmatprep.subr.bf16.mxu0 0
    %2301 = vmatpush1.bf16.msra.mxu0 0
    %2302 = vmatprep.subr.bf16.mxu0 0
    %2303 = vmatpush1.bf16.msra.mxu0 0
    %2304 = vmatprep.subr.bf16.mxu0 0
    %2305 = vmatpush1.bf16.msra.mxu0 0
    %2306 = vmatprep.subr.bf16.mxu0 0
    %2307 = vmatpush1.bf16.msra.mxu0 0
    %2308 = vmatprep.subr.bf16.mxu0 0
    %2309 = vmatpush1.bf16.msra.mxu0 0
    %2310 = vmatprep.subr.bf16.mxu0 0
    %2311 = vmatpush1.bf16.msra.mxu0 0
    %2312 = vmatprep.subr.bf16.mxu0 0
    %2313 = vmatpush1.bf16.msra.mxu0 0
    %2314 = vmatprep.mubr.bf16.mxu0 0
    %2315 = vmatmul.mubr.bf16.gmra.mrb[0].mxu0 %v1094
    %v2316 = vpop.f32.mrb[0].mxu0
    %v2317 = vadd.f32 0.0, %v2316
    %v2318 = vpop.f32.mrb[0].mxu0
    %v2319 = vpop.f32.mrb[0].mxu0
    %v2320 = vadd.f32 0.0, %v2319
    %v2321 = vpop.f32.mrb[0].mxu0
    %2322 = vdwg.mxu0
    %v2323 = vpack.c.bf16 %v2320, %v2317
    %2324 = vmatprep.subr.bf16.mxu0 0
    %2325 = vmatpush1.bf16.msra.mxu0 %v1170
    %2326 = vmatprep.subr.bf16.mxu0 0
    %2327 = vmatpush1.bf16.msra.mxu0 %v1171
    %2328 = vmatprep.subr.bf16.mxu0 0
    %2329 = vmatpush1.bf16.msra.mxu0 %v1172
    %2330 = vmatprep.subr.bf16.mxu0 0
    %2331 = vmatpush1.bf16.msra.mxu0 %v1173
    %2332 = vmatprep.subr.bf16.mxu0 0
    %2333 = vmatpush1.bf16.msra.mxu0 %v1174
    %2334 = vmatprep.subr.bf16.mxu0 0
    %2335 = vmatpush1.bf16.msra.mxu0 %v1175
    %2336 = vmatprep.subr.bf16.mxu0 0
    %2337 = vmatpush1.bf16.msra.mxu0 %v1176
    %2338 = vmatprep.subr.bf16.mxu0 0
    %2339 = vmatpush1.bf16.msra.mxu0 %v1177
    %2340 = vmatprep.subr.bf16.mxu0 0
    %2341 = vmatpush1.bf16.msra.mxu0 0
    %2342 = vmatprep.subr.bf16.mxu0 0
    %2343 = vmatpush1.bf16.msra.mxu0 0
    %2344 = vmatprep.subr.bf16.mxu0 0
    %2345 = vmatpush1.bf16.msra.mxu0 0
    %2346 = vmatprep.subr.bf16.mxu0 0
    %2347 = vmatpush1.bf16.msra.mxu0 0
    %2348 = vmatprep.subr.bf16.mxu0 0
    %2349 = vmatpush1.bf16.msra.mxu0 0
    %2350 = vmatprep.subr.bf16.mxu0 0
    %2351 = vmatpush1.bf16.msra.mxu0 0
    %2352 = vmatprep.subr.bf16.mxu0 0
    %2353 = vmatpush1.bf16.msra.mxu0 0
    %2354 = vmatprep.subr.bf16.mxu0 0
    %2355 = vmatpush1.bf16.msra.mxu0 0
    %2356 = vmatprep.mubr.bf16.mxu0 0
    %2357 = vmatmul.mubr.bf16.gmra.mrb[0].mxu0 %v2323
    %v2358 = vpop.f32.mrb[0].mxu0
    %v2359 = vadd.f32 %v832, %v2358
    %v2360 = vpop.f32.mrb[0].mxu0
    %v2361 = vpop.f32.mrb[0].mxu0
    %v2362 = vadd.f32 %v832, %v2361
    %v2363 = vpop.f32.mrb[0].mxu0
    %2364 = vdwg.mxu0
    %v2365 = vmax.f32 %v2359, 0.0
    %v2366 = vmax.f32 %v2362, 0.0
    %v2367 = vand.u32 2147483647, %v2359
    %v2368 = vand.u32 2147483647, %v2362
    %v2369 = vsub.f32 0.0, %v2367
    %v2370 = vsub.f32 0.0, %v2368
    %v2371 = vmul.f32 %v2369, 1.442695
    %v2372 = vpow.pop %v2371
    %v2373 = vmul.f32 %v2370, 1.442695
    %v2374 = vpow.pop %v2373
    %v2375 = vadd.f32 %v2372, 1.0
    %v2376 = vlog2.pop %v2375
    %v2377 = vmul.f32 %v2376, 0.6931472
    %v2378 = vmul.f32 -0.5, %v2372
    %v2379 = vadd.f32 %v2378, 1.0
    %v2380 = vmul.f32 %v2379, %v2372
    %v2381 = vand.u32 2147483647, %v2372
    %vm2382 = vcmp.lt.f32.partialorder %v2381, 0.0004427343
    %v2383 = vsel %vm2382, %v2380, %v2377
    %v2384 = vadd.f32 %v2374, 1.0
    %v2385 = vlog2.pop %v2384
    %v2386 = vmul.f32 %v2385, 0.6931472
    %v2387 = vmul.f32 -0.5, %v2374
    %v2388 = vadd.f32 %v2387, 1.0
    %v2389 = vmul.f32 %v2388, %v2374
    %v2390 = vand.u32 2147483647, %v2374
    %vm2391 = vcmp.lt.f32.partialorder %v2390, 0.0004427343
    %v2392 = vsel %vm2391, %v2389, %v2386
    %v2393 = vadd.f32 %v2365, %v2383
    %v2394 = vadd.f32 %v2366, %v2392
    %v2395 = vsub.f32 %v2393, 0.6931472
    %v2396 = vsub.f32 %v2394, 0.6931472
    %v2397 = vpack.c.bf16 %v2396, %v2395
    %2398 = vmatprep.subr.bf16.mxu0 0
    %2399 = vmatpush1.bf16.msra.mxu0 %v1292
    %2400 = vmatprep.subr.bf16.mxu0 0
    %2401 = vmatpush1.bf16.msra.mxu0 %v1293
    %2402 = vmatprep.subr.bf16.mxu0 0
    %2403 = vmatpush1.bf16.msra.mxu0 %v1294
    %2404 = vmatprep.subr.bf16.mxu0 0
    %2405 = vmatpush1.bf16.msra.mxu0 %v1295
    %2406 = vmatprep.subr.bf16.mxu0 0
    %2407 = vmatpush1.bf16.msra.mxu0 %v1296
    %2408 = vmatprep.subr.bf16.mxu0 0
    %2409 = vmatpush1.bf16.msra.mxu0 %v1297
    %2410 = vmatprep.subr.bf16.mxu0 0
    %2411 = vmatpush1.bf16.msra.mxu0 %v1298
    %2412 = vmatprep.subr.bf16.mxu0 0
    %2413 = vmatpush1.bf16.msra.mxu0 %v1299
    %2414 = vmatprep.subr.bf16.mxu0 0
    %2415 = vmatpush1.bf16.msra.mxu0 0
    %2416 = vmatprep.subr.bf16.mxu0 0
    %2417 = vmatpush1.bf16.msra.mxu0 0
    %2418 = vmatprep.subr.bf16.mxu0 0
    %2419 = vmatpush1.bf16.msra.mxu0 0
    %2420 = vmatprep.subr.bf16.mxu0 0
    %2421 = vmatpush1.bf16.msra.mxu0 0
    %2422 = vmatprep.subr.bf16.mxu0 0
    %2423 = vmatpush1.bf16.msra.mxu0 0
    %2424 = vmatprep.subr.bf16.mxu0 0
    %2425 = vmatpush1.bf16.msra.mxu0 0
    %2426 = vmatprep.subr.bf16.mxu0 0
    %2427 = vmatpush1.bf16.msra.mxu0 0
    %2428 = vmatprep.subr.bf16.mxu0 0
    %2429 = vmatpush1.bf16.msra.mxu0 0
    %2430 = vmatprep.mubr.bf16.mxu0 0
    %2431 = vmatmul.mubr.bf16.gmra.mrb[0].mxu0 %v2397
    %v2432 = vpop.f32.mrb[0].mxu0
    %v2433 = vadd.f32 0.0, %v2432
    %v2434 = vpop.f32.mrb[0].mxu0
    %v2435 = vpop.f32.mrb[0].mxu0
    %v2436 = vadd.f32 0.0, %v2435
    %v2437 = vpop.f32.mrb[0].mxu0
    %2438 = vdwg.mxu0
    %v2439 = vmax.f32 %v2433, 0.0
    %v2440 = vmax.f32 %v2436, 0.0
    %v2441 = vpack.c.bf16 %v2440, %v2439
    %2442 = vmatprep.subr.bf16.mxu0 %v1449
    %2443 = vmatpush1.bf16.msra.mxu0 %v1448
    %2444 = vmatprep.subr.bf16.mxu0 %v1451
    %2445 = vmatpush1.bf16.msra.mxu0 %v1450
    %2446 = vmatprep.subr.bf16.mxu0 %v1453
    %2447 = vmatpush1.bf16.msra.mxu0 %v1452
    %2448 = vmatprep.subr.bf16.mxu0 %v1455
    %2449 = vmatpush1.bf16.msra.mxu0 %v1454
    %2450 = vmatprep.subr.bf16.mxu0 %v1457
    %2451 = vmatpush1.bf16.msra.mxu0 %v1456
    %2452 = vmatprep.subr.bf16.mxu0 %v1459
    %2453 = vmatpush1.bf16.msra.mxu0 %v1458
    %2454 = vmatprep.subr.bf16.mxu0 %v1461
    %2455 = vmatpush1.bf16.msra.mxu0 %v1460
    %2456 = vmatprep.subr.bf16.mxu0 %v1463
    %2457 = vmatpush1.bf16.msra.mxu0 %v1462
    %2458 = vmatprep.subr.bf16.mxu0 %v1465
    %2459 = vmatpush1.bf16.msra.mxu0 %v1464
    %2460 = vmatprep.subr.bf16.mxu0 %v1467
    %2461 = vmatpush1.bf16.msra.mxu0 %v1466
    %2462 = vmatprep.subr.bf16.mxu0 %v1469
    %2463 = vmatpush1.bf16.msra.mxu0 %v1468
    %2464 = vmatprep.subr.bf16.mxu0 %v1471
    %2465 = vmatpush1.bf16.msra.mxu0 %v1470
    %2466 = vmatprep.subr.bf16.mxu0 %v1473
    %2467 = vmatpush1.bf16.msra.mxu0 %v1472
    %2468 = vmatprep.subr.bf16.mxu0 %v1475
    %2469 = vmatpush1.bf16.msra.mxu0 %v1474
    %2470 = vmatprep.subr.bf16.mxu0 %v1477
    %2471 = vmatpush1.bf16.msra.mxu0 %v1476
    %2472 = vmatprep.subr.bf16.mxu0 %v1479
    %2473 = vmatpush1.bf16.msra.mxu0 %v1478
    %2474 = vmatprep.mubr.bf16.mxu0 %v2184
    %2475 = vmatmul.mubr.bf16.gmra.mrb[0].mxu0 %v2441
    %v2476 = vpop.f32.mrb[0].mxu0
    %v2477 = vadd.f32 %v903, %v2476
    %v2478 = vpop.f32.mrb[0].mxu0
    %v2479 = vadd.f32 %v907, %v2478
    %v2480 = vpop.f32.mrb[0].mxu0
    %v2481 = vadd.f32 %v903, %v2480
    %v2482 = vpop.f32.mrb[0].mxu0
    %v2483 = vadd.f32 %v907, %v2482
    %2484 = vdwg.mxu0
    %v2485 = vsub.f32 0.0, %v2477
    %v2486 = vsub.f32 0.0, %v2481
    %v2487 = vmul.f32 %v2485, 1.442695
    %v2488 = vpow.pop %v2487
    %v2489 = vmul.f32 %v2486, 1.442695
    %v2490 = vpow.pop %v2489
    %v2491 = vadd.f32 %v2488, 1.0
    %v2492 = vadd.f32 %v2490, 1.0
    %v2493 = vrcp.pop %v2491
    %v2494 = vrcp.pop %v2492
    %v2495 = vsub.f32 0.0, %v2479
    %v2496 = vsub.f32 0.0, %v2483
    %v2497 = vmul.f32 %v2495, 1.442695
    %v2498 = vpow.pop %v2497
    %v2499 = vmul.f32 %v2496, 1.442695
    %v2500 = vpow.pop %v2499
    %v2501 = vadd.f32 %v2498, 1.0
    %v2502 = vadd.f32 %v2500, 1.0
    %v2503 = vrcp.pop %v2501
    %v2504 = vrcp.pop %v2502
    %2505 = vmatprep.subr.bf16.mxu0 0
    %2506 = vmatpush1.bf16.msra.mxu0 %v1607
    %2507 = vmatprep.subr.bf16.mxu0 0
    %2508 = vmatpush1.bf16.msra.mxu0 %v1608
    %2509 = vmatprep.subr.bf16.mxu0 0
    %2510 = vmatpush1.bf16.msra.mxu0 %v1609
    %2511 = vmatprep.subr.bf16.mxu0 0
    %2512 = vmatpush1.bf16.msra.mxu0 %v1610
    %2513 = vmatprep.subr.bf16.mxu0 0
    %2514 = vmatpush1.bf16.msra.mxu0 %v1611
    %2515 = vmatprep.subr.bf16.mxu0 0
    %2516 = vmatpush1.bf16.msra.mxu0 %v1612
    %2517 = vmatprep.subr.bf16.mxu0 0
    %2518 = vmatpush1.bf16.msra.mxu0 %v1613
    %2519 = vmatprep.subr.bf16.mxu0 0
    %2520 = vmatpush1.bf16.msra.mxu0 %v1614
    %2521 = vmatprep.subr.bf16.mxu0 0
    %2522 = vmatpush1.bf16.msra.mxu0 0
    %2523 = vmatprep.subr.bf16.mxu0 0
    %2524 = vmatpush1.bf16.msra.mxu0 0
    %2525 = vmatprep.subr.bf16.mxu0 0
    %2526 = vmatpush1.bf16.msra.mxu0 0
    %2527 = vmatprep.subr.bf16.mxu0 0
    %2528 = vmatpush1.bf16.msra.mxu0 0
    %2529 = vmatprep.subr.bf16.mxu0 0
    %2530 = vmatpush1.bf16.msra.mxu0 0
    %2531 = vmatprep.subr.bf16.mxu0 0
    %2532 = vmatpush1.bf16.msra.mxu0 0
    %2533 = vmatprep.subr.bf16.mxu0 0
    %2534 = vmatpush1.bf16.msra.mxu0 0
    %2535 = vmatprep.subr.bf16.mxu0 0
    %2536 = vmatpush1.bf16.msra.mxu0 0
    %2537 = vmatprep.mubr.bf16.mxu0 0
    %2538 = vmatmul.mubr.bf16.gmra.mrb[0].mxu0 %v2441
    %v2539 = vpop.f32.mrb[0].mxu0
    %v2540 = vadd.f32 %v915, %v2539
    %v2541 = vpop.f32.mrb[0].mxu0
    %v2542 = vpop.f32.mrb[0].mxu0
    %v2543 = vadd.f32 %v915, %v2542
    %v2544 = vpop.f32.mrb[0].mxu0
    %2545 = vdwg.mxu0
    %2546 = vmatprep.subr.bf16.mxu0 0
    %2547 = vmatpush1.bf16.msra.mxu0 %v1696
    %2548 = vmatprep.subr.bf16.mxu0 0
    %2549 = vmatpush1.bf16.msra.mxu0 %v1697
    %2550 = vmatprep.subr.bf16.mxu0 0
    %2551 = vmatpush1.bf16.msra.mxu0 %v1698
    %2552 = vmatprep.subr.bf16.mxu0 0
    %2553 = vmatpush1.bf16.msra.mxu0 %v1699
    %2554 = vmatprep.subr.bf16.mxu0 0
    %2555 = vmatpush1.bf16.msra.mxu0 %v1700
    %2556 = vmatprep.subr.bf16.mxu0 0
    %2557 = vmatpush1.bf16.msra.mxu0 %v1701
    %2558 = vmatprep.subr.bf16.mxu0 0
    %2559 = vmatpush1.bf16.msra.mxu0 %v1702
    %2560 = vmatprep.subr.bf16.mxu0 0
    %2561 = vmatpush1.bf16.msra.mxu0 %v1703
    %2562 = vmatprep.subr.bf16.mxu0 0
    %2563 = vmatpush1.bf16.msra.mxu0 0
    %2564 = vmatprep.subr.bf16.mxu0 0
    %2565 = vmatpush1.bf16.msra.mxu0 0
    %2566 = vmatprep.subr.bf16.mxu0 0
    %2567 = vmatpush1.bf16.msra.mxu0 0
    %2568 = vmatprep.subr.bf16.mxu0 0
    %2569 = vmatpush1.bf16.msra.mxu0 0
    %2570 = vmatprep.subr.bf16.mxu0 0
    %2571 = vmatpush1.bf16.msra.mxu0 0
    %2572 = vmatprep.subr.bf16.mxu0 0
    %2573 = vmatpush1.bf16.msra.mxu0 0
    %2574 = vmatprep.subr.bf16.mxu0 0
    %2575 = vmatpush1.bf16.msra.mxu0 0
    %2576 = vmatprep.subr.bf16.mxu0 0
    %2577 = vmatpush1.bf16.msra.mxu0 0
    %2578 = vmatprep.mubr.bf16.mxu0 0
    %2579 = vmatmul.mubr.bf16.gmra.mrb[0].mxu0 %v2184
    %v2580 = vpop.f32.mrb[0].mxu0
    %v2581 = vadd.f32 %v922, %v2580
    %v2582 = vpop.f32.mrb[0].mxu0
    %v2583 = vpop.f32.mrb[0].mxu0
    %v2584 = vadd.f32 %v922, %v2583
    %v2585 = vpop.f32.mrb[0].mxu0
    %2586 = vdwg.mxu0
    %v2587 = vmul.f32 %v2493, %v2581
    %v2588 = vmul.f32 %v2494, %v2584
    %v2589 = vadd.f32 %v2540, %v2587
    %v2590 = vadd.f32 %v2543, %v2588
    %v2591 = vtanh.pop %v2589
    %v2592 = vtanh.pop %v2590
    %v2593 = vsub.f32 1.0, %v2503
    %v2594 = vsub.f32 1.0, %v2504
    %v2595 = vmul.f32 %v2593, %v2591
    %v2596 = vmul.f32 %v2594, %v2592
    %v2597 = vmul.f32 %v2503, %v2182
    %v2598 = vmul.f32 %v2504, %v2183
    %v2599 = vadd.f32 %v2595, %v2597
    %v2600 = vadd.f32 %v2596, %v2598
    %v2601 = vpack.c.bf16 %v2600, %v2599
    %v2602 = vld [vmem:[%s21] sm:$0x3]
    %vm2603 = vcmp.gt.f32.partialorder %v2602, 0.5
    %v2604 = vld [vmem:[#allocation31] sm:$0xff]
    %v2605 = vld [vmem:[#allocation31 + $0x8] sm:$0xff]
    %v2606 = vld [vmem:[#allocation31 + $0x10] sm:$0xff]
    %v2607 = vld [vmem:[#allocation31 + $0x18] sm:$0xff]
    %v2608 = vld [vmem:[#allocation31 + $0x20] sm:$0xff]
    %v2609 = vld [vmem:[#allocation31 + $0x28] sm:$0xff]
    %v2610 = vld [vmem:[#allocation31 + $0x30] sm:$0xff]
    %v2611 = vld [vmem:[#allocation31 + $0x38] sm:$0xff]
    %v2612 = vld [vmem:[#allocation31 + $0x40] sm:$0xff]
    %v2613 = vld [vmem:[#allocation31 + $0x48] sm:$0xff]
    %v2614 = vld [vmem:[#allocation31 + $0x50] sm:$0xff]
    %v2615 = vld [vmem:[#allocation31 + $0x58] sm:$0xff]
    %v2616 = vld [vmem:[#allocation31 + $0x60] sm:$0xff]
    %v2617 = vld [vmem:[#allocation31 + $0x68] sm:$0xff]
    %v2618 = vld [vmem:[#allocation31 + $0x70] sm:$0xff]
    %v2619 = vld [vmem:[#allocation31 + $0x78] sm:$0xff]
    %v2620 = vld [vmem:[#allocation31 + $0x80] sm:$0xff]
    %v2621 = vld [vmem:[#allocation31 + $0x88] sm:$0xff]
    %v2622 = vld [vmem:[#allocation31 + $0x90] sm:$0xff]
    %v2623 = vld [vmem:[#allocation31 + $0x98] sm:$0xff]
    %v2624 = vld [vmem:[#allocation31 + $0xa0] sm:$0xff]
    %v2625 = vld [vmem:[#allocation31 + $0xa8] sm:$0xff]
    %v2626 = vld [vmem:[#allocation31 + $0xb0] sm:$0xff]
    %v2627 = vld [vmem:[#allocation31 + $0xb8] sm:$0xff]
    %v2628 = vld [vmem:[#allocation31 + $0xc0] sm:$0xff]
    %v2629 = vld [vmem:[#allocation31 + $0xc8] sm:$0xff]
    %v2630 = vld [vmem:[#allocation31 + $0xd0] sm:$0xff]
    %v2631 = vld [vmem:[#allocation31 + $0xd8] sm:$0xff]
    %v2632 = vld [vmem:[#allocation31 + $0xe0] sm:$0xff]
    %v2633 = vld [vmem:[#allocation31 + $0xe8] sm:$0xff]
    %v2634 = vld [vmem:[#allocation31 + $0xf0] sm:$0xff]
    %v2635 = vld [vmem:[#allocation31 + $0xf8] sm:$0xff]
    %v2636 = vld [vmem:[#allocation32] sm:$0xff]
    %v2637 = vld [vmem:[#allocation32 + $0x8] sm:$0xff]
    %v2638 = vld [vmem:[#allocation32 + $0x10] sm:$0xff]
    %v2639 = vld [vmem:[#allocation32 + $0x18] sm:$0xff]
    %v2640 = vld [vmem:[#allocation32 + $0x20] sm:$0xff]
    %v2641 = vld [vmem:[#allocation32 + $0x28] sm:$0xff]
    %v2642 = vld [vmem:[#allocation32 + $0x30] sm:$0xff]
    %v2643 = vld [vmem:[#allocation32 + $0x38] sm:$0xff]
    %v2644 = vld [vmem:[#allocation32 + $0x40] sm:$0xff]
    %v2645 = vld [vmem:[#allocation32 + $0x48] sm:$0xff]
    %v2646 = vld [vmem:[#allocation32 + $0x50] sm:$0xff]
    %v2647 = vld [vmem:[#allocation32 + $0x58] sm:$0xff]
    %v2648 = vld [vmem:[#allocation32 + $0x60] sm:$0xff]
    %v2649 = vld [vmem:[#allocation32 + $0x68] sm:$0xff]
    %v2650 = vld [vmem:[#allocation32 + $0x70] sm:$0xff]
    %v2651 = vld [vmem:[#allocation32 + $0x78] sm:$0xff]
    %v2652 = vld [vmem:[#allocation32 + $0x80] sm:$0xff]
    %v2653 = vld [vmem:[#allocation32 + $0x88] sm:$0xff]
    %v2654 = vld [vmem:[#allocation32 + $0x90] sm:$0xff]
    %v2655 = vld [vmem:[#allocation32 + $0x98] sm:$0xff]
    %v2656 = vld [vmem:[#allocation32 + $0xa0] sm:$0xff]
    %v2657 = vld [vmem:[#allocation32 + $0xa8] sm:$0xff]
    %v2658 = vld [vmem:[#allocation32 + $0xb0] sm:$0xff]
    %v2659 = vld [vmem:[#allocation32 + $0xb8] sm:$0xff]
    %v2660 = vld [vmem:[#allocation32 + $0xc0] sm:$0xff]
    %v2661 = vld [vmem:[#allocation32 + $0xc8] sm:$0xff]
    %v2662 = vld [vmem:[#allocation32 + $0xd0] sm:$0xff]
    %v2663 = vld [vmem:[#allocation32 + $0xd8] sm:$0xff]
    %v2664 = vld [vmem:[#allocation32 + $0xe0] sm:$0xff]
    %v2665 = vld [vmem:[#allocation32 + $0xe8] sm:$0xff]
    %v2666 = vld [vmem:[#allocation32 + $0xf0] sm:$0xff]
    %v2667 = vld [vmem:[#allocation32 + $0xf8] sm:$0xff]
    %v2668 = vld [vmem:[%s24] sm:$0xf]
    %v2670 = vlaneseq
    %v2671 = vshrl.u32 %v2670, 7
    %v2672 = vsub.s32 0, %v2671
    %v2673 = vrot.slane %v2668, %v2672
    %v2674 = vlaneseq
    %v2675 = vshrl.u32 %v2674, 7
    %v2676 = vsub.s32 1, %v2675
    %v2677 = vrot.slane %v2668, %v2676
    %v2678 = vlaneseq
    %v2679 = vshrl.u32 %v2678, 7
    %v2680 = vsub.s32 2, %v2679
    %v2681 = vrot.slane %v2668, %v2680
    %v2682 = vlaneseq
    %v2683 = vshrl.u32 %v2682, 7
    %v2684 = vsub.s32 3, %v2683
    %v2685 = vrot.slane %v2668, %v2684
    %v2722 = vunpack.c.l.b16 %v2636
    %v2723 = vunpack.c.h.b16 %v2636
    %v2724 = vunpack.c.l.b16 %v2637
    %v2725 = vunpack.c.h.b16 %v2637
    %v2726 = vunpack.c.l.b16 %v2638
    %v2727 = vunpack.c.h.b16 %v2638
    %v2728 = vunpack.c.l.b16 %v2639
    %v2729 = vunpack.c.h.b16 %v2639
    %v2730 = vunpack.c.l.b16 %v2640
    %v2731 = vunpack.c.h.b16 %v2640
    %v2732 = vunpack.c.l.b16 %v2641
    %v2733 = vunpack.c.h.b16 %v2641
    %v2734 = vunpack.c.l.b16 %v2642
    %v2735 = vunpack.c.h.b16 %v2642
    %v2736 = vunpack.c.l.b16 %v2643
    %v2737 = vunpack.c.h.b16 %v2643
    %v2738 = vunpack.c.l.b16 %v2644
    %v2739 = vunpack.c.h.b16 %v2644
    %v2740 = vunpack.c.l.b16 %v2645
    %v2741 = vunpack.c.h.b16 %v2645
    %v2742 = vunpack.c.l.b16 %v2646
    %v2743 = vunpack.c.h.b16 %v2646
    %v2744 = vunpack.c.l.b16 %v2647
    %v2745 = vunpack.c.h.b16 %v2647
    %v2746 = vunpack.c.l.b16 %v2648
    %v2747 = vunpack.c.h.b16 %v2648
    %v2748 = vunpack.c.l.b16 %v2649
    %v2749 = vunpack.c.h.b16 %v2649
    %v2750 = vunpack.c.l.b16 %v2650
    %v2751 = vunpack.c.h.b16 %v2650
    %v2752 = vunpack.c.l.b16 %v2651
    %v2753 = vunpack.c.h.b16 %v2651
    %v2754 = vunpack.c.l.b16 %v2652
    %v2755 = vunpack.c.h.b16 %v2652
    %v2756 = vunpack.c.l.b16 %v2653
    %v2757 = vunpack.c.h.b16 %v2653
    %v2758 = vunpack.c.l.b16 %v2654
    %v2759 = vunpack.c.h.b16 %v2654
    %v2760 = vunpack.c.l.b16 %v2655
    %v2761 = vunpack.c.h.b16 %v2655
    %v2762 = vunpack.c.l.b16 %v2656
    %v2763 = vunpack.c.h.b16 %v2656
    %v2764 = vunpack.c.l.b16 %v2657
    %v2765 = vunpack.c.h.b16 %v2657
    %v2766 = vunpack.c.l.b16 %v2658
    %v2767 = vunpack.c.h.b16 %v2658
    %v2768 = vunpack.c.l.b16 %v2659
    %v2769 = vunpack.c.h.b16 %v2659
    %v2770 = vunpack.c.l.b16 %v2660
    %v2771 = vunpack.c.h.b16 %v2660
    %v2772 = vunpack.c.l.b16 %v2661
    %v2773 = vunpack.c.h.b16 %v2661
    %v2774 = vunpack.c.l.b16 %v2662
    %v2775 = vunpack.c.h.b16 %v2662
    %v2776 = vunpack.c.l.b16 %v2663
    %v2777 = vunpack.c.h.b16 %v2663
    %v2778 = vunpack.c.l.b16 %v2664
    %v2779 = vunpack.c.h.b16 %v2664
    %v2780 = vunpack.c.l.b16 %v2665
    %v2781 = vunpack.c.h.b16 %v2665
    %v2782 = vunpack.c.l.b16 %v2666
    %v2783 = vunpack.c.h.b16 %v2666
    %v2784 = vunpack.c.l.b16 %v2667
    %v2785 = vunpack.c.h.b16 %v2667
    %v2786 = vpack.c.b16 %v2726, %v2722
    %v2787 = vpack.c.b16 %v2727, %v2723
    %v2788 = vpack.c.b16 %v2728, %v2724
    %v2789 = vpack.c.b16 %v2729, %v2725
    %v2790 = vpack.c.b16 %v2734, %v2730
    %v2791 = vpack.c.b16 %v2735, %v2731
    %v2792 = vpack.c.b16 %v2736, %v2732
    %v2793 = vpack.c.b16 %v2737, %v2733
    %v2794 = vpack.c.b16 %v2742, %v2738
    %v2795 = vpack.c.b16 %v2743, %v2739
    %v2796 = vpack.c.b16 %v2744, %v2740
    %v2797 = vpack.c.b16 %v2745, %v2741
    %v2798 = vpack.c.b16 %v2750, %v2746
    %v2799 = vpack.c.b16 %v2751, %v2747
    %v2800 = vpack.c.b16 %v2752, %v2748
    %v2801 = vpack.c.b16 %v2753, %v2749
    %v2802 = vpack.c.b16 %v2758, %v2754
    %v2803 = vpack.c.b16 %v2759, %v2755
    %v2804 = vpack.c.b16 %v2760, %v2756
    %v2805 = vpack.c.b16 %v2761, %v2757
    %v2806 = vpack.c.b16 %v2766, %v2762
    %v2807 = vpack.c.b16 %v2767, %v2763
    %v2808 = vpack.c.b16 %v2768, %v2764
    %v2809 = vpack.c.b16 %v2769, %v2765
    %v2810 = vpack.c.b16 %v2774, %v2770
    %v2811 = vpack.c.b16 %v2775, %v2771
    %v2812 = vpack.c.b16 %v2776, %v2772
    %v2813 = vpack.c.b16 %v2777, %v2773
    %v2814 = vpack.c.b16 %v2782, %v2778
    %v2815 = vpack.c.b16 %v2783, %v2779
    %v2816 = vpack.c.b16 %v2784, %v2780
    %v2817 = vpack.c.b16 %v2785, %v2781
    %2850 = vmatprep.subr.bf16.mxu0 %v2787
    %2851 = vmatpush1.bf16.msra.mxu0 %v2786
    %2852 = vmatprep.subr.bf16.mxu0 %v2791
    %2853 = vmatpush1.bf16.msra.mxu0 %v2790
    %2854 = vmatprep.subr.bf16.mxu0 %v2795
    %2855 = vmatpush1.bf16.msra.mxu0 %v2794
    %2856 = vmatprep.subr.bf16.mxu0 %v2799
    %2857 = vmatpush1.bf16.msra.mxu0 %v2798
    %2858 = vmatprep.subr.bf16.mxu0 %v2803
    %2859 = vmatpush1.bf16.msra.mxu0 %v2802
    %2860 = vmatprep.subr.bf16.mxu0 %v2807
    %2861 = vmatpush1.bf16.msra.mxu0 %v2806
    %2862 = vmatprep.subr.bf16.mxu0 %v2811
    %2863 = vmatpush1.bf16.msra.mxu0 %v2810
    %2864 = vmatprep.subr.bf16.mxu0 %v2815
    %2865 = vmatpush1.bf16.msra.mxu0 %v2814
    %2866 = vmatprep.subr.bf16.mxu0 0
    %2867 = vmatpush1.bf16.msra.mxu0 0
    %2868 = vmatprep.subr.bf16.mxu0 0
    %2869 = vmatpush1.bf16.msra.mxu0 0
    %2870 = vmatprep.subr.bf16.mxu0 0
    %2871 = vmatpush1.bf16.msra.mxu0 0
    %2872 = vmatprep.subr.bf16.mxu0 0
    %2873 = vmatpush1.bf16.msra.mxu0 0
    %2874 = vmatprep.subr.bf16.mxu0 0
    %2875 = vmatpush1.bf16.msra.mxu0 0
    %2876 = vmatprep.subr.bf16.mxu0 0
    %2877 = vmatpush1.bf16.msra.mxu0 0
    %2878 = vmatprep.subr.bf16.mxu0 0
    %2879 = vmatpush1.bf16.msra.mxu0 0
    %2880 = vmatprep.subr.bf16.mxu0 0
    %2881 = vmatpush1.bf16.msra.mxu0 0
    %2882 = vmatprep.mubr.bf16.mxu0 0
    %2883 = vmatmul.mubr.bf16.gmra.mrb[0].mxu0 0
    %v2884 = vpop.f32.mrb[0].mxu0
    %v2885 = vadd.f32 0.0, %v2884
    %v2886 = vpop.f32.mrb[0].mxu0
    %v2887 = vadd.f32 0.0, %v2886
    %v2888 = vpop.f32.mrb[0].mxu0
    %v2889 = vpop.f32.mrb[0].mxu0
    %2890 = vdwg.mxu0
    %2891 = vmatprep.subr.bf16.mxu0 %v2789
    %2892 = vmatpush1.bf16.msra.mxu0 %v2788
    %2893 = vmatprep.subr.bf16.mxu0 %v2793
    %2894 = vmatpush1.bf16.msra.mxu0 %v2792
    %2895 = vmatprep.subr.bf16.mxu0 %v2797
    %2896 = vmatpush1.bf16.msra.mxu0 %v2796
    %2897 = vmatprep.subr.bf16.mxu0 %v2801
    %2898 = vmatpush1.bf16.msra.mxu0 %v2800
    %2899 = vmatprep.subr.bf16.mxu0 %v2805
    %2900 = vmatpush1.bf16.msra.mxu0 %v2804
    %2901 = vmatprep.subr.bf16.mxu0 %v2809
    %2902 = vmatpush1.bf16.msra.mxu0 %v2808
    %2903 = vmatprep.subr.bf16.mxu0 %v2813
    %2904 = vmatpush1.bf16.msra.mxu0 %v2812
    %2905 = vmatprep.subr.bf16.mxu0 %v2817
    %2906 = vmatpush1.bf16.msra.mxu0 %v2816
    %2907 = vmatprep.subr.bf16.mxu0 0
    %2908 = vmatpush1.bf16.msra.mxu0 0
    %2909 = vmatprep.subr.bf16.mxu0 0
    %2910 = vmatpush1.bf16.msra.mxu0 0
    %2911 = vmatprep.subr.bf16.mxu0 0
    %2912 = vmatpush1.bf16.msra.mxu0 0
    %2913 = vmatprep.subr.bf16.mxu0 0
    %2914 = vmatpush1.bf16.msra.mxu0 0
    %2915 = vmatprep.subr.bf16.mxu0 0
    %2916 = vmatpush1.bf16.msra.mxu0 0
    %2917 = vmatprep.subr.bf16.mxu0 0
    %2918 = vmatpush1.bf16.msra.mxu0 0
    %2919 = vmatprep.subr.bf16.mxu0 0
    %2920 = vmatpush1.bf16.msra.mxu0 0
    %2921 = vmatprep.subr.bf16.mxu0 0
    %2922 = vmatpush1.bf16.msra.mxu0 0
    %2923 = vmatprep.mubr.bf16.mxu0 0
    %2924 = vmatmul.mubr.bf16.gmra.mrb[0].mxu0 0
    %v2925 = vpop.f32.mrb[0].mxu0
    %v2926 = vadd.f32 0.0, %v2925
    %v2927 = vpop.f32.mrb[0].mxu0
    %v2928 = vadd.f32 0.0, %v2927
    %v2929 = vpop.f32.mrb[0].mxu0
    %v2930 = vpop.f32.mrb[0].mxu0
    %2931 = vdwg.mxu0
    %v2964 = vunpack.c.l.b16 %v2604
    %v2965 = vunpack.c.h.b16 %v2604
    %v2966 = vunpack.c.l.b16 %v2605
    %v2967 = vunpack.c.h.b16 %v2605
    %v2968 = vunpack.c.l.b16 %v2606
    %v2969 = vunpack.c.h.b16 %v2606
    %v2970 = vunpack.c.l.b16 %v2607
    %v2971 = vunpack.c.h.b16 %v2607
    %v2972 = vunpack.c.l.b16 %v2608
    %v2973 = vunpack.c.h.b16 %v2608
    %v2974 = vunpack.c.l.b16 %v2609
    %v2975 = vunpack.c.h.b16 %v2609
    %v2976 = vunpack.c.l.b16 %v2610
    %v2977 = vunpack.c.h.b16 %v2610
    %v2978 = vunpack.c.l.b16 %v2611
    %v2979 = vunpack.c.h.b16 %v2611
    %v2980 = vunpack.c.l.b16 %v2612
    %v2981 = vunpack.c.h.b16 %v2612
    %v2982 = vunpack.c.l.b16 %v2613
    %v2983 = vunpack.c.h.b16 %v2613
    %v2984 = vunpack.c.l.b16 %v2614
    %v2985 = vunpack.c.h.b16 %v2614
    %v2986 = vunpack.c.l.b16 %v2615
    %v2987 = vunpack.c.h.b16 %v2615
    %v2988 = vunpack.c.l.b16 %v2616
    %v2989 = vunpack.c.h.b16 %v2616
    %v2990 = vunpack.c.l.b16 %v2617
    %v2991 = vunpack.c.h.b16 %v2617
    %v2992 = vunpack.c.l.b16 %v2618
    %v2993 = vunpack.c.h.b16 %v2618
    %v2994 = vunpack.c.l.b16 %v2619
    %v2995 = vunpack.c.h.b16 %v2619
    %v2996 = vunpack.c.l.b16 %v2620
    %v2997 = vunpack.c.h.b16 %v2620
    %v2998 = vunpack.c.l.b16 %v2621
    %v2999 = vunpack.c.h.b16 %v2621
    %v3000 = vunpack.c.l.b16 %v2622
    %v3001 = vunpack.c.h.b16 %v2622
    %v3002 = vunpack.c.l.b16 %v2623
    %v3003 = vunpack.c.h.b16 %v2623
    %v3004 = vunpack.c.l.b16 %v2624
    %v3005 = vunpack.c.h.b16 %v2624
    %v3006 = vunpack.c.l.b16 %v2625
    %v3007 = vunpack.c.h.b16 %v2625
    %v3008 = vunpack.c.l.b16 %v2626
    %v3009 = vunpack.c.h.b16 %v2626
    %v3010 = vunpack.c.l.b16 %v2627
    %v3011 = vunpack.c.h.b16 %v2627
    %v3012 = vunpack.c.l.b16 %v2628
    %v3013 = vunpack.c.h.b16 %v2628
    %v3014 = vunpack.c.l.b16 %v2629
    %v3015 = vunpack.c.h.b16 %v2629
    %v3016 = vunpack.c.l.b16 %v2630
    %v3017 = vunpack.c.h.b16 %v2630
    %v3018 = vunpack.c.l.b16 %v2631
    %v3019 = vunpack.c.h.b16 %v2631
    %v3020 = vunpack.c.l.b16 %v2632
    %v3021 = vunpack.c.h.b16 %v2632
    %v3022 = vunpack.c.l.b16 %v2633
    %v3023 = vunpack.c.h.b16 %v2633
    %v3024 = vunpack.c.l.b16 %v2634
    %v3025 = vunpack.c.h.b16 %v2634
    %v3026 = vunpack.c.l.b16 %v2635
    %v3027 = vunpack.c.h.b16 %v2635
    %v3028 = vpack.c.b16 %v2968, %v2964
    %v3029 = vpack.c.b16 %v2969, %v2965
    %v3030 = vpack.c.b16 %v2970, %v2966
    %v3031 = vpack.c.b16 %v2971, %v2967
    %v3032 = vpack.c.b16 %v2976, %v2972
    %v3033 = vpack.c.b16 %v2977, %v2973
    %v3034 = vpack.c.b16 %v2978, %v2974
    %v3035 = vpack.c.b16 %v2979, %v2975
    %v3036 = vpack.c.b16 %v2984, %v2980
    %v3037 = vpack.c.b16 %v2985, %v2981
    %v3038 = vpack.c.b16 %v2986, %v2982
    %v3039 = vpack.c.b16 %v2987, %v2983
    %v3040 = vpack.c.b16 %v2992, %v2988
    %v3041 = vpack.c.b16 %v2993, %v2989
    %v3042 = vpack.c.b16 %v2994, %v2990
    %v3043 = vpack.c.b16 %v2995, %v2991
    %v3044 = vpack.c.b16 %v3000, %v2996
    %v3045 = vpack.c.b16 %v3001, %v2997
    %v3046 = vpack.c.b16 %v3002, %v2998
    %v3047 = vpack.c.b16 %v3003, %v2999
    %v3048 = vpack.c.b16 %v3008, %v3004
    %v3049 = vpack.c.b16 %v3009, %v3005
    %v3050 = vpack.c.b16 %v3010, %v3006
    %v3051 = vpack.c.b16 %v3011, %v3007
    %v3052 = vpack.c.b16 %v3016, %v3012
    %v3053 = vpack.c.b16 %v3017, %v3013
    %v3054 = vpack.c.b16 %v3018, %v3014
    %v3055 = vpack.c.b16 %v3019, %v3015
    %v3056 = vpack.c.b16 %v3024, %v3020
    %v3057 = vpack.c.b16 %v3025, %v3021
    %v3058 = vpack.c.b16 %v3026, %v3022
    %v3059 = vpack.c.b16 %v3027, %v3023
    %3092 = vmatprep.subr.bf16.mxu0 %v3029
    %3093 = vmatpush1.bf16.msra.mxu0 %v3028
    %3094 = vmatprep.subr.bf16.mxu0 %v3033
    %3095 = vmatpush1.bf16.msra.mxu0 %v3032
    %3096 = vmatprep.subr.bf16.mxu0 %v3037
    %3097 = vmatpush1.bf16.msra.mxu0 %v3036
    %3098 = vmatprep.subr.bf16.mxu0 %v3041
    %3099 = vmatpush1.bf16.msra.mxu0 %v3040
    %3100 = vmatprep.subr.bf16.mxu0 %v3045
    %3101 = vmatpush1.bf16.msra.mxu0 %v3044
    %3102 = vmatprep.subr.bf16.mxu0 %v3049
    %3103 = vmatpush1.bf16.msra.mxu0 %v3048
    %3104 = vmatprep.subr.bf16.mxu0 %v3053
    %3105 = vmatpush1.bf16.msra.mxu0 %v3052
    %3106 = vmatprep.subr.bf16.mxu0 %v3057
    %3107 = vmatpush1.bf16.msra.mxu0 %v3056
    %3108 = vmatprep.subr.bf16.mxu0 0
    %3109 = vmatpush1.bf16.msra.mxu0 0
    %3110 = vmatprep.subr.bf16.mxu0 0
    %3111 = vmatpush1.bf16.msra.mxu0 0
    %3112 = vmatprep.subr.bf16.mxu0 0
    %3113 = vmatpush1.bf16.msra.mxu0 0
    %3114 = vmatprep.subr.bf16.mxu0 0
    %3115 = vmatpush1.bf16.msra.mxu0 0
    %3116 = vmatprep.subr.bf16.mxu0 0
    %3117 = vmatpush1.bf16.msra.mxu0 0
    %3118 = vmatprep.subr.bf16.mxu0 0
    %3119 = vmatpush1.bf16.msra.mxu0 0
    %3120 = vmatprep.subr.bf16.mxu0 0
    %3121 = vmatpush1.bf16.msra.mxu0 0
    %3122 = vmatprep.subr.bf16.mxu0 0
    %3123 = vmatpush1.bf16.msra.mxu0 0
    %3124 = vmatprep.mubr.bf16.mxu0 0
    %3125 = vmatmul.mubr.bf16.gmra.mrb[0].mxu0 0
    %v3126 = vpop.f32.mrb[0].mxu0
    %v3127 = vadd.f32 %v2885, %v3126
    %v3128 = vpop.f32.mrb[0].mxu0
    %v3129 = vadd.f32 %v2887, %v3128
    %v3130 = vpop.f32.mrb[0].mxu0
    %v3131 = vpop.f32.mrb[0].mxu0
    %3132 = vdwg.mxu0
    %3133 = vmatprep.subr.bf16.mxu0 %v3031
    %3134 = vmatpush1.bf16.msra.mxu0 %v3030
    %3135 = vmatprep.subr.bf16.mxu0 %v3035
    %3136 = vmatpush1.bf16.msra.mxu0 %v3034
    %3137 = vmatprep.subr.bf16.mxu0 %v3039
    %3138 = vmatpush1.bf16.msra.mxu0 %v3038
    %3139 = vmatprep.subr.bf16.mxu0 %v3043
    %3140 = vmatpush1.bf16.msra.mxu0 %v3042
    %3141 = vmatprep.subr.bf16.mxu0 %v3047
    %3142 = vmatpush1.bf16.msra.mxu0 %v3046
    %3143 = vmatprep.subr.bf16.mxu0 %v3051
    %3144 = vmatpush1.bf16.msra.mxu0 %v3050
    %3145 = vmatprep.subr.bf16.mxu0 %v3055
    %3146 = vmatpush1.bf16.msra.mxu0 %v3054
    %3147 = vmatprep.subr.bf16.mxu0 %v3059
    %3148 = vmatpush1.bf16.msra.mxu0 %v3058
    %3149 = vmatprep.subr.bf16.mxu0 0
    %3150 = vmatpush1.bf16.msra.mxu0 0
    %3151 = vmatprep.subr.bf16.mxu0 0
    %3152 = vmatpush1.bf16.msra.mxu0 0
    %3153 = vmatprep.subr.bf16.mxu0 0
    %3154 = vmatpush1.bf16.msra.mxu0 0
    %3155 = vmatprep.subr.bf16.mxu0 0
    %3156 = vmatpush1.bf16.msra.mxu0 0
    %3157 = vmatprep.subr.bf16.mxu0 0
    %3158 = vmatpush1.bf16.msra.mxu0 0
    %3159 = vmatprep.subr.bf16.mxu0 0
    %3160 = vmatpush1.bf16.msra.mxu0 0
    %3161 = vmatprep.subr.bf16.mxu0 0
    %3162 = vmatpush1.bf16.msra.mxu0 0
    %3163 = vmatprep.subr.bf16.mxu0 0
    %3164 = vmatpush1.bf16.msra.mxu0 0
    %3165 = vmatprep.mubr.bf16.mxu0 0
    %3166 = vmatmul.mubr.bf16.gmra.mrb[0].mxu0 0
    %v3167 = vpop.f32.mrb[0].mxu0
    %v3168 = vadd.f32 %v2926, %v3167
    %v3169 = vpop.f32.mrb[0].mxu0
    %v3170 = vadd.f32 %v2928, %v3169
    %v3171 = vpop.f32.mrb[0].mxu0
    %v3172 = vpop.f32.mrb[0].mxu0
    %3173 = vdwg.mxu0
    %v3174 = vadd.f32 %v3127, %v2673
    %v3175 = vadd.f32 %v3129, %v2677
    %v3176 = vadd.f32 %v3168, %v2681
    %v3177 = vadd.f32 %v3170, %v2685
    %v3178 = vsub.f32 0.0, %v3174
    %v3179 = vmul.f32 %v3178, 1.442695
    %v3180 = vpow.pop %v3179
    %v3181 = vadd.f32 %v3180, 1.0
    %v3182 = vrcp.pop %v3181
    %v3183 = vsub.f32 0.0, %v3175
    %v3184 = vmul.f32 %v3183, 1.442695
    %v3185 = vpow.pop %v3184
    %v3186 = vadd.f32 %v3185, 1.0
    %v3187 = vrcp.pop %v3186
    %v3188 = vtanh.pop %v3176
    %v3189 = vsub.f32 0.0, %v3177
    %v3190 = vmul.f32 %v3189, 1.442695
    %v3191 = vpow.pop %v3190
    %v3192 = vadd.f32 %v3191, 1.0
    %v3193 = vrcp.pop %v3192
    %v3194 = vmul.f32 %v3187, 0.0
    %v3195 = vmul.f32 %v3182, %v3188
    %v3196 = vadd.f32 %v3194, %v3195
    %v3197 = vtanh.pop %v3196
    %v3198 = vmul.f32 %v3193, %v3197
    %v3199 = vpack.c.bf16 %v3198, %v3198
    %3200 = vmatprep.subr.bf16.mxu0 0
    %3201 = vmatpush1.bf16.xpose.msra.mxu0 %v2601
    %3202 = vmatprep.subr.bf16.mxu0 0
    %3203 = vmatpush1.bf16.xpose.msra.mxu0 0
    %3204 = vmatprep.subr.bf16.mxu0 0
    %3205 = vmatpush1.bf16.xpose.msra.mxu0 0
    %3206 = vmatprep.subr.bf16.mxu0 0
    %3207 = vmatpush1.bf16.xpose.msra.mxu0 0
    %3208 = vmatprep.subr.bf16.mxu0 0
    %3209 = vmatpush1.bf16.xpose.msra.mxu0 0
    %3210 = vmatprep.subr.bf16.mxu0 0
    %3211 = vmatpush1.bf16.xpose.msra.mxu0 0
    %3212 = vmatprep.subr.bf16.mxu0 0
    %3213 = vmatpush1.bf16.xpose.msra.mxu0 0
    %3214 = vmatprep.subr.bf16.mxu0 0
    %3215 = vmatpush1.bf16.xpose.msra.mxu0 0
    %3216 = vmatprep.subr.bf16.mxu0 0
    %3217 = vmatpush1.bf16.xpose.msra.mxu0 0
    %3218 = vmatprep.subr.bf16.mxu0 0
    %3219 = vmatpush1.bf16.xpose.msra.mxu0 0
    %3220 = vmatprep.subr.bf16.mxu0 0
    %3221 = vmatpush1.bf16.xpose.msra.mxu0 0
    %3222 = vmatprep.subr.bf16.mxu0 0
    %3223 = vmatpush1.bf16.xpose.msra.mxu0 0
    %3224 = vmatprep.subr.bf16.mxu0 0
    %3225 = vmatpush1.bf16.xpose.msra.mxu0 0
    %3226 = vmatprep.subr.bf16.mxu0 0
    %3227 = vmatpush1.bf16.xpose.msra.mxu0 0
    %3228 = vmatprep.subr.bf16.mxu0 0
    %3229 = vmatpush1.bf16.xpose.msra.mxu0 0
    %3230 = vmatprep.subr.bf16.mxu0 0
    %3231 = vmatpush1.bf16.xpose.msra.mxu0 0
    %3232 = vmatprep.mubr.bf16.mxu0 0
    %3233 = vmatmul.mubr.bf16.gmra.mrb[0].mxu0 %v3199
    %v3234 = vpop.f32.mrb[0].mxu0
    %v3235 = vadd.f32 0.0, %v3234
    %v3236 = vpop.f32.mrb[0].mxu0
    %v3237 = vpop.f32.mrb[0].mxu0
    %v3238 = vpop.f32.mrb[0].mxu0
    %3239 = vdwg.mxu0
    %v3240 = vsel %vm2603, %v3235, -1e+30
    %vm3241 = vcmask 123904
    %v3242 = vsel %vm3241, %v3240, -inf
    %3243 = vmax.xlane.f32.xlu0 %v3242
    %v3244 = vpop.xlane.xlu0 %3243
    %v3245 = vsub.f32 %v3240, %v3244
    %v3246 = vmul.f32 %v3245, 1.442695
    %v3247 = vpow.pop %v3246
    %v3248 = vmul.f32 %v2602, %v3247
    %v3249 = vsel %vm3241, %v3248, 0.0
    %3250 = vadd.xlane.f32.xlu0 %v3249
    %v3251 = vpop.xlane.xlu0 %3250
    %v3252 = vmax.f32 %v3251, 1e-20
    %v3253 = vpack.c.bf16 %v3248, %v3248
    %v3255 = vsel %vm1025, %v3253, 0
    %3257 = vmatprep.subr.bf16.mxu0 0
    %3258 = vmatpush1.bf16.msra.mxu0 %v2601
    %3259 = vmatprep.subr.bf16.mxu0 0
    %3260 = vmatpush1.bf16.msra.mxu0 0
    %3261 = vmatprep.subr.bf16.mxu0 0
    %3262 = vmatpush1.bf16.msra.mxu0 0
    %3263 = vmatprep.subr.bf16.mxu0 0
    %3264 = vmatpush1.bf16.msra.mxu0 0
    %3265 = vmatprep.subr.bf16.mxu0 0
    %3266 = vmatpush1.bf16.msra.mxu0 0
    %3267 = vmatprep.subr.bf16.mxu0 0
    %3268 = vmatpush1.bf16.msra.mxu0 0
    %3269 = vmatprep.subr.bf16.mxu0 0
    %3270 = vmatpush1.bf16.msra.mxu0 0
    %3271 = vmatprep.subr.bf16.mxu0 0
    %3272 = vmatpush1.bf16.msra.mxu0 0
    %3273 = vmatprep.subr.bf16.mxu0 0
    %3274 = vmatpush1.bf16.msra.mxu0 0
    %3275 = vmatprep.subr.bf16.mxu0 0
    %3276 = vmatpush1.bf16.msra.mxu0 0
    %3277 = vmatprep.subr.bf16.mxu0 0
    %3278 = vmatpush1.bf16.msra.mxu0 0
    %3279 = vmatprep.subr.bf16.mxu0 0
    %3280 = vmatpush1.bf16.msra.mxu0 0
    %3281 = vmatprep.subr.bf16.mxu0 0
    %3282 = vmatpush1.bf16.msra.mxu0 0
    %3283 = vmatprep.subr.bf16.mxu0 0
    %3284 = vmatpush1.bf16.msra.mxu0 0
    %3285 = vmatprep.subr.bf16.mxu0 0
    %3286 = vmatpush1.bf16.msra.mxu0 0
    %3287 = vmatprep.subr.bf16.mxu0 0
    %3288 = vmatpush1.bf16.msra.mxu0 0
    %3289 = vmatprep.mubr.bf16.mxu0 0
    %3290 = vmatmul.mubr.bf16.gmra.mrb[0].mxu0 %v3255
    %v3291 = vpop.f32.mrb[0].mxu0
    %v3292 = vadd.f32 0.0, %v3291
    %v3293 = vpop.f32.mrb[0].mxu0
    %v3294 = vpop.f32.mrb[0].mxu0
    %v3295 = vpop.f32.mrb[0].mxu0
    %3296 = vdwg.mxu0
    %v3297 = vrcp.pop %v3252
    %v3298 = vmul.f32 %v3292, %v3297
    %v3299 = vpack.c.bf16 %v3298, %v3298
    %3300 = vmatprep.subr.bf16.mxu0 %v2787
    %3301 = vmatpush1.bf16.msra.mxu0 %v2786
    %3302 = vmatprep.subr.bf16.mxu0 %v2791
    %3303 = vmatpush1.bf16.msra.mxu0 %v2790
    %3304 = vmatprep.subr.bf16.mxu0 %v2795
    %3305 = vmatpush1.bf16.msra.mxu0 %v2794
    %3306 = vmatprep.subr.bf16.mxu0 %v2799
    %3307 = vmatpush1.bf16.msra.mxu0 %v2798
    %3308 = vmatprep.subr.bf16.mxu0 %v2803
    %3309 = vmatpush1.bf16.msra.mxu0 %v2802
    %3310 = vmatprep.subr.bf16.mxu0 %v2807
    %3311 = vmatpush1.bf16.msra.mxu0 %v2806
    %3312 = vmatprep.subr.bf16.mxu0 %v2811
    %3313 = vmatpush1.bf16.msra.mxu0 %v2810
    %3314 = vmatprep.subr.bf16.mxu0 %v2815
    %3315 = vmatpush1.bf16.msra.mxu0 %v2814
    %3316 = vmatprep.subr.bf16.mxu0 0
    %3317 = vmatpush1.bf16.msra.mxu0 0
    %3318 = vmatprep.subr.bf16.mxu0 0
    %3319 = vmatpush1.bf16.msra.mxu0 0
    %3320 = vmatprep.subr.bf16.mxu0 0
    %3321 = vmatpush1.bf16.msra.mxu0 0
    %3322 = vmatprep.subr.bf16.mxu0 0
    %3323 = vmatpush1.bf16.msra.mxu0 0
    %3324 = vmatprep.subr.bf16.mxu0 0
    %3325 = vmatpush1.bf16.msra.mxu0 0
    %3326 = vmatprep.subr.bf16.mxu0 0
    %3327 = vmatpush1.bf16.msra.mxu0 0
    %3328 = vmatprep.subr.bf16.mxu0 0
    %3329 = vmatpush1.bf16.msra.mxu0 0
    %3330 = vmatprep.subr.bf16.mxu0 0
    %3331 = vmatpush1.bf16.msra.mxu0 0
    %3332 = vmatprep.mubr.bf16.mxu0 0
    %3333 = vmatmul.mubr.bf16.gmra.mrb[0].mxu0 %v3299
    %v3334 = vpop.f32.mrb[0].mxu0
    %v3335 = vadd.f32 0.0, %v3334
    %v3336 = vpop.f32.mrb[0].mxu0
    %v3337 = vadd.f32 0.0, %v3336
    %v3338 = vpop.f32.mrb[0].mxu0
    %v3339 = vpop.f32.mrb[0].mxu0
    %3340 = vdwg.mxu0
    %3341 = vmatprep.subr.bf16.mxu0 %v2789
    %3342 = vmatpush1.bf16.msra.mxu0 %v2788
    %3343 = vmatprep.subr.bf16.mxu0 %v2793
    %3344 = vmatpush1.bf16.msra.mxu0 %v2792
    %3345 = vmatprep.subr.bf16.mxu0 %v2797
    %3346 = vmatpush1.bf16.msra.mxu0 %v2796
    %3347 = vmatprep.subr.bf16.mxu0 %v2801
    %3348 = vmatpush1.bf16.msra.mxu0 %v2800
    %3349 = vmatprep.subr.bf16.mxu0 %v2805
    %3350 = vmatpush1.bf16.msra.mxu0 %v2804
    %3351 = vmatprep.subr.bf16.mxu0 %v2809
    %3352 = vmatpush1.bf16.msra.mxu0 %v2808
    %3353 = vmatprep.subr.bf16.mxu0 %v2813
    %3354 = vmatpush1.bf16.msra.mxu0 %v2812
    %3355 = vmatprep.subr.bf16.mxu0 %v2817
    %3356 = vmatpush1.bf16.msra.mxu0 %v2816
    %3357 = vmatprep.subr.bf16.mxu0 0
    %3358 = vmatpush1.bf16.msra.mxu0 0
    %3359 = vmatprep.subr.bf16.mxu0 0
    %3360 = vmatpush1.bf16.msra.mxu0 0
    %3361 = vmatprep.subr.bf16.mxu0 0
    %3362 = vmatpush1.bf16.msra.mxu0 0
    %3363 = vmatprep.subr.bf16.mxu0 0
    %3364 = vmatpush1.bf16.msra.mxu0 0
    %3365 = vmatprep.subr.bf16.mxu0 0
    %3366 = vmatpush1.bf16.msra.mxu0 0
    %3367 = vmatprep.subr.bf16.mxu0 0
    %3368 = vmatpush1.bf16.msra.mxu0 0
    %3369 = vmatprep.subr.bf16.mxu0 0
    %3370 = vmatpush1.bf16.msra.mxu0 0
    %3371 = vmatprep.subr.bf16.mxu0 0
    %3372 = vmatpush1.bf16.msra.mxu0 0
    %3373 = vmatprep.mubr.bf16.mxu0 0
    %3374 = vmatmul.mubr.bf16.gmra.mrb[0].mxu0 %v3299
    %v3375 = vpop.f32.mrb[0].mxu0
    %v3376 = vadd.f32 0.0, %v3375
    %v3377 = vpop.f32.mrb[0].mxu0
    %v3378 = vadd.f32 0.0, %v3377
    %v3379 = vpop.f32.mrb[0].mxu0
    %v3380 = vpop.f32.mrb[0].mxu0
    %3381 = vdwg.mxu0
    %3382 = vmatprep.subr.bf16.mxu0 %v3029
    %3383 = vmatpush1.bf16.msra.mxu0 %v3028
    %3384 = vmatprep.subr.bf16.mxu0 %v3033
    %3385 = vmatpush1.bf16.msra.mxu0 %v3032
    %3386 = vmatprep.subr.bf16.mxu0 %v3037
    %3387 = vmatpush1.bf16.msra.mxu0 %v3036
    %3388 = vmatprep.subr.bf16.mxu0 %v3041
    %3389 = vmatpush1.bf16.msra.mxu0 %v3040
    %3390 = vmatprep.subr.bf16.mxu0 %v3045
    %3391 = vmatpush1.bf16.msra.mxu0 %v3044
    %3392 = vmatprep.subr.bf16.mxu0 %v3049
    %3393 = vmatpush1.bf16.msra.mxu0 %v3048
    %3394 = vmatprep.subr.bf16.mxu0 %v3053
    %3395 = vmatpush1.bf16.msra.mxu0 %v3052
    %3396 = vmatprep.subr.bf16.mxu0 %v3057
    %3397 = vmatpush1.bf16.msra.mxu0 %v3056
    %3398 = vmatprep.subr.bf16.mxu0 0
    %3399 = vmatpush1.bf16.msra.mxu0 0
    %3400 = vmatprep.subr.bf16.mxu0 0
    %3401 = vmatpush1.bf16.msra.mxu0 0
    %3402 = vmatprep.subr.bf16.mxu0 0
    %3403 = vmatpush1.bf16.msra.mxu0 0
    %3404 = vmatprep.subr.bf16.mxu0 0
    %3405 = vmatpush1.bf16.msra.mxu0 0
    %3406 = vmatprep.subr.bf16.mxu0 0
    %3407 = vmatpush1.bf16.msra.mxu0 0
    %3408 = vmatprep.subr.bf16.mxu0 0
    %3409 = vmatpush1.bf16.msra.mxu0 0
    %3410 = vmatprep.subr.bf16.mxu0 0
    %3411 = vmatpush1.bf16.msra.mxu0 0
    %3412 = vmatprep.subr.bf16.mxu0 0
    %3413 = vmatpush1.bf16.msra.mxu0 0
    %3414 = vmatprep.mubr.bf16.mxu0 0
    %3415 = vmatmul.mubr.bf16.gmra.mrb[0].mxu0 %v3199
    %v3416 = vpop.f32.mrb[0].mxu0
    %v3417 = vadd.f32 %v3335, %v3416
    %v3418 = vpop.f32.mrb[0].mxu0
    %v3419 = vadd.f32 %v3337, %v3418
    %v3420 = vpop.f32.mrb[0].mxu0
    %v3421 = vpop.f32.mrb[0].mxu0
    %3422 = vdwg.mxu0
    %3423 = vmatprep.subr.bf16.mxu0 %v3031
    %3424 = vmatpush1.bf16.msra.mxu0 %v3030
    %3425 = vmatprep.subr.bf16.mxu0 %v3035
    %3426 = vmatpush1.bf16.msra.mxu0 %v3034
    %3427 = vmatprep.subr.bf16.mxu0 %v3039
    %3428 = vmatpush1.bf16.msra.mxu0 %v3038
    %3429 = vmatprep.subr.bf16.mxu0 %v3043
    %3430 = vmatpush1.bf16.msra.mxu0 %v3042
    %3431 = vmatprep.subr.bf16.mxu0 %v3047
    %3432 = vmatpush1.bf16.msra.mxu0 %v3046
    %3433 = vmatprep.subr.bf16.mxu0 %v3051
    %3434 = vmatpush1.bf16.msra.mxu0 %v3050
    %3435 = vmatprep.subr.bf16.mxu0 %v3055
    %3436 = vmatpush1.bf16.msra.mxu0 %v3054
    %3437 = vmatprep.subr.bf16.mxu0 %v3059
    %3438 = vmatpush1.bf16.msra.mxu0 %v3058
    %3439 = vmatprep.subr.bf16.mxu0 0
    %3440 = vmatpush1.bf16.msra.mxu0 0
    %3441 = vmatprep.subr.bf16.mxu0 0
    %3442 = vmatpush1.bf16.msra.mxu0 0
    %3443 = vmatprep.subr.bf16.mxu0 0
    %3444 = vmatpush1.bf16.msra.mxu0 0
    %3445 = vmatprep.subr.bf16.mxu0 0
    %3446 = vmatpush1.bf16.msra.mxu0 0
    %3447 = vmatprep.subr.bf16.mxu0 0
    %3448 = vmatpush1.bf16.msra.mxu0 0
    %3449 = vmatprep.subr.bf16.mxu0 0
    %3450 = vmatpush1.bf16.msra.mxu0 0
    %3451 = vmatprep.subr.bf16.mxu0 0
    %3452 = vmatpush1.bf16.msra.mxu0 0
    %3453 = vmatprep.subr.bf16.mxu0 0
    %3454 = vmatpush1.bf16.msra.mxu0 0
    %3455 = vmatprep.mubr.bf16.mxu0 0
    %3456 = vmatmul.mubr.bf16.gmra.mrb[0].mxu0 %v3199
    %v3457 = vpop.f32.mrb[0].mxu0
    %v3458 = vadd.f32 %v3376, %v3457
    %v3459 = vpop.f32.mrb[0].mxu0
    %v3460 = vadd.f32 %v3378, %v3459
    %v3461 = vpop.f32.mrb[0].mxu0
    %v3462 = vpop.f32.mrb[0].mxu0
    %3463 = vdwg.mxu0
    %v3464 = vadd.f32 %v3417, %v2673
    %v3465 = vadd.f32 %v3419, %v2677
    %v3466 = vadd.f32 %v3458, %v2681
    %v3467 = vadd.f32 %v3460, %v2685
    %v3468 = vsub.f32 0.0, %v3464
    %v3469 = vmul.f32 %v3468, 1.442695
    %v3470 = vpow.pop %v3469
    %v3471 = vadd.f32 %v3470, 1.0
    %v3472 = vrcp.pop %v3471
    %v3473 = vsub.f32 0.0, %v3465
    %v3474 = vmul.f32 %v3473, 1.442695
    %v3475 = vpow.pop %v3474
    %v3476 = vadd.f32 %v3475, 1.0
    %v3477 = vrcp.pop %v3476
    %v3478 = vtanh.pop %v3466
    %v3479 = vsub.f32 0.0, %v3467
    %v3480 = vmul.f32 %v3479, 1.442695
    %v3481 = vpow.pop %v3480
    %v3482 = vadd.f32 %v3481, 1.0
    %v3483 = vrcp.pop %v3482
    %v3484 = vmul.f32 %v3477, %v3196
    %v3485 = vmul.f32 %v3472, %v3478
    %v3486 = vadd.f32 %v3484, %v3485
    %v3487 = vtanh.pop %v3486
    %v3488 = vmul.f32 %v3483, %v3487
    %v3489 = vpack.c.bf16 %v3488, %v3488
    %3490 = vmatprep.subr.bf16.mxu0 0
    %3491 = vmatpush1.bf16.xpose.msra.mxu0 %v2601
    %3492 = vmatprep.subr.bf16.mxu0 0
    %3493 = vmatpush1.bf16.xpose.msra.mxu0 0
    %3494 = vmatprep.subr.bf16.mxu0 0
    %3495 = vmatpush1.bf16.xpose.msra.mxu0 0
    %3496 = vmatprep.subr.bf16.mxu0 0
    %3497 = vmatpush1.bf16.xpose.msra.mxu0 0
    %3498 = vmatprep.subr.bf16.mxu0 0
    %3499 = vmatpush1.bf16.xpose.msra.mxu0 0
    %3500 = vmatprep.subr.bf16.mxu0 0
    %3501 = vmatpush1.bf16.xpose.msra.mxu0 0
    %3502 = vmatprep.subr.bf16.mxu0 0
    %3503 = vmatpush1.bf16.xpose.msra.mxu0 0
    %3504 = vmatprep.subr.bf16.mxu0 0
    %3505 = vmatpush1.bf16.xpose.msra.mxu0 0
    %3506 = vmatprep.subr.bf16.mxu0 0
    %3507 = vmatpush1.bf16.xpose.msra.mxu0 0
    %3508 = vmatprep.subr.bf16.mxu0 0
    %3509 = vmatpush1.bf16.xpose.msra.mxu0 0
    %3510 = vmatprep.subr.bf16.mxu0 0
    %3511 = vmatpush1.bf16.xpose.msra.mxu0 0
    %3512 = vmatprep.subr.bf16.mxu0 0
    %3513 = vmatpush1.bf16.xpose.msra.mxu0 0
    %3514 = vmatprep.subr.bf16.mxu0 0
    %3515 = vmatpush1.bf16.xpose.msra.mxu0 0
    %3516 = vmatprep.subr.bf16.mxu0 0
    %3517 = vmatpush1.bf16.xpose.msra.mxu0 0
    %3518 = vmatprep.subr.bf16.mxu0 0
    %3519 = vmatpush1.bf16.xpose.msra.mxu0 0
    %3520 = vmatprep.subr.bf16.mxu0 0
    %3521 = vmatpush1.bf16.xpose.msra.mxu0 0
    %3522 = vmatprep.mubr.bf16.mxu0 0
    %3523 = vmatmul.mubr.bf16.gmra.mrb[0].mxu0 %v3489
    %v3524 = vpop.f32.mrb[0].mxu0
    %v3525 = vadd.f32 0.0, %v3524
    %v3526 = vpop.f32.mrb[0].mxu0
    %v3527 = vpop.f32.mrb[0].mxu0
    %v3528 = vpop.f32.mrb[0].mxu0
    %3529 = vdwg.mxu0
    %v3530 = vsel %vm2603, %v3525, -1e+30
    %v3531 = vsel %vm3241, %v3530, -inf
    %3532 = vmax.xlane.f32.xlu0 %v3531
    %v3533 = vpop.xlane.xlu0 %3532
    %v3534 = vsub.f32 %v3530, %v3533
    %v3535 = vmul.f32 %v3534, 1.442695
    %v3536 = vpow.pop %v3535
    %v3537 = vmul.f32 %v2602, %v3536
    %v3538 = vsel %vm3241, %v3537, 0.0
    %3539 = vadd.xlane.f32.xlu0 %v3538
    %v3540 = vpop.xlane.xlu0 %3539
    %v3541 = vmax.f32 %v3540, 1e-20
    %v3542 = vpack.c.bf16 %v3537, %v3537
    %v3544 = vsel %vm1025, %v3542, 0
    %3546 = vmatprep.subr.bf16.mxu0 0
    %3547 = vmatpush1.bf16.msra.mxu0 %v2601
    %3548 = vmatprep.subr.bf16.mxu0 0
    %3549 = vmatpush1.bf16.msra.mxu0 0
    %3550 = vmatprep.subr.bf16.mxu0 0
    %3551 = vmatpush1.bf16.msra.mxu0 0
    %3552 = vmatprep.subr.bf16.mxu0 0
    %3553 = vmatpush1.bf16.msra.mxu0 0
    %3554 = vmatprep.subr.bf16.mxu0 0
    %3555 = vmatpush1.bf16.msra.mxu0 0
    %3556 = vmatprep.subr.bf16.mxu0 0
    %3557 = vmatpush1.bf16.msra.mxu0 0
    %3558 = vmatprep.subr.bf16.mxu0 0
    %3559 = vmatpush1.bf16.msra.mxu0 0
    %3560 = vmatprep.subr.bf16.mxu0 0
    %3561 = vmatpush1.bf16.msra.mxu0 0
    %3562 = vmatprep.subr.bf16.mxu0 0
    %3563 = vmatpush1.bf16.msra.mxu0 0
    %3564 = vmatprep.subr.bf16.mxu0 0
    %3565 = vmatpush1.bf16.msra.mxu0 0
    %3566 = vmatprep.subr.bf16.mxu0 0
    %3567 = vmatpush1.bf16.msra.mxu0 0
    %3568 = vmatprep.subr.bf16.mxu0 0
    %3569 = vmatpush1.bf16.msra.mxu0 0
    %3570 = vmatprep.subr.bf16.mxu0 0
    %3571 = vmatpush1.bf16.msra.mxu0 0
    %3572 = vmatprep.subr.bf16.mxu0 0
    %3573 = vmatpush1.bf16.msra.mxu0 0
    %3574 = vmatprep.subr.bf16.mxu0 0
    %3575 = vmatpush1.bf16.msra.mxu0 0
    %3576 = vmatprep.subr.bf16.mxu0 0
    %3577 = vmatpush1.bf16.msra.mxu0 0
    %3578 = vmatprep.mubr.bf16.mxu0 0
    %3579 = vmatmul.mubr.bf16.gmra.mrb[0].mxu0 %v3544
    %v3580 = vpop.f32.mrb[0].mxu0
    %v3581 = vadd.f32 0.0, %v3580
    %v3582 = vpop.f32.mrb[0].mxu0
    %v3583 = vpop.f32.mrb[0].mxu0
    %v3584 = vpop.f32.mrb[0].mxu0
    %3585 = vdwg.mxu0
    %v3586 = vrcp.pop %v3541
    %v3587 = vmul.f32 %v3581, %v3586
    %v3588 = vpack.c.bf16 %v3587, %v3587
    %3589 = vmatprep.subr.bf16.mxu0 %v2787
    %3590 = vmatpush1.bf16.msra.mxu0 %v2786
    %3591 = vmatprep.subr.bf16.mxu0 %v2791
    %3592 = vmatpush1.bf16.msra.mxu0 %v2790
    %3593 = vmatprep.subr.bf16.mxu0 %v2795
    %3594 = vmatpush1.bf16.msra.mxu0 %v2794
    %3595 = vmatprep.subr.bf16.mxu0 %v2799
    %3596 = vmatpush1.bf16.msra.mxu0 %v2798
    %3597 = vmatprep.subr.bf16.mxu0 %v2803
    %3598 = vmatpush1.bf16.msra.mxu0 %v2802
    %3599 = vmatprep.subr.bf16.mxu0 %v2807
    %3600 = vmatpush1.bf16.msra.mxu0 %v2806
    %3601 = vmatprep.subr.bf16.mxu0 %v2811
    %3602 = vmatpush1.bf16.msra.mxu0 %v2810
    %3603 = vmatprep.subr.bf16.mxu0 %v2815
    %3604 = vmatpush1.bf16.msra.mxu0 %v2814
    %3605 = vmatprep.subr.bf16.mxu0 0
    %3606 = vmatpush1.bf16.msra.mxu0 0
    %3607 = vmatprep.subr.bf16.mxu0 0
    %3608 = vmatpush1.bf16.msra.mxu0 0
    %3609 = vmatprep.subr.bf16.mxu0 0
    %3610 = vmatpush1.bf16.msra.mxu0 0
    %3611 = vmatprep.subr.bf16.mxu0 0
    %3612 = vmatpush1.bf16.msra.mxu0 0
    %3613 = vmatprep.subr.bf16.mxu0 0
    %3614 = vmatpush1.bf16.msra.mxu0 0
    %3615 = vmatprep.subr.bf16.mxu0 0
    %3616 = vmatpush1.bf16.msra.mxu0 0
    %3617 = vmatprep.subr.bf16.mxu0 0
    %3618 = vmatpush1.bf16.msra.mxu0 0
    %3619 = vmatprep.subr.bf16.mxu0 0
    %3620 = vmatpush1.bf16.msra.mxu0 0
    %3621 = vmatprep.mubr.bf16.mxu0 0
    %3622 = vmatmul.mubr.bf16.gmra.mrb[0].mxu0 %v3588
    %v3623 = vpop.f32.mrb[0].mxu0
    %v3624 = vadd.f32 0.0, %v3623
    %v3625 = vpop.f32.mrb[0].mxu0
    %v3626 = vadd.f32 0.0, %v3625
    %v3627 = vpop.f32.mrb[0].mxu0
    %v3628 = vpop.f32.mrb[0].mxu0
    %3629 = vdwg.mxu0
    %3630 = vmatprep.subr.bf16.mxu0 %v2789
    %3631 = vmatpush1.bf16.msra.mxu0 %v2788
    %3632 = vmatprep.subr.bf16.mxu0 %v2793
    %3633 = vmatpush1.bf16.msra.mxu0 %v2792
    %3634 = vmatprep.subr.bf16.mxu0 %v2797
    %3635 = vmatpush1.bf16.msra.mxu0 %v2796
    %3636 = vmatprep.subr.bf16.mxu0 %v2801
    %3637 = vmatpush1.bf16.msra.mxu0 %v2800
    %3638 = vmatprep.subr.bf16.mxu0 %v2805
    %3639 = vmatpush1.bf16.msra.mxu0 %v2804
    %3640 = vmatprep.subr.bf16.mxu0 %v2809
    %3641 = vmatpush1.bf16.msra.mxu0 %v2808
    %3642 = vmatprep.subr.bf16.mxu0 %v2813
    %3643 = vmatpush1.bf16.msra.mxu0 %v2812
    %3644 = vmatprep.subr.bf16.mxu0 %v2817
    %3645 = vmatpush1.bf16.msra.mxu0 %v2816
    %3646 = vmatprep.subr.bf16.mxu0 0
    %3647 = vmatpush1.bf16.msra.mxu0 0
    %3648 = vmatprep.subr.bf16.mxu0 0
    %3649 = vmatpush1.bf16.msra.mxu0 0
    %3650 = vmatprep.subr.bf16.mxu0 0
    %3651 = vmatpush1.bf16.msra.mxu0 0
    %3652 = vmatprep.subr.bf16.mxu0 0
    %3653 = vmatpush1.bf16.msra.mxu0 0
    %3654 = vmatprep.subr.bf16.mxu0 0
    %3655 = vmatpush1.bf16.msra.mxu0 0
    %3656 = vmatprep.subr.bf16.mxu0 0
    %3657 = vmatpush1.bf16.msra.mxu0 0
    %3658 = vmatprep.subr.bf16.mxu0 0
    %3659 = vmatpush1.bf16.msra.mxu0 0
    %3660 = vmatprep.subr.bf16.mxu0 0
    %3661 = vmatpush1.bf16.msra.mxu0 0
    %3662 = vmatprep.mubr.bf16.mxu0 0
    %3663 = vmatmul.mubr.bf16.gmra.mrb[0].mxu0 %v3588
    %v3664 = vpop.f32.mrb[0].mxu0
    %v3665 = vadd.f32 0.0, %v3664
    %v3666 = vpop.f32.mrb[0].mxu0
    %v3667 = vadd.f32 0.0, %v3666
    %v3668 = vpop.f32.mrb[0].mxu0
    %v3669 = vpop.f32.mrb[0].mxu0
    %3670 = vdwg.mxu0
    %3671 = vmatprep.subr.bf16.mxu0 %v3029
    %3672 = vmatpush1.bf16.msra.mxu0 %v3028
    %3673 = vmatprep.subr.bf16.mxu0 %v3033
    %3674 = vmatpush1.bf16.msra.mxu0 %v3032
    %3675 = vmatprep.subr.bf16.mxu0 %v3037
    %3676 = vmatpush1.bf16.msra.mxu0 %v3036
    %3677 = vmatprep.subr.bf16.mxu0 %v3041
    %3678 = vmatpush1.bf16.msra.mxu0 %v3040
    %3679 = vmatprep.subr.bf16.mxu0 %v3045
    %3680 = vmatpush1.bf16.msra.mxu0 %v3044
    %3681 = vmatprep.subr.bf16.mxu0 %v3049
    %3682 = vmatpush1.bf16.msra.mxu0 %v3048
    %3683 = vmatprep.subr.bf16.mxu0 %v3053
    %3684 = vmatpush1.bf16.msra.mxu0 %v3052
    %3685 = vmatprep.subr.bf16.mxu0 %v3057
    %3686 = vmatpush1.bf16.msra.mxu0 %v3056
    %3687 = vmatprep.subr.bf16.mxu0 0
    %3688 = vmatpush1.bf16.msra.mxu0 0
    %3689 = vmatprep.subr.bf16.mxu0 0
    %3690 = vmatpush1.bf16.msra.mxu0 0
    %3691 = vmatprep.subr.bf16.mxu0 0
    %3692 = vmatpush1.bf16.msra.mxu0 0
    %3693 = vmatprep.subr.bf16.mxu0 0
    %3694 = vmatpush1.bf16.msra.mxu0 0
    %3695 = vmatprep.subr.bf16.mxu0 0
    %3696 = vmatpush1.bf16.msra.mxu0 0
    %3697 = vmatprep.subr.bf16.mxu0 0
    %3698 = vmatpush1.bf16.msra.mxu0 0
    %3699 = vmatprep.subr.bf16.mxu0 0
    %3700 = vmatpush1.bf16.msra.mxu0 0
    %3701 = vmatprep.subr.bf16.mxu0 0
    %3702 = vmatpush1.bf16.msra.mxu0 0
    %3703 = vmatprep.mubr.bf16.mxu0 0
    %3704 = vmatmul.mubr.bf16.gmra.mrb[0].mxu0 %v3489
    %v3705 = vpop.f32.mrb[0].mxu0
    %v3706 = vadd.f32 %v3624, %v3705
    %v3707 = vpop.f32.mrb[0].mxu0
    %v3708 = vadd.f32 %v3626, %v3707
    %v3709 = vpop.f32.mrb[0].mxu0
    %v3710 = vpop.f32.mrb[0].mxu0
    %3711 = vdwg.mxu0
    %3712 = vmatprep.subr.bf16.mxu0 %v3031
    %3713 = vmatpush1.bf16.msra.mxu0 %v3030
    %3714 = vmatprep.subr.bf16.mxu0 %v3035
    %3715 = vmatpush1.bf16.msra.mxu0 %v3034
    %3716 = vmatprep.subr.bf16.mxu0 %v3039
    %3717 = vmatpush1.bf16.msra.mxu0 %v3038
    %3718 = vmatprep.subr.bf16.mxu0 %v3043
    %3719 = vmatpush1.bf16.msra.mxu0 %v3042
    %3720 = vmatprep.subr.bf16.mxu0 %v3047
    %3721 = vmatpush1.bf16.msra.mxu0 %v3046
    %3722 = vmatprep.subr.bf16.mxu0 %v3051
    %3723 = vmatpush1.bf16.msra.mxu0 %v3050
    %3724 = vmatprep.subr.bf16.mxu0 %v3055
    %3725 = vmatpush1.bf16.msra.mxu0 %v3054
    %3726 = vmatprep.subr.bf16.mxu0 %v3059
    %3727 = vmatpush1.bf16.msra.mxu0 %v3058
    %3728 = vmatprep.subr.bf16.mxu0 0
    %3729 = vmatpush1.bf16.msra.mxu0 0
    %3730 = vmatprep.subr.bf16.mxu0 0
    %3731 = vmatpush1.bf16.msra.mxu0 0
    %3732 = vmatprep.subr.bf16.mxu0 0
    %3733 = vmatpush1.bf16.msra.mxu0 0
    %3734 = vmatprep.subr.bf16.mxu0 0
    %3735 = vmatpush1.bf16.msra.mxu0 0
    %3736 = vmatprep.subr.bf16.mxu0 0
    %3737 = vmatpush1.bf16.msra.mxu0 0
    %3738 = vmatprep.subr.bf16.mxu0 0
    %3739 = vmatpush1.bf16.msra.mxu0 0
    %3740 = vmatprep.subr.bf16.mxu0 0
    %3741 = vmatpush1.bf16.msra.mxu0 0
    %3742 = vmatprep.subr.bf16.mxu0 0
    %3743 = vmatpush1.bf16.msra.mxu0 0
    %3744 = vmatprep.mubr.bf16.mxu0 0
    %3745 = vmatmul.mubr.bf16.gmra.mrb[0].mxu0 %v3489
    %v3746 = vpop.f32.mrb[0].mxu0
    %v3747 = vadd.f32 %v3665, %v3746
    %v3748 = vpop.f32.mrb[0].mxu0
    %v3749 = vadd.f32 %v3667, %v3748
    %v3750 = vpop.f32.mrb[0].mxu0
    %v3751 = vpop.f32.mrb[0].mxu0
    %3752 = vdwg.mxu0
    %v3753 = vadd.f32 %v3706, %v2673
    %v3754 = vadd.f32 %v3708, %v2677
    %v3755 = vadd.f32 %v3747, %v2681
    %v3756 = vadd.f32 %v3749, %v2685
    %v3757 = vsub.f32 0.0, %v3753
    %v3758 = vmul.f32 %v3757, 1.442695
    %v3759 = vpow.pop %v3758
    %v3760 = vadd.f32 %v3759, 1.0
    %v3761 = vrcp.pop %v3760
    %v3762 = vsub.f32 0.0, %v3754
    %v3763 = vmul.f32 %v3762, 1.442695
    %v3764 = vpow.pop %v3763
    %v3765 = vadd.f32 %v3764, 1.0
    %v3766 = vrcp.pop %v3765
    %v3767 = vtanh.pop %v3755
    %v3768 = vsub.f32 0.0, %v3756
    %v3769 = vmul.f32 %v3768, 1.442695
    %v3770 = vpow.pop %v3769
    %v3771 = vadd.f32 %v3770, 1.0
    %v3772 = vrcp.pop %v3771
    %v3773 = vmul.f32 %v3766, %v3486
    %v3774 = vmul.f32 %v3761, %v3767
    %v3775 = vadd.f32 %v3773, %v3774
    %v3776 = vtanh.pop %v3775
    %v3777 = vmul.f32 %v3772, %v3776
    %v3778 = vpack.c.bf16 %v3777, %v3777
    %3779 = vmatprep.subr.bf16.mxu0 0
    %3780 = vmatpush1.bf16.xpose.msra.mxu0 %v2601
    %3781 = vmatprep.subr.bf16.mxu0 0
    %3782 = vmatpush1.bf16.xpose.msra.mxu0 0
    %3783 = vmatprep.subr.bf16.mxu0 0
    %3784 = vmatpush1.bf16.xpose.msra.mxu0 0
    %3785 = vmatprep.subr.bf16.mxu0 0
    %3786 = vmatpush1.bf16.xpose.msra.mxu0 0
    %3787 = vmatprep.subr.bf16.mxu0 0
    %3788 = vmatpush1.bf16.xpose.msra.mxu0 0
    %3789 = vmatprep.subr.bf16.mxu0 0
    %3790 = vmatpush1.bf16.xpose.msra.mxu0 0
    %3791 = vmatprep.subr.bf16.mxu0 0
    %3792 = vmatpush1.bf16.xpose.msra.mxu0 0
    %3793 = vmatprep.subr.bf16.mxu0 0
    %3794 = vmatpush1.bf16.xpose.msra.mxu0 0
    %3795 = vmatprep.subr.bf16.mxu0 0
    %3796 = vmatpush1.bf16.xpose.msra.mxu0 0
    %3797 = vmatprep.subr.bf16.mxu0 0
    %3798 = vmatpush1.bf16.xpose.msra.mxu0 0
    %3799 = vmatprep.subr.bf16.mxu0 0
    %3800 = vmatpush1.bf16.xpose.msra.mxu0 0
    %3801 = vmatprep.subr.bf16.mxu0 0
    %3802 = vmatpush1.bf16.xpose.msra.mxu0 0
    %3803 = vmatprep.subr.bf16.mxu0 0
    %3804 = vmatpush1.bf16.xpose.msra.mxu0 0
    %3805 = vmatprep.subr.bf16.mxu0 0
    %3806 = vmatpush1.bf16.xpose.msra.mxu0 0
    %3807 = vmatprep.subr.bf16.mxu0 0
    %3808 = vmatpush1.bf16.xpose.msra.mxu0 0
    %3809 = vmatprep.subr.bf16.mxu0 0
    %3810 = vmatpush1.bf16.xpose.msra.mxu0 0
    %3811 = vmatprep.mubr.bf16.mxu0 0
    %3812 = vmatmul.mubr.bf16.gmra.mrb[0].mxu0 %v3778
    %v3813 = vpop.f32.mrb[0].mxu0
    %v3814 = vadd.f32 0.0, %v3813
    %v3815 = vpop.f32.mrb[0].mxu0
    %v3816 = vpop.f32.mrb[0].mxu0
    %v3817 = vpop.f32.mrb[0].mxu0
    %3818 = vdwg.mxu0
    %v3819 = vsel %vm2603, %v3814, -1e+30
    %v3820 = vsel %vm3241, %v3819, -inf
    %3821 = vmax.xlane.f32.xlu0 %v3820
    %v3822 = vpop.xlane.xlu0 %3821
    %v3823 = vsub.f32 %v3819, %v3822
    %v3824 = vmul.f32 %v3823, 1.442695
    %v3825 = vpow.pop %v3824
    %v3826 = vmul.f32 %v2602, %v3825
    %v3827 = vsel %vm3241, %v3826, 0.0
    %3828 = vadd.xlane.f32.xlu0 %v3827
    %v3829 = vpop.xlane.xlu0 %3828
    %v3830 = vmax.f32 %v3829, 1e-20
    %v3831 = vpack.c.bf16 %v3826, %v3826
    %v3833 = vsel %vm1025, %v3831, 0
    %3835 = vmatprep.subr.bf16.mxu0 0
    %3836 = vmatpush1.bf16.msra.mxu0 %v2601
    %3837 = vmatprep.subr.bf16.mxu0 0
    %3838 = vmatpush1.bf16.msra.mxu0 0
    %3839 = vmatprep.subr.bf16.mxu0 0
    %3840 = vmatpush1.bf16.msra.mxu0 0
    %3841 = vmatprep.subr.bf16.mxu0 0
    %3842 = vmatpush1.bf16.msra.mxu0 0
    %3843 = vmatprep.subr.bf16.mxu0 0
    %3844 = vmatpush1.bf16.msra.mxu0 0
    %3845 = vmatprep.subr.bf16.mxu0 0
    %3846 = vmatpush1.bf16.msra.mxu0 0
    %3847 = vmatprep.subr.bf16.mxu0 0
    %3848 = vmatpush1.bf16.msra.mxu0 0
    %3849 = vmatprep.subr.bf16.mxu0 0
    %3850 = vmatpush1.bf16.msra.mxu0 0
    %3851 = vmatprep.subr.bf16.mxu0 0
    %3852 = vmatpush1.bf16.msra.mxu0 0
    %3853 = vmatprep.subr.bf16.mxu0 0
    %3854 = vmatpush1.bf16.msra.mxu0 0
    %3855 = vmatprep.subr.bf16.mxu0 0
    %3856 = vmatpush1.bf16.msra.mxu0 0
    %3857 = vmatprep.subr.bf16.mxu0 0
    %3858 = vmatpush1.bf16.msra.mxu0 0
    %3859 = vmatprep.subr.bf16.mxu0 0
    %3860 = vmatpush1.bf16.msra.mxu0 0
    %3861 = vmatprep.subr.bf16.mxu0 0
    %3862 = vmatpush1.bf16.msra.mxu0 0
    %3863 = vmatprep.subr.bf16.mxu0 0
    %3864 = vmatpush1.bf16.msra.mxu0 0
    %3865 = vmatprep.subr.bf16.mxu0 0
    %3866 = vmatpush1.bf16.msra.mxu0 0
    %3867 = vmatprep.mubr.bf16.mxu0 0
    %3868 = vmatmul.mubr.bf16.gmra.mrb[0].mxu0 %v3833
    %v3869 = vpop.f32.mrb[0].mxu0
    %v3870 = vadd.f32 0.0, %v3869
    %v3871 = vpop.f32.mrb[0].mxu0
    %v3872 = vpop.f32.mrb[0].mxu0
    %v3873 = vpop.f32.mrb[0].mxu0
    %3874 = vdwg.mxu0
    %v3875 = vrcp.pop %v3830
    %v3876 = vmul.f32 %v3870, %v3875
    %v3877 = vld [vmem:[%s25] sm:$0xf]
    %v3878 = vld [vmem:[%s25 + $0x4] sm:$0xf]
    %v3879 = vld [vmem:[%s25 + $0x8] sm:$0xf]
    %v3880 = vld [vmem:[%s25 + $0xc] sm:$0xf]
    %v3881 = vld [vmem:[%s25 + $0x10] sm:$0xf]
    %v3882 = vld [vmem:[%s25 + $0x14] sm:$0xf]
    %v3883 = vld [vmem:[%s25 + $0x18] sm:$0xf]
    %v3884 = vld [vmem:[%s25 + $0x1c] sm:$0xf]
    %v3885 = vld [vmem:[%s25 + $0x20] sm:$0xf]
    %v3886 = vld [vmem:[%s25 + $0x24] sm:$0xf]
    %v3887 = vld [vmem:[%s25 + $0x28] sm:$0xf]
    %v3888 = vld [vmem:[%s25 + $0x2c] sm:$0xf]
    %v3889 = vld [vmem:[%s25 + $0x30] sm:$0xf]
    %v3890 = vld [vmem:[%s25 + $0x34] sm:$0xf]
    %v3891 = vld [vmem:[%s25 + $0x38] sm:$0xf]
    %v3892 = vld [vmem:[%s25 + $0x3c] sm:$0xf]
    %v3893 = vld [vmem:[#allocation34] sm:$0xf]
    %v3894 = vld [vmem:[#allocation34 + $0x4] sm:$0xf]
    %v3895 = vld [vmem:[#allocation34 + $0x8] sm:$0xf]
    %v3896 = vld [vmem:[#allocation34 + $0xc] sm:$0xf]
    %v3897 = vld [vmem:[#allocation34 + $0x10] sm:$0xf]
    %v3898 = vld [vmem:[#allocation34 + $0x14] sm:$0xf]
    %v3899 = vld [vmem:[#allocation34 + $0x18] sm:$0xf]
    %v3900 = vld [vmem:[#allocation34 + $0x1c] sm:$0xf]
    %v3901 = vld [vmem:[#allocation34 + $0x20] sm:$0xf]
    %v3902 = vld [vmem:[#allocation34 + $0x24] sm:$0xf]
    %v3903 = vld [vmem:[#allocation34 + $0x28] sm:$0xf]
    %v3904 = vld [vmem:[#allocation34 + $0x2c] sm:$0xf]
    %v3905 = vld [vmem:[#allocation34 + $0x30] sm:$0xf]
    %v3906 = vld [vmem:[#allocation34 + $0x34] sm:$0xf]
    %v3907 = vld [vmem:[#allocation34 + $0x38] sm:$0xf]
    %v3908 = vld [vmem:[#allocation34 + $0x3c] sm:$0xf]
    %v3909 = vpack.c.bf16 %v3876, %v3876
    %v3926 = vunpack.c.l.b16 %v3893
    %v3927 = vunpack.c.l.b16 %v3894
    %v3928 = vunpack.c.l.b16 %v3895
    %v3929 = vunpack.c.l.b16 %v3896
    %v3930 = vunpack.c.l.b16 %v3897
    %v3931 = vunpack.c.l.b16 %v3898
    %v3932 = vunpack.c.l.b16 %v3899
    %v3933 = vunpack.c.l.b16 %v3900
    %v3934 = vunpack.c.l.b16 %v3901
    %v3935 = vunpack.c.l.b16 %v3902
    %v3936 = vunpack.c.l.b16 %v3903
    %v3937 = vunpack.c.l.b16 %v3904
    %v3938 = vunpack.c.l.b16 %v3905
    %v3939 = vunpack.c.l.b16 %v3906
    %v3940 = vunpack.c.l.b16 %v3907
    %v3941 = vunpack.c.l.b16 %v3908
    %v3942 = vpack.c.b16 %v3927, %v3926
    %v3943 = vpack.c.b16 %v3929, %v3928
    %v3944 = vpack.c.b16 %v3931, %v3930
    %v3945 = vpack.c.b16 %v3933, %v3932
    %v3946 = vpack.c.b16 %v3935, %v3934
    %v3947 = vpack.c.b16 %v3937, %v3936
    %v3948 = vpack.c.b16 %v3939, %v3938
    %v3949 = vpack.c.b16 %v3941, %v3940
    %3958 = vmatprep.subr.bf16.mxu0 0
    %3959 = vmatpush1.bf16.msra.mxu0 %v3942
    %3960 = vmatprep.subr.bf16.mxu0 0
    %3961 = vmatpush1.bf16.msra.mxu0 %v3943
    %3962 = vmatprep.subr.bf16.mxu0 0
    %3963 = vmatpush1.bf16.msra.mxu0 %v3944
    %3964 = vmatprep.subr.bf16.mxu0 0
    %3965 = vmatpush1.bf16.msra.mxu0 %v3945
    %3966 = vmatprep.subr.bf16.mxu0 0
    %3967 = vmatpush1.bf16.msra.mxu0 %v3946
    %3968 = vmatprep.subr.bf16.mxu0 0
    %3969 = vmatpush1.bf16.msra.mxu0 %v3947
    %3970 = vmatprep.subr.bf16.mxu0 0
    %3971 = vmatpush1.bf16.msra.mxu0 %v3948
    %3972 = vmatprep.subr.bf16.mxu0 0
    %3973 = vmatpush1.bf16.msra.mxu0 %v3949
    %3974 = vmatprep.subr.bf16.mxu0 0
    %3975 = vmatpush1.bf16.msra.mxu0 0
    %3976 = vmatprep.subr.bf16.mxu0 0
    %3977 = vmatpush1.bf16.msra.mxu0 0
    %3978 = vmatprep.subr.bf16.mxu0 0
    %3979 = vmatpush1.bf16.msra.mxu0 0
    %3980 = vmatprep.subr.bf16.mxu0 0
    %3981 = vmatpush1.bf16.msra.mxu0 0
    %3982 = vmatprep.subr.bf16.mxu0 0
    %3983 = vmatpush1.bf16.msra.mxu0 0
    %3984 = vmatprep.subr.bf16.mxu0 0
    %3985 = vmatpush1.bf16.msra.mxu0 0
    %3986 = vmatprep.subr.bf16.mxu0 0
    %3987 = vmatpush1.bf16.msra.mxu0 0
    %3988 = vmatprep.subr.bf16.mxu0 0
    %3989 = vmatpush1.bf16.msra.mxu0 0
    %3990 = vmatprep.mubr.bf16.mxu0 0
    %3991 = vmatmul.mubr.bf16.gmra.mrb[0].mxu0 %v3909
    %v3992 = vpop.f32.mrb[0].mxu0
    %v3993 = vadd.f32 0.0, %v3992
    %v3994 = vpop.f32.mrb[0].mxu0
    %v3995 = vpop.f32.mrb[0].mxu0
    %v3996 = vpop.f32.mrb[0].mxu0
    %3997 = vdwg.mxu0
    %v4014 = vunpack.c.l.b16 %v3877
    %v4015 = vunpack.c.l.b16 %v3878
    %v4016 = vunpack.c.l.b16 %v3879
    %v4017 = vunpack.c.l.b16 %v3880
    %v4018 = vunpack.c.l.b16 %v3881
    %v4019 = vunpack.c.l.b16 %v3882
    %v4020 = vunpack.c.l.b16 %v3883
    %v4021 = vunpack.c.l.b16 %v3884
    %v4022 = vunpack.c.l.b16 %v3885
    %v4023 = vunpack.c.l.b16 %v3886
    %v4024 = vunpack.c.l.b16 %v3887
    %v4025 = vunpack.c.l.b16 %v3888
    %v4026 = vunpack.c.l.b16 %v3889
    %v4027 = vunpack.c.l.b16 %v3890
    %v4028 = vunpack.c.l.b16 %v3891
    %v4029 = vunpack.c.l.b16 %v3892
    %v4030 = vpack.c.b16 %v4015, %v4014
    %v4031 = vpack.c.b16 %v4017, %v4016
    %v4032 = vpack.c.b16 %v4019, %v4018
    %v4033 = vpack.c.b16 %v4021, %v4020
    %v4034 = vpack.c.b16 %v4023, %v4022
    %v4035 = vpack.c.b16 %v4025, %v4024
    %v4036 = vpack.c.b16 %v4027, %v4026
    %v4037 = vpack.c.b16 %v4029, %v4028
    %4046 = vmatprep.subr.bf16.mxu0 0
    %4047 = vmatpush1.bf16.msra.mxu0 %v4030
    %4048 = vmatprep.subr.bf16.mxu0 0
    %4049 = vmatpush1.bf16.msra.mxu0 %v4031
    %4050 = vmatprep.subr.bf16.mxu0 0
    %4051 = vmatpush1.bf16.msra.mxu0 %v4032
    %4052 = vmatprep.subr.bf16.mxu0 0
    %4053 = vmatpush1.bf16.msra.mxu0 %v4033
    %4054 = vmatprep.subr.bf16.mxu0 0
    %4055 = vmatpush1.bf16.msra.mxu0 %v4034
    %4056 = vmatprep.subr.bf16.mxu0 0
    %4057 = vmatpush1.bf16.msra.mxu0 %v4035
    %4058 = vmatprep.subr.bf16.mxu0 0
    %4059 = vmatpush1.bf16.msra.mxu0 %v4036
    %4060 = vmatprep.subr.bf16.mxu0 0
    %4061 = vmatpush1.bf16.msra.mxu0 %v4037
    %4062 = vmatprep.subr.bf16.mxu0 0
    %4063 = vmatpush1.bf16.msra.mxu0 0
    %4064 = vmatprep.subr.bf16.mxu0 0
    %4065 = vmatpush1.bf16.msra.mxu0 0
    %4066 = vmatprep.subr.bf16.mxu0 0
    %4067 = vmatpush1.bf16.msra.mxu0 0
    %4068 = vmatprep.subr.bf16.mxu0 0
    %4069 = vmatpush1.bf16.msra.mxu0 0
    %4070 = vmatprep.subr.bf16.mxu0 0
    %4071 = vmatpush1.bf16.msra.mxu0 0
    %4072 = vmatprep.subr.bf16.mxu0 0
    %4073 = vmatpush1.bf16.msra.mxu0 0
    %4074 = vmatprep.subr.bf16.mxu0 0
    %4075 = vmatpush1.bf16.msra.mxu0 0
    %4076 = vmatprep.subr.bf16.mxu0 0
    %4077 = vmatpush1.bf16.msra.mxu0 0
    %4078 = vmatprep.mubr.bf16.mxu0 0
    %4079 = vmatmul.mubr.bf16.gmra.mrb[0].mxu0 %v3778
    %v4080 = vpop.f32.mrb[0].mxu0
    %v4081 = vadd.f32 %v3993, %v4080
    %v4082 = vpop.f32.mrb[0].mxu0
    %v4083 = vpop.f32.mrb[0].mxu0
    %v4084 = vpop.f32.mrb[0].mxu0
    %4085 = vdwg.mxu0
    %v4086 = vld [vmem:[%s27] sm:$0x1]
    %v4088 = vlaneseq
    %v4089 = vshrl.u32 %v4088, 7
    %v4090 = vsub.s32 0, %v4089
    %v4091 = vrot.slane %v4086, %v4090
    %v4093 = vadd.f32 %v4081, %v4091
    %v4094 = vmax.f32 %v4093, 0.0
    %4095 = vst [vmem:[#allocation35] sm:$0x3] %v4094
    // Predicated region
    $region198: #{tpu_custom_call.1} parent=1 // pred_check
      _
    $region199: #{tpu_custom_call.1} parent=1 // pred_check_branch
      %4097 = sbr.rel (0) target = $region201
    $region200: #{tpu_custom_call.1} parent=1 // pred_region
      %s4099 = ssub.s32 32, 32
      %4100 = vsyncadd [#allocation4], %s4099
      %s4102 = sshll.u32 [#allocation35], 4
      %s4103 = int_to_ptr.vmem [resolvable:$true] %s4102
      %4105 = dma.vmem_to_hbm [thread:$0]  %s4103, 32, %s28, [#allocation4]
    $region201: #{tpu_custom_call.1} parent=1 // pred_fallthru
      _
    // Predicated region
    $region202: #{tpu_custom_call.1} parent=1 // pred_check
      _
    $region203: #{tpu_custom_call.1} parent=1 // pred_check_branch
      %4107 = sbr.rel (0) target = $region205
    $region204: #{tpu_custom_call.1} parent=1 // pred_region
      %4108 = dma.done [#allocation4], 32
    $region205: #{tpu_custom_call.1} parent=1 // pred_fallthru
      _
    %4109 = vsyncpa [#allocation3], 1
    %4110 = vsyncpa [#allocation6], 1
    %4111 = vsyncpa [#allocation9], 1
    %4112 = vsyncpa [#allocation12], 1
    %4113 = vsyncpa [#allocation15], 1
    %4114 = vsyncpa [#allocation18], 1
    %4115 = vsyncpa [#allocation21], 1
    %4116 = vsyncpa [#allocation24], 1
    %4117 = vsyncpa [#allocation27], 1
    %4118 = vsyncpa [#allocation30], 1
    %4119 = vsyncpa [#allocation33], 1
    %4120 = vsyncpa [#allocation4], 1

</llo_original>
